<compile_context>
chip_gen: v5e
topology: v5e:2x2
jax: 0.10.0
libtpu: 0.0.40
codegen_flags: <defaults>
</compile_context>

<pallas_src>
import functools

import jax
import jax.numpy as jnp
from jax.experimental import pallas as pl
from jax.experimental.pallas import tpu as pltpu

LANE = 128
VMEM_LIMIT = 32 * 1024 * 1024          # safe scoped-VMEM budget on v5e/v6e/v7x
# MXU operand dtype (accumulation is always f32). bf16 is MXU-native on all generations;
# set to jnp.float32 for bit-closer parity with the f32 PyTorch reference.
MATMUL_DTYPE = jnp.bfloat16


# ------------------------------- fused kernel -------------------------------

def _pad_hw1(x):
    """Zero-pad H and W by 1 on each side. x: (TB, H, W, C) -> (TB, H+2, W+2, C)."""
    tb, h, w, c = x.shape
    zw = jnp.zeros((tb, h, 1, c), x.dtype)
    x = jnp.concatenate([zw, x, zw], axis=2)
    zh = jnp.zeros((tb, 1, w + 2, c), x.dtype)
    return jnp.concatenate([zh, x, zh], axis=1)


def _maxpool2x2(y, tb, h, w):
    """y: (tb*h*w, C) with rows ordered (b, h, w) -> (tb, h//2, w//2, C)."""
    c = y.shape[-1]
    y = y.reshape(tb * (h // 2), 2, w, c)
    y = jnp.maximum(y[:, 0], y[:, 1])                    # max over row pairs
    y = y.reshape(tb * (h // 2), w // 2, 2, c)
    y = jnp.maximum(y[:, :, 0, :], y[:, :, 1, :])        # max over column pairs
    return y.reshape(tb, h // 2, w // 2, c)


def _conv3x3_relu_pool(x, w_ref, b_ref):
    """Conv2d(3x3, pad=1) + bias + ReLU + MaxPool2d(2, 2), all in registers.

    x     : (tb, h, w, cin) f32 NHWC
    w_ref : (9, cout) when cin == 1 else (9, cin, cout), MATMUL_DTYPE, tap t = kh*3 + kw
    b_ref : (1, cout) f32
    """
    tb, h, w, cin = x.shape
    m = tb * h * w
    xp = _pad_hw1(x)
    taps = [xp[:, kh:kh + h, kw:kw + w, :] for kh in range(3) for kw in range(3)]

    if cin == 1:
        # First layer: a single (M, 9) x (9, cout) MXU matmul.
        patches = jnp.concatenate([t.reshape(m, 1) for t in taps], axis=-1)
        y = jnp.dot(patches.astype(MATMUL_DTYPE), w_ref[...],
                    preferred_element_type=jnp.float32)
    else:
        # Unrolled accumulation over the 9 taps: no (M, 9*cin) patch buffer materialized.
        cout = w_ref.shape[-1]
        y = jnp.zeros((m, cout), jnp.float32)
        for t in range(9):
            y = y + jnp.dot(taps[t].reshape(m, cin).astype(MATMUL_DTYPE), w_ref[t],
                            preferred_element_type=jnp.float32)

    y = jnp.maximum(y + b_ref[...], 0.0)                 # bias + ReLU
    return _maxpool2x2(y, tb, h, w)


def _piano_fwd_kernel(x_ref, w1_ref, b1_ref, w2_ref, b2_ref, w3_ref, b3_ref,
                      fw1_ref, fb1_ref, fw2_ref, fb2_ref, o_ref):
    x = x_ref[...]                                       # (TB, H, W, 1) f32
    a = _conv3x3_relu_pool(x, w1_ref, b1_ref)            # (TB, H/2, W/2, 16)
    a = _conv3x3_relu_pool(a, w2_ref, b2_ref)            # (TB, H/4, W/4, 32)
    a = _conv3x3_relu_pool(a, w3_ref, b3_ref)            # (TB, H/8, W/8, 64)

    tb, hf, wf, c3 = a.shape
    if (hf, wf) != (4, 4):
        # AdaptiveAvgPool2d((4, 4)) for evenly-divisible maps (identity at 32x32 input).
        kh, kw = hf // 4, wf // 4
        s = a.reshape(tb * 4, kh, wf, c3)
        r = s[:, 0]
        for i in range(1, kh):
            r = r + s[:, i]
        s = r.reshape(tb * 4, 4, kw, c3)
        r = s[:, :, 0, :]
        for j in range(1, kw):
            r = r + s[:, :, j, :]
        a = (r * (1.0 / (kh * kw))).reshape(tb, 4, 4, c3)

    # Classifier: Linear(64*4*4 -> 256) + ReLU + Linear(256 -> padded classes). The NCHW
    # x.view(B, -1) flatten order is pre-folded into fw1 (shape (16, 64, 256)), so the NHWC
    # feature map contracts position-by-position with no in-kernel transpose or big reshape.
    a = a.reshape(tb, 16, c3)
    nh = fw1_ref.shape[-1]
    hid = jnp.zeros((tb, nh), jnp.float32)
    for p in range(16):
        hid = hid + jnp.dot(a[:, p, :].astype(MATMUL_DTYPE), fw1_ref[p],
                            preferred_element_type=jnp.float32)
    hid = jnp.maximum(hid + fb1_ref[...], 0.0)
    logits = jnp.dot(hid.astype(MATMUL_DTYPE), fw2_ref[...],
                     preferred_element_type=jnp.float32) + fb2_ref[...]
    o_ref[...] = logits.reshape(o_ref.shape)


# ------------------------------ host-side wrappers ------------------------------

def _pick_batch_tile(b):
    """Batch tile: keep grid >= 2 when B >= 2 (v7x two TensorCores), cap per-step work."""
    if b <= 1:
        return 1
    cap = 8 if b >= 16 else max(1, b // 2)
    tb = min(cap, b)
    while b % tb:
        tb -= 1
    return max(tb, 1)


def pack_params(params):
    """One-time re-layout of PyTorch-layout parameters into kernel-ready operands."""
    md = MATMUL_DTYPE

    def conv_w(w):                                   # (Cout, Cin, 3, 3) -> (9, Cin, Cout)
        cout, cin = w.shape[0], w.shape[1]
        return w.transpose(2, 3, 1, 0).reshape(9, cin, cout).astype(md)

    nc = params["fw2"].shape[0]
    np_ = ((nc + LANE - 1) // LANE) * LANE           # lane-dense padded class count
    c3 = params["w3"].shape[0]                       # 64
    nh = params["fw1"].shape[0]                      # 256

    # Fold the NCHW x.view(B, -1) flatten order into fc1: rows become (pos=h*4+w, c).
    fw1 = params["fw1"].reshape(nh, c3, 4, 4).transpose(2, 3, 1, 0)
    fw1 = fw1.reshape(16, c3, nh).astype(md)
    fw2 = jnp.pad(params["fw2"].T, ((0, 0), (0, np_ - nc))).astype(md)      # (nh, np_)
    fb2 = jnp.pad(params["fb2"], (0, np_ - nc)).reshape(1, np_).astype(jnp.float32)

    return dict(
        w1=conv_w(params["w1"])[:, 0, :],            # (9, 16)  (Cin == 1)
        b1=params["b1"].reshape(1, -1).astype(jnp.float32),
        w2=conv_w(params["w2"]),                     # (9, 16, 32)
        b2=params["b2"].reshape(1, -1).astype(jnp.float32),
        w3=conv_w(params["w3"]),                     # (9, 32, 64)
        b3=params["b3"].reshape(1, -1).astype(jnp.float32),
        fw1=fw1,
        fb1=params["fb1"].reshape(1, -1).astype(jnp.float32),
        fw2=fw2,
        fb2=fb2,
    )


@functools.partial(jax.jit, static_argnames=("num_classes",))
def forward(packed, x, *, num_classes):
    """x: (B, 1, H, W) NCHW f32, matching the PyTorch module. Dropouts are identity."""
    b, _, h, w = x.shape
    # TODO(synk): MaxPool2d floor behavior for odd H/W and AdaptiveAvgPool2d for feature
    # maps not divisible by 4 are not implemented in the fused kernel.
    assert h % 8 == 0 and w % 8 == 0 and (h // 8) % 4 == 0 and (w // 8) % 4 == 0

    x = jnp.transpose(x, (0, 2, 3, 1))               # NHWC (free for a single channel)
    tb = _pick_batch_tile(b)
    np_ = packed["fw2"].shape[-1]
    nh = packed["fw1"].shape[-1]

    def resident(arr):                               # whole-array block, constant index
        nd = arr.ndim
        return pl.BlockSpec(arr.shape, lambda i, _nd=nd: (0,) * _nd)

    flops_img = (2 * h * w * 9 * 16
                 + 2 * (h // 2) * (w // 2) * 9 * 16 * 32
                 + 2 * (h // 4) * (w // 4) * 9 * 32 * 64
                 + 2 * 16 * 64 * nh + 2 * nh * np_)
    bytes_acc = 4 * b * h * w + 4 * b * np_ + sum(
        int(v.size) * v.dtype.itemsize for v in packed.values())

    out = pl.pallas_call(
        _piano_fwd_kernel,
        out_shape=jax.ShapeDtypeStruct((b, 1, np_), jnp.float32),
        grid_spec=pltpu.PrefetchScalarGridSpec(
            num_scalar_prefetch=0,
            grid=(b // tb,),
            in_specs=[
                pl.BlockSpec((tb, h, w, 1), lambda i: (i, 0, 0, 0)),
                resident(packed["w1"]), resident(packed["b1"]),
                resident(packed["w2"]), resident(packed["b2"]),
                resident(packed["w3"]), resident(packed["b3"]),
                resident(packed["fw1"]), resident(packed["fb1"]),
                resident(packed["fw2"]), resident(packed["fb2"]),
            ],
            out_specs=pl.BlockSpec((tb, 1, np_), lambda i: (i, 0, 0)),
        ),
        compiler_params=pltpu.CompilerParams(
            dimension_semantics=("parallel",),
            vmem_limit_bytes=VMEM_LIMIT,
        ),
        cost_estimate=pl.CostEstimate(flops=b * flops_img, transcendentals=0,
                                      bytes_accessed=bytes_acc),
    )(x, packed["w1"], packed["b1"], packed["w2"], packed["b2"],
      packed["w3"], packed["b3"], packed["fw1"], packed["fb1"],
      packed["fw2"], packed["fb2"])

    return out.reshape(b, np_)[:, :num_classes]


# ------------------------------ parameters & reference ------------------------------

def init_params(key, num_classes):
    ks = jax.random.split(key, 10)

    def conv_w(k, cout, cin):
        return jax.random.normal(k, (cout, cin, 3, 3), jnp.float32) * 0.1

    def lin_w(k, o, i):
        return jax.random.normal(k, (o, i), jnp.float32) * 0.05

    return dict(
        w1=conv_w(ks[0], 16, 1),  b1=jax.random.normal(ks[1], (16,), jnp.float32) * 0.01,
        w2=conv_w(ks[2], 32, 16), b2=jax.random.normal(ks[3], (32,), jnp.float32) * 0.01,
        w3=conv_w(ks[4], 64, 32), b3=jax.random.normal(ks[5], (64,), jnp.float32) * 0.01,
        fw1=lin_w(ks[6], 256, 64 * 4 * 4),
        fb1=jax.random.normal(ks[7], (256,), jnp.float32) * 0.01,
        fw2=lin_w(ks[8], num_classes, 256),
        fb2=jax.random.normal(ks[9], (num_classes,), jnp.float32) * 0.01,  # bug fixed
    )


def reference_forward(params, x):
    """Pure-JAX (XLA) f32 reference of the PyTorch module in eval mode."""
    def conv(x, w, b):
        y = jax.lax.conv_general_dilated(x, w, (1, 1), ((1, 1), (1, 1)),
                                         dimension_numbers=("NCHW", "OIHW", "NCHW"))
        return y + b.reshape(1, -1, 1, 1)

    def pool(x):
        n, c, h, w = x.shape
        return x.reshape(n, c, h // 2, 2, w // 2, 2).max(axis=(3, 5))

    x = pool(jax.nn.relu(conv(x, params["w1"], params["b1"])))
    x = pool(jax.nn.relu(conv(x, params["w2"], params["b2"])))
    x = pool(jax.nn.relu(conv(x, params["w3"], params["b3"])))
    n, c, h, w = x.shape
    x = x.reshape(n, c, 4, h // 4, 4, w // 4).mean(axis=(3, 5))   # adaptive pool (4, 4)
    x = x.reshape(n, -1)
    h1 = jax.nn.relu(x @ params["fw1"].T + params["fb1"])
    return h1 @ params["fw2"].T + params["fb2"]


# --------------------------------- demo -------------------------------------

if __name__ == "__main__":
    key = jax.random.PRNGKey(0)
    pkey, xkey = jax.random.split(key)

    num_classes = 10
    params = init_params(pkey, num_classes)
    packed = pack_params(params)                     # one-time weight re-layout (hoisted)

    # NCHW grayscale input; 32x32 reaches exactly 4x4 before the adaptive pool (identity).
    x = jax.random.normal(xkey, (2, 1, 32, 32), jnp.float32)

    logits = forward(packed, x, num_classes=num_classes)
    logits = jax.block_until_ready(logits)
    assert logits.shape == (2, num_classes)

    ref = jax.block_until_ready(reference_forward(params, x))
    err = float(jnp.max(jnp.abs(logits - ref)))
    tol = 3e-2 + 8e-2 * float(jnp.max(jnp.abs(ref)))  # relaxed for bf16 MXU operands
    if not err < tol:
        raise AssertionError(f"Pallas output mismatch: max abs err {err:.4f} > tol {tol:.4f}")
    print("KERNEL_OK")
</pallas_src>

<mosaic_0001>
module attributes {stable_mosaic.version = 11 : i64} {
  func.func @_piano_fwd_kernel(%arg0: i32, %arg1: memref<1x32x32x1xf32, #tpu.memory_space<vmem>>, %arg2: memref<9x16xbf16, #tpu.memory_space<vmem>>, %arg3: memref<1x16xf32, #tpu.memory_space<vmem>>, %arg4: memref<9x16x32xbf16, #tpu.memory_space<vmem>>, %arg5: memref<1x32xf32, #tpu.memory_space<vmem>>, %arg6: memref<9x32x64xbf16, #tpu.memory_space<vmem>>, %arg7: memref<1x64xf32, #tpu.memory_space<vmem>>, %arg8: memref<16x64x256xbf16, #tpu.memory_space<vmem>>, %arg9: memref<1x256xf32, #tpu.memory_space<vmem>>, %arg10: memref<256x128xbf16, #tpu.memory_space<vmem>>, %arg11: memref<1x128xf32, #tpu.memory_space<vmem>>, %arg12: memref<1x1x128xf32, #tpu.memory_space<vmem>>) attributes {dimension_semantics = [#tpu.dimension_semantics<parallel>], iteration_bounds = array<i64: 2>, scalar_prefetch = 0 : i64, scratch_operands = 0 : i64, tpu.core_type = #tpu.core_type<tc>, window_params = [{transform_indices = @transform_0, window_bounds = array<i64: 1, 32, 32, 1>}, {pipeline_mode = #tpu.pipeline_mode<synchronous>, transform_indices = @transform_1, window_bounds = array<i64: 9, 16>}, {pipeline_mode = #tpu.pipeline_mode<synchronous>, transform_indices = @transform_2, window_bounds = array<i64: 1, 16>}, {pipeline_mode = #tpu.pipeline_mode<synchronous>, transform_indices = @transform_3, window_bounds = array<i64: 9, 16, 32>}, {pipeline_mode = #tpu.pipeline_mode<synchronous>, transform_indices = @transform_4, window_bounds = array<i64: 1, 32>}, {pipeline_mode = #tpu.pipeline_mode<synchronous>, transform_indices = @transform_5, window_bounds = array<i64: 9, 32, 64>}, {pipeline_mode = #tpu.pipeline_mode<synchronous>, transform_indices = @transform_6, window_bounds = array<i64: 1, 64>}, {pipeline_mode = #tpu.pipeline_mode<synchronous>, transform_indices = @transform_7, window_bounds = array<i64: 16, 64, 256>}, {pipeline_mode = #tpu.pipeline_mode<synchronous>, transform_indices = @transform_8, window_bounds = array<i64: 1, 256>}, {pipeline_mode = #tpu.pipeline_mode<synchronous>, transform_indices = @transform_9, window_bounds = array<i64: 256, 128>}, {pipeline_mode = #tpu.pipeline_mode<synchronous>, transform_indices = @transform_10, window_bounds = array<i64: 1, 128>}, {transform_indices = @transform_11, window_bounds = array<i64: 1, 1, 128>}]} {
    %c0 = arith.constant 0 : index
    %c0_0 = arith.constant 0 : index
    %c0_1 = arith.constant 0 : index
    %c0_2 = arith.constant 0 : index
    %0 = vector.load %arg1[%c0, %c0_0, %c0_1, %c0_2] : memref<1x32x32x1xf32, #tpu.memory_space<vmem>>, vector<1x32x32x1xf32>
    %cst = arith.constant 0.000000e+00 : f32
    %1 = vector.broadcast %cst : f32 to vector<1x32x1x1xf32>
    %2 = tpu.concatenate %1, %0, %1 in 2 : vector<1x32x1x1xf32>, vector<1x32x32x1xf32>, vector<1x32x1x1xf32> -> vector<1x32x34x1xf32>
    %cst_3 = arith.constant 0.000000e+00 : f32
    %3 = vector.broadcast %cst_3 : f32 to vector<1x1x34x1xf32>
    %4 = tpu.concatenate %3, %2, %3 in 1 : vector<1x1x34x1xf32>, vector<1x32x34x1xf32>, vector<1x1x34x1xf32> -> vector<1x34x34x1xf32>
    %5 = vector.extract_strided_slice %4 {offsets = [0, 0, 0, 0], sizes = [1, 32, 32, 1], strides = [1, 1, 1, 1]} : vector<1x34x34x1xf32> to vector<1x32x32x1xf32>
    %6 = vector.extract_strided_slice %4 {offsets = [0, 0, 1, 0], sizes = [1, 32, 32, 1], strides = [1, 1, 1, 1]} : vector<1x34x34x1xf32> to vector<1x32x32x1xf32>
    %7 = vector.extract_strided_slice %4 {offsets = [0, 0, 2, 0], sizes = [1, 32, 32, 1], strides = [1, 1, 1, 1]} : vector<1x34x34x1xf32> to vector<1x32x32x1xf32>
    %8 = vector.extract_strided_slice %4 {offsets = [0, 1, 0, 0], sizes = [1, 32, 32, 1], strides = [1, 1, 1, 1]} : vector<1x34x34x1xf32> to vector<1x32x32x1xf32>
    %9 = vector.extract_strided_slice %4 {offsets = [0, 1, 1, 0], sizes = [1, 32, 32, 1], strides = [1, 1, 1, 1]} : vector<1x34x34x1xf32> to vector<1x32x32x1xf32>
    %10 = vector.extract_strided_slice %4 {offsets = [0, 1, 2, 0], sizes = [1, 32, 32, 1], strides = [1, 1, 1, 1]} : vector<1x34x34x1xf32> to vector<1x32x32x1xf32>
    %11 = vector.extract_strided_slice %4 {offsets = [0, 2, 0, 0], sizes = [1, 32, 32, 1], strides = [1, 1, 1, 1]} : vector<1x34x34x1xf32> to vector<1x32x32x1xf32>
    %12 = vector.extract_strided_slice %4 {offsets = [0, 2, 1, 0], sizes = [1, 32, 32, 1], strides = [1, 1, 1, 1]} : vector<1x34x34x1xf32> to vector<1x32x32x1xf32>
    %13 = vector.extract_strided_slice %4 {offsets = [0, 2, 2, 0], sizes = [1, 32, 32, 1], strides = [1, 1, 1, 1]} : vector<1x34x34x1xf32> to vector<1x32x32x1xf32>
    %14 = vector.shape_cast %5 : vector<1x32x32x1xf32> to vector<1024x1xf32>
    %15 = vector.shape_cast %6 : vector<1x32x32x1xf32> to vector<1024x1xf32>
    %16 = vector.shape_cast %7 : vector<1x32x32x1xf32> to vector<1024x1xf32>
    %17 = vector.shape_cast %8 : vector<1x32x32x1xf32> to vector<1024x1xf32>
    %18 = vector.shape_cast %9 : vector<1x32x32x1xf32> to vector<1024x1xf32>
    %19 = vector.shape_cast %10 : vector<1x32x32x1xf32> to vector<1024x1xf32>
    %20 = vector.shape_cast %11 : vector<1x32x32x1xf32> to vector<1024x1xf32>
    %21 = vector.shape_cast %12 : vector<1x32x32x1xf32> to vector<1024x1xf32>
    %22 = vector.shape_cast %13 : vector<1x32x32x1xf32> to vector<1024x1xf32>
    %23 = tpu.concatenate %14, %15, %16, %17, %18, %19, %20, %21, %22 in 1 : vector<1024x1xf32>, vector<1024x1xf32>, vector<1024x1xf32>, vector<1024x1xf32>, vector<1024x1xf32>, vector<1024x1xf32>, vector<1024x1xf32>, vector<1024x1xf32>, vector<1024x1xf32> -> vector<1024x9xf32>
    %24 = arith.truncf %23 : vector<1024x9xf32> to vector<1024x9xbf16>
    %c0_4 = arith.constant 0 : index
    %c0_5 = arith.constant 0 : index
    %25 = vector.load %arg2[%c0_4, %c0_5] : memref<9x16xbf16, #tpu.memory_space<vmem>>, vector<9x16xbf16>
    %cst_6 = arith.constant dense<0.000000e+00> : vector<1024x16xf32>
    %26 = tpu.matmul %24, %25, %cst_6 {dimension_numbers = #tpu.dot_dimension_numbers<[1], [0], [0], [1], [0, 0, 1, 1], [], []>} : vector<1024x9xbf16>, vector<9x16xbf16>, vector<1024x16xf32> -> vector<1024x16xf32>
    %c0_7 = arith.constant 0 : index
    %c0_8 = arith.constant 0 : index
    %27 = vector.load %arg3[%c0_7, %c0_8] : memref<1x16xf32, #tpu.memory_space<vmem>>, vector<1x16xf32>
    %28 = vector.broadcast %27 : vector<1x16xf32> to vector<1024x16xf32>
    %29 = arith.addf %26, %28 : vector<1024x16xf32>
    %cst_9 = arith.constant 0.000000e+00 : f32
    %30 = vector.broadcast %cst_9 : f32 to vector<1024x16xf32>
    %31 = arith.maximumf %29, %30 : vector<1024x16xf32>
    %32 = vector.shape_cast %31 : vector<1024x16xf32> to vector<16x2x32x16xf32>
    %33 = vector.extract_strided_slice %32 {offsets = [0, 0, 0, 0], sizes = [16, 1, 32, 16], strides = [1, 1, 1, 1]} : vector<16x2x32x16xf32> to vector<16x1x32x16xf32>
    %34 = vector.shape_cast %33 : vector<16x1x32x16xf32> to vector<16x32x16xf32>
    %35 = vector.extract_strided_slice %32 {offsets = [0, 1, 0, 0], sizes = [16, 1, 32, 16], strides = [1, 1, 1, 1]} : vector<16x2x32x16xf32> to vector<16x1x32x16xf32>
    %36 = vector.shape_cast %35 : vector<16x1x32x16xf32> to vector<16x32x16xf32>
    %37 = arith.maximumf %34, %36 : vector<16x32x16xf32>
    %38 = vector.shape_cast %37 : vector<16x32x16xf32> to vector<16x16x2x16xf32>
    %39 = vector.extract_strided_slice %38 {offsets = [0, 0, 0, 0], sizes = [16, 16, 1, 16], strides = [1, 1, 1, 1]} : vector<16x16x2x16xf32> to vector<16x16x1x16xf32>
    %40 = vector.shape_cast %39 : vector<16x16x1x16xf32> to vector<16x16x16xf32>
    %41 = vector.extract_strided_slice %38 {offsets = [0, 0, 1, 0], sizes = [16, 16, 1, 16], strides = [1, 1, 1, 1]} : vector<16x16x2x16xf32> to vector<16x16x1x16xf32>
    %42 = vector.shape_cast %41 : vector<16x16x1x16xf32> to vector<16x16x16xf32>
    %43 = arith.maximumf %40, %42 : vector<16x16x16xf32>
    %44 = vector.shape_cast %43 : vector<16x16x16xf32> to vector<1x16x16x16xf32>
    %cst_10 = arith.constant 0.000000e+00 : f32
    %45 = vector.broadcast %cst_10 : f32 to vector<1x16x1x16xf32>
    %46 = tpu.concatenate %45, %44, %45 in 2 : vector<1x16x1x16xf32>, vector<1x16x16x16xf32>, vector<1x16x1x16xf32> -> vector<1x16x18x16xf32>
    %cst_11 = arith.constant 0.000000e+00 : f32
    %47 = vector.broadcast %cst_11 : f32 to vector<1x1x18x16xf32>
    %48 = tpu.concatenate %47, %46, %47 in 1 : vector<1x1x18x16xf32>, vector<1x16x18x16xf32>, vector<1x1x18x16xf32> -> vector<1x18x18x16xf32>
    %49 = vector.extract_strided_slice %48 {offsets = [0, 0, 0, 0], sizes = [1, 16, 16, 16], strides = [1, 1, 1, 1]} : vector<1x18x18x16xf32> to vector<1x16x16x16xf32>
    %50 = vector.extract_strided_slice %48 {offsets = [0, 0, 1, 0], sizes = [1, 16, 16, 16], strides = [1, 1, 1, 1]} : vector<1x18x18x16xf32> to vector<1x16x16x16xf32>
    %51 = vector.extract_strided_slice %48 {offsets = [0, 0, 2, 0], sizes = [1, 16, 16, 16], strides = [1, 1, 1, 1]} : vector<1x18x18x16xf32> to vector<1x16x16x16xf32>
    %52 = vector.extract_strided_slice %48 {offsets = [0, 1, 0, 0], sizes = [1, 16, 16, 16], strides = [1, 1, 1, 1]} : vector<1x18x18x16xf32> to vector<1x16x16x16xf32>
    %53 = vector.extract_strided_slice %48 {offsets = [0, 1, 1, 0], sizes = [1, 16, 16, 16], strides = [1, 1, 1, 1]} : vector<1x18x18x16xf32> to vector<1x16x16x16xf32>
    %54 = vector.extract_strided_slice %48 {offsets = [0, 1, 2, 0], sizes = [1, 16, 16, 16], strides = [1, 1, 1, 1]} : vector<1x18x18x16xf32> to vector<1x16x16x16xf32>
    %55 = vector.extract_strided_slice %48 {offsets = [0, 2, 0, 0], sizes = [1, 16, 16, 16], strides = [1, 1, 1, 1]} : vector<1x18x18x16xf32> to vector<1x16x16x16xf32>
    %56 = vector.extract_strided_slice %48 {offsets = [0, 2, 1, 0], sizes = [1, 16, 16, 16], strides = [1, 1, 1, 1]} : vector<1x18x18x16xf32> to vector<1x16x16x16xf32>
    %57 = vector.extract_strided_slice %48 {offsets = [0, 2, 2, 0], sizes = [1, 16, 16, 16], strides = [1, 1, 1, 1]} : vector<1x18x18x16xf32> to vector<1x16x16x16xf32>
    %cst_12 = arith.constant 0.000000e+00 : f32
    %58 = vector.broadcast %cst_12 : f32 to vector<256x32xf32>
    %59 = vector.shape_cast %49 : vector<1x16x16x16xf32> to vector<256x16xf32>
    %60 = arith.truncf %59 : vector<256x16xf32> to vector<256x16xbf16>
    %c0_13 = arith.constant 0 : index
    %c0_14 = arith.constant 0 : index
    %c0_15 = arith.constant 0 : index
    %61 = vector.load %arg4[%c0_13, %c0_14, %c0_15] : memref<9x16x32xbf16, #tpu.memory_space<vmem>>, vector<1x16x32xbf16>
    %62 = vector.shape_cast %61 : vector<1x16x32xbf16> to vector<16x32xbf16>
    %cst_16 = arith.constant dense<0.000000e+00> : vector<256x32xf32>
    %63 = tpu.matmul %60, %62, %cst_16 {dimension_numbers = #tpu.dot_dimension_numbers<[1], [0], [0], [1], [0, 0, 1, 1], [], []>} : vector<256x16xbf16>, vector<16x32xbf16>, vector<256x32xf32> -> vector<256x32xf32>
    %64 = arith.addf %58, %63 : vector<256x32xf32>
    %65 = vector.shape_cast %50 : vector<1x16x16x16xf32> to vector<256x16xf32>
    %66 = arith.truncf %65 : vector<256x16xf32> to vector<256x16xbf16>
    %c1 = arith.constant 1 : index
    %c0_17 = arith.constant 0 : index
    %c0_18 = arith.constant 0 : index
    %67 = vector.load %arg4[%c1, %c0_17, %c0_18] : memref<9x16x32xbf16, #tpu.memory_space<vmem>>, vector<1x16x32xbf16>
    %68 = vector.shape_cast %67 : vector<1x16x32xbf16> to vector<16x32xbf16>
    %cst_19 = arith.constant dense<0.000000e+00> : vector<256x32xf32>
    %69 = tpu.matmul %66, %68, %cst_19 {dimension_numbers = #tpu.dot_dimension_numbers<[1], [0], [0], [1], [0, 0, 1, 1], [], []>} : vector<256x16xbf16>, vector<16x32xbf16>, vector<256x32xf32> -> vector<256x32xf32>
    %70 = arith.addf %64, %69 : vector<256x32xf32>
    %71 = vector.shape_cast %51 : vector<1x16x16x16xf32> to vector<256x16xf32>
    %72 = arith.truncf %71 : vector<256x16xf32> to vector<256x16xbf16>
    %c2 = arith.constant 2 : index
    %c0_20 = arith.constant 0 : index
    %c0_21 = arith.constant 0 : index
    %73 = vector.load %arg4[%c2, %c0_20, %c0_21] : memref<9x16x32xbf16, #tpu.memory_space<vmem>>, vector<1x16x32xbf16>
    %74 = vector.shape_cast %73 : vector<1x16x32xbf16> to vector<16x32xbf16>
    %cst_22 = arith.constant dense<0.000000e+00> : vector<256x32xf32>
    %75 = tpu.matmul %72, %74, %cst_22 {dimension_numbers = #tpu.dot_dimension_numbers<[1], [0], [0], [1], [0, 0, 1, 1], [], []>} : vector<256x16xbf16>, vector<16x32xbf16>, vector<256x32xf32> -> vector<256x32xf32>
    %76 = arith.addf %70, %75 : vector<256x32xf32>
    %77 = vector.shape_cast %52 : vector<1x16x16x16xf32> to vector<256x16xf32>
    %78 = arith.truncf %77 : vector<256x16xf32> to vector<256x16xbf16>
    %c3 = arith.constant 3 : index
    %c0_23 = arith.constant 0 : index
    %c0_24 = arith.constant 0 : index
    %79 = vector.load %arg4[%c3, %c0_23, %c0_24] : memref<9x16x32xbf16, #tpu.memory_space<vmem>>, vector<1x16x32xbf16>
    %80 = vector.shape_cast %79 : vector<1x16x32xbf16> to vector<16x32xbf16>
    %cst_25 = arith.constant dense<0.000000e+00> : vector<256x32xf32>
    %81 = tpu.matmul %78, %80, %cst_25 {dimension_numbers = #tpu.dot_dimension_numbers<[1], [0], [0], [1], [0, 0, 1, 1], [], []>} : vector<256x16xbf16>, vector<16x32xbf16>, vector<256x32xf32> -> vector<256x32xf32>
    %82 = arith.addf %76, %81 : vector<256x32xf32>
    %83 = vector.shape_cast %53 : vector<1x16x16x16xf32> to vector<256x16xf32>
    %84 = arith.truncf %83 : vector<256x16xf32> to vector<256x16xbf16>
    %c4 = arith.constant 4 : index
    %c0_26 = arith.constant 0 : index
    %c0_27 = arith.constant 0 : index
    %85 = vector.load %arg4[%c4, %c0_26, %c0_27] : memref<9x16x32xbf16, #tpu.memory_space<vmem>>, vector<1x16x32xbf16>
    %86 = vector.shape_cast %85 : vector<1x16x32xbf16> to vector<16x32xbf16>
    %cst_28 = arith.constant dense<0.000000e+00> : vector<256x32xf32>
    %87 = tpu.matmul %84, %86, %cst_28 {dimension_numbers = #tpu.dot_dimension_numbers<[1], [0], [0], [1], [0, 0, 1, 1], [], []>} : vector<256x16xbf16>, vector<16x32xbf16>, vector<256x32xf32> -> vector<256x32xf32>
    %88 = arith.addf %82, %87 : vector<256x32xf32>
    %89 = vector.shape_cast %54 : vector<1x16x16x16xf32> to vector<256x16xf32>
    %90 = arith.truncf %89 : vector<256x16xf32> to vector<256x16xbf16>
    %c5 = arith.constant 5 : index
    %c0_29 = arith.constant 0 : index
    %c0_30 = arith.constant 0 : index
    %91 = vector.load %arg4[%c5, %c0_29, %c0_30] : memref<9x16x32xbf16, #tpu.memory_space<vmem>>, vector<1x16x32xbf16>
    %92 = vector.shape_cast %91 : vector<1x16x32xbf16> to vector<16x32xbf16>
    %cst_31 = arith.constant dense<0.000000e+00> : vector<256x32xf32>
    %93 = tpu.matmul %90, %92, %cst_31 {dimension_numbers = #tpu.dot_dimension_numbers<[1], [0], [0], [1], [0, 0, 1, 1], [], []>} : vector<256x16xbf16>, vector<16x32xbf16>, vector<256x32xf32> -> vector<256x32xf32>
    %94 = arith.addf %88, %93 : vector<256x32xf32>
    %95 = vector.shape_cast %55 : vector<1x16x16x16xf32> to vector<256x16xf32>
    %96 = arith.truncf %95 : vector<256x16xf32> to vector<256x16xbf16>
    %c6 = arith.constant 6 : index
    %c0_32 = arith.constant 0 : index
    %c0_33 = arith.constant 0 : index
    %97 = vector.load %arg4[%c6, %c0_32, %c0_33] : memref<9x16x32xbf16, #tpu.memory_space<vmem>>, vector<1x16x32xbf16>
    %98 = vector.shape_cast %97 : vector<1x16x32xbf16> to vector<16x32xbf16>
    %cst_34 = arith.constant dense<0.000000e+00> : vector<256x32xf32>
    %99 = tpu.matmul %96, %98, %cst_34 {dimension_numbers = #tpu.dot_dimension_numbers<[1], [0], [0], [1], [0, 0, 1, 1], [], []>} : vector<256x16xbf16>, vector<16x32xbf16>, vector<256x32xf32> -> vector<256x32xf32>
    %100 = arith.addf %94, %99 : vector<256x32xf32>
    %101 = vector.shape_cast %56 : vector<1x16x16x16xf32> to vector<256x16xf32>
    %102 = arith.truncf %101 : vector<256x16xf32> to vector<256x16xbf16>
    %c7 = arith.constant 7 : index
    %c0_35 = arith.constant 0 : index
    %c0_36 = arith.constant 0 : index
    %103 = vector.load %arg4[%c7, %c0_35, %c0_36] : memref<9x16x32xbf16, #tpu.memory_space<vmem>>, vector<1x16x32xbf16>
    %104 = vector.shape_cast %103 : vector<1x16x32xbf16> to vector<16x32xbf16>
    %cst_37 = arith.constant dense<0.000000e+00> : vector<256x32xf32>
    %105 = tpu.matmul %102, %104, %cst_37 {dimension_numbers = #tpu.dot_dimension_numbers<[1], [0], [0], [1], [0, 0, 1, 1], [], []>} : vector<256x16xbf16>, vector<16x32xbf16>, vector<256x32xf32> -> vector<256x32xf32>
    %106 = arith.addf %100, %105 : vector<256x32xf32>
    %107 = vector.shape_cast %57 : vector<1x16x16x16xf32> to vector<256x16xf32>
    %108 = arith.truncf %107 : vector<256x16xf32> to vector<256x16xbf16>
    %c8 = arith.constant 8 : index
    %c0_38 = arith.constant 0 : index
    %c0_39 = arith.constant 0 : index
    %109 = vector.load %arg4[%c8, %c0_38, %c0_39] : memref<9x16x32xbf16, #tpu.memory_space<vmem>>, vector<1x16x32xbf16>
    %110 = vector.shape_cast %109 : vector<1x16x32xbf16> to vector<16x32xbf16>
    %cst_40 = arith.constant dense<0.000000e+00> : vector<256x32xf32>
    %111 = tpu.matmul %108, %110, %cst_40 {dimension_numbers = #tpu.dot_dimension_numbers<[1], [0], [0], [1], [0, 0, 1, 1], [], []>} : vector<256x16xbf16>, vector<16x32xbf16>, vector<256x32xf32> -> vector<256x32xf32>
    %112 = arith.addf %106, %111 : vector<256x32xf32>
    %c0_41 = arith.constant 0 : index
    %c0_42 = arith.constant 0 : index
    %113 = vector.load %arg5[%c0_41, %c0_42] : memref<1x32xf32, #tpu.memory_space<vmem>>, vector<1x32xf32>
    %114 = vector.broadcast %113 : vector<1x32xf32> to vector<256x32xf32>
    %115 = arith.addf %112, %114 : vector<256x32xf32>
    %cst_43 = arith.constant 0.000000e+00 : f32
    %116 = vector.broadcast %cst_43 : f32 to vector<256x32xf32>
    %117 = arith.maximumf %115, %116 : vector<256x32xf32>
    %118 = vector.shape_cast %117 : vector<256x32xf32> to vector<8x2x16x32xf32>
    %119 = vector.extract_strided_slice %118 {offsets = [0, 0, 0, 0], sizes = [8, 1, 16, 32], strides = [1, 1, 1, 1]} : vector<8x2x16x32xf32> to vector<8x1x16x32xf32>
    %120 = vector.shape_cast %119 : vector<8x1x16x32xf32> to vector<8x16x32xf32>
    %121 = vector.extract_strided_slice %118 {offsets = [0, 1, 0, 0], sizes = [8, 1, 16, 32], strides = [1, 1, 1, 1]} : vector<8x2x16x32xf32> to vector<8x1x16x32xf32>
    %122 = vector.shape_cast %121 : vector<8x1x16x32xf32> to vector<8x16x32xf32>
    %123 = arith.maximumf %120, %122 : vector<8x16x32xf32>
    %124 = vector.shape_cast %123 : vector<8x16x32xf32> to vector<8x8x2x32xf32>
    %125 = vector.extract_strided_slice %124 {offsets = [0, 0, 0, 0], sizes = [8, 8, 1, 32], strides = [1, 1, 1, 1]} : vector<8x8x2x32xf32> to vector<8x8x1x32xf32>
    %126 = vector.shape_cast %125 : vector<8x8x1x32xf32> to vector<8x8x32xf32>
    %127 = vector.extract_strided_slice %124 {offsets = [0, 0, 1, 0], sizes = [8, 8, 1, 32], strides = [1, 1, 1, 1]} : vector<8x8x2x32xf32> to vector<8x8x1x32xf32>
    %128 = vector.shape_cast %127 : vector<8x8x1x32xf32> to vector<8x8x32xf32>
    %129 = arith.maximumf %126, %128 : vector<8x8x32xf32>
    %130 = vector.shape_cast %129 : vector<8x8x32xf32> to vector<1x8x8x32xf32>
    %cst_44 = arith.constant 0.000000e+00 : f32
    %131 = vector.broadcast %cst_44 : f32 to vector<1x8x1x32xf32>
    %132 = tpu.concatenate %131, %130, %131 in 2 : vector<1x8x1x32xf32>, vector<1x8x8x32xf32>, vector<1x8x1x32xf32> -> vector<1x8x10x32xf32>
    %cst_45 = arith.constant 0.000000e+00 : f32
    %133 = vector.broadcast %cst_45 : f32 to vector<1x1x10x32xf32>
    %134 = tpu.concatenate %133, %132, %133 in 1 : vector<1x1x10x32xf32>, vector<1x8x10x32xf32>, vector<1x1x10x32xf32> -> vector<1x10x10x32xf32>
    %135 = vector.extract_strided_slice %134 {offsets = [0, 0, 0, 0], sizes = [1, 8, 8, 32], strides = [1, 1, 1, 1]} : vector<1x10x10x32xf32> to vector<1x8x8x32xf32>
    %136 = vector.extract_strided_slice %134 {offsets = [0, 0, 1, 0], sizes = [1, 8, 8, 32], strides = [1, 1, 1, 1]} : vector<1x10x10x32xf32> to vector<1x8x8x32xf32>
    %137 = vector.extract_strided_slice %134 {offsets = [0, 0, 2, 0], sizes = [1, 8, 8, 32], strides = [1, 1, 1, 1]} : vector<1x10x10x32xf32> to vector<1x8x8x32xf32>
    %138 = vector.extract_strided_slice %134 {offsets = [0, 1, 0, 0], sizes = [1, 8, 8, 32], strides = [1, 1, 1, 1]} : vector<1x10x10x32xf32> to vector<1x8x8x32xf32>
    %139 = vector.extract_strided_slice %134 {offsets = [0, 1, 1, 0], sizes = [1, 8, 8, 32], strides = [1, 1, 1, 1]} : vector<1x10x10x32xf32> to vector<1x8x8x32xf32>
    %140 = vector.extract_strided_slice %134 {offsets = [0, 1, 2, 0], sizes = [1, 8, 8, 32], strides = [1, 1, 1, 1]} : vector<1x10x10x32xf32> to vector<1x8x8x32xf32>
    %141 = vector.extract_strided_slice %134 {offsets = [0, 2, 0, 0], sizes = [1, 8, 8, 32], strides = [1, 1, 1, 1]} : vector<1x10x10x32xf32> to vector<1x8x8x32xf32>
    %142 = vector.extract_strided_slice %134 {offsets = [0, 2, 1, 0], sizes = [1, 8, 8, 32], strides = [1, 1, 1, 1]} : vector<1x10x10x32xf32> to vector<1x8x8x32xf32>
    %143 = vector.extract_strided_slice %134 {offsets = [0, 2, 2, 0], sizes = [1, 8, 8, 32], strides = [1, 1, 1, 1]} : vector<1x10x10x32xf32> to vector<1x8x8x32xf32>
    %cst_46 = arith.constant 0.000000e+00 : f32
    %144 = vector.broadcast %cst_46 : f32 to vector<64x64xf32>
    %145 = vector.shape_cast %135 : vector<1x8x8x32xf32> to vector<64x32xf32>
    %146 = arith.truncf %145 : vector<64x32xf32> to vector<64x32xbf16>
    %c0_47 = arith.constant 0 : index
    %c0_48 = arith.constant 0 : index
    %c0_49 = arith.constant 0 : index
    %147 = vector.load %arg6[%c0_47, %c0_48, %c0_49] : memref<9x32x64xbf16, #tpu.memory_space<vmem>>, vector<1x32x64xbf16>
    %148 = vector.shape_cast %147 : vector<1x32x64xbf16> to vector<32x64xbf16>
    %cst_50 = arith.constant dense<0.000000e+00> : vector<64x64xf32>
    %149 = tpu.matmul %146, %148, %cst_50 {dimension_numbers = #tpu.dot_dimension_numbers<[1], [0], [0], [1], [0, 0, 1, 1], [], []>} : vector<64x32xbf16>, vector<32x64xbf16>, vector<64x64xf32> -> vector<64x64xf32>
    %150 = arith.addf %144, %149 : vector<64x64xf32>
    %151 = vector.shape_cast %136 : vector<1x8x8x32xf32> to vector<64x32xf32>
    %152 = arith.truncf %151 : vector<64x32xf32> to vector<64x32xbf16>
    %c1_51 = arith.constant 1 : index
    %c0_52 = arith.constant 0 : index
    %c0_53 = arith.constant 0 : index
    %153 = vector.load %arg6[%c1_51, %c0_52, %c0_53] : memref<9x32x64xbf16, #tpu.memory_space<vmem>>, vector<1x32x64xbf16>
    %154 = vector.shape_cast %153 : vector<1x32x64xbf16> to vector<32x64xbf16>
    %cst_54 = arith.constant dense<0.000000e+00> : vector<64x64xf32>
    %155 = tpu.matmul %152, %154, %cst_54 {dimension_numbers = #tpu.dot_dimension_numbers<[1], [0], [0], [1], [0, 0, 1, 1], [], []>} : vector<64x32xbf16>, vector<32x64xbf16>, vector<64x64xf32> -> vector<64x64xf32>
    %156 = arith.addf %150, %155 : vector<64x64xf32>
    %157 = vector.shape_cast %137 : vector<1x8x8x32xf32> to vector<64x32xf32>
    %158 = arith.truncf %157 : vector<64x32xf32> to vector<64x32xbf16>
    %c2_55 = arith.constant 2 : index
    %c0_56 = arith.constant 0 : index
    %c0_57 = arith.constant 0 : index
    %159 = vector.load %arg6[%c2_55, %c0_56, %c0_57] : memref<9x32x64xbf16, #tpu.memory_space<vmem>>, vector<1x32x64xbf16>
    %160 = vector.shape_cast %159 : vector<1x32x64xbf16> to vector<32x64xbf16>
    %cst_58 = arith.constant dense<0.000000e+00> : vector<64x64xf32>
    %161 = tpu.matmul %158, %160, %cst_58 {dimension_numbers = #tpu.dot_dimension_numbers<[1], [0], [0], [1], [0, 0, 1, 1], [], []>} : vector<64x32xbf16>, vector<32x64xbf16>, vector<64x64xf32> -> vector<64x64xf32>
    %162 = arith.addf %156, %161 : vector<64x64xf32>
    %163 = vector.shape_cast %138 : vector<1x8x8x32xf32> to vector<64x32xf32>
    %164 = arith.truncf %163 : vector<64x32xf32> to vector<64x32xbf16>
    %c3_59 = arith.constant 3 : index
    %c0_60 = arith.constant 0 : index
    %c0_61 = arith.constant 0 : index
    %165 = vector.load %arg6[%c3_59, %c0_60, %c0_61] : memref<9x32x64xbf16, #tpu.memory_space<vmem>>, vector<1x32x64xbf16>
    %166 = vector.shape_cast %165 : vector<1x32x64xbf16> to vector<32x64xbf16>
    %cst_62 = arith.constant dense<0.000000e+00> : vector<64x64xf32>
    %167 = tpu.matmul %164, %166, %cst_62 {dimension_numbers = #tpu.dot_dimension_numbers<[1], [0], [0], [1], [0, 0, 1, 1], [], []>} : vector<64x32xbf16>, vector<32x64xbf16>, vector<64x64xf32> -> vector<64x64xf32>
    %168 = arith.addf %162, %167 : vector<64x64xf32>
    %169 = vector.shape_cast %139 : vector<1x8x8x32xf32> to vector<64x32xf32>
    %170 = arith.truncf %169 : vector<64x32xf32> to vector<64x32xbf16>
    %c4_63 = arith.constant 4 : index
    %c0_64 = arith.constant 0 : index
    %c0_65 = arith.constant 0 : index
    %171 = vector.load %arg6[%c4_63, %c0_64, %c0_65] : memref<9x32x64xbf16, #tpu.memory_space<vmem>>, vector<1x32x64xbf16>
    %172 = vector.shape_cast %171 : vector<1x32x64xbf16> to vector<32x64xbf16>
    %cst_66 = arith.constant dense<0.000000e+00> : vector<64x64xf32>
    %173 = tpu.matmul %170, %172, %cst_66 {dimension_numbers = #tpu.dot_dimension_numbers<[1], [0], [0], [1], [0, 0, 1, 1], [], []>} : vector<64x32xbf16>, vector<32x64xbf16>, vector<64x64xf32> -> vector<64x64xf32>
    %174 = arith.addf %168, %173 : vector<64x64xf32>
    %175 = vector.shape_cast %140 : vector<1x8x8x32xf32> to vector<64x32xf32>
    %176 = arith.truncf %175 : vector<64x32xf32> to vector<64x32xbf16>
    %c5_67 = arith.constant 5 : index
    %c0_68 = arith.constant 0 : index
    %c0_69 = arith.constant 0 : index
    %177 = vector.load %arg6[%c5_67, %c0_68, %c0_69] : memref<9x32x64xbf16, #tpu.memory_space<vmem>>, vector<1x32x64xbf16>
    %178 = vector.shape_cast %177 : vector<1x32x64xbf16> to vector<32x64xbf16>
    %cst_70 = arith.constant dense<0.000000e+00> : vector<64x64xf32>
    %179 = tpu.matmul %176, %178, %cst_70 {dimension_numbers = #tpu.dot_dimension_numbers<[1], [0], [0], [1], [0, 0, 1, 1], [], []>} : vector<64x32xbf16>, vector<32x64xbf16>, vector<64x64xf32> -> vector<64x64xf32>
    %180 = arith.addf %174, %179 : vector<64x64xf32>
    %181 = vector.shape_cast %141 : vector<1x8x8x32xf32> to vector<64x32xf32>
    %182 = arith.truncf %181 : vector<64x32xf32> to vector<64x32xbf16>
    %c6_71 = arith.constant 6 : index
    %c0_72 = arith.constant 0 : index
    %c0_73 = arith.constant 0 : index
    %183 = vector.load %arg6[%c6_71, %c0_72, %c0_73] : memref<9x32x64xbf16, #tpu.memory_space<vmem>>, vector<1x32x64xbf16>
    %184 = vector.shape_cast %183 : vector<1x32x64xbf16> to vector<32x64xbf16>
    %cst_74 = arith.constant dense<0.000000e+00> : vector<64x64xf32>
    %185 = tpu.matmul %182, %184, %cst_74 {dimension_numbers = #tpu.dot_dimension_numbers<[1], [0], [0], [1], [0, 0, 1, 1], [], []>} : vector<64x32xbf16>, vector<32x64xbf16>, vector<64x64xf32> -> vector<64x64xf32>
    %186 = arith.addf %180, %185 : vector<64x64xf32>
    %187 = vector.shape_cast %142 : vector<1x8x8x32xf32> to vector<64x32xf32>
    %188 = arith.truncf %187 : vector<64x32xf32> to vector<64x32xbf16>
    %c7_75 = arith.constant 7 : index
    %c0_76 = arith.constant 0 : index
    %c0_77 = arith.constant 0 : index
    %189 = vector.load %arg6[%c7_75, %c0_76, %c0_77] : memref<9x32x64xbf16, #tpu.memory_space<vmem>>, vector<1x32x64xbf16>
    %190 = vector.shape_cast %189 : vector<1x32x64xbf16> to vector<32x64xbf16>
    %cst_78 = arith.constant dense<0.000000e+00> : vector<64x64xf32>
    %191 = tpu.matmul %188, %190, %cst_78 {dimension_numbers = #tpu.dot_dimension_numbers<[1], [0], [0], [1], [0, 0, 1, 1], [], []>} : vector<64x32xbf16>, vector<32x64xbf16>, vector<64x64xf32> -> vector<64x64xf32>
    %192 = arith.addf %186, %191 : vector<64x64xf32>
    %193 = vector.shape_cast %143 : vector<1x8x8x32xf32> to vector<64x32xf32>
    %194 = arith.truncf %193 : vector<64x32xf32> to vector<64x32xbf16>
    %c8_79 = arith.constant 8 : index
    %c0_80 = arith.constant 0 : index
    %c0_81 = arith.constant 0 : index
    %195 = vector.load %arg6[%c8_79, %c0_80, %c0_81] : memref<9x32x64xbf16, #tpu.memory_space<vmem>>, vector<1x32x64xbf16>
    %196 = vector.shape_cast %195 : vector<1x32x64xbf16> to vector<32x64xbf16>
    %cst_82 = arith.constant dense<0.000000e+00> : vector<64x64xf32>
    %197 = tpu.matmul %194, %196, %cst_82 {dimension_numbers = #tpu.dot_dimension_numbers<[1], [0], [0], [1], [0, 0, 1, 1], [], []>} : vector<64x32xbf16>, vector<32x64xbf16>, vector<64x64xf32> -> vector<64x64xf32>
    %198 = arith.addf %192, %197 : vector<64x64xf32>
    %c0_83 = arith.constant 0 : index
    %c0_84 = arith.constant 0 : index
    %199 = vector.load %arg7[%c0_83, %c0_84] : memref<1x64xf32, #tpu.memory_space<vmem>>, vector<1x64xf32>
    %200 = vector.broadcast %199 : vector<1x64xf32> to vector<64x64xf32>
    %201 = arith.addf %198, %200 : vector<64x64xf32>
    %cst_85 = arith.constant 0.000000e+00 : f32
    %202 = vector.broadcast %cst_85 : f32 to vector<64x64xf32>
    %203 = arith.maximumf %201, %202 : vector<64x64xf32>
    %204 = vector.shape_cast %203 : vector<64x64xf32> to vector<4x2x8x64xf32>
    %205 = vector.extract_strided_slice %204 {offsets = [0, 0, 0, 0], sizes = [4, 1, 8, 64], strides = [1, 1, 1, 1]} : vector<4x2x8x64xf32> to vector<4x1x8x64xf32>
    %206 = vector.shape_cast %205 : vector<4x1x8x64xf32> to vector<4x8x64xf32>
    %207 = vector.extract_strided_slice %204 {offsets = [0, 1, 0, 0], sizes = [4, 1, 8, 64], strides = [1, 1, 1, 1]} : vector<4x2x8x64xf32> to vector<4x1x8x64xf32>
    %208 = vector.shape_cast %207 : vector<4x1x8x64xf32> to vector<4x8x64xf32>
    %209 = arith.maximumf %206, %208 : vector<4x8x64xf32>
    %210 = vector.shape_cast %209 : vector<4x8x64xf32> to vector<4x4x2x64xf32>
    %211 = vector.extract_strided_slice %210 {offsets = [0, 0, 0, 0], sizes = [4, 4, 1, 64], strides = [1, 1, 1, 1]} : vector<4x4x2x64xf32> to vector<4x4x1x64xf32>
    %212 = vector.shape_cast %211 : vector<4x4x1x64xf32> to vector<4x4x64xf32>
    %213 = vector.extract_strided_slice %210 {offsets = [0, 0, 1, 0], sizes = [4, 4, 1, 64], strides = [1, 1, 1, 1]} : vector<4x4x2x64xf32> to vector<4x4x1x64xf32>
    %214 = vector.shape_cast %213 : vector<4x4x1x64xf32> to vector<4x4x64xf32>
    %215 = arith.maximumf %212, %214 : vector<4x4x64xf32>
    %216 = vector.shape_cast %215 : vector<4x4x64xf32> to vector<1x4x4x64xf32>
    %217 = vector.shape_cast %216 : vector<1x4x4x64xf32> to vector<1x16x64xf32>
    %cst_86 = arith.constant 0.000000e+00 : f32
    %218 = vector.broadcast %cst_86 : f32 to vector<1x256xf32>
    %219 = vector.extract_strided_slice %217 {offsets = [0, 0, 0], sizes = [1, 1, 64], strides = [1, 1, 1]} : vector<1x16x64xf32> to vector<1x1x64xf32>
    %220 = vector.shape_cast %219 : vector<1x1x64xf32> to vector<1x64xf32>
    %221 = arith.truncf %220 : vector<1x64xf32> to vector<1x64xbf16>
    %c0_87 = arith.constant 0 : index
    %c0_88 = arith.constant 0 : index
    %c0_89 = arith.constant 0 : index
    %222 = vector.load %arg8[%c0_87, %c0_88, %c0_89] : memref<16x64x256xbf16, #tpu.memory_space<vmem>>, vector<1x64x256xbf16>
    %223 = vector.shape_cast %222 : vector<1x64x256xbf16> to vector<64x256xbf16>
    %cst_90 = arith.constant dense<0.000000e+00> : vector<1x256xf32>
    %224 = tpu.matmul %221, %223, %cst_90 {dimension_numbers = #tpu.dot_dimension_numbers<[1], [0], [0], [1], [0, 0, 1, 1], [], []>} : vector<1x64xbf16>, vector<64x256xbf16>, vector<1x256xf32> -> vector<1x256xf32>
    %225 = arith.addf %218, %224 : vector<1x256xf32>
    %226 = vector.extract_strided_slice %217 {offsets = [0, 1, 0], sizes = [1, 1, 64], strides = [1, 1, 1]} : vector<1x16x64xf32> to vector<1x1x64xf32>
    %227 = vector.shape_cast %226 : vector<1x1x64xf32> to vector<1x64xf32>
    %228 = arith.truncf %227 : vector<1x64xf32> to vector<1x64xbf16>
    %c1_91 = arith.constant 1 : index
    %c0_92 = arith.constant 0 : index
    %c0_93 = arith.constant 0 : index
    %229 = vector.load %arg8[%c1_91, %c0_92, %c0_93] : memref<16x64x256xbf16, #tpu.memory_space<vmem>>, vector<1x64x256xbf16>
    %230 = vector.shape_cast %229 : vector<1x64x256xbf16> to vector<64x256xbf16>
    %cst_94 = arith.constant dense<0.000000e+00> : vector<1x256xf32>
    %231 = tpu.matmul %228, %230, %cst_94 {dimension_numbers = #tpu.dot_dimension_numbers<[1], [0], [0], [1], [0, 0, 1, 1], [], []>} : vector<1x64xbf16>, vector<64x256xbf16>, vector<1x256xf32> -> vector<1x256xf32>
    %232 = arith.addf %225, %231 : vector<1x256xf32>
    %233 = vector.extract_strided_slice %217 {offsets = [0, 2, 0], sizes = [1, 1, 64], strides = [1, 1, 1]} : vector<1x16x64xf32> to vector<1x1x64xf32>
    %234 = vector.shape_cast %233 : vector<1x1x64xf32> to vector<1x64xf32>
    %235 = arith.truncf %234 : vector<1x64xf32> to vector<1x64xbf16>
    %c2_95 = arith.constant 2 : index
    %c0_96 = arith.constant 0 : index
    %c0_97 = arith.constant 0 : index
    %236 = vector.load %arg8[%c2_95, %c0_96, %c0_97] : memref<16x64x256xbf16, #tpu.memory_space<vmem>>, vector<1x64x256xbf16>
    %237 = vector.shape_cast %236 : vector<1x64x256xbf16> to vector<64x256xbf16>
    %cst_98 = arith.constant dense<0.000000e+00> : vector<1x256xf32>
    %238 = tpu.matmul %235, %237, %cst_98 {dimension_numbers = #tpu.dot_dimension_numbers<[1], [0], [0], [1], [0, 0, 1, 1], [], []>} : vector<1x64xbf16>, vector<64x256xbf16>, vector<1x256xf32> -> vector<1x256xf32>
    %239 = arith.addf %232, %238 : vector<1x256xf32>
    %240 = vector.extract_strided_slice %217 {offsets = [0, 3, 0], sizes = [1, 1, 64], strides = [1, 1, 1]} : vector<1x16x64xf32> to vector<1x1x64xf32>
    %241 = vector.shape_cast %240 : vector<1x1x64xf32> to vector<1x64xf32>
    %242 = arith.truncf %241 : vector<1x64xf32> to vector<1x64xbf16>
    %c3_99 = arith.constant 3 : index
    %c0_100 = arith.constant 0 : index
    %c0_101 = arith.constant 0 : index
    %243 = vector.load %arg8[%c3_99, %c0_100, %c0_101] : memref<16x64x256xbf16, #tpu.memory_space<vmem>>, vector<1x64x256xbf16>
    %244 = vector.shape_cast %243 : vector<1x64x256xbf16> to vector<64x256xbf16>
    %cst_102 = arith.constant dense<0.000000e+00> : vector<1x256xf32>
    %245 = tpu.matmul %242, %244, %cst_102 {dimension_numbers = #tpu.dot_dimension_numbers<[1], [0], [0], [1], [0, 0, 1, 1], [], []>} : vector<1x64xbf16>, vector<64x256xbf16>, vector<1x256xf32> -> vector<1x256xf32>
    %246 = arith.addf %239, %245 : vector<1x256xf32>
    %247 = vector.extract_strided_slice %217 {offsets = [0, 4, 0], sizes = [1, 1, 64], strides = [1, 1, 1]} : vector<1x16x64xf32> to vector<1x1x64xf32>
    %248 = vector.shape_cast %247 : vector<1x1x64xf32> to vector<1x64xf32>
    %249 = arith.truncf %248 : vector<1x64xf32> to vector<1x64xbf16>
    %c4_103 = arith.constant 4 : index
    %c0_104 = arith.constant 0 : index
    %c0_105 = arith.constant 0 : index
    %250 = vector.load %arg8[%c4_103, %c0_104, %c0_105] : memref<16x64x256xbf16, #tpu.memory_space<vmem>>, vector<1x64x256xbf16>
    %251 = vector.shape_cast %250 : vector<1x64x256xbf16> to vector<64x256xbf16>
    %cst_106 = arith.constant dense<0.000000e+00> : vector<1x256xf32>
    %252 = tpu.matmul %249, %251, %cst_106 {dimension_numbers = #tpu.dot_dimension_numbers<[1], [0], [0], [1], [0, 0, 1, 1], [], []>} : vector<1x64xbf16>, vector<64x256xbf16>, vector<1x256xf32> -> vector<1x256xf32>
    %253 = arith.addf %246, %252 : vector<1x256xf32>
    %254 = vector.extract_strided_slice %217 {offsets = [0, 5, 0], sizes = [1, 1, 64], strides = [1, 1, 1]} : vector<1x16x64xf32> to vector<1x1x64xf32>
    %255 = vector.shape_cast %254 : vector<1x1x64xf32> to vector<1x64xf32>
    %256 = arith.truncf %255 : vector<1x64xf32> to vector<1x64xbf16>
    %c5_107 = arith.constant 5 : index
    %c0_108 = arith.constant 0 : index
    %c0_109 = arith.constant 0 : index
    %257 = vector.load %arg8[%c5_107, %c0_108, %c0_109] : memref<16x64x256xbf16, #tpu.memory_space<vmem>>, vector<1x64x256xbf16>
    %258 = vector.shape_cast %257 : vector<1x64x256xbf16> to vector<64x256xbf16>
    %cst_110 = arith.constant dense<0.000000e+00> : vector<1x256xf32>
    %259 = tpu.matmul %256, %258, %cst_110 {dimension_numbers = #tpu.dot_dimension_numbers<[1], [0], [0], [1], [0, 0, 1, 1], [], []>} : vector<1x64xbf16>, vector<64x256xbf16>, vector<1x256xf32> -> vector<1x256xf32>
    %260 = arith.addf %253, %259 : vector<1x256xf32>
    %261 = vector.extract_strided_slice %217 {offsets = [0, 6, 0], sizes = [1, 1, 64], strides = [1, 1, 1]} : vector<1x16x64xf32> to vector<1x1x64xf32>
    %262 = vector.shape_cast %261 : vector<1x1x64xf32> to vector<1x64xf32>
    %263 = arith.truncf %262 : vector<1x64xf32> to vector<1x64xbf16>
    %c6_111 = arith.constant 6 : index
    %c0_112 = arith.constant 0 : index
    %c0_113 = arith.constant 0 : index
    %264 = vector.load %arg8[%c6_111, %c0_112, %c0_113] : memref<16x64x256xbf16, #tpu.memory_space<vmem>>, vector<1x64x256xbf16>
    %265 = vector.shape_cast %264 : vector<1x64x256xbf16> to vector<64x256xbf16>
    %cst_114 = arith.constant dense<0.000000e+00> : vector<1x256xf32>
    %266 = tpu.matmul %263, %265, %cst_114 {dimension_numbers = #tpu.dot_dimension_numbers<[1], [0], [0], [1], [0, 0, 1, 1], [], []>} : vector<1x64xbf16>, vector<64x256xbf16>, vector<1x256xf32> -> vector<1x256xf32>
    %267 = arith.addf %260, %266 : vector<1x256xf32>
    %268 = vector.extract_strided_slice %217 {offsets = [0, 7, 0], sizes = [1, 1, 64], strides = [1, 1, 1]} : vector<1x16x64xf32> to vector<1x1x64xf32>
    %269 = vector.shape_cast %268 : vector<1x1x64xf32> to vector<1x64xf32>
    %270 = arith.truncf %269 : vector<1x64xf32> to vector<1x64xbf16>
    %c7_115 = arith.constant 7 : index
    %c0_116 = arith.constant 0 : index
    %c0_117 = arith.constant 0 : index
    %271 = vector.load %arg8[%c7_115, %c0_116, %c0_117] : memref<16x64x256xbf16, #tpu.memory_space<vmem>>, vector<1x64x256xbf16>
    %272 = vector.shape_cast %271 : vector<1x64x256xbf16> to vector<64x256xbf16>
    %cst_118 = arith.constant dense<0.000000e+00> : vector<1x256xf32>
    %273 = tpu.matmul %270, %272, %cst_118 {dimension_numbers = #tpu.dot_dimension_numbers<[1], [0], [0], [1], [0, 0, 1, 1], [], []>} : vector<1x64xbf16>, vector<64x256xbf16>, vector<1x256xf32> -> vector<1x256xf32>
    %274 = arith.addf %267, %273 : vector<1x256xf32>
    %275 = vector.extract_strided_slice %217 {offsets = [0, 8, 0], sizes = [1, 1, 64], strides = [1, 1, 1]} : vector<1x16x64xf32> to vector<1x1x64xf32>
    %276 = vector.shape_cast %275 : vector<1x1x64xf32> to vector<1x64xf32>
    %277 = arith.truncf %276 : vector<1x64xf32> to vector<1x64xbf16>
    %c8_119 = arith.constant 8 : index
    %c0_120 = arith.constant 0 : index
    %c0_121 = arith.constant 0 : index
    %278 = vector.load %arg8[%c8_119, %c0_120, %c0_121] : memref<16x64x256xbf16, #tpu.memory_space<vmem>>, vector<1x64x256xbf16>
    %279 = vector.shape_cast %278 : vector<1x64x256xbf16> to vector<64x256xbf16>
    %cst_122 = arith.constant dense<0.000000e+00> : vector<1x256xf32>
    %280 = tpu.matmul %277, %279, %cst_122 {dimension_numbers = #tpu.dot_dimension_numbers<[1], [0], [0], [1], [0, 0, 1, 1], [], []>} : vector<1x64xbf16>, vector<64x256xbf16>, vector<1x256xf32> -> vector<1x256xf32>
    %281 = arith.addf %274, %280 : vector<1x256xf32>
    %282 = vector.extract_strided_slice %217 {offsets = [0, 9, 0], sizes = [1, 1, 64], strides = [1, 1, 1]} : vector<1x16x64xf32> to vector<1x1x64xf32>
    %283 = vector.shape_cast %282 : vector<1x1x64xf32> to vector<1x64xf32>
    %284 = arith.truncf %283 : vector<1x64xf32> to vector<1x64xbf16>
    %c9 = arith.constant 9 : index
    %c0_123 = arith.constant 0 : index
    %c0_124 = arith.constant 0 : index
    %285 = vector.load %arg8[%c9, %c0_123, %c0_124] : memref<16x64x256xbf16, #tpu.memory_space<vmem>>, vector<1x64x256xbf16>
    %286 = vector.shape_cast %285 : vector<1x64x256xbf16> to vector<64x256xbf16>
    %cst_125 = arith.constant dense<0.000000e+00> : vector<1x256xf32>
    %287 = tpu.matmul %284, %286, %cst_125 {dimension_numbers = #tpu.dot_dimension_numbers<[1], [0], [0], [1], [0, 0, 1, 1], [], []>} : vector<1x64xbf16>, vector<64x256xbf16>, vector<1x256xf32> -> vector<1x256xf32>
    %288 = arith.addf %281, %287 : vector<1x256xf32>
    %289 = vector.extract_strided_slice %217 {offsets = [0, 10, 0], sizes = [1, 1, 64], strides = [1, 1, 1]} : vector<1x16x64xf32> to vector<1x1x64xf32>
    %290 = vector.shape_cast %289 : vector<1x1x64xf32> to vector<1x64xf32>
    %291 = arith.truncf %290 : vector<1x64xf32> to vector<1x64xbf16>
    %c10 = arith.constant 10 : index
    %c0_126 = arith.constant 0 : index
    %c0_127 = arith.constant 0 : index
    %292 = vector.load %arg8[%c10, %c0_126, %c0_127] : memref<16x64x256xbf16, #tpu.memory_space<vmem>>, vector<1x64x256xbf16>
    %293 = vector.shape_cast %292 : vector<1x64x256xbf16> to vector<64x256xbf16>
    %cst_128 = arith.constant dense<0.000000e+00> : vector<1x256xf32>
    %294 = tpu.matmul %291, %293, %cst_128 {dimension_numbers = #tpu.dot_dimension_numbers<[1], [0], [0], [1], [0, 0, 1, 1], [], []>} : vector<1x64xbf16>, vector<64x256xbf16>, vector<1x256xf32> -> vector<1x256xf32>
    %295 = arith.addf %288, %294 : vector<1x256xf32>
    %296 = vector.extract_strided_slice %217 {offsets = [0, 11, 0], sizes = [1, 1, 64], strides = [1, 1, 1]} : vector<1x16x64xf32> to vector<1x1x64xf32>
    %297 = vector.shape_cast %296 : vector<1x1x64xf32> to vector<1x64xf32>
    %298 = arith.truncf %297 : vector<1x64xf32> to vector<1x64xbf16>
    %c11 = arith.constant 11 : index
    %c0_129 = arith.constant 0 : index
    %c0_130 = arith.constant 0 : index
    %299 = vector.load %arg8[%c11, %c0_129, %c0_130] : memref<16x64x256xbf16, #tpu.memory_space<vmem>>, vector<1x64x256xbf16>
    %300 = vector.shape_cast %299 : vector<1x64x256xbf16> to vector<64x256xbf16>
    %cst_131 = arith.constant dense<0.000000e+00> : vector<1x256xf32>
    %301 = tpu.matmul %298, %300, %cst_131 {dimension_numbers = #tpu.dot_dimension_numbers<[1], [0], [0], [1], [0, 0, 1, 1], [], []>} : vector<1x64xbf16>, vector<64x256xbf16>, vector<1x256xf32> -> vector<1x256xf32>
    %302 = arith.addf %295, %301 : vector<1x256xf32>
    %303 = vector.extract_strided_slice %217 {offsets = [0, 12, 0], sizes = [1, 1, 64], strides = [1, 1, 1]} : vector<1x16x64xf32> to vector<1x1x64xf32>
    %304 = vector.shape_cast %303 : vector<1x1x64xf32> to vector<1x64xf32>
    %305 = arith.truncf %304 : vector<1x64xf32> to vector<1x64xbf16>
    %c12 = arith.constant 12 : index
    %c0_132 = arith.constant 0 : index
    %c0_133 = arith.constant 0 : index
    %306 = vector.load %arg8[%c12, %c0_132, %c0_133] : memref<16x64x256xbf16, #tpu.memory_space<vmem>>, vector<1x64x256xbf16>
    %307 = vector.shape_cast %306 : vector<1x64x256xbf16> to vector<64x256xbf16>
    %cst_134 = arith.constant dense<0.000000e+00> : vector<1x256xf32>
    %308 = tpu.matmul %305, %307, %cst_134 {dimension_numbers = #tpu.dot_dimension_numbers<[1], [0], [0], [1], [0, 0, 1, 1], [], []>} : vector<1x64xbf16>, vector<64x256xbf16>, vector<1x256xf32> -> vector<1x256xf32>
    %309 = arith.addf %302, %308 : vector<1x256xf32>
    %310 = vector.extract_strided_slice %217 {offsets = [0, 13, 0], sizes = [1, 1, 64], strides = [1, 1, 1]} : vector<1x16x64xf32> to vector<1x1x64xf32>
    %311 = vector.shape_cast %310 : vector<1x1x64xf32> to vector<1x64xf32>
    %312 = arith.truncf %311 : vector<1x64xf32> to vector<1x64xbf16>
    %c13 = arith.constant 13 : index
    %c0_135 = arith.constant 0 : index
    %c0_136 = arith.constant 0 : index
    %313 = vector.load %arg8[%c13, %c0_135, %c0_136] : memref<16x64x256xbf16, #tpu.memory_space<vmem>>, vector<1x64x256xbf16>
    %314 = vector.shape_cast %313 : vector<1x64x256xbf16> to vector<64x256xbf16>
    %cst_137 = arith.constant dense<0.000000e+00> : vector<1x256xf32>
    %315 = tpu.matmul %312, %314, %cst_137 {dimension_numbers = #tpu.dot_dimension_numbers<[1], [0], [0], [1], [0, 0, 1, 1], [], []>} : vector<1x64xbf16>, vector<64x256xbf16>, vector<1x256xf32> -> vector<1x256xf32>
    %316 = arith.addf %309, %315 : vector<1x256xf32>
    %317 = vector.extract_strided_slice %217 {offsets = [0, 14, 0], sizes = [1, 1, 64], strides = [1, 1, 1]} : vector<1x16x64xf32> to vector<1x1x64xf32>
    %318 = vector.shape_cast %317 : vector<1x1x64xf32> to vector<1x64xf32>
    %319 = arith.truncf %318 : vector<1x64xf32> to vector<1x64xbf16>
    %c14 = arith.constant 14 : index
    %c0_138 = arith.constant 0 : index
    %c0_139 = arith.constant 0 : index
    %320 = vector.load %arg8[%c14, %c0_138, %c0_139] : memref<16x64x256xbf16, #tpu.memory_space<vmem>>, vector<1x64x256xbf16>
    %321 = vector.shape_cast %320 : vector<1x64x256xbf16> to vector<64x256xbf16>
    %cst_140 = arith.constant dense<0.000000e+00> : vector<1x256xf32>
    %322 = tpu.matmul %319, %321, %cst_140 {dimension_numbers = #tpu.dot_dimension_numbers<[1], [0], [0], [1], [0, 0, 1, 1], [], []>} : vector<1x64xbf16>, vector<64x256xbf16>, vector<1x256xf32> -> vector<1x256xf32>
    %323 = arith.addf %316, %322 : vector<1x256xf32>
    %324 = vector.extract_strided_slice %217 {offsets = [0, 15, 0], sizes = [1, 1, 64], strides = [1, 1, 1]} : vector<1x16x64xf32> to vector<1x1x64xf32>
    %325 = vector.shape_cast %324 : vector<1x1x64xf32> to vector<1x64xf32>
    %326 = arith.truncf %325 : vector<1x64xf32> to vector<1x64xbf16>
    %c15 = arith.constant 15 : index
    %c0_141 = arith.constant 0 : index
    %c0_142 = arith.constant 0 : index
    %327 = vector.load %arg8[%c15, %c0_141, %c0_142] : memref<16x64x256xbf16, #tpu.memory_space<vmem>>, vector<1x64x256xbf16>
    %328 = vector.shape_cast %327 : vector<1x64x256xbf16> to vector<64x256xbf16>
    %cst_143 = arith.constant dense<0.000000e+00> : vector<1x256xf32>
    %329 = tpu.matmul %326, %328, %cst_143 {dimension_numbers = #tpu.dot_dimension_numbers<[1], [0], [0], [1], [0, 0, 1, 1], [], []>} : vector<1x64xbf16>, vector<64x256xbf16>, vector<1x256xf32> -> vector<1x256xf32>
    %330 = arith.addf %323, %329 : vector<1x256xf32>
    %c0_144 = arith.constant 0 : index
    %c0_145 = arith.constant 0 : index
    %331 = vector.load %arg9[%c0_144, %c0_145] : memref<1x256xf32, #tpu.memory_space<vmem>>, vector<1x256xf32>
    %332 = arith.addf %330, %331 : vector<1x256xf32>
    %cst_146 = arith.constant 0.000000e+00 : f32
    %333 = vector.broadcast %cst_146 : f32 to vector<1x256xf32>
    %334 = arith.maximumf %332, %333 : vector<1x256xf32>
    %335 = arith.truncf %334 : vector<1x256xf32> to vector<1x256xbf16>
    %c0_147 = arith.constant 0 : index
    %c0_148 = arith.constant 0 : index
    %336 = vector.load %arg10[%c0_147, %c0_148] : memref<256x128xbf16, #tpu.memory_space<vmem>>, vector<256x128xbf16>
    %cst_149 = arith.constant dense<0.000000e+00> : vector<1x128xf32>
    %337 = tpu.matmul %335, %336, %cst_149 {dimension_numbers = #tpu.dot_dimension_numbers<[1], [0], [0], [1], [0, 0, 1, 1], [], []>} : vector<1x256xbf16>, vector<256x128xbf16>, vector<1x128xf32> -> vector<1x128xf32>
    %c0_150 = arith.constant 0 : index
    %c0_151 = arith.constant 0 : index
    %338 = vector.load %arg11[%c0_150, %c0_151] : memref<1x128xf32, #tpu.memory_space<vmem>>, vector<1x128xf32>
    %339 = arith.addf %337, %338 : vector<1x128xf32>
    %340 = vector.shape_cast %339 : vector<1x128xf32> to vector<1x1x128xf32>
    %c0_152 = arith.constant 0 : index
    %c0_153 = arith.constant 0 : index
    %c0_154 = arith.constant 0 : index
    %341 = vector.load %arg12[%c0_152, %c0_153, %c0_154] : memref<1x1x128xf32, #tpu.memory_space<vmem>>, vector<1x1x128xf32>
    tpu.vector_store %arg12[%c0_152, %c0_153, %c0_154], %340 {strides = array<i32>} : memref<1x1x128xf32, #tpu.memory_space<vmem>>, vector<1x1x128xf32>,
    return
  }
  func.func @transform_0(%arg0: i32) -> (i32, i32, i32, i32) {
    %c0_i32 = arith.constant 0 : i32
    %c0_i32_0 = arith.constant 0 : i32
    %c0_i32_1 = arith.constant 0 : i32
    %c0_i32_2 = arith.constant 0 : i32
    return %arg0, %c0_i32, %c0_i32_0, %c0_i32_1 : i32, i32, i32, i32
  }
  func.func @transform_1(%arg0: i32) -> (i32, i32) {
    %c0_i32 = arith.constant 0 : i32
    %c0_i32_0 = arith.constant 0 : i32
    %c0_i32_1 = arith.constant 0 : i32
    return %c0_i32, %c0_i32_0 : i32, i32
  }
  func.func @transform_2(%arg0: i32) -> (i32, i32) {
    %c0_i32 = arith.constant 0 : i32
    %c0_i32_0 = arith.constant 0 : i32
    %c0_i32_1 = arith.constant 0 : i32
    return %c0_i32, %c0_i32_0 : i32, i32
  }
  func.func @transform_3(%arg0: i32) -> (i32, i32, i32) {
    %c0_i32 = arith.constant 0 : i32
    %c0_i32_0 = arith.constant 0 : i32
    %c0_i32_1 = arith.constant 0 : i32
    %c0_i32_2 = arith.constant 0 : i32
    return %c0_i32, %c0_i32_0, %c0_i32_1 : i32, i32, i32
  }
  func.func @transform_4(%arg0: i32) -> (i32, i32) {
    %c0_i32 = arith.constant 0 : i32
    %c0_i32_0 = arith.constant 0 : i32
    %c0_i32_1 = arith.constant 0 : i32
    return %c0_i32, %c0_i32_0 : i32, i32
  }
  func.func @transform_5(%arg0: i32) -> (i32, i32, i32) {
    %c0_i32 = arith.constant 0 : i32
    %c0_i32_0 = arith.constant 0 : i32
    %c0_i32_1 = arith.constant 0 : i32
    %c0_i32_2 = arith.constant 0 : i32
    return %c0_i32, %c0_i32_0, %c0_i32_1 : i32, i32, i32
  }
  func.func @transform_6(%arg0: i32) -> (i32, i32) {
    %c0_i32 = arith.constant 0 : i32
    %c0_i32_0 = arith.constant 0 : i32
    %c0_i32_1 = arith.constant 0 : i32
    return %c0_i32, %c0_i32_0 : i32, i32
  }
  func.func @transform_7(%arg0: i32) -> (i32, i32, i32) {
    %c0_i32 = arith.constant 0 : i32
    %c0_i32_0 = arith.constant 0 : i32
    %c0_i32_1 = arith.constant 0 : i32
    %c0_i32_2 = arith.constant 0 : i32
    return %c0_i32, %c0_i32_0, %c0_i32_1 : i32, i32, i32
  }
  func.func @transform_8(%arg0: i32) -> (i32, i32) {
    %c0_i32 = arith.constant 0 : i32
    %c0_i32_0 = arith.constant 0 : i32
    %c0_i32_1 = arith.constant 0 : i32
    return %c0_i32, %c0_i32_0 : i32, i32
  }
  func.func @transform_9(%arg0: i32) -> (i32, i32) {
    %c0_i32 = arith.constant 0 : i32
    %c0_i32_0 = arith.constant 0 : i32
    %c0_i32_1 = arith.constant 0 : i32
    return %c0_i32, %c0_i32_0 : i32, i32
  }
  func.func @transform_10(%arg0: i32) -> (i32, i32) {
    %c0_i32 = arith.constant 0 : i32
    %c0_i32_0 = arith.constant 0 : i32
    %c0_i32_1 = arith.constant 0 : i32
    return %c0_i32, %c0_i32_0 : i32, i32
  }
  func.func @transform_11(%arg0: i32) -> (i32, i32, i32) {
    %c0_i32 = arith.constant 0 : i32
    %c0_i32_0 = arith.constant 0 : i32
    %c0_i32_1 = arith.constant 0 : i32
    return %arg0, %c0_i32, %c0_i32_0 : i32, i32, i32
  }
}

</mosaic_0001>

<llo_original>
// kernel: forward.1
$region0: #{forward.1}
  #allocation0 [shape = 'u32[]', space=smem, size = 0x4, offset = 0x4, fixed_abs, tag = 'smem constant byte address 0x4 - core index']
  #allocation1 [shape = 'u32[72,128]{1,0:T(1,128)}', space=vmem, size = 0x9000, scoped, tag = 'internal scratch']
  %s0 = inlined_call_operand.vmem [shape: f32[2,32,32,1], index: 0, kind: input, shape index: {}]
  %s1 = inlined_call_operand.vmem [shape: bf16[9,16], index: 1, kind: input, shape index: {}]
  %s2 = inlined_call_operand.vmem [shape: f32[1,16], index: 2, kind: input, shape index: {}]
  %s3 = inlined_call_operand.vmem [shape: bf16[9,16,32], index: 3, kind: input, shape index: {}]
  %s4 = inlined_call_operand.vmem [shape: f32[1,32], index: 4, kind: input, shape index: {}]
  %s5 = inlined_call_operand.vmem [shape: bf16[9,32,64], index: 5, kind: input, shape index: {}]
  %s6 = inlined_call_operand.vmem [shape: f32[1,64], index: 6, kind: input, shape index: {}]
  %s7 = inlined_call_operand.vmem [shape: bf16[16,64,256], index: 7, kind: input, shape index: {}]
  %s8 = inlined_call_operand.vmem [shape: f32[1,256], index: 8, kind: input, shape index: {}]
  %s9 = inlined_call_operand.vmem [shape: bf16[256,128], index: 9, kind: input, shape index: {}]
  %s10 = inlined_call_operand.vmem [shape: f32[1,128], index: 10, kind: input, shape index: {}]
  %s11 = inlined_call_operand.hbm [shape: f32[2,1,128], index: 11, kind: output, shape index: {}]
  %s12 = sld [smem:[#allocation0]]
  $region77: #{forward.1} parent=0
    _
  %s14 = ssub.s32 1, %s12
  %s15 = scalar_select 0, %s14, %s12
  $region1: #{forward.1} parent=0
    #allocation2 [shape = 'u8[1024]{0}', space=vmem, size = 0x400, scoped, tag = 'output window, operand 0']
    #allocation3 [shape = 's32[2]{0}', space=sflag, size = 0x8, scoped, tag = 'scoped memory for forward.1']
    %16 = vsyncpa [#allocation3], 0
    %s17 = scalar_lea.sflag [#allocation3], 1
    %18 = vsyncpa %s17, 0
    loop: start=0, step=1, limit=4
    $region2: #{forward.1} parent=1 // loop_pre_header
      _
    $region3: #{forward.1} parent=1 // loop_header
      %s20 = sphi 0, %s24
      %p21 = scmp.ge.s32.totalorder %s20, 4
      %s30 = sphi 0, %s32
      %s33 = sphi 0, %s30
      %s34 = sphi 0, %s33
      %s50 = sphi 0, %s34
      %s54 = sphi 0, %s54
      %s56 = sphi 0, %s54
      %s57 = sphi 0, %s56
      %s71 = sphi 0, %s57
      %s75 = sphi 0, %s75
      %s77 = sphi 0, %s75
      %s78 = sphi 0, %s77
      %s92 = sphi 0, %s78
      %s96 = sphi 0, %s96
      %s98 = sphi 0, %s96
      %s99 = sphi 0, %s98
      %s113 = sphi 0, %s99
      %s117 = sphi 0, %s117
      %s119 = sphi 0, %s117
      %s120 = sphi 0, %s119
      %s134 = sphi 0, %s120
      %s138 = sphi 0, %s138
      %s140 = sphi 0, %s138
      %s141 = sphi 0, %s140
      %s155 = sphi 0, %s141
      %s159 = sphi 0, %s159
      %s161 = sphi 0, %s159
      %s162 = sphi 0, %s161
      %s176 = sphi 0, %s162
      %s180 = sphi 0, %s180
      %s182 = sphi 0, %s180
      %s183 = sphi 0, %s182
      %s197 = sphi 0, %s183
      %s201 = sphi 0, %s201
      %s203 = sphi 0, %s201
      %s204 = sphi 0, %s203
      %s218 = sphi 0, %s204
      %s222 = sphi 0, %s222
      %s224 = sphi 0, %s222
      %s225 = sphi 0, %s224
      %s239 = sphi 0, %s225
      %s243 = sphi 0, %s243
      %s245 = sphi 0, %s243
      %s246 = sphi 0, %s245
      %s260 = sphi 0, %s246
      %s266 = sphi 0, %s268
      %s269 = sphi 0, %s266
      %s270 = sphi 0, %s269
      %s286 = sphi 0, %s270
    $region4: #{forward.1} parent=1 // loop_header_branch
      %23 = sbr.rel (%p21) target = $region8
    $region5: #{forward.1} parent=1 // loop_body
      %s25 = ssub.s32 %s20, 1
      %s26 = ssub.s32 %s20, 2
      %s27 = sadd.s32 %s20, 1
      %s28 = ssub.s32 %s20, %s27
      %p29 = scmp.eq.s32.totalorder %s28, 0
      %s31 = sadd.s32 %s30, 1
      %s32 = scalar_select %p29, %s30, %s31
      %p35 = pneg %p29
      %p36 = scmp.eq.s32.totalorder %s20, 1
      %p37 = por %p35, %p36
      %p38 = scmp.ne.s32.totalorder %s30, %s33
      %p39 = scmp.eq.s32.totalorder %s20, 0
      %p40 = por %p38, %p39
      %p41 = scmp.ne.s32.totalorder %s30, %s33
      %p42 = scmp.eq.s32.totalorder %s25, 1
      %p43 = por %p41, %p42
      %p44 = scmp.ne.s32.totalorder %s33, %s34
      %p45 = scmp.eq.s32.totalorder %s25, 0
      %p46 = por %p44, %p45
      %p47 = scmp.ne.s32.totalorder %s33, %s34
      %p48 = scmp.eq.s32.totalorder %s26, 1
      %p49 = por %p47, %p48
      %p51 = scmp.ne.s32.totalorder %s34, %s50
      %p52 = scmp.eq.s32.totalorder %s26, 0
      %p53 = por %p51, %p52
      %s55 = sadd.s32 %s54, 1
      %p58 = scmp.eq.s32.totalorder %s20, 1
      %p59 = scmp.ne.s32.totalorder %s54, %s56
      %p60 = scmp.eq.s32.totalorder %s20, 0
      %p61 = por %p59, %p60
      %p62 = scmp.ne.s32.totalorder %s54, %s56
      %p63 = scmp.eq.s32.totalorder %s25, 1
      %p64 = por %p62, %p63
      %p65 = scmp.ne.s32.totalorder %s56, %s57
      %p66 = scmp.eq.s32.totalorder %s25, 0
      %p67 = por %p65, %p66
      %p68 = scmp.ne.s32.totalorder %s56, %s57
      %p69 = scmp.eq.s32.totalorder %s26, 1
      %p70 = por %p68, %p69
      %p72 = scmp.ne.s32.totalorder %s57, %s71
      %p73 = scmp.eq.s32.totalorder %s26, 0
      %p74 = por %p72, %p73
      %s76 = sadd.s32 %s75, 1
      %p79 = scmp.eq.s32.totalorder %s20, 1
      %p80 = scmp.ne.s32.totalorder %s75, %s77
      %p81 = scmp.eq.s32.totalorder %s20, 0
      %p82 = por %p80, %p81
      %p83 = scmp.ne.s32.totalorder %s75, %s77
      %p84 = scmp.eq.s32.totalorder %s25, 1
      %p85 = por %p83, %p84
      %p86 = scmp.ne.s32.totalorder %s77, %s78
      %p87 = scmp.eq.s32.totalorder %s25, 0
      %p88 = por %p86, %p87
      %p89 = scmp.ne.s32.totalorder %s77, %s78
      %p90 = scmp.eq.s32.totalorder %s26, 1
      %p91 = por %p89, %p90
      %p93 = scmp.ne.s32.totalorder %s78, %s92
      %p94 = scmp.eq.s32.totalorder %s26, 0
      %p95 = por %p93, %p94
      %s97 = sadd.s32 %s96, 1
      %p100 = scmp.eq.s32.totalorder %s20, 1
      %p101 = scmp.ne.s32.totalorder %s96, %s98
      %p102 = scmp.eq.s32.totalorder %s20, 0
      %p103 = por %p101, %p102
      %p104 = scmp.ne.s32.totalorder %s96, %s98
      %p105 = scmp.eq.s32.totalorder %s25, 1
      %p106 = por %p104, %p105
      %p107 = scmp.ne.s32.totalorder %s98, %s99
      %p108 = scmp.eq.s32.totalorder %s25, 0
      %p109 = por %p107, %p108
      %p110 = scmp.ne.s32.totalorder %s98, %s99
      %p111 = scmp.eq.s32.totalorder %s26, 1
      %p112 = por %p110, %p111
      %p114 = scmp.ne.s32.totalorder %s99, %s113
      %p115 = scmp.eq.s32.totalorder %s26, 0
      %p116 = por %p114, %p115
      %s118 = sadd.s32 %s117, 1
      %p121 = scmp.eq.s32.totalorder %s20, 1
      %p122 = scmp.ne.s32.totalorder %s117, %s119
      %p123 = scmp.eq.s32.totalorder %s20, 0
      %p124 = por %p122, %p123
      %p125 = scmp.ne.s32.totalorder %s117, %s119
      %p126 = scmp.eq.s32.totalorder %s25, 1
      %p127 = por %p125, %p126
      %p128 = scmp.ne.s32.totalorder %s119, %s120
      %p129 = scmp.eq.s32.totalorder %s25, 0
      %p130 = por %p128, %p129
      %p131 = scmp.ne.s32.totalorder %s119, %s120
      %p132 = scmp.eq.s32.totalorder %s26, 1
      %p133 = por %p131, %p132
      %p135 = scmp.ne.s32.totalorder %s120, %s134
      %p136 = scmp.eq.s32.totalorder %s26, 0
      %p137 = por %p135, %p136
      %s139 = sadd.s32 %s138, 1
      %p142 = scmp.eq.s32.totalorder %s20, 1
      %p143 = scmp.ne.s32.totalorder %s138, %s140
      %p144 = scmp.eq.s32.totalorder %s20, 0
      %p145 = por %p143, %p144
      %p146 = scmp.ne.s32.totalorder %s138, %s140
      %p147 = scmp.eq.s32.totalorder %s25, 1
      %p148 = por %p146, %p147
      %p149 = scmp.ne.s32.totalorder %s140, %s141
      %p150 = scmp.eq.s32.totalorder %s25, 0
      %p151 = por %p149, %p150
      %p152 = scmp.ne.s32.totalorder %s140, %s141
      %p153 = scmp.eq.s32.totalorder %s26, 1
      %p154 = por %p152, %p153
      %p156 = scmp.ne.s32.totalorder %s141, %s155
      %p157 = scmp.eq.s32.totalorder %s26, 0
      %p158 = por %p156, %p157
      %s160 = sadd.s32 %s159, 1
      %p163 = scmp.eq.s32.totalorder %s20, 1
      %p164 = scmp.ne.s32.totalorder %s159, %s161
      %p165 = scmp.eq.s32.totalorder %s20, 0
      %p166 = por %p164, %p165
      %p167 = scmp.ne.s32.totalorder %s159, %s161
      %p168 = scmp.eq.s32.totalorder %s25, 1
      %p169 = por %p167, %p168
      %p170 = scmp.ne.s32.totalorder %s161, %s162
      %p171 = scmp.eq.s32.totalorder %s25, 0
      %p172 = por %p170, %p171
      %p173 = scmp.ne.s32.totalorder %s161, %s162
      %p174 = scmp.eq.s32.totalorder %s26, 1
      %p175 = por %p173, %p174
      %p177 = scmp.ne.s32.totalorder %s162, %s176
      %p178 = scmp.eq.s32.totalorder %s26, 0
      %p179 = por %p177, %p178
      %s181 = sadd.s32 %s180, 1
      %p184 = scmp.eq.s32.totalorder %s20, 1
      %p185 = scmp.ne.s32.totalorder %s180, %s182
      %p186 = scmp.eq.s32.totalorder %s20, 0
      %p187 = por %p185, %p186
      %p188 = scmp.ne.s32.totalorder %s180, %s182
      %p189 = scmp.eq.s32.totalorder %s25, 1
      %p190 = por %p188, %p189
      %p191 = scmp.ne.s32.totalorder %s182, %s183
      %p192 = scmp.eq.s32.totalorder %s25, 0
      %p193 = por %p191, %p192
      %p194 = scmp.ne.s32.totalorder %s182, %s183
      %p195 = scmp.eq.s32.totalorder %s26, 1
      %p196 = por %p194, %p195
      %p198 = scmp.ne.s32.totalorder %s183, %s197
      %p199 = scmp.eq.s32.totalorder %s26, 0
      %p200 = por %p198, %p199
      %s202 = sadd.s32 %s201, 1
      %p205 = scmp.eq.s32.totalorder %s20, 1
      %p206 = scmp.ne.s32.totalorder %s201, %s203
      %p207 = scmp.eq.s32.totalorder %s20, 0
      %p208 = por %p206, %p207
      %p209 = scmp.ne.s32.totalorder %s201, %s203
      %p210 = scmp.eq.s32.totalorder %s25, 1
      %p211 = por %p209, %p210
      %p212 = scmp.ne.s32.totalorder %s203, %s204
      %p213 = scmp.eq.s32.totalorder %s25, 0
      %p214 = por %p212, %p213
      %p215 = scmp.ne.s32.totalorder %s203, %s204
      %p216 = scmp.eq.s32.totalorder %s26, 1
      %p217 = por %p215, %p216
      %p219 = scmp.ne.s32.totalorder %s204, %s218
      %p220 = scmp.eq.s32.totalorder %s26, 0
      %p221 = por %p219, %p220
      %s223 = sadd.s32 %s222, 1
      %p226 = scmp.eq.s32.totalorder %s20, 1
      %p227 = scmp.ne.s32.totalorder %s222, %s224
      %p228 = scmp.eq.s32.totalorder %s20, 0
      %p229 = por %p227, %p228
      %p230 = scmp.ne.s32.totalorder %s222, %s224
      %p231 = scmp.eq.s32.totalorder %s25, 1
      %p232 = por %p230, %p231
      %p233 = scmp.ne.s32.totalorder %s224, %s225
      %p234 = scmp.eq.s32.totalorder %s25, 0
      %p235 = por %p233, %p234
      %p236 = scmp.ne.s32.totalorder %s224, %s225
      %p237 = scmp.eq.s32.totalorder %s26, 1
      %p238 = por %p236, %p237
      %p240 = scmp.ne.s32.totalorder %s225, %s239
      %p241 = scmp.eq.s32.totalorder %s26, 0
      %p242 = por %p240, %p241
      %s244 = sadd.s32 %s243, 1
      %p247 = scmp.eq.s32.totalorder %s20, 1
      %p248 = scmp.ne.s32.totalorder %s243, %s245
      %p249 = scmp.eq.s32.totalorder %s20, 0
      %p250 = por %p248, %p249
      %p251 = scmp.ne.s32.totalorder %s243, %s245
      %p252 = scmp.eq.s32.totalorder %s25, 1
      %p253 = por %p251, %p252
      %p254 = scmp.ne.s32.totalorder %s245, %s246
      %p255 = scmp.eq.s32.totalorder %s25, 0
      %p256 = por %p254, %p255
      %p257 = scmp.ne.s32.totalorder %s245, %s246
      %p258 = scmp.eq.s32.totalorder %s26, 1
      %p259 = por %p257, %p258
      %p261 = scmp.ne.s32.totalorder %s246, %s260
      %p262 = scmp.eq.s32.totalorder %s26, 0
      %p263 = por %p261, %p262
      %s264 = ssub.s32 %s20, %s27
      %p265 = scmp.eq.s32.totalorder %s264, 0
      %s267 = sadd.s32 %s266, 1
      %s268 = scalar_select %p265, %s266, %s267
      %p271 = pneg %p265
      %p272 = scmp.eq.s32.totalorder %s20, 1
      %p273 = por %p271, %p272
      %p274 = scmp.ne.s32.totalorder %s266, %s269
      %p275 = scmp.eq.s32.totalorder %s20, 0
      %p276 = por %p274, %p275
      %p277 = scmp.ne.s32.totalorder %s266, %s269
      %p278 = scmp.eq.s32.totalorder %s25, 1
      %p279 = por %p277, %p278
      %p280 = scmp.ne.s32.totalorder %s269, %s270
      %p281 = scmp.eq.s32.totalorder %s25, 0
      %p282 = por %p280, %p281
      %p283 = scmp.ne.s32.totalorder %s269, %s270
      %p284 = scmp.eq.s32.totalorder %s26, 1
      %p285 = por %p283, %p284
      %p287 = scmp.ne.s32.totalorder %s270, %s286
      %p288 = scmp.eq.s32.totalorder %s26, 0
      %p289 = por %p287, %p288
      %p290 = scmp.le.s32.totalorder 1, %s20
      %p291 = scmp.lt.s32.totalorder %s20, 3
      %p292 = pnand %p290, %p291
      %p293 = pneg %p292
      // Predicated region
      $region9: #{forward.1} parent=5 // pred_check
        _
      $region10: #{forward.1} parent=5 // pred_check_branch
        %295 = sbr.rel (%p292) target = $region12
      $region11: #{forward.1} parent=5 // pred_region
        %s296 = ssub.s32 %s20, 1
        // Predicated region
        $region13: #{forward.1} parent=11 // pred_check
          %p297 = pneg %p67
        $region14: #{forward.1} parent=11 // pred_check_branch
          %299 = sbr.rel (%p297) target = $region16
        $region15: #{forward.1} parent=11 // pred_region
          _
        $region16: #{forward.1} parent=11 // pred_fallthru
          _
        // Predicated region
        $region17: #{forward.1} parent=11 // pred_check
          %p300 = pneg %p88
        $region18: #{forward.1} parent=11 // pred_check_branch
          %302 = sbr.rel (%p300) target = $region20
        $region19: #{forward.1} parent=11 // pred_region
          _
        $region20: #{forward.1} parent=11 // pred_fallthru
          _
        // Predicated region
        $region21: #{forward.1} parent=11 // pred_check
          %p303 = pneg %p109
        $region22: #{forward.1} parent=11 // pred_check_branch
          %305 = sbr.rel (%p303) target = $region24
        $region23: #{forward.1} parent=11 // pred_region
          _
        $region24: #{forward.1} parent=11 // pred_fallthru
          _
        // Predicated region
        $region25: #{forward.1} parent=11 // pred_check
          %p306 = pneg %p130
        $region26: #{forward.1} parent=11 // pred_check_branch
          %308 = sbr.rel (%p306) target = $region28
        $region27: #{forward.1} parent=11 // pred_region
          _
        $region28: #{forward.1} parent=11 // pred_fallthru
          _
        // Predicated region
        $region29: #{forward.1} parent=11 // pred_check
          %p309 = pneg %p151
        $region30: #{forward.1} parent=11 // pred_check_branch
          %311 = sbr.rel (%p309) target = $region32
        $region31: #{forward.1} parent=11 // pred_region
          _
        $region32: #{forward.1} parent=11 // pred_fallthru
          _
        // Predicated region
        $region33: #{forward.1} parent=11 // pred_check
          %p312 = pneg %p172
        $region34: #{forward.1} parent=11 // pred_check_branch
          %314 = sbr.rel (%p312) target = $region36
        $region35: #{forward.1} parent=11 // pred_region
          _
        $region36: #{forward.1} parent=11 // pred_fallthru
          _
        // Predicated region
        $region37: #{forward.1} parent=11 // pred_check
          %p315 = pneg %p193
        $region38: #{forward.1} parent=11 // pred_check_branch
          %317 = sbr.rel (%p315) target = $region40
        $region39: #{forward.1} parent=11 // pred_region
          _
        $region40: #{forward.1} parent=11 // pred_fallthru
          _
        // Predicated region
        $region41: #{forward.1} parent=11 // pred_check
          %p318 = pneg %p214
        $region42: #{forward.1} parent=11 // pred_check_branch
          %320 = sbr.rel (%p318) target = $region44
        $region43: #{forward.1} parent=11 // pred_region
          _
        $region44: #{forward.1} parent=11 // pred_fallthru
          _
        // Predicated region
        $region45: #{forward.1} parent=11 // pred_check
          %p321 = pneg %p235
        $region46: #{forward.1} parent=11 // pred_check_branch
          %323 = sbr.rel (%p321) target = $region48
        $region47: #{forward.1} parent=11 // pred_region
          _
        $region48: #{forward.1} parent=11 // pred_fallthru
          _
        // Predicated region
        $region49: #{forward.1} parent=11 // pred_check
          %p324 = pneg %p256
        $region50: #{forward.1} parent=11 // pred_check_branch
          %326 = sbr.rel (%p324) target = $region52
        $region51: #{forward.1} parent=11 // pred_region
          _
        $region52: #{forward.1} parent=11 // pred_fallthru
          _
      $region12: #{forward.1} parent=5 // pred_fallthru
        _
      %p327 = scmp.lt.s32.totalorder %s20, 2
      // Predicated region
      $region53: #{forward.1} parent=5 // pred_check
        %p328 = pneg %p327
      $region54: #{forward.1} parent=5 // pred_check_branch
        %330 = sbr.rel (%p328) target = $region56
      $region55: #{forward.1} parent=5 // pred_region
        // Predicated region
        $region57: #{forward.1} parent=55 // pred_check
          %p331 = pneg %p40
        $region58: #{forward.1} parent=55 // pred_check_branch
          %333 = sbr.rel (%p331) target = $region60
        $region59: #{forward.1} parent=55 // pred_region
          %p334 = scmp.lt.s32.totalorder %s20, 1
          %s335 = scalar_select %p334, %s20, 1
          %s336 = smul.addr %s335, 128
          %s337 = smul.addr %s336, 8
          %s338 = scalar_lea.vmem %s0, %s337
        $region60: #{forward.1} parent=55 // pred_fallthru
          _
      $region56: #{forward.1} parent=5 // pred_fallthru
        _
      %p339 = scmp.le.s32.totalorder 1, %s20
      %p340 = scmp.lt.s32.totalorder %s20, 3
      %p341 = pnand %p339, %p340
      %p342 = pneg %p341
      // Predicated region
      $region61: #{forward.1} parent=5 // pred_check
        _
      $region62: #{forward.1} parent=5 // pred_check_branch
        %344 = sbr.rel (%p341) target = $region64
      $region63: #{forward.1} parent=5 // pred_region
        %s345 = ssub.s32 %s20, 1
        %p346 = scmp.lt.s32.totalorder %s25, 1
        %s347 = scalar_select %p346, %s25, 1
        %s348 = smul.addr %s347, 128
        %s349 = smul.addr %s348, 8
        %s350 = scalar_lea.vmem %s0, %s349
        %p351 = pneg %p46
        %p352 = pneg %p43
        %p353 = pneg %p67
        %p354 = pneg %p64
        %p355 = pneg %p88
        %p356 = pneg %p85
        %p357 = pneg %p109
        %p358 = pneg %p106
        %p359 = pneg %p130
        %p360 = pneg %p127
        %p361 = pneg %p151
        %p362 = pneg %p148
        %p363 = pneg %p172
        %p364 = pneg %p169
        %p365 = pneg %p193
        %p366 = pneg %p190
        %p367 = pneg %p214
        %p368 = pneg %p211
        %p369 = pneg %p235
        %p370 = pneg %p232
        %p371 = pneg %p256
        %p372 = pneg %p253
        %p373 = pneg %p282
        %p374 = pneg %p279
        %s375 = sand.u32 %s269, 1
        %s376 = scalar_lea.sflag [#allocation3], %s375
        %s377 = sand.u32 %s269, 1
        %s378 = scalar_lea.vmem [#allocation2], %s377
        %p379 = scmp.lt.s32.totalorder %s25, 1
        %s380 = scalar_select %p379, %s25, 1
        %s381 = smul.addr %s380, 128
        %s382 = smul.addr %s381, 8
        %s383 = scalar_lea.vmem %s0, %s382
        %v385 = vld [vmem:[%s383] sm:$0xff]
        %v386 = vld [vmem:[%s383 + $0x8] sm:$0xff]
        %v387 = vld [vmem:[%s383 + $0x10] sm:$0xff]
        %v388 = vld [vmem:[%s383 + $0x18] sm:$0xff]
        %v389 = vld [vmem:[%s383 + $0x20] sm:$0xff]
        %v390 = vld [vmem:[%s383 + $0x28] sm:$0xff]
        %v391 = vld [vmem:[%s383 + $0x30] sm:$0xff]
        %v392 = vld [vmem:[%s383 + $0x38] sm:$0xff]
        %v393 = vld [vmem:[%s383 + $0x40] sm:$0xff]
        %v394 = vld [vmem:[%s383 + $0x48] sm:$0xff]
        %v395 = vld [vmem:[%s383 + $0x50] sm:$0xff]
        %v396 = vld [vmem:[%s383 + $0x58] sm:$0xff]
        %v397 = vld [vmem:[%s383 + $0x60] sm:$0xff]
        %v398 = vld [vmem:[%s383 + $0x68] sm:$0xff]
        %v399 = vld [vmem:[%s383 + $0x70] sm:$0xff]
        %v400 = vld [vmem:[%s383 + $0x78] sm:$0xff]
        %v401 = vld [vmem:[%s383 + $0x80] sm:$0xff]
        %v402 = vld [vmem:[%s383 + $0x88] sm:$0xff]
        %v403 = vld [vmem:[%s383 + $0x90] sm:$0xff]
        %v404 = vld [vmem:[%s383 + $0x98] sm:$0xff]
        %v405 = vld [vmem:[%s383 + $0xa0] sm:$0xff]
        %v406 = vld [vmem:[%s383 + $0xa8] sm:$0xff]
        %v407 = vld [vmem:[%s383 + $0xb0] sm:$0xff]
        %v408 = vld [vmem:[%s383 + $0xb8] sm:$0xff]
        %v409 = vld [vmem:[%s383 + $0xc0] sm:$0xff]
        %v410 = vld [vmem:[%s383 + $0xc8] sm:$0xff]
        %v411 = vld [vmem:[%s383 + $0xd0] sm:$0xff]
        %v412 = vld [vmem:[%s383 + $0xd8] sm:$0xff]
        %v413 = vld [vmem:[%s383 + $0xe0] sm:$0xff]
        %v414 = vld [vmem:[%s383 + $0xe8] sm:$0xff]
        %v415 = vld [vmem:[%s383 + $0xf0] sm:$0xff]
        %v416 = vld [vmem:[%s383 + $0xf8] sm:$0xff]
        %v417 = vld [vmem:[%s383 + $0x100] sm:$0xff]
        %v418 = vld [vmem:[%s383 + $0x108] sm:$0xff]
        %v419 = vld [vmem:[%s383 + $0x110] sm:$0xff]
        %v420 = vld [vmem:[%s383 + $0x118] sm:$0xff]
        %v421 = vld [vmem:[%s383 + $0x120] sm:$0xff]
        %v422 = vld [vmem:[%s383 + $0x128] sm:$0xff]
        %v423 = vld [vmem:[%s383 + $0x130] sm:$0xff]
        %v424 = vld [vmem:[%s383 + $0x138] sm:$0xff]
        %v425 = vld [vmem:[%s383 + $0x140] sm:$0xff]
        %v426 = vld [vmem:[%s383 + $0x148] sm:$0xff]
        %v427 = vld [vmem:[%s383 + $0x150] sm:$0xff]
        %v428 = vld [vmem:[%s383 + $0x158] sm:$0xff]
        %v429 = vld [vmem:[%s383 + $0x160] sm:$0xff]
        %v430 = vld [vmem:[%s383 + $0x168] sm:$0xff]
        %v431 = vld [vmem:[%s383 + $0x170] sm:$0xff]
        %v432 = vld [vmem:[%s383 + $0x178] sm:$0xff]
        %v433 = vld [vmem:[%s383 + $0x180] sm:$0xff]
        %v434 = vld [vmem:[%s383 + $0x188] sm:$0xff]
        %v435 = vld [vmem:[%s383 + $0x190] sm:$0xff]
        %v436 = vld [vmem:[%s383 + $0x198] sm:$0xff]
        %v437 = vld [vmem:[%s383 + $0x1a0] sm:$0xff]
        %v438 = vld [vmem:[%s383 + $0x1a8] sm:$0xff]
        %v439 = vld [vmem:[%s383 + $0x1b0] sm:$0xff]
        %v440 = vld [vmem:[%s383 + $0x1b8] sm:$0xff]
        %v441 = vld [vmem:[%s383 + $0x1c0] sm:$0xff]
        %v442 = vld [vmem:[%s383 + $0x1c8] sm:$0xff]
        %v443 = vld [vmem:[%s383 + $0x1d0] sm:$0xff]
        %v444 = vld [vmem:[%s383 + $0x1d8] sm:$0xff]
        %v445 = vld [vmem:[%s383 + $0x1e0] sm:$0xff]
        %v446 = vld [vmem:[%s383 + $0x1e8] sm:$0xff]
        %v447 = vld [vmem:[%s383 + $0x1f0] sm:$0xff]
        %v448 = vld [vmem:[%s383 + $0x1f8] sm:$0xff]
        %v449 = vld [vmem:[%s383 + $0x200] sm:$0xff]
        %v450 = vld [vmem:[%s383 + $0x208] sm:$0xff]
        %v451 = vld [vmem:[%s383 + $0x210] sm:$0xff]
        %v452 = vld [vmem:[%s383 + $0x218] sm:$0xff]
        %v453 = vld [vmem:[%s383 + $0x220] sm:$0xff]
        %v454 = vld [vmem:[%s383 + $0x228] sm:$0xff]
        %v455 = vld [vmem:[%s383 + $0x230] sm:$0xff]
        %v456 = vld [vmem:[%s383 + $0x238] sm:$0xff]
        %v457 = vld [vmem:[%s383 + $0x240] sm:$0xff]
        %v458 = vld [vmem:[%s383 + $0x248] sm:$0xff]
        %v459 = vld [vmem:[%s383 + $0x250] sm:$0xff]
        %v460 = vld [vmem:[%s383 + $0x258] sm:$0xff]
        %v461 = vld [vmem:[%s383 + $0x260] sm:$0xff]
        %v462 = vld [vmem:[%s383 + $0x268] sm:$0xff]
        %v463 = vld [vmem:[%s383 + $0x270] sm:$0xff]
        %v464 = vld [vmem:[%s383 + $0x278] sm:$0xff]
        %v465 = vld [vmem:[%s383 + $0x280] sm:$0xff]
        %v466 = vld [vmem:[%s383 + $0x288] sm:$0xff]
        %v467 = vld [vmem:[%s383 + $0x290] sm:$0xff]
        %v468 = vld [vmem:[%s383 + $0x298] sm:$0xff]
        %v469 = vld [vmem:[%s383 + $0x2a0] sm:$0xff]
        %v470 = vld [vmem:[%s383 + $0x2a8] sm:$0xff]
        %v471 = vld [vmem:[%s383 + $0x2b0] sm:$0xff]
        %v472 = vld [vmem:[%s383 + $0x2b8] sm:$0xff]
        %v473 = vld [vmem:[%s383 + $0x2c0] sm:$0xff]
        %v474 = vld [vmem:[%s383 + $0x2c8] sm:$0xff]
        %v475 = vld [vmem:[%s383 + $0x2d0] sm:$0xff]
        %v476 = vld [vmem:[%s383 + $0x2d8] sm:$0xff]
        %v477 = vld [vmem:[%s383 + $0x2e0] sm:$0xff]
        %v478 = vld [vmem:[%s383 + $0x2e8] sm:$0xff]
        %v479 = vld [vmem:[%s383 + $0x2f0] sm:$0xff]
        %v480 = vld [vmem:[%s383 + $0x2f8] sm:$0xff]
        %v481 = vld [vmem:[%s383 + $0x300] sm:$0xff]
        %v482 = vld [vmem:[%s383 + $0x308] sm:$0xff]
        %v483 = vld [vmem:[%s383 + $0x310] sm:$0xff]
        %v484 = vld [vmem:[%s383 + $0x318] sm:$0xff]
        %v485 = vld [vmem:[%s383 + $0x320] sm:$0xff]
        %v486 = vld [vmem:[%s383 + $0x328] sm:$0xff]
        %v487 = vld [vmem:[%s383 + $0x330] sm:$0xff]
        %v488 = vld [vmem:[%s383 + $0x338] sm:$0xff]
        %v489 = vld [vmem:[%s383 + $0x340] sm:$0xff]
        %v490 = vld [vmem:[%s383 + $0x348] sm:$0xff]
        %v491 = vld [vmem:[%s383 + $0x350] sm:$0xff]
        %v492 = vld [vmem:[%s383 + $0x358] sm:$0xff]
        %v493 = vld [vmem:[%s383 + $0x360] sm:$0xff]
        %v494 = vld [vmem:[%s383 + $0x368] sm:$0xff]
        %v495 = vld [vmem:[%s383 + $0x370] sm:$0xff]
        %v496 = vld [vmem:[%s383 + $0x378] sm:$0xff]
        %v497 = vld [vmem:[%s383 + $0x380] sm:$0xff]
        %v498 = vld [vmem:[%s383 + $0x388] sm:$0xff]
        %v499 = vld [vmem:[%s383 + $0x390] sm:$0xff]
        %v500 = vld [vmem:[%s383 + $0x398] sm:$0xff]
        %v501 = vld [vmem:[%s383 + $0x3a0] sm:$0xff]
        %v502 = vld [vmem:[%s383 + $0x3a8] sm:$0xff]
        %v503 = vld [vmem:[%s383 + $0x3b0] sm:$0xff]
        %v504 = vld [vmem:[%s383 + $0x3b8] sm:$0xff]
        %v505 = vld [vmem:[%s383 + $0x3c0] sm:$0xff]
        %v506 = vld [vmem:[%s383 + $0x3c8] sm:$0xff]
        %v507 = vld [vmem:[%s383 + $0x3d0] sm:$0xff]
        %v508 = vld [vmem:[%s383 + $0x3d8] sm:$0xff]
        %v509 = vld [vmem:[%s383 + $0x3e0] sm:$0xff]
        %v510 = vld [vmem:[%s383 + $0x3e8] sm:$0xff]
        %v511 = vld [vmem:[%s383 + $0x3f0] sm:$0xff]
        %v512 = vld [vmem:[%s383 + $0x3f8] sm:$0xff]
        %vm641 = vcmask 1040384
        %v642 = vrot.slane %v385, 7
        %v643 = vrot.slane %v386, 7
        %v644 = vsel %vm641, %v642, %v643
        %v645 = vrot.slane %v387, 7
        %v646 = vsel %vm641, %v643, %v645
        %v647 = vrot.slane %v388, 7
        %v648 = vsel %vm641, %v645, %v647
        %v649 = vrot.slane %v389, 7
        %v650 = vrot.slane %v390, 7
        %v651 = vsel %vm641, %v649, %v650
        %v652 = vrot.slane %v391, 7
        %v653 = vsel %vm641, %v650, %v652
        %v654 = vrot.slane %v392, 7
        %v655 = vsel %vm641, %v652, %v654
        %v656 = vrot.slane %v393, 7
        %v657 = vrot.slane %v394, 7
        %v658 = vsel %vm641, %v656, %v657
        %v659 = vrot.slane %v395, 7
        %v660 = vsel %vm641, %v657, %v659
        %v661 = vrot.slane %v396, 7
        %v662 = vsel %vm641, %v659, %v661
        %v663 = vrot.slane %v397, 7
        %v664 = vrot.slane %v398, 7
        %v665 = vsel %vm641, %v663, %v664
        %v666 = vrot.slane %v399, 7
        %v667 = vsel %vm641, %v664, %v666
        %v668 = vrot.slane %v400, 7
        %v669 = vsel %vm641, %v666, %v668
        %v670 = vrot.slane %v401, 7
        %v671 = vrot.slane %v402, 7
        %v672 = vsel %vm641, %v670, %v671
        %v673 = vrot.slane %v403, 7
        %v674 = vsel %vm641, %v671, %v673
        %v675 = vrot.slane %v404, 7
        %v676 = vsel %vm641, %v673, %v675
        %v677 = vrot.slane %v405, 7
        %v678 = vrot.slane %v406, 7
        %v679 = vsel %vm641, %v677, %v678
        %v680 = vrot.slane %v407, 7
        %v681 = vsel %vm641, %v678, %v680
        %v682 = vrot.slane %v408, 7
        %v683 = vsel %vm641, %v680, %v682
        %v684 = vrot.slane %v409, 7
        %v685 = vrot.slane %v410, 7
        %v686 = vsel %vm641, %v684, %v685
        %v687 = vrot.slane %v411, 7
        %v688 = vsel %vm641, %v685, %v687
        %v689 = vrot.slane %v412, 7
        %v690 = vsel %vm641, %v687, %v689
        %v691 = vrot.slane %v413, 7
        %v692 = vrot.slane %v414, 7
        %v693 = vsel %vm641, %v691, %v692
        %v694 = vrot.slane %v415, 7
        %v695 = vsel %vm641, %v692, %v694
        %v696 = vrot.slane %v416, 7
        %v697 = vsel %vm641, %v694, %v696
        %v698 = vrot.slane %v417, 7
        %v699 = vrot.slane %v418, 7
        %v700 = vsel %vm641, %v698, %v699
        %v701 = vrot.slane %v419, 7
        %v702 = vsel %vm641, %v699, %v701
        %v703 = vrot.slane %v420, 7
        %v704 = vsel %vm641, %v701, %v703
        %v705 = vrot.slane %v421, 7
        %v706 = vrot.slane %v422, 7
        %v707 = vsel %vm641, %v705, %v706
        %v708 = vrot.slane %v423, 7
        %v709 = vsel %vm641, %v706, %v708
        %v710 = vrot.slane %v424, 7
        %v711 = vsel %vm641, %v708, %v710
        %v712 = vrot.slane %v425, 7
        %v713 = vrot.slane %v426, 7
        %v714 = vsel %vm641, %v712, %v713
        %v715 = vrot.slane %v427, 7
        %v716 = vsel %vm641, %v713, %v715
        %v717 = vrot.slane %v428, 7
        %v718 = vsel %vm641, %v715, %v717
        %v719 = vrot.slane %v429, 7
        %v720 = vrot.slane %v430, 7
        %v721 = vsel %vm641, %v719, %v720
        %v722 = vrot.slane %v431, 7
        %v723 = vsel %vm641, %v720, %v722
        %v724 = vrot.slane %v432, 7
        %v725 = vsel %vm641, %v722, %v724
        %v726 = vrot.slane %v433, 7
        %v727 = vrot.slane %v434, 7
        %v728 = vsel %vm641, %v726, %v727
        %v729 = vrot.slane %v435, 7
        %v730 = vsel %vm641, %v727, %v729
        %v731 = vrot.slane %v436, 7
        %v732 = vsel %vm641, %v729, %v731
        %v733 = vrot.slane %v437, 7
        %v734 = vrot.slane %v438, 7
        %v735 = vsel %vm641, %v733, %v734
        %v736 = vrot.slane %v439, 7
        %v737 = vsel %vm641, %v734, %v736
        %v738 = vrot.slane %v440, 7
        %v739 = vsel %vm641, %v736, %v738
        %v740 = vrot.slane %v441, 7
        %v741 = vrot.slane %v442, 7
        %v742 = vsel %vm641, %v740, %v741
        %v743 = vrot.slane %v443, 7
        %v744 = vsel %vm641, %v741, %v743
        %v745 = vrot.slane %v444, 7
        %v746 = vsel %vm641, %v743, %v745
        %v747 = vrot.slane %v445, 7
        %v748 = vrot.slane %v446, 7
        %v749 = vsel %vm641, %v747, %v748
        %v750 = vrot.slane %v447, 7
        %v751 = vsel %vm641, %v748, %v750
        %v752 = vrot.slane %v448, 7
        %v753 = vsel %vm641, %v750, %v752
        %v754 = vrot.slane %v449, 7
        %v755 = vrot.slane %v450, 7
        %v756 = vsel %vm641, %v754, %v755
        %v757 = vrot.slane %v451, 7
        %v758 = vsel %vm641, %v755, %v757
        %v759 = vrot.slane %v452, 7
        %v760 = vsel %vm641, %v757, %v759
        %v761 = vrot.slane %v453, 7
        %v762 = vrot.slane %v454, 7
        %v763 = vsel %vm641, %v761, %v762
        %v764 = vrot.slane %v455, 7
        %v765 = vsel %vm641, %v762, %v764
        %v766 = vrot.slane %v456, 7
        %v767 = vsel %vm641, %v764, %v766
        %v768 = vrot.slane %v457, 7
        %v769 = vrot.slane %v458, 7
        %v770 = vsel %vm641, %v768, %v769
        %v771 = vrot.slane %v459, 7
        %v772 = vsel %vm641, %v769, %v771
        %v773 = vrot.slane %v460, 7
        %v774 = vsel %vm641, %v771, %v773
        %v775 = vrot.slane %v461, 7
        %v776 = vrot.slane %v462, 7
        %v777 = vsel %vm641, %v775, %v776
        %v778 = vrot.slane %v463, 7
        %v779 = vsel %vm641, %v776, %v778
        %v780 = vrot.slane %v464, 7
        %v781 = vsel %vm641, %v778, %v780
        %v782 = vrot.slane %v465, 7
        %v783 = vrot.slane %v466, 7
        %v784 = vsel %vm641, %v782, %v783
        %v785 = vrot.slane %v467, 7
        %v786 = vsel %vm641, %v783, %v785
        %v787 = vrot.slane %v468, 7
        %v788 = vsel %vm641, %v785, %v787
        %v789 = vrot.slane %v469, 7
        %v790 = vrot.slane %v470, 7
        %v791 = vsel %vm641, %v789, %v790
        %v792 = vrot.slane %v471, 7
        %v793 = vsel %vm641, %v790, %v792
        %v794 = vrot.slane %v472, 7
        %v795 = vsel %vm641, %v792, %v794
        %v796 = vrot.slane %v473, 7
        %v797 = vrot.slane %v474, 7
        %v798 = vsel %vm641, %v796, %v797
        %v799 = vrot.slane %v475, 7
        %v800 = vsel %vm641, %v797, %v799
        %v801 = vrot.slane %v476, 7
        %v802 = vsel %vm641, %v799, %v801
        %v803 = vrot.slane %v477, 7
        %v804 = vrot.slane %v478, 7
        %v805 = vsel %vm641, %v803, %v804
        %v806 = vrot.slane %v479, 7
        %v807 = vsel %vm641, %v804, %v806
        %v808 = vrot.slane %v480, 7
        %v809 = vsel %vm641, %v806, %v808
        %v810 = vrot.slane %v481, 7
        %v811 = vrot.slane %v482, 7
        %v812 = vsel %vm641, %v810, %v811
        %v813 = vrot.slane %v483, 7
        %v814 = vsel %vm641, %v811, %v813
        %v815 = vrot.slane %v484, 7
        %v816 = vsel %vm641, %v813, %v815
        %v817 = vrot.slane %v485, 7
        %v818 = vrot.slane %v486, 7
        %v819 = vsel %vm641, %v817, %v818
        %v820 = vrot.slane %v487, 7
        %v821 = vsel %vm641, %v818, %v820
        %v822 = vrot.slane %v488, 7
        %v823 = vsel %vm641, %v820, %v822
        %v824 = vrot.slane %v489, 7
        %v825 = vrot.slane %v490, 7
        %v826 = vsel %vm641, %v824, %v825
        %v827 = vrot.slane %v491, 7
        %v828 = vsel %vm641, %v825, %v827
        %v829 = vrot.slane %v492, 7
        %v830 = vsel %vm641, %v827, %v829
        %v831 = vrot.slane %v493, 7
        %v832 = vrot.slane %v494, 7
        %v833 = vsel %vm641, %v831, %v832
        %v834 = vrot.slane %v495, 7
        %v835 = vsel %vm641, %v832, %v834
        %v836 = vrot.slane %v496, 7
        %v837 = vsel %vm641, %v834, %v836
        %v838 = vrot.slane %v497, 7
        %v839 = vrot.slane %v498, 7
        %v840 = vsel %vm641, %v838, %v839
        %v841 = vrot.slane %v499, 7
        %v842 = vsel %vm641, %v839, %v841
        %v843 = vrot.slane %v500, 7
        %v844 = vsel %vm641, %v841, %v843
        %v845 = vrot.slane %v501, 7
        %v846 = vrot.slane %v502, 7
        %v847 = vsel %vm641, %v845, %v846
        %v848 = vrot.slane %v503, 7
        %v849 = vsel %vm641, %v846, %v848
        %v850 = vrot.slane %v504, 7
        %v851 = vsel %vm641, %v848, %v850
        %v852 = vrot.slane %v505, 7
        %v853 = vrot.slane %v506, 7
        %v854 = vsel %vm641, %v852, %v853
        %v855 = vrot.slane %v507, 7
        %v856 = vsel %vm641, %v853, %v855
        %v857 = vrot.slane %v508, 7
        %v858 = vsel %vm641, %v855, %v857
        %v859 = vrot.slane %v509, 7
        %v860 = vrot.slane %v510, 7
        %v861 = vsel %vm641, %v859, %v860
        %v862 = vrot.slane %v511, 7
        %v863 = vsel %vm641, %v860, %v862
        %v864 = vrot.slane %v512, 7
        %v865 = vsel %vm641, %v862, %v864
        %v1023 = vsel %vm641, 0.0, %v642
        %v1024 = vsel %vm641, 0.0, %v649
        %v1025 = vsel %vm641, 0.0, %v656
        %v1026 = vsel %vm641, 0.0, %v663
        %v1027 = vsel %vm641, 0.0, %v670
        %v1028 = vsel %vm641, 0.0, %v677
        %v1029 = vsel %vm641, 0.0, %v684
        %v1030 = vsel %vm641, 0.0, %v691
        %v1031 = vsel %vm641, 0.0, %v698
        %v1032 = vsel %vm641, 0.0, %v705
        %v1033 = vsel %vm641, 0.0, %v712
        %v1034 = vsel %vm641, 0.0, %v719
        %v1035 = vsel %vm641, 0.0, %v726
        %v1036 = vsel %vm641, 0.0, %v733
        %v1037 = vsel %vm641, 0.0, %v740
        %v1038 = vsel %vm641, 0.0, %v747
        %v1039 = vsel %vm641, 0.0, %v754
        %v1040 = vsel %vm641, 0.0, %v761
        %v1041 = vsel %vm641, 0.0, %v768
        %v1042 = vsel %vm641, 0.0, %v775
        %v1043 = vsel %vm641, 0.0, %v782
        %v1044 = vsel %vm641, 0.0, %v789
        %v1045 = vsel %vm641, 0.0, %v796
        %v1046 = vsel %vm641, 0.0, %v803
        %v1047 = vsel %vm641, 0.0, %v810
        %v1048 = vsel %vm641, 0.0, %v817
        %v1049 = vsel %vm641, 0.0, %v824
        %v1050 = vsel %vm641, 0.0, %v831
        %v1051 = vsel %vm641, 0.0, %v838
        %v1052 = vsel %vm641, 0.0, %v845
        %v1053 = vsel %vm641, 0.0, %v852
        %v1054 = vsel %vm641, 0.0, %v859
        %v1055 = vsel %vm641, %v647, 0.0
        %v1056 = vsel %vm641, %v654, 0.0
        %v1057 = vsel %vm641, %v661, 0.0
        %v1058 = vsel %vm641, %v668, 0.0
        %v1059 = vsel %vm641, %v675, 0.0
        %v1060 = vsel %vm641, %v682, 0.0
        %v1061 = vsel %vm641, %v689, 0.0
        %v1062 = vsel %vm641, %v696, 0.0
        %v1063 = vsel %vm641, %v703, 0.0
        %v1064 = vsel %vm641, %v710, 0.0
        %v1065 = vsel %vm641, %v717, 0.0
        %v1066 = vsel %vm641, %v724, 0.0
        %v1067 = vsel %vm641, %v731, 0.0
        %v1068 = vsel %vm641, %v738, 0.0
        %v1069 = vsel %vm641, %v745, 0.0
        %v1070 = vsel %vm641, %v752, 0.0
        %v1071 = vsel %vm641, %v759, 0.0
        %v1072 = vsel %vm641, %v766, 0.0
        %v1073 = vsel %vm641, %v773, 0.0
        %v1074 = vsel %vm641, %v780, 0.0
        %v1075 = vsel %vm641, %v787, 0.0
        %v1076 = vsel %vm641, %v794, 0.0
        %v1077 = vsel %vm641, %v801, 0.0
        %v1078 = vsel %vm641, %v808, 0.0
        %v1079 = vsel %vm641, %v815, 0.0
        %v1080 = vsel %vm641, %v822, 0.0
        %v1081 = vsel %vm641, %v829, 0.0
        %v1082 = vsel %vm641, %v836, 0.0
        %v1083 = vsel %vm641, %v843, 0.0
        %v1084 = vsel %vm641, %v850, 0.0
        %v1085 = vsel %vm641, %v857, 0.0
        %v1086 = vsel %vm641, %v864, 0.0
        %vm1150 = vcmask 1046528
        %v1151 = vrot.slane 0.0, 1
        %v1152 = vsel %vm1150, %v1151, %v1151
        %v1153 = vrot.slane %v1023, 1
        %v1154 = vrot.slane %v644, 1
        %v1155 = vsel %vm1150, %v1153, %v1154
        %v1156 = vrot.slane %v646, 1
        %v1157 = vsel %vm1150, %v1154, %v1156
        %v1158 = vrot.slane %v648, 1
        %v1159 = vsel %vm1150, %v1156, %v1158
        %v1160 = vrot.slane %v1055, 1
        %v1161 = vsel %vm1150, %v1158, %v1160
        %v1162 = vrot.slane %v1024, 1
        %v1163 = vrot.slane %v651, 1
        %v1164 = vsel %vm1150, %v1162, %v1163
        %v1165 = vrot.slane %v653, 1
        %v1166 = vsel %vm1150, %v1163, %v1165
        %v1167 = vrot.slane %v655, 1
        %v1168 = vsel %vm1150, %v1165, %v1167
        %v1169 = vrot.slane %v1056, 1
        %v1170 = vsel %vm1150, %v1167, %v1169
        %v1171 = vrot.slane %v1025, 1
        %v1172 = vrot.slane %v658, 1
        %v1173 = vsel %vm1150, %v1171, %v1172
        %v1174 = vrot.slane %v660, 1
        %v1175 = vsel %vm1150, %v1172, %v1174
        %v1176 = vrot.slane %v662, 1
        %v1177 = vsel %vm1150, %v1174, %v1176
        %v1178 = vrot.slane %v1057, 1
        %v1179 = vsel %vm1150, %v1176, %v1178
        %v1180 = vrot.slane %v1026, 1
        %v1181 = vrot.slane %v665, 1
        %v1182 = vsel %vm1150, %v1180, %v1181
        %v1183 = vrot.slane %v667, 1
        %v1184 = vsel %vm1150, %v1181, %v1183
        %v1185 = vrot.slane %v669, 1
        %v1186 = vsel %vm1150, %v1183, %v1185
        %v1187 = vrot.slane %v1058, 1
        %v1188 = vsel %vm1150, %v1185, %v1187
        %v1189 = vrot.slane %v1027, 1
        %v1190 = vrot.slane %v672, 1
        %v1191 = vsel %vm1150, %v1189, %v1190
        %v1192 = vrot.slane %v674, 1
        %v1193 = vsel %vm1150, %v1190, %v1192
        %v1194 = vrot.slane %v676, 1
        %v1195 = vsel %vm1150, %v1192, %v1194
        %v1196 = vrot.slane %v1059, 1
        %v1197 = vsel %vm1150, %v1194, %v1196
        %v1198 = vrot.slane %v1028, 1
        %v1199 = vrot.slane %v679, 1
        %v1200 = vsel %vm1150, %v1198, %v1199
        %v1201 = vrot.slane %v681, 1
        %v1202 = vsel %vm1150, %v1199, %v1201
        %v1203 = vrot.slane %v683, 1
        %v1204 = vsel %vm1150, %v1201, %v1203
        %v1205 = vrot.slane %v1060, 1
        %v1206 = vsel %vm1150, %v1203, %v1205
        %v1207 = vrot.slane %v1029, 1
        %v1208 = vrot.slane %v686, 1
        %v1209 = vsel %vm1150, %v1207, %v1208
        %v1210 = vrot.slane %v688, 1
        %v1211 = vsel %vm1150, %v1208, %v1210
        %v1212 = vrot.slane %v690, 1
        %v1213 = vsel %vm1150, %v1210, %v1212
        %v1214 = vrot.slane %v1061, 1
        %v1215 = vsel %vm1150, %v1212, %v1214
        %v1216 = vrot.slane %v1030, 1
        %v1217 = vrot.slane %v693, 1
        %v1218 = vsel %vm1150, %v1216, %v1217
        %v1219 = vrot.slane %v695, 1
        %v1220 = vsel %vm1150, %v1217, %v1219
        %v1221 = vrot.slane %v697, 1
        %v1222 = vsel %vm1150, %v1219, %v1221
        %v1223 = vrot.slane %v1062, 1
        %v1224 = vsel %vm1150, %v1221, %v1223
        %v1225 = vrot.slane %v1031, 1
        %v1226 = vrot.slane %v700, 1
        %v1227 = vsel %vm1150, %v1225, %v1226
        %v1228 = vrot.slane %v702, 1
        %v1229 = vsel %vm1150, %v1226, %v1228
        %v1230 = vrot.slane %v704, 1
        %v1231 = vsel %vm1150, %v1228, %v1230
        %v1232 = vrot.slane %v1063, 1
        %v1233 = vsel %vm1150, %v1230, %v1232
        %v1234 = vrot.slane %v1032, 1
        %v1235 = vrot.slane %v707, 1
        %v1236 = vsel %vm1150, %v1234, %v1235
        %v1237 = vrot.slane %v709, 1
        %v1238 = vsel %vm1150, %v1235, %v1237
        %v1239 = vrot.slane %v711, 1
        %v1240 = vsel %vm1150, %v1237, %v1239
        %v1241 = vrot.slane %v1064, 1
        %v1242 = vsel %vm1150, %v1239, %v1241
        %v1243 = vrot.slane %v1033, 1
        %v1244 = vrot.slane %v714, 1
        %v1245 = vsel %vm1150, %v1243, %v1244
        %v1246 = vrot.slane %v716, 1
        %v1247 = vsel %vm1150, %v1244, %v1246
        %v1248 = vrot.slane %v718, 1
        %v1249 = vsel %vm1150, %v1246, %v1248
        %v1250 = vrot.slane %v1065, 1
        %v1251 = vsel %vm1150, %v1248, %v1250
        %v1252 = vrot.slane %v1034, 1
        %v1253 = vrot.slane %v721, 1
        %v1254 = vsel %vm1150, %v1252, %v1253
        %v1255 = vrot.slane %v723, 1
        %v1256 = vsel %vm1150, %v1253, %v1255
        %v1257 = vrot.slane %v725, 1
        %v1258 = vsel %vm1150, %v1255, %v1257
        %v1259 = vrot.slane %v1066, 1
        %v1260 = vsel %vm1150, %v1257, %v1259
        %v1261 = vrot.slane %v1035, 1
        %v1262 = vrot.slane %v728, 1
        %v1263 = vsel %vm1150, %v1261, %v1262
        %v1264 = vrot.slane %v730, 1
        %v1265 = vsel %vm1150, %v1262, %v1264
        %v1266 = vrot.slane %v732, 1
        %v1267 = vsel %vm1150, %v1264, %v1266
        %v1268 = vrot.slane %v1067, 1
        %v1269 = vsel %vm1150, %v1266, %v1268
        %v1270 = vrot.slane %v1036, 1
        %v1271 = vrot.slane %v735, 1
        %v1272 = vsel %vm1150, %v1270, %v1271
        %v1273 = vrot.slane %v737, 1
        %v1274 = vsel %vm1150, %v1271, %v1273
        %v1275 = vrot.slane %v739, 1
        %v1276 = vsel %vm1150, %v1273, %v1275
        %v1277 = vrot.slane %v1068, 1
        %v1278 = vsel %vm1150, %v1275, %v1277
        %v1279 = vrot.slane %v1037, 1
        %v1280 = vrot.slane %v742, 1
        %v1281 = vsel %vm1150, %v1279, %v1280
        %v1282 = vrot.slane %v744, 1
        %v1283 = vsel %vm1150, %v1280, %v1282
        %v1284 = vrot.slane %v746, 1
        %v1285 = vsel %vm1150, %v1282, %v1284
        %v1286 = vrot.slane %v1069, 1
        %v1287 = vsel %vm1150, %v1284, %v1286
        %v1288 = vrot.slane %v1038, 1
        %v1289 = vrot.slane %v749, 1
        %v1290 = vsel %vm1150, %v1288, %v1289
        %v1291 = vrot.slane %v751, 1
        %v1292 = vsel %vm1150, %v1289, %v1291
        %v1293 = vrot.slane %v753, 1
        %v1294 = vsel %vm1150, %v1291, %v1293
        %v1295 = vrot.slane %v1070, 1
        %v1296 = vsel %vm1150, %v1293, %v1295
        %v1297 = vrot.slane %v1039, 1
        %v1298 = vrot.slane %v756, 1
        %v1299 = vsel %vm1150, %v1297, %v1298
        %v1300 = vrot.slane %v758, 1
        %v1301 = vsel %vm1150, %v1298, %v1300
        %v1302 = vrot.slane %v760, 1
        %v1303 = vsel %vm1150, %v1300, %v1302
        %v1304 = vrot.slane %v1071, 1
        %v1305 = vsel %vm1150, %v1302, %v1304
        %v1306 = vrot.slane %v1040, 1
        %v1307 = vrot.slane %v763, 1
        %v1308 = vsel %vm1150, %v1306, %v1307
        %v1309 = vrot.slane %v765, 1
        %v1310 = vsel %vm1150, %v1307, %v1309
        %v1311 = vrot.slane %v767, 1
        %v1312 = vsel %vm1150, %v1309, %v1311
        %v1313 = vrot.slane %v1072, 1
        %v1314 = vsel %vm1150, %v1311, %v1313
        %v1315 = vrot.slane %v1041, 1
        %v1316 = vrot.slane %v770, 1
        %v1317 = vsel %vm1150, %v1315, %v1316
        %v1318 = vrot.slane %v772, 1
        %v1319 = vsel %vm1150, %v1316, %v1318
        %v1320 = vrot.slane %v774, 1
        %v1321 = vsel %vm1150, %v1318, %v1320
        %v1322 = vrot.slane %v1073, 1
        %v1323 = vsel %vm1150, %v1320, %v1322
        %v1324 = vrot.slane %v1042, 1
        %v1325 = vrot.slane %v777, 1
        %v1326 = vsel %vm1150, %v1324, %v1325
        %v1327 = vrot.slane %v779, 1
        %v1328 = vsel %vm1150, %v1325, %v1327
        %v1329 = vrot.slane %v781, 1
        %v1330 = vsel %vm1150, %v1327, %v1329
        %v1331 = vrot.slane %v1074, 1
        %v1332 = vsel %vm1150, %v1329, %v1331
        %v1333 = vrot.slane %v1043, 1
        %v1334 = vrot.slane %v784, 1
        %v1335 = vsel %vm1150, %v1333, %v1334
        %v1336 = vrot.slane %v786, 1
        %v1337 = vsel %vm1150, %v1334, %v1336
        %v1338 = vrot.slane %v788, 1
        %v1339 = vsel %vm1150, %v1336, %v1338
        %v1340 = vrot.slane %v1075, 1
        %v1341 = vsel %vm1150, %v1338, %v1340
        %v1342 = vrot.slane %v1044, 1
        %v1343 = vrot.slane %v791, 1
        %v1344 = vsel %vm1150, %v1342, %v1343
        %v1345 = vrot.slane %v793, 1
        %v1346 = vsel %vm1150, %v1343, %v1345
        %v1347 = vrot.slane %v795, 1
        %v1348 = vsel %vm1150, %v1345, %v1347
        %v1349 = vrot.slane %v1076, 1
        %v1350 = vsel %vm1150, %v1347, %v1349
        %v1351 = vrot.slane %v1045, 1
        %v1352 = vrot.slane %v798, 1
        %v1353 = vsel %vm1150, %v1351, %v1352
        %v1354 = vrot.slane %v800, 1
        %v1355 = vsel %vm1150, %v1352, %v1354
        %v1356 = vrot.slane %v802, 1
        %v1357 = vsel %vm1150, %v1354, %v1356
        %v1358 = vrot.slane %v1077, 1
        %v1359 = vsel %vm1150, %v1356, %v1358
        %v1360 = vrot.slane %v1046, 1
        %v1361 = vrot.slane %v805, 1
        %v1362 = vsel %vm1150, %v1360, %v1361
        %v1363 = vrot.slane %v807, 1
        %v1364 = vsel %vm1150, %v1361, %v1363
        %v1365 = vrot.slane %v809, 1
        %v1366 = vsel %vm1150, %v1363, %v1365
        %v1367 = vrot.slane %v1078, 1
        %v1368 = vsel %vm1150, %v1365, %v1367
        %v1369 = vrot.slane %v1047, 1
        %v1370 = vrot.slane %v812, 1
        %v1371 = vsel %vm1150, %v1369, %v1370
        %v1372 = vrot.slane %v814, 1
        %v1373 = vsel %vm1150, %v1370, %v1372
        %v1374 = vrot.slane %v816, 1
        %v1375 = vsel %vm1150, %v1372, %v1374
        %v1376 = vrot.slane %v1079, 1
        %v1377 = vsel %vm1150, %v1374, %v1376
        %v1378 = vrot.slane %v1048, 1
        %v1379 = vrot.slane %v819, 1
        %v1380 = vsel %vm1150, %v1378, %v1379
        %v1381 = vrot.slane %v821, 1
        %v1382 = vsel %vm1150, %v1379, %v1381
        %v1383 = vrot.slane %v823, 1
        %v1384 = vsel %vm1150, %v1381, %v1383
        %v1385 = vrot.slane %v1080, 1
        %v1386 = vsel %vm1150, %v1383, %v1385
        %v1387 = vrot.slane %v1049, 1
        %v1388 = vrot.slane %v826, 1
        %v1389 = vsel %vm1150, %v1387, %v1388
        %v1390 = vrot.slane %v828, 1
        %v1391 = vsel %vm1150, %v1388, %v1390
        %v1392 = vrot.slane %v830, 1
        %v1393 = vsel %vm1150, %v1390, %v1392
        %v1394 = vrot.slane %v1081, 1
        %v1395 = vsel %vm1150, %v1392, %v1394
        %v1396 = vrot.slane %v1050, 1
        %v1397 = vrot.slane %v833, 1
        %v1398 = vsel %vm1150, %v1396, %v1397
        %v1399 = vrot.slane %v835, 1
        %v1400 = vsel %vm1150, %v1397, %v1399
        %v1401 = vrot.slane %v837, 1
        %v1402 = vsel %vm1150, %v1399, %v1401
        %v1403 = vrot.slane %v1082, 1
        %v1404 = vsel %vm1150, %v1401, %v1403
        %v1405 = vrot.slane %v1051, 1
        %v1406 = vrot.slane %v840, 1
        %v1407 = vsel %vm1150, %v1405, %v1406
        %v1408 = vrot.slane %v842, 1
        %v1409 = vsel %vm1150, %v1406, %v1408
        %v1410 = vrot.slane %v844, 1
        %v1411 = vsel %vm1150, %v1408, %v1410
        %v1412 = vrot.slane %v1083, 1
        %v1413 = vsel %vm1150, %v1410, %v1412
        %v1414 = vrot.slane %v1052, 1
        %v1415 = vrot.slane %v847, 1
        %v1416 = vsel %vm1150, %v1414, %v1415
        %v1417 = vrot.slane %v849, 1
        %v1418 = vsel %vm1150, %v1415, %v1417
        %v1419 = vrot.slane %v851, 1
        %v1420 = vsel %vm1150, %v1417, %v1419
        %v1421 = vrot.slane %v1084, 1
        %v1422 = vsel %vm1150, %v1419, %v1421
        %v1423 = vrot.slane %v1053, 1
        %v1424 = vrot.slane %v854, 1
        %v1425 = vsel %vm1150, %v1423, %v1424
        %v1426 = vrot.slane %v856, 1
        %v1427 = vsel %vm1150, %v1424, %v1426
        %v1428 = vrot.slane %v858, 1
        %v1429 = vsel %vm1150, %v1426, %v1428
        %v1430 = vrot.slane %v1085, 1
        %v1431 = vsel %vm1150, %v1428, %v1430
        %vm1432 = vcmask 1045504
        %v1433 = vrot.slane 0.0, 2
        %v1434 = vsel %vm1432, %v1433, %v1433
        %v1435 = vrot.slane %v1023, 2
        %v1436 = vrot.slane %v644, 2
        %v1437 = vsel %vm1432, %v1435, %v1436
        %v1438 = vrot.slane %v646, 2
        %v1439 = vsel %vm1432, %v1436, %v1438
        %v1440 = vrot.slane %v648, 2
        %v1441 = vsel %vm1432, %v1438, %v1440
        %v1442 = vrot.slane %v1055, 2
        %v1443 = vsel %vm1432, %v1440, %v1442
        %v1444 = vrot.slane %v1024, 2
        %v1445 = vrot.slane %v651, 2
        %v1446 = vsel %vm1432, %v1444, %v1445
        %v1447 = vrot.slane %v653, 2
        %v1448 = vsel %vm1432, %v1445, %v1447
        %v1449 = vrot.slane %v655, 2
        %v1450 = vsel %vm1432, %v1447, %v1449
        %v1451 = vrot.slane %v1056, 2
        %v1452 = vsel %vm1432, %v1449, %v1451
        %v1453 = vrot.slane %v1025, 2
        %v1454 = vrot.slane %v658, 2
        %v1455 = vsel %vm1432, %v1453, %v1454
        %v1456 = vrot.slane %v660, 2
        %v1457 = vsel %vm1432, %v1454, %v1456
        %v1458 = vrot.slane %v662, 2
        %v1459 = vsel %vm1432, %v1456, %v1458
        %v1460 = vrot.slane %v1057, 2
        %v1461 = vsel %vm1432, %v1458, %v1460
        %v1462 = vrot.slane %v1026, 2
        %v1463 = vrot.slane %v665, 2
        %v1464 = vsel %vm1432, %v1462, %v1463
        %v1465 = vrot.slane %v667, 2
        %v1466 = vsel %vm1432, %v1463, %v1465
        %v1467 = vrot.slane %v669, 2
        %v1468 = vsel %vm1432, %v1465, %v1467
        %v1469 = vrot.slane %v1058, 2
        %v1470 = vsel %vm1432, %v1467, %v1469
        %v1471 = vrot.slane %v1027, 2
        %v1472 = vrot.slane %v672, 2
        %v1473 = vsel %vm1432, %v1471, %v1472
        %v1474 = vrot.slane %v674, 2
        %v1475 = vsel %vm1432, %v1472, %v1474
        %v1476 = vrot.slane %v676, 2
        %v1477 = vsel %vm1432, %v1474, %v1476
        %v1478 = vrot.slane %v1059, 2
        %v1479 = vsel %vm1432, %v1476, %v1478
        %v1480 = vrot.slane %v1028, 2
        %v1481 = vrot.slane %v679, 2
        %v1482 = vsel %vm1432, %v1480, %v1481
        %v1483 = vrot.slane %v681, 2
        %v1484 = vsel %vm1432, %v1481, %v1483
        %v1485 = vrot.slane %v683, 2
        %v1486 = vsel %vm1432, %v1483, %v1485
        %v1487 = vrot.slane %v1060, 2
        %v1488 = vsel %vm1432, %v1485, %v1487
        %v1489 = vrot.slane %v1029, 2
        %v1490 = vrot.slane %v686, 2
        %v1491 = vsel %vm1432, %v1489, %v1490
        %v1492 = vrot.slane %v688, 2
        %v1493 = vsel %vm1432, %v1490, %v1492
        %v1494 = vrot.slane %v690, 2
        %v1495 = vsel %vm1432, %v1492, %v1494
        %v1496 = vrot.slane %v1061, 2
        %v1497 = vsel %vm1432, %v1494, %v1496
        %v1498 = vrot.slane %v1030, 2
        %v1499 = vrot.slane %v693, 2
        %v1500 = vsel %vm1432, %v1498, %v1499
        %v1501 = vrot.slane %v695, 2
        %v1502 = vsel %vm1432, %v1499, %v1501
        %v1503 = vrot.slane %v697, 2
        %v1504 = vsel %vm1432, %v1501, %v1503
        %v1505 = vrot.slane %v1062, 2
        %v1506 = vsel %vm1432, %v1503, %v1505
        %v1507 = vrot.slane %v1031, 2
        %v1508 = vrot.slane %v700, 2
        %v1509 = vsel %vm1432, %v1507, %v1508
        %v1510 = vrot.slane %v702, 2
        %v1511 = vsel %vm1432, %v1508, %v1510
        %v1512 = vrot.slane %v704, 2
        %v1513 = vsel %vm1432, %v1510, %v1512
        %v1514 = vrot.slane %v1063, 2
        %v1515 = vsel %vm1432, %v1512, %v1514
        %v1516 = vrot.slane %v1032, 2
        %v1517 = vrot.slane %v707, 2
        %v1518 = vsel %vm1432, %v1516, %v1517
        %v1519 = vrot.slane %v709, 2
        %v1520 = vsel %vm1432, %v1517, %v1519
        %v1521 = vrot.slane %v711, 2
        %v1522 = vsel %vm1432, %v1519, %v1521
        %v1523 = vrot.slane %v1064, 2
        %v1524 = vsel %vm1432, %v1521, %v1523
        %v1525 = vrot.slane %v1033, 2
        %v1526 = vrot.slane %v714, 2
        %v1527 = vsel %vm1432, %v1525, %v1526
        %v1528 = vrot.slane %v716, 2
        %v1529 = vsel %vm1432, %v1526, %v1528
        %v1530 = vrot.slane %v718, 2
        %v1531 = vsel %vm1432, %v1528, %v1530
        %v1532 = vrot.slane %v1065, 2
        %v1533 = vsel %vm1432, %v1530, %v1532
        %v1534 = vrot.slane %v1034, 2
        %v1535 = vrot.slane %v721, 2
        %v1536 = vsel %vm1432, %v1534, %v1535
        %v1537 = vrot.slane %v723, 2
        %v1538 = vsel %vm1432, %v1535, %v1537
        %v1539 = vrot.slane %v725, 2
        %v1540 = vsel %vm1432, %v1537, %v1539
        %v1541 = vrot.slane %v1066, 2
        %v1542 = vsel %vm1432, %v1539, %v1541
        %v1543 = vrot.slane %v1035, 2
        %v1544 = vrot.slane %v728, 2
        %v1545 = vsel %vm1432, %v1543, %v1544
        %v1546 = vrot.slane %v730, 2
        %v1547 = vsel %vm1432, %v1544, %v1546
        %v1548 = vrot.slane %v732, 2
        %v1549 = vsel %vm1432, %v1546, %v1548
        %v1550 = vrot.slane %v1067, 2
        %v1551 = vsel %vm1432, %v1548, %v1550
        %v1552 = vrot.slane %v1036, 2
        %v1553 = vrot.slane %v735, 2
        %v1554 = vsel %vm1432, %v1552, %v1553
        %v1555 = vrot.slane %v737, 2
        %v1556 = vsel %vm1432, %v1553, %v1555
        %v1557 = vrot.slane %v739, 2
        %v1558 = vsel %vm1432, %v1555, %v1557
        %v1559 = vrot.slane %v1068, 2
        %v1560 = vsel %vm1432, %v1557, %v1559
        %v1561 = vrot.slane %v1037, 2
        %v1562 = vrot.slane %v742, 2
        %v1563 = vsel %vm1432, %v1561, %v1562
        %v1564 = vrot.slane %v744, 2
        %v1565 = vsel %vm1432, %v1562, %v1564
        %v1566 = vrot.slane %v746, 2
        %v1567 = vsel %vm1432, %v1564, %v1566
        %v1568 = vrot.slane %v1069, 2
        %v1569 = vsel %vm1432, %v1566, %v1568
        %v1570 = vrot.slane %v1038, 2
        %v1571 = vrot.slane %v749, 2
        %v1572 = vsel %vm1432, %v1570, %v1571
        %v1573 = vrot.slane %v751, 2
        %v1574 = vsel %vm1432, %v1571, %v1573
        %v1575 = vrot.slane %v753, 2
        %v1576 = vsel %vm1432, %v1573, %v1575
        %v1577 = vrot.slane %v1070, 2
        %v1578 = vsel %vm1432, %v1575, %v1577
        %v1579 = vrot.slane %v1039, 2
        %v1580 = vrot.slane %v756, 2
        %v1581 = vsel %vm1432, %v1579, %v1580
        %v1582 = vrot.slane %v758, 2
        %v1583 = vsel %vm1432, %v1580, %v1582
        %v1584 = vrot.slane %v760, 2
        %v1585 = vsel %vm1432, %v1582, %v1584
        %v1586 = vrot.slane %v1071, 2
        %v1587 = vsel %vm1432, %v1584, %v1586
        %v1588 = vrot.slane %v1040, 2
        %v1589 = vrot.slane %v763, 2
        %v1590 = vsel %vm1432, %v1588, %v1589
        %v1591 = vrot.slane %v765, 2
        %v1592 = vsel %vm1432, %v1589, %v1591
        %v1593 = vrot.slane %v767, 2
        %v1594 = vsel %vm1432, %v1591, %v1593
        %v1595 = vrot.slane %v1072, 2
        %v1596 = vsel %vm1432, %v1593, %v1595
        %v1597 = vrot.slane %v1041, 2
        %v1598 = vrot.slane %v770, 2
        %v1599 = vsel %vm1432, %v1597, %v1598
        %v1600 = vrot.slane %v772, 2
        %v1601 = vsel %vm1432, %v1598, %v1600
        %v1602 = vrot.slane %v774, 2
        %v1603 = vsel %vm1432, %v1600, %v1602
        %v1604 = vrot.slane %v1073, 2
        %v1605 = vsel %vm1432, %v1602, %v1604
        %v1606 = vrot.slane %v1042, 2
        %v1607 = vrot.slane %v777, 2
        %v1608 = vsel %vm1432, %v1606, %v1607
        %v1609 = vrot.slane %v779, 2
        %v1610 = vsel %vm1432, %v1607, %v1609
        %v1611 = vrot.slane %v781, 2
        %v1612 = vsel %vm1432, %v1609, %v1611
        %v1613 = vrot.slane %v1074, 2
        %v1614 = vsel %vm1432, %v1611, %v1613
        %v1615 = vrot.slane %v1043, 2
        %v1616 = vrot.slane %v784, 2
        %v1617 = vsel %vm1432, %v1615, %v1616
        %v1618 = vrot.slane %v786, 2
        %v1619 = vsel %vm1432, %v1616, %v1618
        %v1620 = vrot.slane %v788, 2
        %v1621 = vsel %vm1432, %v1618, %v1620
        %v1622 = vrot.slane %v1075, 2
        %v1623 = vsel %vm1432, %v1620, %v1622
        %v1624 = vrot.slane %v1044, 2
        %v1625 = vrot.slane %v791, 2
        %v1626 = vsel %vm1432, %v1624, %v1625
        %v1627 = vrot.slane %v793, 2
        %v1628 = vsel %vm1432, %v1625, %v1627
        %v1629 = vrot.slane %v795, 2
        %v1630 = vsel %vm1432, %v1627, %v1629
        %v1631 = vrot.slane %v1076, 2
        %v1632 = vsel %vm1432, %v1629, %v1631
        %v1633 = vrot.slane %v1045, 2
        %v1634 = vrot.slane %v798, 2
        %v1635 = vsel %vm1432, %v1633, %v1634
        %v1636 = vrot.slane %v800, 2
        %v1637 = vsel %vm1432, %v1634, %v1636
        %v1638 = vrot.slane %v802, 2
        %v1639 = vsel %vm1432, %v1636, %v1638
        %v1640 = vrot.slane %v1077, 2
        %v1641 = vsel %vm1432, %v1638, %v1640
        %v1642 = vrot.slane %v1046, 2
        %v1643 = vrot.slane %v805, 2
        %v1644 = vsel %vm1432, %v1642, %v1643
        %v1645 = vrot.slane %v807, 2
        %v1646 = vsel %vm1432, %v1643, %v1645
        %v1647 = vrot.slane %v809, 2
        %v1648 = vsel %vm1432, %v1645, %v1647
        %v1649 = vrot.slane %v1078, 2
        %v1650 = vsel %vm1432, %v1647, %v1649
        %v1651 = vrot.slane %v1047, 2
        %v1652 = vrot.slane %v812, 2
        %v1653 = vsel %vm1432, %v1651, %v1652
        %v1654 = vrot.slane %v814, 2
        %v1655 = vsel %vm1432, %v1652, %v1654
        %v1656 = vrot.slane %v816, 2
        %v1657 = vsel %vm1432, %v1654, %v1656
        %v1658 = vrot.slane %v1079, 2
        %v1659 = vsel %vm1432, %v1656, %v1658
        %v1660 = vrot.slane %v1048, 2
        %v1661 = vrot.slane %v819, 2
        %v1662 = vsel %vm1432, %v1660, %v1661
        %v1663 = vrot.slane %v821, 2
        %v1664 = vsel %vm1432, %v1661, %v1663
        %v1665 = vrot.slane %v823, 2
        %v1666 = vsel %vm1432, %v1663, %v1665
        %v1667 = vrot.slane %v1080, 2
        %v1668 = vsel %vm1432, %v1665, %v1667
        %v1669 = vrot.slane %v1049, 2
        %v1670 = vrot.slane %v826, 2
        %v1671 = vsel %vm1432, %v1669, %v1670
        %v1672 = vrot.slane %v828, 2
        %v1673 = vsel %vm1432, %v1670, %v1672
        %v1674 = vrot.slane %v830, 2
        %v1675 = vsel %vm1432, %v1672, %v1674
        %v1676 = vrot.slane %v1081, 2
        %v1677 = vsel %vm1432, %v1674, %v1676
        %v1678 = vrot.slane %v1050, 2
        %v1679 = vrot.slane %v833, 2
        %v1680 = vsel %vm1432, %v1678, %v1679
        %v1681 = vrot.slane %v835, 2
        %v1682 = vsel %vm1432, %v1679, %v1681
        %v1683 = vrot.slane %v837, 2
        %v1684 = vsel %vm1432, %v1681, %v1683
        %v1685 = vrot.slane %v1082, 2
        %v1686 = vsel %vm1432, %v1683, %v1685
        %v1687 = vrot.slane %v1051, 2
        %v1688 = vrot.slane %v840, 2
        %v1689 = vsel %vm1432, %v1687, %v1688
        %v1690 = vrot.slane %v842, 2
        %v1691 = vsel %vm1432, %v1688, %v1690
        %v1692 = vrot.slane %v844, 2
        %v1693 = vsel %vm1432, %v1690, %v1692
        %v1694 = vrot.slane %v1083, 2
        %v1695 = vsel %vm1432, %v1692, %v1694
        %v1696 = vrot.slane %v1052, 2
        %v1697 = vrot.slane %v847, 2
        %v1698 = vsel %vm1432, %v1696, %v1697
        %v1699 = vrot.slane %v849, 2
        %v1700 = vsel %vm1432, %v1697, %v1699
        %v1701 = vrot.slane %v851, 2
        %v1702 = vsel %vm1432, %v1699, %v1701
        %v1703 = vrot.slane %v1084, 2
        %v1704 = vsel %vm1432, %v1701, %v1703
        %v1705 = vrot.slane %v1053, 2
        %v1706 = vrot.slane %v854, 2
        %v1707 = vsel %vm1432, %v1705, %v1706
        %v1708 = vrot.slane %v856, 2
        %v1709 = vsel %vm1432, %v1706, %v1708
        %v1710 = vrot.slane %v858, 2
        %v1711 = vsel %vm1432, %v1708, %v1710
        %v1712 = vrot.slane %v1085, 2
        %v1713 = vsel %vm1432, %v1710, %v1712
        %v1716 = vrot.slane %v1054, 1
        %v1717 = vrot.slane %v861, 1
        %v1718 = vsel %vm1150, %v1716, %v1717
        %v1719 = vrot.slane %v863, 1
        %v1720 = vsel %vm1150, %v1717, %v1719
        %v1721 = vrot.slane %v865, 1
        %v1722 = vsel %vm1150, %v1719, %v1721
        %v1723 = vrot.slane %v1086, 1
        %v1724 = vsel %vm1150, %v1721, %v1723
        %v1725 = vrot.slane %v1054, 2
        %v1726 = vrot.slane %v861, 2
        %v1727 = vsel %vm1432, %v1725, %v1726
        %v1728 = vrot.slane %v863, 2
        %v1729 = vsel %vm1432, %v1726, %v1728
        %v1730 = vrot.slane %v865, 2
        %v1731 = vsel %vm1432, %v1728, %v1730
        %v1732 = vrot.slane %v1086, 2
        %v1733 = vsel %vm1432, %v1730, %v1732
        %1734 = vrot.lane.b32.xlu0 %v1152, 1
        %v1735 = vpop.permute.xlu0 %1734
        %1736 = vrot.lane.b32.xlu0 %v1155, 1
        %v1737 = vpop.permute.xlu0 %1736
        %1738 = vrot.lane.b32.xlu0 %v1157, 1
        %v1739 = vpop.permute.xlu0 %1738
        %1740 = vrot.lane.b32.xlu0 %v1159, 1
        %v1741 = vpop.permute.xlu0 %1740
        %1742 = vrot.lane.b32.xlu0 %v1161, 1
        %v1743 = vpop.permute.xlu0 %1742
        %1744 = vrot.lane.b32.xlu0 %v1164, 1
        %v1745 = vpop.permute.xlu0 %1744
        %1746 = vrot.lane.b32.xlu0 %v1166, 1
        %v1747 = vpop.permute.xlu0 %1746
        %1748 = vrot.lane.b32.xlu0 %v1168, 1
        %v1749 = vpop.permute.xlu0 %1748
        %1750 = vrot.lane.b32.xlu0 %v1170, 1
        %v1751 = vpop.permute.xlu0 %1750
        %1752 = vrot.lane.b32.xlu0 %v1173, 1
        %v1753 = vpop.permute.xlu0 %1752
        %1754 = vrot.lane.b32.xlu0 %v1175, 1
        %v1755 = vpop.permute.xlu0 %1754
        %1756 = vrot.lane.b32.xlu0 %v1177, 1
        %v1757 = vpop.permute.xlu0 %1756
        %1758 = vrot.lane.b32.xlu0 %v1179, 1
        %v1759 = vpop.permute.xlu0 %1758
        %1760 = vrot.lane.b32.xlu0 %v1182, 1
        %v1761 = vpop.permute.xlu0 %1760
        %1762 = vrot.lane.b32.xlu0 %v1184, 1
        %v1763 = vpop.permute.xlu0 %1762
        %1764 = vrot.lane.b32.xlu0 %v1186, 1
        %v1765 = vpop.permute.xlu0 %1764
        %1766 = vrot.lane.b32.xlu0 %v1188, 1
        %v1767 = vpop.permute.xlu0 %1766
        %1768 = vrot.lane.b32.xlu0 %v1191, 1
        %v1769 = vpop.permute.xlu0 %1768
        %1770 = vrot.lane.b32.xlu0 %v1193, 1
        %v1771 = vpop.permute.xlu0 %1770
        %1772 = vrot.lane.b32.xlu0 %v1195, 1
        %v1773 = vpop.permute.xlu0 %1772
        %1774 = vrot.lane.b32.xlu0 %v1197, 1
        %v1775 = vpop.permute.xlu0 %1774
        %1776 = vrot.lane.b32.xlu0 %v1200, 1
        %v1777 = vpop.permute.xlu0 %1776
        %1778 = vrot.lane.b32.xlu0 %v1202, 1
        %v1779 = vpop.permute.xlu0 %1778
        %1780 = vrot.lane.b32.xlu0 %v1204, 1
        %v1781 = vpop.permute.xlu0 %1780
        %1782 = vrot.lane.b32.xlu0 %v1206, 1
        %v1783 = vpop.permute.xlu0 %1782
        %1784 = vrot.lane.b32.xlu0 %v1209, 1
        %v1785 = vpop.permute.xlu0 %1784
        %1786 = vrot.lane.b32.xlu0 %v1211, 1
        %v1787 = vpop.permute.xlu0 %1786
        %1788 = vrot.lane.b32.xlu0 %v1213, 1
        %v1789 = vpop.permute.xlu0 %1788
        %1790 = vrot.lane.b32.xlu0 %v1215, 1
        %v1791 = vpop.permute.xlu0 %1790
        %1792 = vrot.lane.b32.xlu0 %v1218, 1
        %v1793 = vpop.permute.xlu0 %1792
        %1794 = vrot.lane.b32.xlu0 %v1220, 1
        %v1795 = vpop.permute.xlu0 %1794
        %1796 = vrot.lane.b32.xlu0 %v1222, 1
        %v1797 = vpop.permute.xlu0 %1796
        %1798 = vrot.lane.b32.xlu0 %v1224, 1
        %v1799 = vpop.permute.xlu0 %1798
        %1800 = vrot.lane.b32.xlu0 %v1227, 1
        %v1801 = vpop.permute.xlu0 %1800
        %1802 = vrot.lane.b32.xlu0 %v1229, 1
        %v1803 = vpop.permute.xlu0 %1802
        %1804 = vrot.lane.b32.xlu0 %v1231, 1
        %v1805 = vpop.permute.xlu0 %1804
        %1806 = vrot.lane.b32.xlu0 %v1233, 1
        %v1807 = vpop.permute.xlu0 %1806
        %1808 = vrot.lane.b32.xlu0 %v1236, 1
        %v1809 = vpop.permute.xlu0 %1808
        %1810 = vrot.lane.b32.xlu0 %v1238, 1
        %v1811 = vpop.permute.xlu0 %1810
        %1812 = vrot.lane.b32.xlu0 %v1240, 1
        %v1813 = vpop.permute.xlu0 %1812
        %1814 = vrot.lane.b32.xlu0 %v1242, 1
        %v1815 = vpop.permute.xlu0 %1814
        %1816 = vrot.lane.b32.xlu0 %v1245, 1
        %v1817 = vpop.permute.xlu0 %1816
        %1818 = vrot.lane.b32.xlu0 %v1247, 1
        %v1819 = vpop.permute.xlu0 %1818
        %1820 = vrot.lane.b32.xlu0 %v1249, 1
        %v1821 = vpop.permute.xlu0 %1820
        %1822 = vrot.lane.b32.xlu0 %v1251, 1
        %v1823 = vpop.permute.xlu0 %1822
        %1824 = vrot.lane.b32.xlu0 %v1254, 1
        %v1825 = vpop.permute.xlu0 %1824
        %1826 = vrot.lane.b32.xlu0 %v1256, 1
        %v1827 = vpop.permute.xlu0 %1826
        %1828 = vrot.lane.b32.xlu0 %v1258, 1
        %v1829 = vpop.permute.xlu0 %1828
        %1830 = vrot.lane.b32.xlu0 %v1260, 1
        %v1831 = vpop.permute.xlu0 %1830
        %1832 = vrot.lane.b32.xlu0 %v1263, 1
        %v1833 = vpop.permute.xlu0 %1832
        %1834 = vrot.lane.b32.xlu0 %v1265, 1
        %v1835 = vpop.permute.xlu0 %1834
        %1836 = vrot.lane.b32.xlu0 %v1267, 1
        %v1837 = vpop.permute.xlu0 %1836
        %1838 = vrot.lane.b32.xlu0 %v1269, 1
        %v1839 = vpop.permute.xlu0 %1838
        %1840 = vrot.lane.b32.xlu0 %v1272, 1
        %v1841 = vpop.permute.xlu0 %1840
        %1842 = vrot.lane.b32.xlu0 %v1274, 1
        %v1843 = vpop.permute.xlu0 %1842
        %1844 = vrot.lane.b32.xlu0 %v1276, 1
        %v1845 = vpop.permute.xlu0 %1844
        %1846 = vrot.lane.b32.xlu0 %v1278, 1
        %v1847 = vpop.permute.xlu0 %1846
        %1848 = vrot.lane.b32.xlu0 %v1281, 1
        %v1849 = vpop.permute.xlu0 %1848
        %1850 = vrot.lane.b32.xlu0 %v1283, 1
        %v1851 = vpop.permute.xlu0 %1850
        %1852 = vrot.lane.b32.xlu0 %v1285, 1
        %v1853 = vpop.permute.xlu0 %1852
        %1854 = vrot.lane.b32.xlu0 %v1287, 1
        %v1855 = vpop.permute.xlu0 %1854
        %1856 = vrot.lane.b32.xlu0 %v1290, 1
        %v1857 = vpop.permute.xlu0 %1856
        %1858 = vrot.lane.b32.xlu0 %v1292, 1
        %v1859 = vpop.permute.xlu0 %1858
        %1860 = vrot.lane.b32.xlu0 %v1294, 1
        %v1861 = vpop.permute.xlu0 %1860
        %1862 = vrot.lane.b32.xlu0 %v1296, 1
        %v1863 = vpop.permute.xlu0 %1862
        %1864 = vrot.lane.b32.xlu0 %v1299, 1
        %v1865 = vpop.permute.xlu0 %1864
        %1866 = vrot.lane.b32.xlu0 %v1301, 1
        %v1867 = vpop.permute.xlu0 %1866
        %1868 = vrot.lane.b32.xlu0 %v1303, 1
        %v1869 = vpop.permute.xlu0 %1868
        %1870 = vrot.lane.b32.xlu0 %v1305, 1
        %v1871 = vpop.permute.xlu0 %1870
        %1872 = vrot.lane.b32.xlu0 %v1308, 1
        %v1873 = vpop.permute.xlu0 %1872
        %1874 = vrot.lane.b32.xlu0 %v1310, 1
        %v1875 = vpop.permute.xlu0 %1874
        %1876 = vrot.lane.b32.xlu0 %v1312, 1
        %v1877 = vpop.permute.xlu0 %1876
        %1878 = vrot.lane.b32.xlu0 %v1314, 1
        %v1879 = vpop.permute.xlu0 %1878
        %1880 = vrot.lane.b32.xlu0 %v1317, 1
        %v1881 = vpop.permute.xlu0 %1880
        %1882 = vrot.lane.b32.xlu0 %v1319, 1
        %v1883 = vpop.permute.xlu0 %1882
        %1884 = vrot.lane.b32.xlu0 %v1321, 1
        %v1885 = vpop.permute.xlu0 %1884
        %1886 = vrot.lane.b32.xlu0 %v1323, 1
        %v1887 = vpop.permute.xlu0 %1886
        %1888 = vrot.lane.b32.xlu0 %v1326, 1
        %v1889 = vpop.permute.xlu0 %1888
        %1890 = vrot.lane.b32.xlu0 %v1328, 1
        %v1891 = vpop.permute.xlu0 %1890
        %1892 = vrot.lane.b32.xlu0 %v1330, 1
        %v1893 = vpop.permute.xlu0 %1892
        %1894 = vrot.lane.b32.xlu0 %v1332, 1
        %v1895 = vpop.permute.xlu0 %1894
        %1896 = vrot.lane.b32.xlu0 %v1335, 1
        %v1897 = vpop.permute.xlu0 %1896
        %1898 = vrot.lane.b32.xlu0 %v1337, 1
        %v1899 = vpop.permute.xlu0 %1898
        %1900 = vrot.lane.b32.xlu0 %v1339, 1
        %v1901 = vpop.permute.xlu0 %1900
        %1902 = vrot.lane.b32.xlu0 %v1341, 1
        %v1903 = vpop.permute.xlu0 %1902
        %1904 = vrot.lane.b32.xlu0 %v1344, 1
        %v1905 = vpop.permute.xlu0 %1904
        %1906 = vrot.lane.b32.xlu0 %v1346, 1
        %v1907 = vpop.permute.xlu0 %1906
        %1908 = vrot.lane.b32.xlu0 %v1348, 1
        %v1909 = vpop.permute.xlu0 %1908
        %1910 = vrot.lane.b32.xlu0 %v1350, 1
        %v1911 = vpop.permute.xlu0 %1910
        %1912 = vrot.lane.b32.xlu0 %v1353, 1
        %v1913 = vpop.permute.xlu0 %1912
        %1914 = vrot.lane.b32.xlu0 %v1355, 1
        %v1915 = vpop.permute.xlu0 %1914
        %1916 = vrot.lane.b32.xlu0 %v1357, 1
        %v1917 = vpop.permute.xlu0 %1916
        %1918 = vrot.lane.b32.xlu0 %v1359, 1
        %v1919 = vpop.permute.xlu0 %1918
        %1920 = vrot.lane.b32.xlu0 %v1362, 1
        %v1921 = vpop.permute.xlu0 %1920
        %1922 = vrot.lane.b32.xlu0 %v1364, 1
        %v1923 = vpop.permute.xlu0 %1922
        %1924 = vrot.lane.b32.xlu0 %v1366, 1
        %v1925 = vpop.permute.xlu0 %1924
        %1926 = vrot.lane.b32.xlu0 %v1368, 1
        %v1927 = vpop.permute.xlu0 %1926
        %1928 = vrot.lane.b32.xlu0 %v1371, 1
        %v1929 = vpop.permute.xlu0 %1928
        %1930 = vrot.lane.b32.xlu0 %v1373, 1
        %v1931 = vpop.permute.xlu0 %1930
        %1932 = vrot.lane.b32.xlu0 %v1375, 1
        %v1933 = vpop.permute.xlu0 %1932
        %1934 = vrot.lane.b32.xlu0 %v1377, 1
        %v1935 = vpop.permute.xlu0 %1934
        %1936 = vrot.lane.b32.xlu0 %v1380, 1
        %v1937 = vpop.permute.xlu0 %1936
        %1938 = vrot.lane.b32.xlu0 %v1382, 1
        %v1939 = vpop.permute.xlu0 %1938
        %1940 = vrot.lane.b32.xlu0 %v1384, 1
        %v1941 = vpop.permute.xlu0 %1940
        %1942 = vrot.lane.b32.xlu0 %v1386, 1
        %v1943 = vpop.permute.xlu0 %1942
        %1944 = vrot.lane.b32.xlu0 %v1389, 1
        %v1945 = vpop.permute.xlu0 %1944
        %1946 = vrot.lane.b32.xlu0 %v1391, 1
        %v1947 = vpop.permute.xlu0 %1946
        %1948 = vrot.lane.b32.xlu0 %v1393, 1
        %v1949 = vpop.permute.xlu0 %1948
        %1950 = vrot.lane.b32.xlu0 %v1395, 1
        %v1951 = vpop.permute.xlu0 %1950
        %1952 = vrot.lane.b32.xlu0 %v1398, 1
        %v1953 = vpop.permute.xlu0 %1952
        %1954 = vrot.lane.b32.xlu0 %v1400, 1
        %v1955 = vpop.permute.xlu0 %1954
        %1956 = vrot.lane.b32.xlu0 %v1402, 1
        %v1957 = vpop.permute.xlu0 %1956
        %1958 = vrot.lane.b32.xlu0 %v1404, 1
        %v1959 = vpop.permute.xlu0 %1958
        %1960 = vrot.lane.b32.xlu0 %v1407, 1
        %v1961 = vpop.permute.xlu0 %1960
        %1962 = vrot.lane.b32.xlu0 %v1409, 1
        %v1963 = vpop.permute.xlu0 %1962
        %1964 = vrot.lane.b32.xlu0 %v1411, 1
        %v1965 = vpop.permute.xlu0 %1964
        %1966 = vrot.lane.b32.xlu0 %v1413, 1
        %v1967 = vpop.permute.xlu0 %1966
        %1968 = vrot.lane.b32.xlu0 %v1416, 1
        %v1969 = vpop.permute.xlu0 %1968
        %1970 = vrot.lane.b32.xlu0 %v1418, 1
        %v1971 = vpop.permute.xlu0 %1970
        %1972 = vrot.lane.b32.xlu0 %v1420, 1
        %v1973 = vpop.permute.xlu0 %1972
        %1974 = vrot.lane.b32.xlu0 %v1422, 1
        %v1975 = vpop.permute.xlu0 %1974
        %1976 = vrot.lane.b32.xlu0 %v1425, 1
        %v1977 = vpop.permute.xlu0 %1976
        %1978 = vrot.lane.b32.xlu0 %v1427, 1
        %v1979 = vpop.permute.xlu0 %1978
        %1980 = vrot.lane.b32.xlu0 %v1429, 1
        %v1981 = vpop.permute.xlu0 %1980
        %1982 = vrot.lane.b32.xlu0 %v1431, 1
        %v1983 = vpop.permute.xlu0 %1982
        %2109 = vrot.lane.b32.xlu0 %v1434, 2
        %v2110 = vpop.permute.xlu0 %2109
        %2111 = vrot.lane.b32.xlu0 %v1437, 2
        %v2112 = vpop.permute.xlu0 %2111
        %2113 = vrot.lane.b32.xlu0 %v1439, 2
        %v2114 = vpop.permute.xlu0 %2113
        %2115 = vrot.lane.b32.xlu0 %v1441, 2
        %v2116 = vpop.permute.xlu0 %2115
        %2117 = vrot.lane.b32.xlu0 %v1443, 2
        %v2118 = vpop.permute.xlu0 %2117
        %2119 = vrot.lane.b32.xlu0 %v1446, 2
        %v2120 = vpop.permute.xlu0 %2119
        %2121 = vrot.lane.b32.xlu0 %v1448, 2
        %v2122 = vpop.permute.xlu0 %2121
        %2123 = vrot.lane.b32.xlu0 %v1450, 2
        %v2124 = vpop.permute.xlu0 %2123
        %2125 = vrot.lane.b32.xlu0 %v1452, 2
        %v2126 = vpop.permute.xlu0 %2125
        %2127 = vrot.lane.b32.xlu0 %v1455, 2
        %v2128 = vpop.permute.xlu0 %2127
        %2129 = vrot.lane.b32.xlu0 %v1457, 2
        %v2130 = vpop.permute.xlu0 %2129
        %2131 = vrot.lane.b32.xlu0 %v1459, 2
        %v2132 = vpop.permute.xlu0 %2131
        %2133 = vrot.lane.b32.xlu0 %v1461, 2
        %v2134 = vpop.permute.xlu0 %2133
        %2135 = vrot.lane.b32.xlu0 %v1464, 2
        %v2136 = vpop.permute.xlu0 %2135
        %2137 = vrot.lane.b32.xlu0 %v1466, 2
        %v2138 = vpop.permute.xlu0 %2137
        %2139 = vrot.lane.b32.xlu0 %v1468, 2
        %v2140 = vpop.permute.xlu0 %2139
        %2141 = vrot.lane.b32.xlu0 %v1470, 2
        %v2142 = vpop.permute.xlu0 %2141
        %2143 = vrot.lane.b32.xlu0 %v1473, 2
        %v2144 = vpop.permute.xlu0 %2143
        %2145 = vrot.lane.b32.xlu0 %v1475, 2
        %v2146 = vpop.permute.xlu0 %2145
        %2147 = vrot.lane.b32.xlu0 %v1477, 2
        %v2148 = vpop.permute.xlu0 %2147
        %2149 = vrot.lane.b32.xlu0 %v1479, 2
        %v2150 = vpop.permute.xlu0 %2149
        %2151 = vrot.lane.b32.xlu0 %v1482, 2
        %v2152 = vpop.permute.xlu0 %2151
        %2153 = vrot.lane.b32.xlu0 %v1484, 2
        %v2154 = vpop.permute.xlu0 %2153
        %2155 = vrot.lane.b32.xlu0 %v1486, 2
        %v2156 = vpop.permute.xlu0 %2155
        %2157 = vrot.lane.b32.xlu0 %v1488, 2
        %v2158 = vpop.permute.xlu0 %2157
        %2159 = vrot.lane.b32.xlu0 %v1491, 2
        %v2160 = vpop.permute.xlu0 %2159
        %2161 = vrot.lane.b32.xlu0 %v1493, 2
        %v2162 = vpop.permute.xlu0 %2161
        %2163 = vrot.lane.b32.xlu0 %v1495, 2
        %v2164 = vpop.permute.xlu0 %2163
        %2165 = vrot.lane.b32.xlu0 %v1497, 2
        %v2166 = vpop.permute.xlu0 %2165
        %2167 = vrot.lane.b32.xlu0 %v1500, 2
        %v2168 = vpop.permute.xlu0 %2167
        %2169 = vrot.lane.b32.xlu0 %v1502, 2
        %v2170 = vpop.permute.xlu0 %2169
        %2171 = vrot.lane.b32.xlu0 %v1504, 2
        %v2172 = vpop.permute.xlu0 %2171
        %2173 = vrot.lane.b32.xlu0 %v1506, 2
        %v2174 = vpop.permute.xlu0 %2173
        %2175 = vrot.lane.b32.xlu0 %v1509, 2
        %v2176 = vpop.permute.xlu0 %2175
        %2177 = vrot.lane.b32.xlu0 %v1511, 2
        %v2178 = vpop.permute.xlu0 %2177
        %2179 = vrot.lane.b32.xlu0 %v1513, 2
        %v2180 = vpop.permute.xlu0 %2179
        %2181 = vrot.lane.b32.xlu0 %v1515, 2
        %v2182 = vpop.permute.xlu0 %2181
        %2183 = vrot.lane.b32.xlu0 %v1518, 2
        %v2184 = vpop.permute.xlu0 %2183
        %2185 = vrot.lane.b32.xlu0 %v1520, 2
        %v2186 = vpop.permute.xlu0 %2185
        %2187 = vrot.lane.b32.xlu0 %v1522, 2
        %v2188 = vpop.permute.xlu0 %2187
        %2189 = vrot.lane.b32.xlu0 %v1524, 2
        %v2190 = vpop.permute.xlu0 %2189
        %2191 = vrot.lane.b32.xlu0 %v1527, 2
        %v2192 = vpop.permute.xlu0 %2191
        %2193 = vrot.lane.b32.xlu0 %v1529, 2
        %v2194 = vpop.permute.xlu0 %2193
        %2195 = vrot.lane.b32.xlu0 %v1531, 2
        %v2196 = vpop.permute.xlu0 %2195
        %2197 = vrot.lane.b32.xlu0 %v1533, 2
        %v2198 = vpop.permute.xlu0 %2197
        %2199 = vrot.lane.b32.xlu0 %v1536, 2
        %v2200 = vpop.permute.xlu0 %2199
        %2201 = vrot.lane.b32.xlu0 %v1538, 2
        %v2202 = vpop.permute.xlu0 %2201
        %2203 = vrot.lane.b32.xlu0 %v1540, 2
        %v2204 = vpop.permute.xlu0 %2203
        %2205 = vrot.lane.b32.xlu0 %v1542, 2
        %v2206 = vpop.permute.xlu0 %2205
        %2207 = vrot.lane.b32.xlu0 %v1545, 2
        %v2208 = vpop.permute.xlu0 %2207
        %2209 = vrot.lane.b32.xlu0 %v1547, 2
        %v2210 = vpop.permute.xlu0 %2209
        %2211 = vrot.lane.b32.xlu0 %v1549, 2
        %v2212 = vpop.permute.xlu0 %2211
        %2213 = vrot.lane.b32.xlu0 %v1551, 2
        %v2214 = vpop.permute.xlu0 %2213
        %2215 = vrot.lane.b32.xlu0 %v1554, 2
        %v2216 = vpop.permute.xlu0 %2215
        %2217 = vrot.lane.b32.xlu0 %v1556, 2
        %v2218 = vpop.permute.xlu0 %2217
        %2219 = vrot.lane.b32.xlu0 %v1558, 2
        %v2220 = vpop.permute.xlu0 %2219
        %2221 = vrot.lane.b32.xlu0 %v1560, 2
        %v2222 = vpop.permute.xlu0 %2221
        %2223 = vrot.lane.b32.xlu0 %v1563, 2
        %v2224 = vpop.permute.xlu0 %2223
        %2225 = vrot.lane.b32.xlu0 %v1565, 2
        %v2226 = vpop.permute.xlu0 %2225
        %2227 = vrot.lane.b32.xlu0 %v1567, 2
        %v2228 = vpop.permute.xlu0 %2227
        %2229 = vrot.lane.b32.xlu0 %v1569, 2
        %v2230 = vpop.permute.xlu0 %2229
        %2231 = vrot.lane.b32.xlu0 %v1572, 2
        %v2232 = vpop.permute.xlu0 %2231
        %2233 = vrot.lane.b32.xlu0 %v1574, 2
        %v2234 = vpop.permute.xlu0 %2233
        %2235 = vrot.lane.b32.xlu0 %v1576, 2
        %v2236 = vpop.permute.xlu0 %2235
        %2237 = vrot.lane.b32.xlu0 %v1578, 2
        %v2238 = vpop.permute.xlu0 %2237
        %2239 = vrot.lane.b32.xlu0 %v1581, 2
        %v2240 = vpop.permute.xlu0 %2239
        %2241 = vrot.lane.b32.xlu0 %v1583, 2
        %v2242 = vpop.permute.xlu0 %2241
        %2243 = vrot.lane.b32.xlu0 %v1585, 2
        %v2244 = vpop.permute.xlu0 %2243
        %2245 = vrot.lane.b32.xlu0 %v1587, 2
        %v2246 = vpop.permute.xlu0 %2245
        %2247 = vrot.lane.b32.xlu0 %v1590, 2
        %v2248 = vpop.permute.xlu0 %2247
        %2249 = vrot.lane.b32.xlu0 %v1592, 2
        %v2250 = vpop.permute.xlu0 %2249
        %2251 = vrot.lane.b32.xlu0 %v1594, 2
        %v2252 = vpop.permute.xlu0 %2251
        %2253 = vrot.lane.b32.xlu0 %v1596, 2
        %v2254 = vpop.permute.xlu0 %2253
        %2255 = vrot.lane.b32.xlu0 %v1599, 2
        %v2256 = vpop.permute.xlu0 %2255
        %2257 = vrot.lane.b32.xlu0 %v1601, 2
        %v2258 = vpop.permute.xlu0 %2257
        %2259 = vrot.lane.b32.xlu0 %v1603, 2
        %v2260 = vpop.permute.xlu0 %2259
        %2261 = vrot.lane.b32.xlu0 %v1605, 2
        %v2262 = vpop.permute.xlu0 %2261
        %2263 = vrot.lane.b32.xlu0 %v1608, 2
        %v2264 = vpop.permute.xlu0 %2263
        %2265 = vrot.lane.b32.xlu0 %v1610, 2
        %v2266 = vpop.permute.xlu0 %2265
        %2267 = vrot.lane.b32.xlu0 %v1612, 2
        %v2268 = vpop.permute.xlu0 %2267
        %2269 = vrot.lane.b32.xlu0 %v1614, 2
        %v2270 = vpop.permute.xlu0 %2269
        %2271 = vrot.lane.b32.xlu0 %v1617, 2
        %v2272 = vpop.permute.xlu0 %2271
        %2273 = vrot.lane.b32.xlu0 %v1619, 2
        %v2274 = vpop.permute.xlu0 %2273
        %2275 = vrot.lane.b32.xlu0 %v1621, 2
        %v2276 = vpop.permute.xlu0 %2275
        %2277 = vrot.lane.b32.xlu0 %v1623, 2
        %v2278 = vpop.permute.xlu0 %2277
        %2279 = vrot.lane.b32.xlu0 %v1626, 2
        %v2280 = vpop.permute.xlu0 %2279
        %2281 = vrot.lane.b32.xlu0 %v1628, 2
        %v2282 = vpop.permute.xlu0 %2281
        %2283 = vrot.lane.b32.xlu0 %v1630, 2
        %v2284 = vpop.permute.xlu0 %2283
        %2285 = vrot.lane.b32.xlu0 %v1632, 2
        %v2286 = vpop.permute.xlu0 %2285
        %2287 = vrot.lane.b32.xlu0 %v1635, 2
        %v2288 = vpop.permute.xlu0 %2287
        %2289 = vrot.lane.b32.xlu0 %v1637, 2
        %v2290 = vpop.permute.xlu0 %2289
        %2291 = vrot.lane.b32.xlu0 %v1639, 2
        %v2292 = vpop.permute.xlu0 %2291
        %2293 = vrot.lane.b32.xlu0 %v1641, 2
        %v2294 = vpop.permute.xlu0 %2293
        %2295 = vrot.lane.b32.xlu0 %v1644, 2
        %v2296 = vpop.permute.xlu0 %2295
        %2297 = vrot.lane.b32.xlu0 %v1646, 2
        %v2298 = vpop.permute.xlu0 %2297
        %2299 = vrot.lane.b32.xlu0 %v1648, 2
        %v2300 = vpop.permute.xlu0 %2299
        %2301 = vrot.lane.b32.xlu0 %v1650, 2
        %v2302 = vpop.permute.xlu0 %2301
        %2303 = vrot.lane.b32.xlu0 %v1653, 2
        %v2304 = vpop.permute.xlu0 %2303
        %2305 = vrot.lane.b32.xlu0 %v1655, 2
        %v2306 = vpop.permute.xlu0 %2305
        %2307 = vrot.lane.b32.xlu0 %v1657, 2
        %v2308 = vpop.permute.xlu0 %2307
        %2309 = vrot.lane.b32.xlu0 %v1659, 2
        %v2310 = vpop.permute.xlu0 %2309
        %2311 = vrot.lane.b32.xlu0 %v1662, 2
        %v2312 = vpop.permute.xlu0 %2311
        %2313 = vrot.lane.b32.xlu0 %v1664, 2
        %v2314 = vpop.permute.xlu0 %2313
        %2315 = vrot.lane.b32.xlu0 %v1666, 2
        %v2316 = vpop.permute.xlu0 %2315
        %2317 = vrot.lane.b32.xlu0 %v1668, 2
        %v2318 = vpop.permute.xlu0 %2317
        %2319 = vrot.lane.b32.xlu0 %v1671, 2
        %v2320 = vpop.permute.xlu0 %2319
        %2321 = vrot.lane.b32.xlu0 %v1673, 2
        %v2322 = vpop.permute.xlu0 %2321
        %2323 = vrot.lane.b32.xlu0 %v1675, 2
        %v2324 = vpop.permute.xlu0 %2323
        %2325 = vrot.lane.b32.xlu0 %v1677, 2
        %v2326 = vpop.permute.xlu0 %2325
        %2327 = vrot.lane.b32.xlu0 %v1680, 2
        %v2328 = vpop.permute.xlu0 %2327
        %2329 = vrot.lane.b32.xlu0 %v1682, 2
        %v2330 = vpop.permute.xlu0 %2329
        %2331 = vrot.lane.b32.xlu0 %v1684, 2
        %v2332 = vpop.permute.xlu0 %2331
        %2333 = vrot.lane.b32.xlu0 %v1686, 2
        %v2334 = vpop.permute.xlu0 %2333
        %2335 = vrot.lane.b32.xlu0 %v1689, 2
        %v2336 = vpop.permute.xlu0 %2335
        %2337 = vrot.lane.b32.xlu0 %v1691, 2
        %v2338 = vpop.permute.xlu0 %2337
        %2339 = vrot.lane.b32.xlu0 %v1693, 2
        %v2340 = vpop.permute.xlu0 %2339
        %2341 = vrot.lane.b32.xlu0 %v1695, 2
        %v2342 = vpop.permute.xlu0 %2341
        %2343 = vrot.lane.b32.xlu0 %v1698, 2
        %v2344 = vpop.permute.xlu0 %2343
        %2345 = vrot.lane.b32.xlu0 %v1700, 2
        %v2346 = vpop.permute.xlu0 %2345
        %2347 = vrot.lane.b32.xlu0 %v1702, 2
        %v2348 = vpop.permute.xlu0 %2347
        %2349 = vrot.lane.b32.xlu0 %v1704, 2
        %v2350 = vpop.permute.xlu0 %2349
        %2351 = vrot.lane.b32.xlu0 %v1707, 2
        %v2352 = vpop.permute.xlu0 %2351
        %2353 = vrot.lane.b32.xlu0 %v1709, 2
        %v2354 = vpop.permute.xlu0 %2353
        %2355 = vrot.lane.b32.xlu0 %v1711, 2
        %v2356 = vpop.permute.xlu0 %2355
        %2357 = vrot.lane.b32.xlu0 %v1713, 2
        %v2358 = vpop.permute.xlu0 %2357
        %2484 = vrot.lane.b32.xlu0 %v1023, 3
        %v2485 = vpop.permute.xlu0 %2484
        %2486 = vrot.lane.b32.xlu0 %v644, 3
        %v2487 = vpop.permute.xlu0 %2486
        %2488 = vrot.lane.b32.xlu0 %v646, 3
        %v2489 = vpop.permute.xlu0 %2488
        %2490 = vrot.lane.b32.xlu0 %v648, 3
        %v2491 = vpop.permute.xlu0 %2490
        %2492 = vrot.lane.b32.xlu0 %v1024, 3
        %v2493 = vpop.permute.xlu0 %2492
        %2494 = vrot.lane.b32.xlu0 %v651, 3
        %v2495 = vpop.permute.xlu0 %2494
        %2496 = vrot.lane.b32.xlu0 %v653, 3
        %v2497 = vpop.permute.xlu0 %2496
        %2498 = vrot.lane.b32.xlu0 %v655, 3
        %v2499 = vpop.permute.xlu0 %2498
        %2500 = vrot.lane.b32.xlu0 %v1025, 3
        %v2501 = vpop.permute.xlu0 %2500
        %2502 = vrot.lane.b32.xlu0 %v658, 3
        %v2503 = vpop.permute.xlu0 %2502
        %2504 = vrot.lane.b32.xlu0 %v660, 3
        %v2505 = vpop.permute.xlu0 %2504
        %2506 = vrot.lane.b32.xlu0 %v662, 3
        %v2507 = vpop.permute.xlu0 %2506
        %2508 = vrot.lane.b32.xlu0 %v1026, 3
        %v2509 = vpop.permute.xlu0 %2508
        %2510 = vrot.lane.b32.xlu0 %v665, 3
        %v2511 = vpop.permute.xlu0 %2510
        %2512 = vrot.lane.b32.xlu0 %v667, 3
        %v2513 = vpop.permute.xlu0 %2512
        %2514 = vrot.lane.b32.xlu0 %v669, 3
        %v2515 = vpop.permute.xlu0 %2514
        %2516 = vrot.lane.b32.xlu0 %v1027, 3
        %v2517 = vpop.permute.xlu0 %2516
        %2518 = vrot.lane.b32.xlu0 %v672, 3
        %v2519 = vpop.permute.xlu0 %2518
        %2520 = vrot.lane.b32.xlu0 %v674, 3
        %v2521 = vpop.permute.xlu0 %2520
        %2522 = vrot.lane.b32.xlu0 %v676, 3
        %v2523 = vpop.permute.xlu0 %2522
        %2524 = vrot.lane.b32.xlu0 %v1028, 3
        %v2525 = vpop.permute.xlu0 %2524
        %2526 = vrot.lane.b32.xlu0 %v679, 3
        %v2527 = vpop.permute.xlu0 %2526
        %2528 = vrot.lane.b32.xlu0 %v681, 3
        %v2529 = vpop.permute.xlu0 %2528
        %2530 = vrot.lane.b32.xlu0 %v683, 3
        %v2531 = vpop.permute.xlu0 %2530
        %2532 = vrot.lane.b32.xlu0 %v1029, 3
        %v2533 = vpop.permute.xlu0 %2532
        %2534 = vrot.lane.b32.xlu0 %v686, 3
        %v2535 = vpop.permute.xlu0 %2534
        %2536 = vrot.lane.b32.xlu0 %v688, 3
        %v2537 = vpop.permute.xlu0 %2536
        %2538 = vrot.lane.b32.xlu0 %v690, 3
        %v2539 = vpop.permute.xlu0 %2538
        %2540 = vrot.lane.b32.xlu0 %v1030, 3
        %v2541 = vpop.permute.xlu0 %2540
        %2542 = vrot.lane.b32.xlu0 %v693, 3
        %v2543 = vpop.permute.xlu0 %2542
        %2544 = vrot.lane.b32.xlu0 %v695, 3
        %v2545 = vpop.permute.xlu0 %2544
        %2546 = vrot.lane.b32.xlu0 %v697, 3
        %v2547 = vpop.permute.xlu0 %2546
        %2548 = vrot.lane.b32.xlu0 %v1031, 3
        %v2549 = vpop.permute.xlu0 %2548
        %2550 = vrot.lane.b32.xlu0 %v700, 3
        %v2551 = vpop.permute.xlu0 %2550
        %2552 = vrot.lane.b32.xlu0 %v702, 3
        %v2553 = vpop.permute.xlu0 %2552
        %2554 = vrot.lane.b32.xlu0 %v704, 3
        %v2555 = vpop.permute.xlu0 %2554
        %2556 = vrot.lane.b32.xlu0 %v1032, 3
        %v2557 = vpop.permute.xlu0 %2556
        %2558 = vrot.lane.b32.xlu0 %v707, 3
        %v2559 = vpop.permute.xlu0 %2558
        %2560 = vrot.lane.b32.xlu0 %v709, 3
        %v2561 = vpop.permute.xlu0 %2560
        %2562 = vrot.lane.b32.xlu0 %v711, 3
        %v2563 = vpop.permute.xlu0 %2562
        %2564 = vrot.lane.b32.xlu0 %v1033, 3
        %v2565 = vpop.permute.xlu0 %2564
        %2566 = vrot.lane.b32.xlu0 %v714, 3
        %v2567 = vpop.permute.xlu0 %2566
        %2568 = vrot.lane.b32.xlu0 %v716, 3
        %v2569 = vpop.permute.xlu0 %2568
        %2570 = vrot.lane.b32.xlu0 %v718, 3
        %v2571 = vpop.permute.xlu0 %2570
        %2572 = vrot.lane.b32.xlu0 %v1034, 3
        %v2573 = vpop.permute.xlu0 %2572
        %2574 = vrot.lane.b32.xlu0 %v721, 3
        %v2575 = vpop.permute.xlu0 %2574
        %2576 = vrot.lane.b32.xlu0 %v723, 3
        %v2577 = vpop.permute.xlu0 %2576
        %2578 = vrot.lane.b32.xlu0 %v725, 3
        %v2579 = vpop.permute.xlu0 %2578
        %2580 = vrot.lane.b32.xlu0 %v1035, 3
        %v2581 = vpop.permute.xlu0 %2580
        %2582 = vrot.lane.b32.xlu0 %v728, 3
        %v2583 = vpop.permute.xlu0 %2582
        %2584 = vrot.lane.b32.xlu0 %v730, 3
        %v2585 = vpop.permute.xlu0 %2584
        %2586 = vrot.lane.b32.xlu0 %v732, 3
        %v2587 = vpop.permute.xlu0 %2586
        %2588 = vrot.lane.b32.xlu0 %v1036, 3
        %v2589 = vpop.permute.xlu0 %2588
        %2590 = vrot.lane.b32.xlu0 %v735, 3
        %v2591 = vpop.permute.xlu0 %2590
        %2592 = vrot.lane.b32.xlu0 %v737, 3
        %v2593 = vpop.permute.xlu0 %2592
        %2594 = vrot.lane.b32.xlu0 %v739, 3
        %v2595 = vpop.permute.xlu0 %2594
        %2596 = vrot.lane.b32.xlu0 %v1037, 3
        %v2597 = vpop.permute.xlu0 %2596
        %2598 = vrot.lane.b32.xlu0 %v742, 3
        %v2599 = vpop.permute.xlu0 %2598
        %2600 = vrot.lane.b32.xlu0 %v744, 3
        %v2601 = vpop.permute.xlu0 %2600
        %2602 = vrot.lane.b32.xlu0 %v746, 3
        %v2603 = vpop.permute.xlu0 %2602
        %2604 = vrot.lane.b32.xlu0 %v1038, 3
        %v2605 = vpop.permute.xlu0 %2604
        %2606 = vrot.lane.b32.xlu0 %v749, 3
        %v2607 = vpop.permute.xlu0 %2606
        %2608 = vrot.lane.b32.xlu0 %v751, 3
        %v2609 = vpop.permute.xlu0 %2608
        %2610 = vrot.lane.b32.xlu0 %v753, 3
        %v2611 = vpop.permute.xlu0 %2610
        %2612 = vrot.lane.b32.xlu0 %v1039, 3
        %v2613 = vpop.permute.xlu0 %2612
        %2614 = vrot.lane.b32.xlu0 %v756, 3
        %v2615 = vpop.permute.xlu0 %2614
        %2616 = vrot.lane.b32.xlu0 %v758, 3
        %v2617 = vpop.permute.xlu0 %2616
        %2618 = vrot.lane.b32.xlu0 %v760, 3
        %v2619 = vpop.permute.xlu0 %2618
        %2620 = vrot.lane.b32.xlu0 %v1040, 3
        %v2621 = vpop.permute.xlu0 %2620
        %2622 = vrot.lane.b32.xlu0 %v763, 3
        %v2623 = vpop.permute.xlu0 %2622
        %2624 = vrot.lane.b32.xlu0 %v765, 3
        %v2625 = vpop.permute.xlu0 %2624
        %2626 = vrot.lane.b32.xlu0 %v767, 3
        %v2627 = vpop.permute.xlu0 %2626
        %2628 = vrot.lane.b32.xlu0 %v1041, 3
        %v2629 = vpop.permute.xlu0 %2628
        %2630 = vrot.lane.b32.xlu0 %v770, 3
        %v2631 = vpop.permute.xlu0 %2630
        %2632 = vrot.lane.b32.xlu0 %v772, 3
        %v2633 = vpop.permute.xlu0 %2632
        %2634 = vrot.lane.b32.xlu0 %v774, 3
        %v2635 = vpop.permute.xlu0 %2634
        %2636 = vrot.lane.b32.xlu0 %v1042, 3
        %v2637 = vpop.permute.xlu0 %2636
        %2638 = vrot.lane.b32.xlu0 %v777, 3
        %v2639 = vpop.permute.xlu0 %2638
        %2640 = vrot.lane.b32.xlu0 %v779, 3
        %v2641 = vpop.permute.xlu0 %2640
        %2642 = vrot.lane.b32.xlu0 %v781, 3
        %v2643 = vpop.permute.xlu0 %2642
        %2644 = vrot.lane.b32.xlu0 %v1043, 3
        %v2645 = vpop.permute.xlu0 %2644
        %2646 = vrot.lane.b32.xlu0 %v784, 3
        %v2647 = vpop.permute.xlu0 %2646
        %2648 = vrot.lane.b32.xlu0 %v786, 3
        %v2649 = vpop.permute.xlu0 %2648
        %2650 = vrot.lane.b32.xlu0 %v788, 3
        %v2651 = vpop.permute.xlu0 %2650
        %2652 = vrot.lane.b32.xlu0 %v1044, 3
        %v2653 = vpop.permute.xlu0 %2652
        %2654 = vrot.lane.b32.xlu0 %v791, 3
        %v2655 = vpop.permute.xlu0 %2654
        %2656 = vrot.lane.b32.xlu0 %v793, 3
        %v2657 = vpop.permute.xlu0 %2656
        %2658 = vrot.lane.b32.xlu0 %v795, 3
        %v2659 = vpop.permute.xlu0 %2658
        %2660 = vrot.lane.b32.xlu0 %v1045, 3
        %v2661 = vpop.permute.xlu0 %2660
        %2662 = vrot.lane.b32.xlu0 %v798, 3
        %v2663 = vpop.permute.xlu0 %2662
        %2664 = vrot.lane.b32.xlu0 %v800, 3
        %v2665 = vpop.permute.xlu0 %2664
        %2666 = vrot.lane.b32.xlu0 %v802, 3
        %v2667 = vpop.permute.xlu0 %2666
        %2668 = vrot.lane.b32.xlu0 %v1046, 3
        %v2669 = vpop.permute.xlu0 %2668
        %2670 = vrot.lane.b32.xlu0 %v805, 3
        %v2671 = vpop.permute.xlu0 %2670
        %2672 = vrot.lane.b32.xlu0 %v807, 3
        %v2673 = vpop.permute.xlu0 %2672
        %2674 = vrot.lane.b32.xlu0 %v809, 3
        %v2675 = vpop.permute.xlu0 %2674
        %2676 = vrot.lane.b32.xlu0 %v1047, 3
        %v2677 = vpop.permute.xlu0 %2676
        %2678 = vrot.lane.b32.xlu0 %v812, 3
        %v2679 = vpop.permute.xlu0 %2678
        %2680 = vrot.lane.b32.xlu0 %v814, 3
        %v2681 = vpop.permute.xlu0 %2680
        %2682 = vrot.lane.b32.xlu0 %v816, 3
        %v2683 = vpop.permute.xlu0 %2682
        %2684 = vrot.lane.b32.xlu0 %v1048, 3
        %v2685 = vpop.permute.xlu0 %2684
        %2686 = vrot.lane.b32.xlu0 %v819, 3
        %v2687 = vpop.permute.xlu0 %2686
        %2688 = vrot.lane.b32.xlu0 %v821, 3
        %v2689 = vpop.permute.xlu0 %2688
        %2690 = vrot.lane.b32.xlu0 %v823, 3
        %v2691 = vpop.permute.xlu0 %2690
        %2692 = vrot.lane.b32.xlu0 %v1049, 3
        %v2693 = vpop.permute.xlu0 %2692
        %2694 = vrot.lane.b32.xlu0 %v826, 3
        %v2695 = vpop.permute.xlu0 %2694
        %2696 = vrot.lane.b32.xlu0 %v828, 3
        %v2697 = vpop.permute.xlu0 %2696
        %2698 = vrot.lane.b32.xlu0 %v830, 3
        %v2699 = vpop.permute.xlu0 %2698
        %2700 = vrot.lane.b32.xlu0 %v1050, 3
        %v2701 = vpop.permute.xlu0 %2700
        %2702 = vrot.lane.b32.xlu0 %v833, 3
        %v2703 = vpop.permute.xlu0 %2702
        %2704 = vrot.lane.b32.xlu0 %v835, 3
        %v2705 = vpop.permute.xlu0 %2704
        %2706 = vrot.lane.b32.xlu0 %v837, 3
        %v2707 = vpop.permute.xlu0 %2706
        %2708 = vrot.lane.b32.xlu0 %v1051, 3
        %v2709 = vpop.permute.xlu0 %2708
        %2710 = vrot.lane.b32.xlu0 %v840, 3
        %v2711 = vpop.permute.xlu0 %2710
        %2712 = vrot.lane.b32.xlu0 %v842, 3
        %v2713 = vpop.permute.xlu0 %2712
        %2714 = vrot.lane.b32.xlu0 %v844, 3
        %v2715 = vpop.permute.xlu0 %2714
        %2716 = vrot.lane.b32.xlu0 %v1052, 3
        %v2717 = vpop.permute.xlu0 %2716
        %2718 = vrot.lane.b32.xlu0 %v847, 3
        %v2719 = vpop.permute.xlu0 %2718
        %2720 = vrot.lane.b32.xlu0 %v849, 3
        %v2721 = vpop.permute.xlu0 %2720
        %2722 = vrot.lane.b32.xlu0 %v851, 3
        %v2723 = vpop.permute.xlu0 %2722
        %2724 = vrot.lane.b32.xlu0 %v1053, 3
        %v2725 = vpop.permute.xlu0 %2724
        %2726 = vrot.lane.b32.xlu0 %v854, 3
        %v2727 = vpop.permute.xlu0 %2726
        %2728 = vrot.lane.b32.xlu0 %v856, 3
        %v2729 = vpop.permute.xlu0 %2728
        %2730 = vrot.lane.b32.xlu0 %v858, 3
        %v2731 = vpop.permute.xlu0 %2730
        %2732 = vrot.lane.b32.xlu0 %v1054, 3
        %v2733 = vpop.permute.xlu0 %2732
        %2734 = vrot.lane.b32.xlu0 %v861, 3
        %v2735 = vpop.permute.xlu0 %2734
        %2736 = vrot.lane.b32.xlu0 %v863, 3
        %v2737 = vpop.permute.xlu0 %2736
        %2738 = vrot.lane.b32.xlu0 %v865, 3
        %v2739 = vpop.permute.xlu0 %2738
        %2868 = vrot.lane.b32.xlu0 %v1155, 4
        %v2869 = vpop.permute.xlu0 %2868
        %2870 = vrot.lane.b32.xlu0 %v1157, 4
        %v2871 = vpop.permute.xlu0 %2870
        %2872 = vrot.lane.b32.xlu0 %v1159, 4
        %v2873 = vpop.permute.xlu0 %2872
        %2874 = vrot.lane.b32.xlu0 %v1161, 4
        %v2875 = vpop.permute.xlu0 %2874
        %2876 = vrot.lane.b32.xlu0 %v1164, 4
        %v2877 = vpop.permute.xlu0 %2876
        %2878 = vrot.lane.b32.xlu0 %v1166, 4
        %v2879 = vpop.permute.xlu0 %2878
        %2880 = vrot.lane.b32.xlu0 %v1168, 4
        %v2881 = vpop.permute.xlu0 %2880
        %2882 = vrot.lane.b32.xlu0 %v1170, 4
        %v2883 = vpop.permute.xlu0 %2882
        %2884 = vrot.lane.b32.xlu0 %v1173, 4
        %v2885 = vpop.permute.xlu0 %2884
        %2886 = vrot.lane.b32.xlu0 %v1175, 4
        %v2887 = vpop.permute.xlu0 %2886
        %2888 = vrot.lane.b32.xlu0 %v1177, 4
        %v2889 = vpop.permute.xlu0 %2888
        %2890 = vrot.lane.b32.xlu0 %v1179, 4
        %v2891 = vpop.permute.xlu0 %2890
        %2892 = vrot.lane.b32.xlu0 %v1182, 4
        %v2893 = vpop.permute.xlu0 %2892
        %2894 = vrot.lane.b32.xlu0 %v1184, 4
        %v2895 = vpop.permute.xlu0 %2894
        %2896 = vrot.lane.b32.xlu0 %v1186, 4
        %v2897 = vpop.permute.xlu0 %2896
        %2898 = vrot.lane.b32.xlu0 %v1188, 4
        %v2899 = vpop.permute.xlu0 %2898
        %2900 = vrot.lane.b32.xlu0 %v1191, 4
        %v2901 = vpop.permute.xlu0 %2900
        %2902 = vrot.lane.b32.xlu0 %v1193, 4
        %v2903 = vpop.permute.xlu0 %2902
        %2904 = vrot.lane.b32.xlu0 %v1195, 4
        %v2905 = vpop.permute.xlu0 %2904
        %2906 = vrot.lane.b32.xlu0 %v1197, 4
        %v2907 = vpop.permute.xlu0 %2906
        %2908 = vrot.lane.b32.xlu0 %v1200, 4
        %v2909 = vpop.permute.xlu0 %2908
        %2910 = vrot.lane.b32.xlu0 %v1202, 4
        %v2911 = vpop.permute.xlu0 %2910
        %2912 = vrot.lane.b32.xlu0 %v1204, 4
        %v2913 = vpop.permute.xlu0 %2912
        %2914 = vrot.lane.b32.xlu0 %v1206, 4
        %v2915 = vpop.permute.xlu0 %2914
        %2916 = vrot.lane.b32.xlu0 %v1209, 4
        %v2917 = vpop.permute.xlu0 %2916
        %2918 = vrot.lane.b32.xlu0 %v1211, 4
        %v2919 = vpop.permute.xlu0 %2918
        %2920 = vrot.lane.b32.xlu0 %v1213, 4
        %v2921 = vpop.permute.xlu0 %2920
        %2922 = vrot.lane.b32.xlu0 %v1215, 4
        %v2923 = vpop.permute.xlu0 %2922
        %2924 = vrot.lane.b32.xlu0 %v1218, 4
        %v2925 = vpop.permute.xlu0 %2924
        %2926 = vrot.lane.b32.xlu0 %v1220, 4
        %v2927 = vpop.permute.xlu0 %2926
        %2928 = vrot.lane.b32.xlu0 %v1222, 4
        %v2929 = vpop.permute.xlu0 %2928
        %2930 = vrot.lane.b32.xlu0 %v1224, 4
        %v2931 = vpop.permute.xlu0 %2930
        %2932 = vrot.lane.b32.xlu0 %v1227, 4
        %v2933 = vpop.permute.xlu0 %2932
        %2934 = vrot.lane.b32.xlu0 %v1229, 4
        %v2935 = vpop.permute.xlu0 %2934
        %2936 = vrot.lane.b32.xlu0 %v1231, 4
        %v2937 = vpop.permute.xlu0 %2936
        %2938 = vrot.lane.b32.xlu0 %v1233, 4
        %v2939 = vpop.permute.xlu0 %2938
        %2940 = vrot.lane.b32.xlu0 %v1236, 4
        %v2941 = vpop.permute.xlu0 %2940
        %2942 = vrot.lane.b32.xlu0 %v1238, 4
        %v2943 = vpop.permute.xlu0 %2942
        %2944 = vrot.lane.b32.xlu0 %v1240, 4
        %v2945 = vpop.permute.xlu0 %2944
        %2946 = vrot.lane.b32.xlu0 %v1242, 4
        %v2947 = vpop.permute.xlu0 %2946
        %2948 = vrot.lane.b32.xlu0 %v1245, 4
        %v2949 = vpop.permute.xlu0 %2948
        %2950 = vrot.lane.b32.xlu0 %v1247, 4
        %v2951 = vpop.permute.xlu0 %2950
        %2952 = vrot.lane.b32.xlu0 %v1249, 4
        %v2953 = vpop.permute.xlu0 %2952
        %2954 = vrot.lane.b32.xlu0 %v1251, 4
        %v2955 = vpop.permute.xlu0 %2954
        %2956 = vrot.lane.b32.xlu0 %v1254, 4
        %v2957 = vpop.permute.xlu0 %2956
        %2958 = vrot.lane.b32.xlu0 %v1256, 4
        %v2959 = vpop.permute.xlu0 %2958
        %2960 = vrot.lane.b32.xlu0 %v1258, 4
        %v2961 = vpop.permute.xlu0 %2960
        %2962 = vrot.lane.b32.xlu0 %v1260, 4
        %v2963 = vpop.permute.xlu0 %2962
        %2964 = vrot.lane.b32.xlu0 %v1263, 4
        %v2965 = vpop.permute.xlu0 %2964
        %2966 = vrot.lane.b32.xlu0 %v1265, 4
        %v2967 = vpop.permute.xlu0 %2966
        %2968 = vrot.lane.b32.xlu0 %v1267, 4
        %v2969 = vpop.permute.xlu0 %2968
        %2970 = vrot.lane.b32.xlu0 %v1269, 4
        %v2971 = vpop.permute.xlu0 %2970
        %2972 = vrot.lane.b32.xlu0 %v1272, 4
        %v2973 = vpop.permute.xlu0 %2972
        %2974 = vrot.lane.b32.xlu0 %v1274, 4
        %v2975 = vpop.permute.xlu0 %2974
        %2976 = vrot.lane.b32.xlu0 %v1276, 4
        %v2977 = vpop.permute.xlu0 %2976
        %2978 = vrot.lane.b32.xlu0 %v1278, 4
        %v2979 = vpop.permute.xlu0 %2978
        %2980 = vrot.lane.b32.xlu0 %v1281, 4
        %v2981 = vpop.permute.xlu0 %2980
        %2982 = vrot.lane.b32.xlu0 %v1283, 4
        %v2983 = vpop.permute.xlu0 %2982
        %2984 = vrot.lane.b32.xlu0 %v1285, 4
        %v2985 = vpop.permute.xlu0 %2984
        %2986 = vrot.lane.b32.xlu0 %v1287, 4
        %v2987 = vpop.permute.xlu0 %2986
        %2988 = vrot.lane.b32.xlu0 %v1290, 4
        %v2989 = vpop.permute.xlu0 %2988
        %2990 = vrot.lane.b32.xlu0 %v1292, 4
        %v2991 = vpop.permute.xlu0 %2990
        %2992 = vrot.lane.b32.xlu0 %v1294, 4
        %v2993 = vpop.permute.xlu0 %2992
        %2994 = vrot.lane.b32.xlu0 %v1296, 4
        %v2995 = vpop.permute.xlu0 %2994
        %2996 = vrot.lane.b32.xlu0 %v1299, 4
        %v2997 = vpop.permute.xlu0 %2996
        %2998 = vrot.lane.b32.xlu0 %v1301, 4
        %v2999 = vpop.permute.xlu0 %2998
        %3000 = vrot.lane.b32.xlu0 %v1303, 4
        %v3001 = vpop.permute.xlu0 %3000
        %3002 = vrot.lane.b32.xlu0 %v1305, 4
        %v3003 = vpop.permute.xlu0 %3002
        %3004 = vrot.lane.b32.xlu0 %v1308, 4
        %v3005 = vpop.permute.xlu0 %3004
        %3006 = vrot.lane.b32.xlu0 %v1310, 4
        %v3007 = vpop.permute.xlu0 %3006
        %3008 = vrot.lane.b32.xlu0 %v1312, 4
        %v3009 = vpop.permute.xlu0 %3008
        %3010 = vrot.lane.b32.xlu0 %v1314, 4
        %v3011 = vpop.permute.xlu0 %3010
        %3012 = vrot.lane.b32.xlu0 %v1317, 4
        %v3013 = vpop.permute.xlu0 %3012
        %3014 = vrot.lane.b32.xlu0 %v1319, 4
        %v3015 = vpop.permute.xlu0 %3014
        %3016 = vrot.lane.b32.xlu0 %v1321, 4
        %v3017 = vpop.permute.xlu0 %3016
        %3018 = vrot.lane.b32.xlu0 %v1323, 4
        %v3019 = vpop.permute.xlu0 %3018
        %3020 = vrot.lane.b32.xlu0 %v1326, 4
        %v3021 = vpop.permute.xlu0 %3020
        %3022 = vrot.lane.b32.xlu0 %v1328, 4
        %v3023 = vpop.permute.xlu0 %3022
        %3024 = vrot.lane.b32.xlu0 %v1330, 4
        %v3025 = vpop.permute.xlu0 %3024
        %3026 = vrot.lane.b32.xlu0 %v1332, 4
        %v3027 = vpop.permute.xlu0 %3026
        %3028 = vrot.lane.b32.xlu0 %v1335, 4
        %v3029 = vpop.permute.xlu0 %3028
        %3030 = vrot.lane.b32.xlu0 %v1337, 4
        %v3031 = vpop.permute.xlu0 %3030
        %3032 = vrot.lane.b32.xlu0 %v1339, 4
        %v3033 = vpop.permute.xlu0 %3032
        %3034 = vrot.lane.b32.xlu0 %v1341, 4
        %v3035 = vpop.permute.xlu0 %3034
        %3036 = vrot.lane.b32.xlu0 %v1344, 4
        %v3037 = vpop.permute.xlu0 %3036
        %3038 = vrot.lane.b32.xlu0 %v1346, 4
        %v3039 = vpop.permute.xlu0 %3038
        %3040 = vrot.lane.b32.xlu0 %v1348, 4
        %v3041 = vpop.permute.xlu0 %3040
        %3042 = vrot.lane.b32.xlu0 %v1350, 4
        %v3043 = vpop.permute.xlu0 %3042
        %3044 = vrot.lane.b32.xlu0 %v1353, 4
        %v3045 = vpop.permute.xlu0 %3044
        %3046 = vrot.lane.b32.xlu0 %v1355, 4
        %v3047 = vpop.permute.xlu0 %3046
        %3048 = vrot.lane.b32.xlu0 %v1357, 4
        %v3049 = vpop.permute.xlu0 %3048
        %3050 = vrot.lane.b32.xlu0 %v1359, 4
        %v3051 = vpop.permute.xlu0 %3050
        %3052 = vrot.lane.b32.xlu0 %v1362, 4
        %v3053 = vpop.permute.xlu0 %3052
        %3054 = vrot.lane.b32.xlu0 %v1364, 4
        %v3055 = vpop.permute.xlu0 %3054
        %3056 = vrot.lane.b32.xlu0 %v1366, 4
        %v3057 = vpop.permute.xlu0 %3056
        %3058 = vrot.lane.b32.xlu0 %v1368, 4
        %v3059 = vpop.permute.xlu0 %3058
        %3060 = vrot.lane.b32.xlu0 %v1371, 4
        %v3061 = vpop.permute.xlu0 %3060
        %3062 = vrot.lane.b32.xlu0 %v1373, 4
        %v3063 = vpop.permute.xlu0 %3062
        %3064 = vrot.lane.b32.xlu0 %v1375, 4
        %v3065 = vpop.permute.xlu0 %3064
        %3066 = vrot.lane.b32.xlu0 %v1377, 4
        %v3067 = vpop.permute.xlu0 %3066
        %3068 = vrot.lane.b32.xlu0 %v1380, 4
        %v3069 = vpop.permute.xlu0 %3068
        %3070 = vrot.lane.b32.xlu0 %v1382, 4
        %v3071 = vpop.permute.xlu0 %3070
        %3072 = vrot.lane.b32.xlu0 %v1384, 4
        %v3073 = vpop.permute.xlu0 %3072
        %3074 = vrot.lane.b32.xlu0 %v1386, 4
        %v3075 = vpop.permute.xlu0 %3074
        %3076 = vrot.lane.b32.xlu0 %v1389, 4
        %v3077 = vpop.permute.xlu0 %3076
        %3078 = vrot.lane.b32.xlu0 %v1391, 4
        %v3079 = vpop.permute.xlu0 %3078
        %3080 = vrot.lane.b32.xlu0 %v1393, 4
        %v3081 = vpop.permute.xlu0 %3080
        %3082 = vrot.lane.b32.xlu0 %v1395, 4
        %v3083 = vpop.permute.xlu0 %3082
        %3084 = vrot.lane.b32.xlu0 %v1398, 4
        %v3085 = vpop.permute.xlu0 %3084
        %3086 = vrot.lane.b32.xlu0 %v1400, 4
        %v3087 = vpop.permute.xlu0 %3086
        %3088 = vrot.lane.b32.xlu0 %v1402, 4
        %v3089 = vpop.permute.xlu0 %3088
        %3090 = vrot.lane.b32.xlu0 %v1404, 4
        %v3091 = vpop.permute.xlu0 %3090
        %3092 = vrot.lane.b32.xlu0 %v1407, 4
        %v3093 = vpop.permute.xlu0 %3092
        %3094 = vrot.lane.b32.xlu0 %v1409, 4
        %v3095 = vpop.permute.xlu0 %3094
        %3096 = vrot.lane.b32.xlu0 %v1411, 4
        %v3097 = vpop.permute.xlu0 %3096
        %3098 = vrot.lane.b32.xlu0 %v1413, 4
        %v3099 = vpop.permute.xlu0 %3098
        %3100 = vrot.lane.b32.xlu0 %v1416, 4
        %v3101 = vpop.permute.xlu0 %3100
        %3102 = vrot.lane.b32.xlu0 %v1418, 4
        %v3103 = vpop.permute.xlu0 %3102
        %3104 = vrot.lane.b32.xlu0 %v1420, 4
        %v3105 = vpop.permute.xlu0 %3104
        %3106 = vrot.lane.b32.xlu0 %v1422, 4
        %v3107 = vpop.permute.xlu0 %3106
        %3108 = vrot.lane.b32.xlu0 %v1425, 4
        %v3109 = vpop.permute.xlu0 %3108
        %3110 = vrot.lane.b32.xlu0 %v1427, 4
        %v3111 = vpop.permute.xlu0 %3110
        %3112 = vrot.lane.b32.xlu0 %v1429, 4
        %v3113 = vpop.permute.xlu0 %3112
        %3114 = vrot.lane.b32.xlu0 %v1431, 4
        %v3115 = vpop.permute.xlu0 %3114
        %3116 = vrot.lane.b32.xlu0 %v1718, 4
        %v3117 = vpop.permute.xlu0 %3116
        %3118 = vrot.lane.b32.xlu0 %v1720, 4
        %v3119 = vpop.permute.xlu0 %3118
        %3120 = vrot.lane.b32.xlu0 %v1722, 4
        %v3121 = vpop.permute.xlu0 %3120
        %3122 = vrot.lane.b32.xlu0 %v1724, 4
        %v3123 = vpop.permute.xlu0 %3122
        %3252 = vrot.lane.b32.xlu0 %v1437, 5
        %v3253 = vpop.permute.xlu0 %3252
        %3254 = vrot.lane.b32.xlu0 %v1439, 5
        %v3255 = vpop.permute.xlu0 %3254
        %3256 = vrot.lane.b32.xlu0 %v1441, 5
        %v3257 = vpop.permute.xlu0 %3256
        %3258 = vrot.lane.b32.xlu0 %v1443, 5
        %v3259 = vpop.permute.xlu0 %3258
        %3260 = vrot.lane.b32.xlu0 %v1446, 5
        %v3261 = vpop.permute.xlu0 %3260
        %3262 = vrot.lane.b32.xlu0 %v1448, 5
        %v3263 = vpop.permute.xlu0 %3262
        %3264 = vrot.lane.b32.xlu0 %v1450, 5
        %v3265 = vpop.permute.xlu0 %3264
        %3266 = vrot.lane.b32.xlu0 %v1452, 5
        %v3267 = vpop.permute.xlu0 %3266
        %3268 = vrot.lane.b32.xlu0 %v1455, 5
        %v3269 = vpop.permute.xlu0 %3268
        %3270 = vrot.lane.b32.xlu0 %v1457, 5
        %v3271 = vpop.permute.xlu0 %3270
        %3272 = vrot.lane.b32.xlu0 %v1459, 5
        %v3273 = vpop.permute.xlu0 %3272
        %3274 = vrot.lane.b32.xlu0 %v1461, 5
        %v3275 = vpop.permute.xlu0 %3274
        %3276 = vrot.lane.b32.xlu0 %v1464, 5
        %v3277 = vpop.permute.xlu0 %3276
        %3278 = vrot.lane.b32.xlu0 %v1466, 5
        %v3279 = vpop.permute.xlu0 %3278
        %3280 = vrot.lane.b32.xlu0 %v1468, 5
        %v3281 = vpop.permute.xlu0 %3280
        %3282 = vrot.lane.b32.xlu0 %v1470, 5
        %v3283 = vpop.permute.xlu0 %3282
        %3284 = vrot.lane.b32.xlu0 %v1473, 5
        %v3285 = vpop.permute.xlu0 %3284
        %3286 = vrot.lane.b32.xlu0 %v1475, 5
        %v3287 = vpop.permute.xlu0 %3286
        %3288 = vrot.lane.b32.xlu0 %v1477, 5
        %v3289 = vpop.permute.xlu0 %3288
        %3290 = vrot.lane.b32.xlu0 %v1479, 5
        %v3291 = vpop.permute.xlu0 %3290
        %3292 = vrot.lane.b32.xlu0 %v1482, 5
        %v3293 = vpop.permute.xlu0 %3292
        %3294 = vrot.lane.b32.xlu0 %v1484, 5
        %v3295 = vpop.permute.xlu0 %3294
        %3296 = vrot.lane.b32.xlu0 %v1486, 5
        %v3297 = vpop.permute.xlu0 %3296
        %3298 = vrot.lane.b32.xlu0 %v1488, 5
        %v3299 = vpop.permute.xlu0 %3298
        %3300 = vrot.lane.b32.xlu0 %v1491, 5
        %v3301 = vpop.permute.xlu0 %3300
        %3302 = vrot.lane.b32.xlu0 %v1493, 5
        %v3303 = vpop.permute.xlu0 %3302
        %3304 = vrot.lane.b32.xlu0 %v1495, 5
        %v3305 = vpop.permute.xlu0 %3304
        %3306 = vrot.lane.b32.xlu0 %v1497, 5
        %v3307 = vpop.permute.xlu0 %3306
        %3308 = vrot.lane.b32.xlu0 %v1500, 5
        %v3309 = vpop.permute.xlu0 %3308
        %3310 = vrot.lane.b32.xlu0 %v1502, 5
        %v3311 = vpop.permute.xlu0 %3310
        %3312 = vrot.lane.b32.xlu0 %v1504, 5
        %v3313 = vpop.permute.xlu0 %3312
        %3314 = vrot.lane.b32.xlu0 %v1506, 5
        %v3315 = vpop.permute.xlu0 %3314
        %3316 = vrot.lane.b32.xlu0 %v1509, 5
        %v3317 = vpop.permute.xlu0 %3316
        %3318 = vrot.lane.b32.xlu0 %v1511, 5
        %v3319 = vpop.permute.xlu0 %3318
        %3320 = vrot.lane.b32.xlu0 %v1513, 5
        %v3321 = vpop.permute.xlu0 %3320
        %3322 = vrot.lane.b32.xlu0 %v1515, 5
        %v3323 = vpop.permute.xlu0 %3322
        %3324 = vrot.lane.b32.xlu0 %v1518, 5
        %v3325 = vpop.permute.xlu0 %3324
        %3326 = vrot.lane.b32.xlu0 %v1520, 5
        %v3327 = vpop.permute.xlu0 %3326
        %3328 = vrot.lane.b32.xlu0 %v1522, 5
        %v3329 = vpop.permute.xlu0 %3328
        %3330 = vrot.lane.b32.xlu0 %v1524, 5
        %v3331 = vpop.permute.xlu0 %3330
        %3332 = vrot.lane.b32.xlu0 %v1527, 5
        %v3333 = vpop.permute.xlu0 %3332
        %3334 = vrot.lane.b32.xlu0 %v1529, 5
        %v3335 = vpop.permute.xlu0 %3334
        %3336 = vrot.lane.b32.xlu0 %v1531, 5
        %v3337 = vpop.permute.xlu0 %3336
        %3338 = vrot.lane.b32.xlu0 %v1533, 5
        %v3339 = vpop.permute.xlu0 %3338
        %3340 = vrot.lane.b32.xlu0 %v1536, 5
        %v3341 = vpop.permute.xlu0 %3340
        %3342 = vrot.lane.b32.xlu0 %v1538, 5
        %v3343 = vpop.permute.xlu0 %3342
        %3344 = vrot.lane.b32.xlu0 %v1540, 5
        %v3345 = vpop.permute.xlu0 %3344
        %3346 = vrot.lane.b32.xlu0 %v1542, 5
        %v3347 = vpop.permute.xlu0 %3346
        %3348 = vrot.lane.b32.xlu0 %v1545, 5
        %v3349 = vpop.permute.xlu0 %3348
        %3350 = vrot.lane.b32.xlu0 %v1547, 5
        %v3351 = vpop.permute.xlu0 %3350
        %3352 = vrot.lane.b32.xlu0 %v1549, 5
        %v3353 = vpop.permute.xlu0 %3352
        %3354 = vrot.lane.b32.xlu0 %v1551, 5
        %v3355 = vpop.permute.xlu0 %3354
        %3356 = vrot.lane.b32.xlu0 %v1554, 5
        %v3357 = vpop.permute.xlu0 %3356
        %3358 = vrot.lane.b32.xlu0 %v1556, 5
        %v3359 = vpop.permute.xlu0 %3358
        %3360 = vrot.lane.b32.xlu0 %v1558, 5
        %v3361 = vpop.permute.xlu0 %3360
        %3362 = vrot.lane.b32.xlu0 %v1560, 5
        %v3363 = vpop.permute.xlu0 %3362
        %3364 = vrot.lane.b32.xlu0 %v1563, 5
        %v3365 = vpop.permute.xlu0 %3364
        %3366 = vrot.lane.b32.xlu0 %v1565, 5
        %v3367 = vpop.permute.xlu0 %3366
        %3368 = vrot.lane.b32.xlu0 %v1567, 5
        %v3369 = vpop.permute.xlu0 %3368
        %3370 = vrot.lane.b32.xlu0 %v1569, 5
        %v3371 = vpop.permute.xlu0 %3370
        %3372 = vrot.lane.b32.xlu0 %v1572, 5
        %v3373 = vpop.permute.xlu0 %3372
        %3374 = vrot.lane.b32.xlu0 %v1574, 5
        %v3375 = vpop.permute.xlu0 %3374
        %3376 = vrot.lane.b32.xlu0 %v1576, 5
        %v3377 = vpop.permute.xlu0 %3376
        %3378 = vrot.lane.b32.xlu0 %v1578, 5
        %v3379 = vpop.permute.xlu0 %3378
        %3380 = vrot.lane.b32.xlu0 %v1581, 5
        %v3381 = vpop.permute.xlu0 %3380
        %3382 = vrot.lane.b32.xlu0 %v1583, 5
        %v3383 = vpop.permute.xlu0 %3382
        %3384 = vrot.lane.b32.xlu0 %v1585, 5
        %v3385 = vpop.permute.xlu0 %3384
        %3386 = vrot.lane.b32.xlu0 %v1587, 5
        %v3387 = vpop.permute.xlu0 %3386
        %3388 = vrot.lane.b32.xlu0 %v1590, 5
        %v3389 = vpop.permute.xlu0 %3388
        %3390 = vrot.lane.b32.xlu0 %v1592, 5
        %v3391 = vpop.permute.xlu0 %3390
        %3392 = vrot.lane.b32.xlu0 %v1594, 5
        %v3393 = vpop.permute.xlu0 %3392
        %3394 = vrot.lane.b32.xlu0 %v1596, 5
        %v3395 = vpop.permute.xlu0 %3394
        %3396 = vrot.lane.b32.xlu0 %v1599, 5
        %v3397 = vpop.permute.xlu0 %3396
        %3398 = vrot.lane.b32.xlu0 %v1601, 5
        %v3399 = vpop.permute.xlu0 %3398
        %3400 = vrot.lane.b32.xlu0 %v1603, 5
        %v3401 = vpop.permute.xlu0 %3400
        %3402 = vrot.lane.b32.xlu0 %v1605, 5
        %v3403 = vpop.permute.xlu0 %3402
        %3404 = vrot.lane.b32.xlu0 %v1608, 5
        %v3405 = vpop.permute.xlu0 %3404
        %3406 = vrot.lane.b32.xlu0 %v1610, 5
        %v3407 = vpop.permute.xlu0 %3406
        %3408 = vrot.lane.b32.xlu0 %v1612, 5
        %v3409 = vpop.permute.xlu0 %3408
        %3410 = vrot.lane.b32.xlu0 %v1614, 5
        %v3411 = vpop.permute.xlu0 %3410
        %3412 = vrot.lane.b32.xlu0 %v1617, 5
        %v3413 = vpop.permute.xlu0 %3412
        %3414 = vrot.lane.b32.xlu0 %v1619, 5
        %v3415 = vpop.permute.xlu0 %3414
        %3416 = vrot.lane.b32.xlu0 %v1621, 5
        %v3417 = vpop.permute.xlu0 %3416
        %3418 = vrot.lane.b32.xlu0 %v1623, 5
        %v3419 = vpop.permute.xlu0 %3418
        %3420 = vrot.lane.b32.xlu0 %v1626, 5
        %v3421 = vpop.permute.xlu0 %3420
        %3422 = vrot.lane.b32.xlu0 %v1628, 5
        %v3423 = vpop.permute.xlu0 %3422
        %3424 = vrot.lane.b32.xlu0 %v1630, 5
        %v3425 = vpop.permute.xlu0 %3424
        %3426 = vrot.lane.b32.xlu0 %v1632, 5
        %v3427 = vpop.permute.xlu0 %3426
        %3428 = vrot.lane.b32.xlu0 %v1635, 5
        %v3429 = vpop.permute.xlu0 %3428
        %3430 = vrot.lane.b32.xlu0 %v1637, 5
        %v3431 = vpop.permute.xlu0 %3430
        %3432 = vrot.lane.b32.xlu0 %v1639, 5
        %v3433 = vpop.permute.xlu0 %3432
        %3434 = vrot.lane.b32.xlu0 %v1641, 5
        %v3435 = vpop.permute.xlu0 %3434
        %3436 = vrot.lane.b32.xlu0 %v1644, 5
        %v3437 = vpop.permute.xlu0 %3436
        %3438 = vrot.lane.b32.xlu0 %v1646, 5
        %v3439 = vpop.permute.xlu0 %3438
        %3440 = vrot.lane.b32.xlu0 %v1648, 5
        %v3441 = vpop.permute.xlu0 %3440
        %3442 = vrot.lane.b32.xlu0 %v1650, 5
        %v3443 = vpop.permute.xlu0 %3442
        %3444 = vrot.lane.b32.xlu0 %v1653, 5
        %v3445 = vpop.permute.xlu0 %3444
        %3446 = vrot.lane.b32.xlu0 %v1655, 5
        %v3447 = vpop.permute.xlu0 %3446
        %3448 = vrot.lane.b32.xlu0 %v1657, 5
        %v3449 = vpop.permute.xlu0 %3448
        %3450 = vrot.lane.b32.xlu0 %v1659, 5
        %v3451 = vpop.permute.xlu0 %3450
        %3452 = vrot.lane.b32.xlu0 %v1662, 5
        %v3453 = vpop.permute.xlu0 %3452
        %3454 = vrot.lane.b32.xlu0 %v1664, 5
        %v3455 = vpop.permute.xlu0 %3454
        %3456 = vrot.lane.b32.xlu0 %v1666, 5
        %v3457 = vpop.permute.xlu0 %3456
        %3458 = vrot.lane.b32.xlu0 %v1668, 5
        %v3459 = vpop.permute.xlu0 %3458
        %3460 = vrot.lane.b32.xlu0 %v1671, 5
        %v3461 = vpop.permute.xlu0 %3460
        %3462 = vrot.lane.b32.xlu0 %v1673, 5
        %v3463 = vpop.permute.xlu0 %3462
        %3464 = vrot.lane.b32.xlu0 %v1675, 5
        %v3465 = vpop.permute.xlu0 %3464
        %3466 = vrot.lane.b32.xlu0 %v1677, 5
        %v3467 = vpop.permute.xlu0 %3466
        %3468 = vrot.lane.b32.xlu0 %v1680, 5
        %v3469 = vpop.permute.xlu0 %3468
        %3470 = vrot.lane.b32.xlu0 %v1682, 5
        %v3471 = vpop.permute.xlu0 %3470
        %3472 = vrot.lane.b32.xlu0 %v1684, 5
        %v3473 = vpop.permute.xlu0 %3472
        %3474 = vrot.lane.b32.xlu0 %v1686, 5
        %v3475 = vpop.permute.xlu0 %3474
        %3476 = vrot.lane.b32.xlu0 %v1689, 5
        %v3477 = vpop.permute.xlu0 %3476
        %3478 = vrot.lane.b32.xlu0 %v1691, 5
        %v3479 = vpop.permute.xlu0 %3478
        %3480 = vrot.lane.b32.xlu0 %v1693, 5
        %v3481 = vpop.permute.xlu0 %3480
        %3482 = vrot.lane.b32.xlu0 %v1695, 5
        %v3483 = vpop.permute.xlu0 %3482
        %3484 = vrot.lane.b32.xlu0 %v1698, 5
        %v3485 = vpop.permute.xlu0 %3484
        %3486 = vrot.lane.b32.xlu0 %v1700, 5
        %v3487 = vpop.permute.xlu0 %3486
        %3488 = vrot.lane.b32.xlu0 %v1702, 5
        %v3489 = vpop.permute.xlu0 %3488
        %3490 = vrot.lane.b32.xlu0 %v1704, 5
        %v3491 = vpop.permute.xlu0 %3490
        %3492 = vrot.lane.b32.xlu0 %v1707, 5
        %v3493 = vpop.permute.xlu0 %3492
        %3494 = vrot.lane.b32.xlu0 %v1709, 5
        %v3495 = vpop.permute.xlu0 %3494
        %3496 = vrot.lane.b32.xlu0 %v1711, 5
        %v3497 = vpop.permute.xlu0 %3496
        %3498 = vrot.lane.b32.xlu0 %v1713, 5
        %v3499 = vpop.permute.xlu0 %3498
        %3500 = vrot.lane.b32.xlu0 %v1727, 5
        %v3501 = vpop.permute.xlu0 %3500
        %3502 = vrot.lane.b32.xlu0 %v1729, 5
        %v3503 = vpop.permute.xlu0 %3502
        %3504 = vrot.lane.b32.xlu0 %v1731, 5
        %v3505 = vpop.permute.xlu0 %3504
        %3506 = vrot.lane.b32.xlu0 %v1733, 5
        %v3507 = vpop.permute.xlu0 %3506
        %3636 = vrot.lane.b32.xlu0 %v1024, 6
        %v3637 = vpop.permute.xlu0 %3636
        %3638 = vrot.lane.b32.xlu0 %v651, 6
        %v3639 = vpop.permute.xlu0 %3638
        %3640 = vrot.lane.b32.xlu0 %v653, 6
        %v3641 = vpop.permute.xlu0 %3640
        %3642 = vrot.lane.b32.xlu0 %v655, 6
        %v3643 = vpop.permute.xlu0 %3642
        %3644 = vrot.lane.b32.xlu0 %v1025, 6
        %v3645 = vpop.permute.xlu0 %3644
        %3646 = vrot.lane.b32.xlu0 %v658, 6
        %v3647 = vpop.permute.xlu0 %3646
        %3648 = vrot.lane.b32.xlu0 %v660, 6
        %v3649 = vpop.permute.xlu0 %3648
        %3650 = vrot.lane.b32.xlu0 %v662, 6
        %v3651 = vpop.permute.xlu0 %3650
        %3652 = vrot.lane.b32.xlu0 %v1026, 6
        %v3653 = vpop.permute.xlu0 %3652
        %3654 = vrot.lane.b32.xlu0 %v665, 6
        %v3655 = vpop.permute.xlu0 %3654
        %3656 = vrot.lane.b32.xlu0 %v667, 6
        %v3657 = vpop.permute.xlu0 %3656
        %3658 = vrot.lane.b32.xlu0 %v669, 6
        %v3659 = vpop.permute.xlu0 %3658
        %3660 = vrot.lane.b32.xlu0 %v1027, 6
        %v3661 = vpop.permute.xlu0 %3660
        %3662 = vrot.lane.b32.xlu0 %v672, 6
        %v3663 = vpop.permute.xlu0 %3662
        %3664 = vrot.lane.b32.xlu0 %v674, 6
        %v3665 = vpop.permute.xlu0 %3664
        %3666 = vrot.lane.b32.xlu0 %v676, 6
        %v3667 = vpop.permute.xlu0 %3666
        %3668 = vrot.lane.b32.xlu0 %v1028, 6
        %v3669 = vpop.permute.xlu0 %3668
        %3670 = vrot.lane.b32.xlu0 %v679, 6
        %v3671 = vpop.permute.xlu0 %3670
        %3672 = vrot.lane.b32.xlu0 %v681, 6
        %v3673 = vpop.permute.xlu0 %3672
        %3674 = vrot.lane.b32.xlu0 %v683, 6
        %v3675 = vpop.permute.xlu0 %3674
        %3676 = vrot.lane.b32.xlu0 %v1029, 6
        %v3677 = vpop.permute.xlu0 %3676
        %3678 = vrot.lane.b32.xlu0 %v686, 6
        %v3679 = vpop.permute.xlu0 %3678
        %3680 = vrot.lane.b32.xlu0 %v688, 6
        %v3681 = vpop.permute.xlu0 %3680
        %3682 = vrot.lane.b32.xlu0 %v690, 6
        %v3683 = vpop.permute.xlu0 %3682
        %3684 = vrot.lane.b32.xlu0 %v1030, 6
        %v3685 = vpop.permute.xlu0 %3684
        %3686 = vrot.lane.b32.xlu0 %v693, 6
        %v3687 = vpop.permute.xlu0 %3686
        %3688 = vrot.lane.b32.xlu0 %v695, 6
        %v3689 = vpop.permute.xlu0 %3688
        %3690 = vrot.lane.b32.xlu0 %v697, 6
        %v3691 = vpop.permute.xlu0 %3690
        %3692 = vrot.lane.b32.xlu0 %v1031, 6
        %v3693 = vpop.permute.xlu0 %3692
        %3694 = vrot.lane.b32.xlu0 %v700, 6
        %v3695 = vpop.permute.xlu0 %3694
        %3696 = vrot.lane.b32.xlu0 %v702, 6
        %v3697 = vpop.permute.xlu0 %3696
        %3698 = vrot.lane.b32.xlu0 %v704, 6
        %v3699 = vpop.permute.xlu0 %3698
        %3700 = vrot.lane.b32.xlu0 %v1032, 6
        %v3701 = vpop.permute.xlu0 %3700
        %3702 = vrot.lane.b32.xlu0 %v707, 6
        %v3703 = vpop.permute.xlu0 %3702
        %3704 = vrot.lane.b32.xlu0 %v709, 6
        %v3705 = vpop.permute.xlu0 %3704
        %3706 = vrot.lane.b32.xlu0 %v711, 6
        %v3707 = vpop.permute.xlu0 %3706
        %3708 = vrot.lane.b32.xlu0 %v1033, 6
        %v3709 = vpop.permute.xlu0 %3708
        %3710 = vrot.lane.b32.xlu0 %v714, 6
        %v3711 = vpop.permute.xlu0 %3710
        %3712 = vrot.lane.b32.xlu0 %v716, 6
        %v3713 = vpop.permute.xlu0 %3712
        %3714 = vrot.lane.b32.xlu0 %v718, 6
        %v3715 = vpop.permute.xlu0 %3714
        %3716 = vrot.lane.b32.xlu0 %v1034, 6
        %v3717 = vpop.permute.xlu0 %3716
        %3718 = vrot.lane.b32.xlu0 %v721, 6
        %v3719 = vpop.permute.xlu0 %3718
        %3720 = vrot.lane.b32.xlu0 %v723, 6
        %v3721 = vpop.permute.xlu0 %3720
        %3722 = vrot.lane.b32.xlu0 %v725, 6
        %v3723 = vpop.permute.xlu0 %3722
        %3724 = vrot.lane.b32.xlu0 %v1035, 6
        %v3725 = vpop.permute.xlu0 %3724
        %3726 = vrot.lane.b32.xlu0 %v728, 6
        %v3727 = vpop.permute.xlu0 %3726
        %3728 = vrot.lane.b32.xlu0 %v730, 6
        %v3729 = vpop.permute.xlu0 %3728
        %3730 = vrot.lane.b32.xlu0 %v732, 6
        %v3731 = vpop.permute.xlu0 %3730
        %3732 = vrot.lane.b32.xlu0 %v1036, 6
        %v3733 = vpop.permute.xlu0 %3732
        %3734 = vrot.lane.b32.xlu0 %v735, 6
        %v3735 = vpop.permute.xlu0 %3734
        %3736 = vrot.lane.b32.xlu0 %v737, 6
        %v3737 = vpop.permute.xlu0 %3736
        %3738 = vrot.lane.b32.xlu0 %v739, 6
        %v3739 = vpop.permute.xlu0 %3738
        %3740 = vrot.lane.b32.xlu0 %v1037, 6
        %v3741 = vpop.permute.xlu0 %3740
        %3742 = vrot.lane.b32.xlu0 %v742, 6
        %v3743 = vpop.permute.xlu0 %3742
        %3744 = vrot.lane.b32.xlu0 %v744, 6
        %v3745 = vpop.permute.xlu0 %3744
        %3746 = vrot.lane.b32.xlu0 %v746, 6
        %v3747 = vpop.permute.xlu0 %3746
        %3748 = vrot.lane.b32.xlu0 %v1038, 6
        %v3749 = vpop.permute.xlu0 %3748
        %3750 = vrot.lane.b32.xlu0 %v749, 6
        %v3751 = vpop.permute.xlu0 %3750
        %3752 = vrot.lane.b32.xlu0 %v751, 6
        %v3753 = vpop.permute.xlu0 %3752
        %3754 = vrot.lane.b32.xlu0 %v753, 6
        %v3755 = vpop.permute.xlu0 %3754
        %3756 = vrot.lane.b32.xlu0 %v1039, 6
        %v3757 = vpop.permute.xlu0 %3756
        %3758 = vrot.lane.b32.xlu0 %v756, 6
        %v3759 = vpop.permute.xlu0 %3758
        %3760 = vrot.lane.b32.xlu0 %v758, 6
        %v3761 = vpop.permute.xlu0 %3760
        %3762 = vrot.lane.b32.xlu0 %v760, 6
        %v3763 = vpop.permute.xlu0 %3762
        %3764 = vrot.lane.b32.xlu0 %v1040, 6
        %v3765 = vpop.permute.xlu0 %3764
        %3766 = vrot.lane.b32.xlu0 %v763, 6
        %v3767 = vpop.permute.xlu0 %3766
        %3768 = vrot.lane.b32.xlu0 %v765, 6
        %v3769 = vpop.permute.xlu0 %3768
        %3770 = vrot.lane.b32.xlu0 %v767, 6
        %v3771 = vpop.permute.xlu0 %3770
        %3772 = vrot.lane.b32.xlu0 %v1041, 6
        %v3773 = vpop.permute.xlu0 %3772
        %3774 = vrot.lane.b32.xlu0 %v770, 6
        %v3775 = vpop.permute.xlu0 %3774
        %3776 = vrot.lane.b32.xlu0 %v772, 6
        %v3777 = vpop.permute.xlu0 %3776
        %3778 = vrot.lane.b32.xlu0 %v774, 6
        %v3779 = vpop.permute.xlu0 %3778
        %3780 = vrot.lane.b32.xlu0 %v1042, 6
        %v3781 = vpop.permute.xlu0 %3780
        %3782 = vrot.lane.b32.xlu0 %v777, 6
        %v3783 = vpop.permute.xlu0 %3782
        %3784 = vrot.lane.b32.xlu0 %v779, 6
        %v3785 = vpop.permute.xlu0 %3784
        %3786 = vrot.lane.b32.xlu0 %v781, 6
        %v3787 = vpop.permute.xlu0 %3786
        %3788 = vrot.lane.b32.xlu0 %v1043, 6
        %v3789 = vpop.permute.xlu0 %3788
        %3790 = vrot.lane.b32.xlu0 %v784, 6
        %v3791 = vpop.permute.xlu0 %3790
        %3792 = vrot.lane.b32.xlu0 %v786, 6
        %v3793 = vpop.permute.xlu0 %3792
        %3794 = vrot.lane.b32.xlu0 %v788, 6
        %v3795 = vpop.permute.xlu0 %3794
        %3796 = vrot.lane.b32.xlu0 %v1044, 6
        %v3797 = vpop.permute.xlu0 %3796
        %3798 = vrot.lane.b32.xlu0 %v791, 6
        %v3799 = vpop.permute.xlu0 %3798
        %3800 = vrot.lane.b32.xlu0 %v793, 6
        %v3801 = vpop.permute.xlu0 %3800
        %3802 = vrot.lane.b32.xlu0 %v795, 6
        %v3803 = vpop.permute.xlu0 %3802
        %3804 = vrot.lane.b32.xlu0 %v1045, 6
        %v3805 = vpop.permute.xlu0 %3804
        %3806 = vrot.lane.b32.xlu0 %v798, 6
        %v3807 = vpop.permute.xlu0 %3806
        %3808 = vrot.lane.b32.xlu0 %v800, 6
        %v3809 = vpop.permute.xlu0 %3808
        %3810 = vrot.lane.b32.xlu0 %v802, 6
        %v3811 = vpop.permute.xlu0 %3810
        %3812 = vrot.lane.b32.xlu0 %v1046, 6
        %v3813 = vpop.permute.xlu0 %3812
        %3814 = vrot.lane.b32.xlu0 %v805, 6
        %v3815 = vpop.permute.xlu0 %3814
        %3816 = vrot.lane.b32.xlu0 %v807, 6
        %v3817 = vpop.permute.xlu0 %3816
        %3818 = vrot.lane.b32.xlu0 %v809, 6
        %v3819 = vpop.permute.xlu0 %3818
        %3820 = vrot.lane.b32.xlu0 %v1047, 6
        %v3821 = vpop.permute.xlu0 %3820
        %3822 = vrot.lane.b32.xlu0 %v812, 6
        %v3823 = vpop.permute.xlu0 %3822
        %3824 = vrot.lane.b32.xlu0 %v814, 6
        %v3825 = vpop.permute.xlu0 %3824
        %3826 = vrot.lane.b32.xlu0 %v816, 6
        %v3827 = vpop.permute.xlu0 %3826
        %3828 = vrot.lane.b32.xlu0 %v1048, 6
        %v3829 = vpop.permute.xlu0 %3828
        %3830 = vrot.lane.b32.xlu0 %v819, 6
        %v3831 = vpop.permute.xlu0 %3830
        %3832 = vrot.lane.b32.xlu0 %v821, 6
        %v3833 = vpop.permute.xlu0 %3832
        %3834 = vrot.lane.b32.xlu0 %v823, 6
        %v3835 = vpop.permute.xlu0 %3834
        %3836 = vrot.lane.b32.xlu0 %v1049, 6
        %v3837 = vpop.permute.xlu0 %3836
        %3838 = vrot.lane.b32.xlu0 %v826, 6
        %v3839 = vpop.permute.xlu0 %3838
        %3840 = vrot.lane.b32.xlu0 %v828, 6
        %v3841 = vpop.permute.xlu0 %3840
        %3842 = vrot.lane.b32.xlu0 %v830, 6
        %v3843 = vpop.permute.xlu0 %3842
        %3844 = vrot.lane.b32.xlu0 %v1050, 6
        %v3845 = vpop.permute.xlu0 %3844
        %3846 = vrot.lane.b32.xlu0 %v833, 6
        %v3847 = vpop.permute.xlu0 %3846
        %3848 = vrot.lane.b32.xlu0 %v835, 6
        %v3849 = vpop.permute.xlu0 %3848
        %3850 = vrot.lane.b32.xlu0 %v837, 6
        %v3851 = vpop.permute.xlu0 %3850
        %3852 = vrot.lane.b32.xlu0 %v1051, 6
        %v3853 = vpop.permute.xlu0 %3852
        %3854 = vrot.lane.b32.xlu0 %v840, 6
        %v3855 = vpop.permute.xlu0 %3854
        %3856 = vrot.lane.b32.xlu0 %v842, 6
        %v3857 = vpop.permute.xlu0 %3856
        %3858 = vrot.lane.b32.xlu0 %v844, 6
        %v3859 = vpop.permute.xlu0 %3858
        %3860 = vrot.lane.b32.xlu0 %v1052, 6
        %v3861 = vpop.permute.xlu0 %3860
        %3862 = vrot.lane.b32.xlu0 %v847, 6
        %v3863 = vpop.permute.xlu0 %3862
        %3864 = vrot.lane.b32.xlu0 %v849, 6
        %v3865 = vpop.permute.xlu0 %3864
        %3866 = vrot.lane.b32.xlu0 %v851, 6
        %v3867 = vpop.permute.xlu0 %3866
        %3868 = vrot.lane.b32.xlu0 %v1053, 6
        %v3869 = vpop.permute.xlu0 %3868
        %3870 = vrot.lane.b32.xlu0 %v854, 6
        %v3871 = vpop.permute.xlu0 %3870
        %3872 = vrot.lane.b32.xlu0 %v856, 6
        %v3873 = vpop.permute.xlu0 %3872
        %3874 = vrot.lane.b32.xlu0 %v858, 6
        %v3875 = vpop.permute.xlu0 %3874
        %3876 = vrot.lane.b32.xlu0 %v1054, 6
        %v3877 = vpop.permute.xlu0 %3876
        %3878 = vrot.lane.b32.xlu0 %v861, 6
        %v3879 = vpop.permute.xlu0 %3878
        %3880 = vrot.lane.b32.xlu0 %v863, 6
        %v3881 = vpop.permute.xlu0 %3880
        %3882 = vrot.lane.b32.xlu0 %v865, 6
        %v3883 = vpop.permute.xlu0 %3882
        %3884 = vrot.lane.b32.xlu0 0.0, 6
        %v3885 = vpop.permute.xlu0 %3884
        %4011 = vrot.lane.b32.xlu0 %v1164, 7
        %v4012 = vpop.permute.xlu0 %4011
        %4013 = vrot.lane.b32.xlu0 %v1166, 7
        %v4014 = vpop.permute.xlu0 %4013
        %4015 = vrot.lane.b32.xlu0 %v1168, 7
        %v4016 = vpop.permute.xlu0 %4015
        %4017 = vrot.lane.b32.xlu0 %v1170, 7
        %v4018 = vpop.permute.xlu0 %4017
        %4019 = vrot.lane.b32.xlu0 %v1173, 7
        %v4020 = vpop.permute.xlu0 %4019
        %4021 = vrot.lane.b32.xlu0 %v1175, 7
        %v4022 = vpop.permute.xlu0 %4021
        %4023 = vrot.lane.b32.xlu0 %v1177, 7
        %v4024 = vpop.permute.xlu0 %4023
        %4025 = vrot.lane.b32.xlu0 %v1179, 7
        %v4026 = vpop.permute.xlu0 %4025
        %4027 = vrot.lane.b32.xlu0 %v1182, 7
        %v4028 = vpop.permute.xlu0 %4027
        %4029 = vrot.lane.b32.xlu0 %v1184, 7
        %v4030 = vpop.permute.xlu0 %4029
        %4031 = vrot.lane.b32.xlu0 %v1186, 7
        %v4032 = vpop.permute.xlu0 %4031
        %4033 = vrot.lane.b32.xlu0 %v1188, 7
        %v4034 = vpop.permute.xlu0 %4033
        %4035 = vrot.lane.b32.xlu0 %v1191, 7
        %v4036 = vpop.permute.xlu0 %4035
        %4037 = vrot.lane.b32.xlu0 %v1193, 7
        %v4038 = vpop.permute.xlu0 %4037
        %4039 = vrot.lane.b32.xlu0 %v1195, 7
        %v4040 = vpop.permute.xlu0 %4039
        %4041 = vrot.lane.b32.xlu0 %v1197, 7
        %v4042 = vpop.permute.xlu0 %4041
        %4043 = vrot.lane.b32.xlu0 %v1200, 7
        %v4044 = vpop.permute.xlu0 %4043
        %4045 = vrot.lane.b32.xlu0 %v1202, 7
        %v4046 = vpop.permute.xlu0 %4045
        %4047 = vrot.lane.b32.xlu0 %v1204, 7
        %v4048 = vpop.permute.xlu0 %4047
        %4049 = vrot.lane.b32.xlu0 %v1206, 7
        %v4050 = vpop.permute.xlu0 %4049
        %4051 = vrot.lane.b32.xlu0 %v1209, 7
        %v4052 = vpop.permute.xlu0 %4051
        %4053 = vrot.lane.b32.xlu0 %v1211, 7
        %v4054 = vpop.permute.xlu0 %4053
        %4055 = vrot.lane.b32.xlu0 %v1213, 7
        %v4056 = vpop.permute.xlu0 %4055
        %4057 = vrot.lane.b32.xlu0 %v1215, 7
        %v4058 = vpop.permute.xlu0 %4057
        %4059 = vrot.lane.b32.xlu0 %v1218, 7
        %v4060 = vpop.permute.xlu0 %4059
        %4061 = vrot.lane.b32.xlu0 %v1220, 7
        %v4062 = vpop.permute.xlu0 %4061
        %4063 = vrot.lane.b32.xlu0 %v1222, 7
        %v4064 = vpop.permute.xlu0 %4063
        %4065 = vrot.lane.b32.xlu0 %v1224, 7
        %v4066 = vpop.permute.xlu0 %4065
        %4067 = vrot.lane.b32.xlu0 %v1227, 7
        %v4068 = vpop.permute.xlu0 %4067
        %4069 = vrot.lane.b32.xlu0 %v1229, 7
        %v4070 = vpop.permute.xlu0 %4069
        %4071 = vrot.lane.b32.xlu0 %v1231, 7
        %v4072 = vpop.permute.xlu0 %4071
        %4073 = vrot.lane.b32.xlu0 %v1233, 7
        %v4074 = vpop.permute.xlu0 %4073
        %4075 = vrot.lane.b32.xlu0 %v1236, 7
        %v4076 = vpop.permute.xlu0 %4075
        %4077 = vrot.lane.b32.xlu0 %v1238, 7
        %v4078 = vpop.permute.xlu0 %4077
        %4079 = vrot.lane.b32.xlu0 %v1240, 7
        %v4080 = vpop.permute.xlu0 %4079
        %4081 = vrot.lane.b32.xlu0 %v1242, 7
        %v4082 = vpop.permute.xlu0 %4081
        %4083 = vrot.lane.b32.xlu0 %v1245, 7
        %v4084 = vpop.permute.xlu0 %4083
        %4085 = vrot.lane.b32.xlu0 %v1247, 7
        %v4086 = vpop.permute.xlu0 %4085
        %4087 = vrot.lane.b32.xlu0 %v1249, 7
        %v4088 = vpop.permute.xlu0 %4087
        %4089 = vrot.lane.b32.xlu0 %v1251, 7
        %v4090 = vpop.permute.xlu0 %4089
        %4091 = vrot.lane.b32.xlu0 %v1254, 7
        %v4092 = vpop.permute.xlu0 %4091
        %4093 = vrot.lane.b32.xlu0 %v1256, 7
        %v4094 = vpop.permute.xlu0 %4093
        %4095 = vrot.lane.b32.xlu0 %v1258, 7
        %v4096 = vpop.permute.xlu0 %4095
        %4097 = vrot.lane.b32.xlu0 %v1260, 7
        %v4098 = vpop.permute.xlu0 %4097
        %4099 = vrot.lane.b32.xlu0 %v1263, 7
        %v4100 = vpop.permute.xlu0 %4099
        %4101 = vrot.lane.b32.xlu0 %v1265, 7
        %v4102 = vpop.permute.xlu0 %4101
        %4103 = vrot.lane.b32.xlu0 %v1267, 7
        %v4104 = vpop.permute.xlu0 %4103
        %4105 = vrot.lane.b32.xlu0 %v1269, 7
        %v4106 = vpop.permute.xlu0 %4105
        %4107 = vrot.lane.b32.xlu0 %v1272, 7
        %v4108 = vpop.permute.xlu0 %4107
        %4109 = vrot.lane.b32.xlu0 %v1274, 7
        %v4110 = vpop.permute.xlu0 %4109
        %4111 = vrot.lane.b32.xlu0 %v1276, 7
        %v4112 = vpop.permute.xlu0 %4111
        %4113 = vrot.lane.b32.xlu0 %v1278, 7
        %v4114 = vpop.permute.xlu0 %4113
        %4115 = vrot.lane.b32.xlu0 %v1281, 7
        %v4116 = vpop.permute.xlu0 %4115
        %4117 = vrot.lane.b32.xlu0 %v1283, 7
        %v4118 = vpop.permute.xlu0 %4117
        %4119 = vrot.lane.b32.xlu0 %v1285, 7
        %v4120 = vpop.permute.xlu0 %4119
        %4121 = vrot.lane.b32.xlu0 %v1287, 7
        %v4122 = vpop.permute.xlu0 %4121
        %4123 = vrot.lane.b32.xlu0 %v1290, 7
        %v4124 = vpop.permute.xlu0 %4123
        %4125 = vrot.lane.b32.xlu0 %v1292, 7
        %v4126 = vpop.permute.xlu0 %4125
        %4127 = vrot.lane.b32.xlu0 %v1294, 7
        %v4128 = vpop.permute.xlu0 %4127
        %4129 = vrot.lane.b32.xlu0 %v1296, 7
        %v4130 = vpop.permute.xlu0 %4129
        %4131 = vrot.lane.b32.xlu0 %v1299, 7
        %v4132 = vpop.permute.xlu0 %4131
        %4133 = vrot.lane.b32.xlu0 %v1301, 7
        %v4134 = vpop.permute.xlu0 %4133
        %4135 = vrot.lane.b32.xlu0 %v1303, 7
        %v4136 = vpop.permute.xlu0 %4135
        %4137 = vrot.lane.b32.xlu0 %v1305, 7
        %v4138 = vpop.permute.xlu0 %4137
        %4139 = vrot.lane.b32.xlu0 %v1308, 7
        %v4140 = vpop.permute.xlu0 %4139
        %4141 = vrot.lane.b32.xlu0 %v1310, 7
        %v4142 = vpop.permute.xlu0 %4141
        %4143 = vrot.lane.b32.xlu0 %v1312, 7
        %v4144 = vpop.permute.xlu0 %4143
        %4145 = vrot.lane.b32.xlu0 %v1314, 7
        %v4146 = vpop.permute.xlu0 %4145
        %4147 = vrot.lane.b32.xlu0 %v1317, 7
        %v4148 = vpop.permute.xlu0 %4147
        %4149 = vrot.lane.b32.xlu0 %v1319, 7
        %v4150 = vpop.permute.xlu0 %4149
        %4151 = vrot.lane.b32.xlu0 %v1321, 7
        %v4152 = vpop.permute.xlu0 %4151
        %4153 = vrot.lane.b32.xlu0 %v1323, 7
        %v4154 = vpop.permute.xlu0 %4153
        %4155 = vrot.lane.b32.xlu0 %v1326, 7
        %v4156 = vpop.permute.xlu0 %4155
        %4157 = vrot.lane.b32.xlu0 %v1328, 7
        %v4158 = vpop.permute.xlu0 %4157
        %4159 = vrot.lane.b32.xlu0 %v1330, 7
        %v4160 = vpop.permute.xlu0 %4159
        %4161 = vrot.lane.b32.xlu0 %v1332, 7
        %v4162 = vpop.permute.xlu0 %4161
        %4163 = vrot.lane.b32.xlu0 %v1335, 7
        %v4164 = vpop.permute.xlu0 %4163
        %4165 = vrot.lane.b32.xlu0 %v1337, 7
        %v4166 = vpop.permute.xlu0 %4165
        %4167 = vrot.lane.b32.xlu0 %v1339, 7
        %v4168 = vpop.permute.xlu0 %4167
        %4169 = vrot.lane.b32.xlu0 %v1341, 7
        %v4170 = vpop.permute.xlu0 %4169
        %4171 = vrot.lane.b32.xlu0 %v1344, 7
        %v4172 = vpop.permute.xlu0 %4171
        %4173 = vrot.lane.b32.xlu0 %v1346, 7
        %v4174 = vpop.permute.xlu0 %4173
        %4175 = vrot.lane.b32.xlu0 %v1348, 7
        %v4176 = vpop.permute.xlu0 %4175
        %4177 = vrot.lane.b32.xlu0 %v1350, 7
        %v4178 = vpop.permute.xlu0 %4177
        %4179 = vrot.lane.b32.xlu0 %v1353, 7
        %v4180 = vpop.permute.xlu0 %4179
        %4181 = vrot.lane.b32.xlu0 %v1355, 7
        %v4182 = vpop.permute.xlu0 %4181
        %4183 = vrot.lane.b32.xlu0 %v1357, 7
        %v4184 = vpop.permute.xlu0 %4183
        %4185 = vrot.lane.b32.xlu0 %v1359, 7
        %v4186 = vpop.permute.xlu0 %4185
        %4187 = vrot.lane.b32.xlu0 %v1362, 7
        %v4188 = vpop.permute.xlu0 %4187
        %4189 = vrot.lane.b32.xlu0 %v1364, 7
        %v4190 = vpop.permute.xlu0 %4189
        %4191 = vrot.lane.b32.xlu0 %v1366, 7
        %v4192 = vpop.permute.xlu0 %4191
        %4193 = vrot.lane.b32.xlu0 %v1368, 7
        %v4194 = vpop.permute.xlu0 %4193
        %4195 = vrot.lane.b32.xlu0 %v1371, 7
        %v4196 = vpop.permute.xlu0 %4195
        %4197 = vrot.lane.b32.xlu0 %v1373, 7
        %v4198 = vpop.permute.xlu0 %4197
        %4199 = vrot.lane.b32.xlu0 %v1375, 7
        %v4200 = vpop.permute.xlu0 %4199
        %4201 = vrot.lane.b32.xlu0 %v1377, 7
        %v4202 = vpop.permute.xlu0 %4201
        %4203 = vrot.lane.b32.xlu0 %v1380, 7
        %v4204 = vpop.permute.xlu0 %4203
        %4205 = vrot.lane.b32.xlu0 %v1382, 7
        %v4206 = vpop.permute.xlu0 %4205
        %4207 = vrot.lane.b32.xlu0 %v1384, 7
        %v4208 = vpop.permute.xlu0 %4207
        %4209 = vrot.lane.b32.xlu0 %v1386, 7
        %v4210 = vpop.permute.xlu0 %4209
        %4211 = vrot.lane.b32.xlu0 %v1389, 7
        %v4212 = vpop.permute.xlu0 %4211
        %4213 = vrot.lane.b32.xlu0 %v1391, 7
        %v4214 = vpop.permute.xlu0 %4213
        %4215 = vrot.lane.b32.xlu0 %v1393, 7
        %v4216 = vpop.permute.xlu0 %4215
        %4217 = vrot.lane.b32.xlu0 %v1395, 7
        %v4218 = vpop.permute.xlu0 %4217
        %4219 = vrot.lane.b32.xlu0 %v1398, 7
        %v4220 = vpop.permute.xlu0 %4219
        %4221 = vrot.lane.b32.xlu0 %v1400, 7
        %v4222 = vpop.permute.xlu0 %4221
        %4223 = vrot.lane.b32.xlu0 %v1402, 7
        %v4224 = vpop.permute.xlu0 %4223
        %4225 = vrot.lane.b32.xlu0 %v1404, 7
        %v4226 = vpop.permute.xlu0 %4225
        %4227 = vrot.lane.b32.xlu0 %v1407, 7
        %v4228 = vpop.permute.xlu0 %4227
        %4229 = vrot.lane.b32.xlu0 %v1409, 7
        %v4230 = vpop.permute.xlu0 %4229
        %4231 = vrot.lane.b32.xlu0 %v1411, 7
        %v4232 = vpop.permute.xlu0 %4231
        %4233 = vrot.lane.b32.xlu0 %v1413, 7
        %v4234 = vpop.permute.xlu0 %4233
        %4235 = vrot.lane.b32.xlu0 %v1416, 7
        %v4236 = vpop.permute.xlu0 %4235
        %4237 = vrot.lane.b32.xlu0 %v1418, 7
        %v4238 = vpop.permute.xlu0 %4237
        %4239 = vrot.lane.b32.xlu0 %v1420, 7
        %v4240 = vpop.permute.xlu0 %4239
        %4241 = vrot.lane.b32.xlu0 %v1422, 7
        %v4242 = vpop.permute.xlu0 %4241
        %4243 = vrot.lane.b32.xlu0 %v1425, 7
        %v4244 = vpop.permute.xlu0 %4243
        %4245 = vrot.lane.b32.xlu0 %v1427, 7
        %v4246 = vpop.permute.xlu0 %4245
        %4247 = vrot.lane.b32.xlu0 %v1429, 7
        %v4248 = vpop.permute.xlu0 %4247
        %4249 = vrot.lane.b32.xlu0 %v1431, 7
        %v4250 = vpop.permute.xlu0 %4249
        %4251 = vrot.lane.b32.xlu0 %v1718, 7
        %v4252 = vpop.permute.xlu0 %4251
        %4253 = vrot.lane.b32.xlu0 %v1720, 7
        %v4254 = vpop.permute.xlu0 %4253
        %4255 = vrot.lane.b32.xlu0 %v1722, 7
        %v4256 = vpop.permute.xlu0 %4255
        %4257 = vrot.lane.b32.xlu0 %v1724, 7
        %v4258 = vpop.permute.xlu0 %4257
        %4259 = vrot.lane.b32.xlu0 %v1152, 7
        %v4260 = vpop.permute.xlu0 %4259
        %4386 = vrot.lane.b32.xlu0 %v1446, 8
        %v4387 = vpop.permute.xlu0 %4386
        %4388 = vrot.lane.b32.xlu0 %v1448, 8
        %v4389 = vpop.permute.xlu0 %4388
        %4390 = vrot.lane.b32.xlu0 %v1450, 8
        %v4391 = vpop.permute.xlu0 %4390
        %4392 = vrot.lane.b32.xlu0 %v1452, 8
        %v4393 = vpop.permute.xlu0 %4392
        %4394 = vrot.lane.b32.xlu0 %v1455, 8
        %v4395 = vpop.permute.xlu0 %4394
        %4396 = vrot.lane.b32.xlu0 %v1457, 8
        %v4397 = vpop.permute.xlu0 %4396
        %4398 = vrot.lane.b32.xlu0 %v1459, 8
        %v4399 = vpop.permute.xlu0 %4398
        %4400 = vrot.lane.b32.xlu0 %v1461, 8
        %v4401 = vpop.permute.xlu0 %4400
        %4402 = vrot.lane.b32.xlu0 %v1464, 8
        %v4403 = vpop.permute.xlu0 %4402
        %4404 = vrot.lane.b32.xlu0 %v1466, 8
        %v4405 = vpop.permute.xlu0 %4404
        %4406 = vrot.lane.b32.xlu0 %v1468, 8
        %v4407 = vpop.permute.xlu0 %4406
        %4408 = vrot.lane.b32.xlu0 %v1470, 8
        %v4409 = vpop.permute.xlu0 %4408
        %4410 = vrot.lane.b32.xlu0 %v1473, 8
        %v4411 = vpop.permute.xlu0 %4410
        %4412 = vrot.lane.b32.xlu0 %v1475, 8
        %v4413 = vpop.permute.xlu0 %4412
        %4414 = vrot.lane.b32.xlu0 %v1477, 8
        %v4415 = vpop.permute.xlu0 %4414
        %4416 = vrot.lane.b32.xlu0 %v1479, 8
        %v4417 = vpop.permute.xlu0 %4416
        %4418 = vrot.lane.b32.xlu0 %v1482, 8
        %v4419 = vpop.permute.xlu0 %4418
        %4420 = vrot.lane.b32.xlu0 %v1484, 8
        %v4421 = vpop.permute.xlu0 %4420
        %4422 = vrot.lane.b32.xlu0 %v1486, 8
        %v4423 = vpop.permute.xlu0 %4422
        %4424 = vrot.lane.b32.xlu0 %v1488, 8
        %v4425 = vpop.permute.xlu0 %4424
        %4426 = vrot.lane.b32.xlu0 %v1491, 8
        %v4427 = vpop.permute.xlu0 %4426
        %4428 = vrot.lane.b32.xlu0 %v1493, 8
        %v4429 = vpop.permute.xlu0 %4428
        %4430 = vrot.lane.b32.xlu0 %v1495, 8
        %v4431 = vpop.permute.xlu0 %4430
        %4432 = vrot.lane.b32.xlu0 %v1497, 8
        %v4433 = vpop.permute.xlu0 %4432
        %4434 = vrot.lane.b32.xlu0 %v1500, 8
        %v4435 = vpop.permute.xlu0 %4434
        %4436 = vrot.lane.b32.xlu0 %v1502, 8
        %v4437 = vpop.permute.xlu0 %4436
        %4438 = vrot.lane.b32.xlu0 %v1504, 8
        %v4439 = vpop.permute.xlu0 %4438
        %4440 = vrot.lane.b32.xlu0 %v1506, 8
        %v4441 = vpop.permute.xlu0 %4440
        %4442 = vrot.lane.b32.xlu0 %v1509, 8
        %v4443 = vpop.permute.xlu0 %4442
        %4444 = vrot.lane.b32.xlu0 %v1511, 8
        %v4445 = vpop.permute.xlu0 %4444
        %4446 = vrot.lane.b32.xlu0 %v1513, 8
        %v4447 = vpop.permute.xlu0 %4446
        %4448 = vrot.lane.b32.xlu0 %v1515, 8
        %v4449 = vpop.permute.xlu0 %4448
        %4450 = vrot.lane.b32.xlu0 %v1518, 8
        %v4451 = vpop.permute.xlu0 %4450
        %4452 = vrot.lane.b32.xlu0 %v1520, 8
        %v4453 = vpop.permute.xlu0 %4452
        %4454 = vrot.lane.b32.xlu0 %v1522, 8
        %v4455 = vpop.permute.xlu0 %4454
        %4456 = vrot.lane.b32.xlu0 %v1524, 8
        %v4457 = vpop.permute.xlu0 %4456
        %4458 = vrot.lane.b32.xlu0 %v1527, 8
        %v4459 = vpop.permute.xlu0 %4458
        %4460 = vrot.lane.b32.xlu0 %v1529, 8
        %v4461 = vpop.permute.xlu0 %4460
        %4462 = vrot.lane.b32.xlu0 %v1531, 8
        %v4463 = vpop.permute.xlu0 %4462
        %4464 = vrot.lane.b32.xlu0 %v1533, 8
        %v4465 = vpop.permute.xlu0 %4464
        %4466 = vrot.lane.b32.xlu0 %v1536, 8
        %v4467 = vpop.permute.xlu0 %4466
        %4468 = vrot.lane.b32.xlu0 %v1538, 8
        %v4469 = vpop.permute.xlu0 %4468
        %4470 = vrot.lane.b32.xlu0 %v1540, 8
        %v4471 = vpop.permute.xlu0 %4470
        %4472 = vrot.lane.b32.xlu0 %v1542, 8
        %v4473 = vpop.permute.xlu0 %4472
        %4474 = vrot.lane.b32.xlu0 %v1545, 8
        %v4475 = vpop.permute.xlu0 %4474
        %4476 = vrot.lane.b32.xlu0 %v1547, 8
        %v4477 = vpop.permute.xlu0 %4476
        %4478 = vrot.lane.b32.xlu0 %v1549, 8
        %v4479 = vpop.permute.xlu0 %4478
        %4480 = vrot.lane.b32.xlu0 %v1551, 8
        %v4481 = vpop.permute.xlu0 %4480
        %4482 = vrot.lane.b32.xlu0 %v1554, 8
        %v4483 = vpop.permute.xlu0 %4482
        %4484 = vrot.lane.b32.xlu0 %v1556, 8
        %v4485 = vpop.permute.xlu0 %4484
        %4486 = vrot.lane.b32.xlu0 %v1558, 8
        %v4487 = vpop.permute.xlu0 %4486
        %4488 = vrot.lane.b32.xlu0 %v1560, 8
        %v4489 = vpop.permute.xlu0 %4488
        %4490 = vrot.lane.b32.xlu0 %v1563, 8
        %v4491 = vpop.permute.xlu0 %4490
        %4492 = vrot.lane.b32.xlu0 %v1565, 8
        %v4493 = vpop.permute.xlu0 %4492
        %4494 = vrot.lane.b32.xlu0 %v1567, 8
        %v4495 = vpop.permute.xlu0 %4494
        %4496 = vrot.lane.b32.xlu0 %v1569, 8
        %v4497 = vpop.permute.xlu0 %4496
        %4498 = vrot.lane.b32.xlu0 %v1572, 8
        %v4499 = vpop.permute.xlu0 %4498
        %4500 = vrot.lane.b32.xlu0 %v1574, 8
        %v4501 = vpop.permute.xlu0 %4500
        %4502 = vrot.lane.b32.xlu0 %v1576, 8
        %v4503 = vpop.permute.xlu0 %4502
        %4504 = vrot.lane.b32.xlu0 %v1578, 8
        %v4505 = vpop.permute.xlu0 %4504
        %4506 = vrot.lane.b32.xlu0 %v1581, 8
        %v4507 = vpop.permute.xlu0 %4506
        %4508 = vrot.lane.b32.xlu0 %v1583, 8
        %v4509 = vpop.permute.xlu0 %4508
        %4510 = vrot.lane.b32.xlu0 %v1585, 8
        %v4511 = vpop.permute.xlu0 %4510
        %4512 = vrot.lane.b32.xlu0 %v1587, 8
        %v4513 = vpop.permute.xlu0 %4512
        %4514 = vrot.lane.b32.xlu0 %v1590, 8
        %v4515 = vpop.permute.xlu0 %4514
        %4516 = vrot.lane.b32.xlu0 %v1592, 8
        %v4517 = vpop.permute.xlu0 %4516
        %4518 = vrot.lane.b32.xlu0 %v1594, 8
        %v4519 = vpop.permute.xlu0 %4518
        %4520 = vrot.lane.b32.xlu0 %v1596, 8
        %v4521 = vpop.permute.xlu0 %4520
        %4522 = vrot.lane.b32.xlu0 %v1599, 8
        %v4523 = vpop.permute.xlu0 %4522
        %4524 = vrot.lane.b32.xlu0 %v1601, 8
        %v4525 = vpop.permute.xlu0 %4524
        %4526 = vrot.lane.b32.xlu0 %v1603, 8
        %v4527 = vpop.permute.xlu0 %4526
        %4528 = vrot.lane.b32.xlu0 %v1605, 8
        %v4529 = vpop.permute.xlu0 %4528
        %4530 = vrot.lane.b32.xlu0 %v1608, 8
        %v4531 = vpop.permute.xlu0 %4530
        %4532 = vrot.lane.b32.xlu0 %v1610, 8
        %v4533 = vpop.permute.xlu0 %4532
        %4534 = vrot.lane.b32.xlu0 %v1612, 8
        %v4535 = vpop.permute.xlu0 %4534
        %4536 = vrot.lane.b32.xlu0 %v1614, 8
        %v4537 = vpop.permute.xlu0 %4536
        %4538 = vrot.lane.b32.xlu0 %v1617, 8
        %v4539 = vpop.permute.xlu0 %4538
        %4540 = vrot.lane.b32.xlu0 %v1619, 8
        %v4541 = vpop.permute.xlu0 %4540
        %4542 = vrot.lane.b32.xlu0 %v1621, 8
        %v4543 = vpop.permute.xlu0 %4542
        %4544 = vrot.lane.b32.xlu0 %v1623, 8
        %v4545 = vpop.permute.xlu0 %4544
        %4546 = vrot.lane.b32.xlu0 %v1626, 8
        %v4547 = vpop.permute.xlu0 %4546
        %4548 = vrot.lane.b32.xlu0 %v1628, 8
        %v4549 = vpop.permute.xlu0 %4548
        %4550 = vrot.lane.b32.xlu0 %v1630, 8
        %v4551 = vpop.permute.xlu0 %4550
        %4552 = vrot.lane.b32.xlu0 %v1632, 8
        %v4553 = vpop.permute.xlu0 %4552
        %4554 = vrot.lane.b32.xlu0 %v1635, 8
        %v4555 = vpop.permute.xlu0 %4554
        %4556 = vrot.lane.b32.xlu0 %v1637, 8
        %v4557 = vpop.permute.xlu0 %4556
        %4558 = vrot.lane.b32.xlu0 %v1639, 8
        %v4559 = vpop.permute.xlu0 %4558
        %4560 = vrot.lane.b32.xlu0 %v1641, 8
        %v4561 = vpop.permute.xlu0 %4560
        %4562 = vrot.lane.b32.xlu0 %v1644, 8
        %v4563 = vpop.permute.xlu0 %4562
        %4564 = vrot.lane.b32.xlu0 %v1646, 8
        %v4565 = vpop.permute.xlu0 %4564
        %4566 = vrot.lane.b32.xlu0 %v1648, 8
        %v4567 = vpop.permute.xlu0 %4566
        %4568 = vrot.lane.b32.xlu0 %v1650, 8
        %v4569 = vpop.permute.xlu0 %4568
        %4570 = vrot.lane.b32.xlu0 %v1653, 8
        %v4571 = vpop.permute.xlu0 %4570
        %4572 = vrot.lane.b32.xlu0 %v1655, 8
        %v4573 = vpop.permute.xlu0 %4572
        %4574 = vrot.lane.b32.xlu0 %v1657, 8
        %v4575 = vpop.permute.xlu0 %4574
        %4576 = vrot.lane.b32.xlu0 %v1659, 8
        %v4577 = vpop.permute.xlu0 %4576
        %4578 = vrot.lane.b32.xlu0 %v1662, 8
        %v4579 = vpop.permute.xlu0 %4578
        %4580 = vrot.lane.b32.xlu0 %v1664, 8
        %v4581 = vpop.permute.xlu0 %4580
        %4582 = vrot.lane.b32.xlu0 %v1666, 8
        %v4583 = vpop.permute.xlu0 %4582
        %4584 = vrot.lane.b32.xlu0 %v1668, 8
        %v4585 = vpop.permute.xlu0 %4584
        %4586 = vrot.lane.b32.xlu0 %v1671, 8
        %v4587 = vpop.permute.xlu0 %4586
        %4588 = vrot.lane.b32.xlu0 %v1673, 8
        %v4589 = vpop.permute.xlu0 %4588
        %4590 = vrot.lane.b32.xlu0 %v1675, 8
        %v4591 = vpop.permute.xlu0 %4590
        %4592 = vrot.lane.b32.xlu0 %v1677, 8
        %v4593 = vpop.permute.xlu0 %4592
        %4594 = vrot.lane.b32.xlu0 %v1680, 8
        %v4595 = vpop.permute.xlu0 %4594
        %4596 = vrot.lane.b32.xlu0 %v1682, 8
        %v4597 = vpop.permute.xlu0 %4596
        %4598 = vrot.lane.b32.xlu0 %v1684, 8
        %v4599 = vpop.permute.xlu0 %4598
        %4600 = vrot.lane.b32.xlu0 %v1686, 8
        %v4601 = vpop.permute.xlu0 %4600
        %4602 = vrot.lane.b32.xlu0 %v1689, 8
        %v4603 = vpop.permute.xlu0 %4602
        %4604 = vrot.lane.b32.xlu0 %v1691, 8
        %v4605 = vpop.permute.xlu0 %4604
        %4606 = vrot.lane.b32.xlu0 %v1693, 8
        %v4607 = vpop.permute.xlu0 %4606
        %4608 = vrot.lane.b32.xlu0 %v1695, 8
        %v4609 = vpop.permute.xlu0 %4608
        %4610 = vrot.lane.b32.xlu0 %v1698, 8
        %v4611 = vpop.permute.xlu0 %4610
        %4612 = vrot.lane.b32.xlu0 %v1700, 8
        %v4613 = vpop.permute.xlu0 %4612
        %4614 = vrot.lane.b32.xlu0 %v1702, 8
        %v4615 = vpop.permute.xlu0 %4614
        %4616 = vrot.lane.b32.xlu0 %v1704, 8
        %v4617 = vpop.permute.xlu0 %4616
        %4618 = vrot.lane.b32.xlu0 %v1707, 8
        %v4619 = vpop.permute.xlu0 %4618
        %4620 = vrot.lane.b32.xlu0 %v1709, 8
        %v4621 = vpop.permute.xlu0 %4620
        %4622 = vrot.lane.b32.xlu0 %v1711, 8
        %v4623 = vpop.permute.xlu0 %4622
        %4624 = vrot.lane.b32.xlu0 %v1713, 8
        %v4625 = vpop.permute.xlu0 %4624
        %4626 = vrot.lane.b32.xlu0 %v1727, 8
        %v4627 = vpop.permute.xlu0 %4626
        %4628 = vrot.lane.b32.xlu0 %v1729, 8
        %v4629 = vpop.permute.xlu0 %4628
        %4630 = vrot.lane.b32.xlu0 %v1731, 8
        %v4631 = vpop.permute.xlu0 %4630
        %4632 = vrot.lane.b32.xlu0 %v1733, 8
        %v4633 = vpop.permute.xlu0 %4632
        %4634 = vrot.lane.b32.xlu0 %v1434, 8
        %v4635 = vpop.permute.xlu0 %4634
        %vm4761 = vcmask 7168
        %v4762 = vsel %vm4761, 0.0, %v1735
        %v4763 = vsel %vm4761, %v1023, %v1737
        %v4764 = vsel %vm4761, %v644, %v1739
        %v4765 = vsel %vm4761, %v646, %v1741
        %v4766 = vsel %vm4761, %v648, %v1743
        %v4767 = vsel %vm4761, %v1024, %v1745
        %v4768 = vsel %vm4761, %v651, %v1747
        %v4769 = vsel %vm4761, %v653, %v1749
        %v4770 = vsel %vm4761, %v655, %v1751
        %v4771 = vsel %vm4761, %v1025, %v1753
        %v4772 = vsel %vm4761, %v658, %v1755
        %v4773 = vsel %vm4761, %v660, %v1757
        %v4774 = vsel %vm4761, %v662, %v1759
        %v4775 = vsel %vm4761, %v1026, %v1761
        %v4776 = vsel %vm4761, %v665, %v1763
        %v4777 = vsel %vm4761, %v667, %v1765
        %v4778 = vsel %vm4761, %v669, %v1767
        %v4779 = vsel %vm4761, %v1027, %v1769
        %v4780 = vsel %vm4761, %v672, %v1771
        %v4781 = vsel %vm4761, %v674, %v1773
        %v4782 = vsel %vm4761, %v676, %v1775
        %v4783 = vsel %vm4761, %v1028, %v1777
        %v4784 = vsel %vm4761, %v679, %v1779
        %v4785 = vsel %vm4761, %v681, %v1781
        %v4786 = vsel %vm4761, %v683, %v1783
        %v4787 = vsel %vm4761, %v1029, %v1785
        %v4788 = vsel %vm4761, %v686, %v1787
        %v4789 = vsel %vm4761, %v688, %v1789
        %v4790 = vsel %vm4761, %v690, %v1791
        %v4791 = vsel %vm4761, %v1030, %v1793
        %v4792 = vsel %vm4761, %v693, %v1795
        %v4793 = vsel %vm4761, %v695, %v1797
        %v4794 = vsel %vm4761, %v697, %v1799
        %v4795 = vsel %vm4761, %v1031, %v1801
        %v4796 = vsel %vm4761, %v700, %v1803
        %v4797 = vsel %vm4761, %v702, %v1805
        %v4798 = vsel %vm4761, %v704, %v1807
        %v4799 = vsel %vm4761, %v1032, %v1809
        %v4800 = vsel %vm4761, %v707, %v1811
        %v4801 = vsel %vm4761, %v709, %v1813
        %v4802 = vsel %vm4761, %v711, %v1815
        %v4803 = vsel %vm4761, %v1033, %v1817
        %v4804 = vsel %vm4761, %v714, %v1819
        %v4805 = vsel %vm4761, %v716, %v1821
        %v4806 = vsel %vm4761, %v718, %v1823
        %v4807 = vsel %vm4761, %v1034, %v1825
        %v4808 = vsel %vm4761, %v721, %v1827
        %v4809 = vsel %vm4761, %v723, %v1829
        %v4810 = vsel %vm4761, %v725, %v1831
        %v4811 = vsel %vm4761, %v1035, %v1833
        %v4812 = vsel %vm4761, %v728, %v1835
        %v4813 = vsel %vm4761, %v730, %v1837
        %v4814 = vsel %vm4761, %v732, %v1839
        %v4815 = vsel %vm4761, %v1036, %v1841
        %v4816 = vsel %vm4761, %v735, %v1843
        %v4817 = vsel %vm4761, %v737, %v1845
        %v4818 = vsel %vm4761, %v739, %v1847
        %v4819 = vsel %vm4761, %v1037, %v1849
        %v4820 = vsel %vm4761, %v742, %v1851
        %v4821 = vsel %vm4761, %v744, %v1853
        %v4822 = vsel %vm4761, %v746, %v1855
        %v4823 = vsel %vm4761, %v1038, %v1857
        %v4824 = vsel %vm4761, %v749, %v1859
        %v4825 = vsel %vm4761, %v751, %v1861
        %v4826 = vsel %vm4761, %v753, %v1863
        %v4827 = vsel %vm4761, %v1039, %v1865
        %v4828 = vsel %vm4761, %v756, %v1867
        %v4829 = vsel %vm4761, %v758, %v1869
        %v4830 = vsel %vm4761, %v760, %v1871
        %v4831 = vsel %vm4761, %v1040, %v1873
        %v4832 = vsel %vm4761, %v763, %v1875
        %v4833 = vsel %vm4761, %v765, %v1877
        %v4834 = vsel %vm4761, %v767, %v1879
        %v4835 = vsel %vm4761, %v1041, %v1881
        %v4836 = vsel %vm4761, %v770, %v1883
        %v4837 = vsel %vm4761, %v772, %v1885
        %v4838 = vsel %vm4761, %v774, %v1887
        %v4839 = vsel %vm4761, %v1042, %v1889
        %v4840 = vsel %vm4761, %v777, %v1891
        %v4841 = vsel %vm4761, %v779, %v1893
        %v4842 = vsel %vm4761, %v781, %v1895
        %v4843 = vsel %vm4761, %v1043, %v1897
        %v4844 = vsel %vm4761, %v784, %v1899
        %v4845 = vsel %vm4761, %v786, %v1901
        %v4846 = vsel %vm4761, %v788, %v1903
        %v4847 = vsel %vm4761, %v1044, %v1905
        %v4848 = vsel %vm4761, %v791, %v1907
        %v4849 = vsel %vm4761, %v793, %v1909
        %v4850 = vsel %vm4761, %v795, %v1911
        %v4851 = vsel %vm4761, %v1045, %v1913
        %v4852 = vsel %vm4761, %v798, %v1915
        %v4853 = vsel %vm4761, %v800, %v1917
        %v4854 = vsel %vm4761, %v802, %v1919
        %v4855 = vsel %vm4761, %v1046, %v1921
        %v4856 = vsel %vm4761, %v805, %v1923
        %v4857 = vsel %vm4761, %v807, %v1925
        %v4858 = vsel %vm4761, %v809, %v1927
        %v4859 = vsel %vm4761, %v1047, %v1929
        %v4860 = vsel %vm4761, %v812, %v1931
        %v4861 = vsel %vm4761, %v814, %v1933
        %v4862 = vsel %vm4761, %v816, %v1935
        %v4863 = vsel %vm4761, %v1048, %v1937
        %v4864 = vsel %vm4761, %v819, %v1939
        %v4865 = vsel %vm4761, %v821, %v1941
        %v4866 = vsel %vm4761, %v823, %v1943
        %v4867 = vsel %vm4761, %v1049, %v1945
        %v4868 = vsel %vm4761, %v826, %v1947
        %v4869 = vsel %vm4761, %v828, %v1949
        %v4870 = vsel %vm4761, %v830, %v1951
        %v4871 = vsel %vm4761, %v1050, %v1953
        %v4872 = vsel %vm4761, %v833, %v1955
        %v4873 = vsel %vm4761, %v835, %v1957
        %v4874 = vsel %vm4761, %v837, %v1959
        %v4875 = vsel %vm4761, %v1051, %v1961
        %v4876 = vsel %vm4761, %v840, %v1963
        %v4877 = vsel %vm4761, %v842, %v1965
        %v4878 = vsel %vm4761, %v844, %v1967
        %v4879 = vsel %vm4761, %v1052, %v1969
        %v4880 = vsel %vm4761, %v847, %v1971
        %v4881 = vsel %vm4761, %v849, %v1973
        %v4882 = vsel %vm4761, %v851, %v1975
        %v4883 = vsel %vm4761, %v1053, %v1977
        %v4884 = vsel %vm4761, %v854, %v1979
        %v4885 = vsel %vm4761, %v856, %v1981
        %v4886 = vsel %vm4761, %v858, %v1983
        %vm4887 = vcmask 15360
        %v4888 = vsel %vm4887, %v4762, %v2110
        %v4889 = vsel %vm4887, %v4763, %v2112
        %v4890 = vsel %vm4887, %v4764, %v2114
        %v4891 = vsel %vm4887, %v4765, %v2116
        %v4892 = vsel %vm4887, %v4766, %v2118
        %v4893 = vsel %vm4887, %v4767, %v2120
        %v4894 = vsel %vm4887, %v4768, %v2122
        %v4895 = vsel %vm4887, %v4769, %v2124
        %v4896 = vsel %vm4887, %v4770, %v2126
        %v4897 = vsel %vm4887, %v4771, %v2128
        %v4898 = vsel %vm4887, %v4772, %v2130
        %v4899 = vsel %vm4887, %v4773, %v2132
        %v4900 = vsel %vm4887, %v4774, %v2134
        %v4901 = vsel %vm4887, %v4775, %v2136
        %v4902 = vsel %vm4887, %v4776, %v2138
        %v4903 = vsel %vm4887, %v4777, %v2140
        %v4904 = vsel %vm4887, %v4778, %v2142
        %v4905 = vsel %vm4887, %v4779, %v2144
        %v4906 = vsel %vm4887, %v4780, %v2146
        %v4907 = vsel %vm4887, %v4781, %v2148
        %v4908 = vsel %vm4887, %v4782, %v2150
        %v4909 = vsel %vm4887, %v4783, %v2152
        %v4910 = vsel %vm4887, %v4784, %v2154
        %v4911 = vsel %vm4887, %v4785, %v2156
        %v4912 = vsel %vm4887, %v4786, %v2158
        %v4913 = vsel %vm4887, %v4787, %v2160
        %v4914 = vsel %vm4887, %v4788, %v2162
        %v4915 = vsel %vm4887, %v4789, %v2164
        %v4916 = vsel %vm4887, %v4790, %v2166
        %v4917 = vsel %vm4887, %v4791, %v2168
        %v4918 = vsel %vm4887, %v4792, %v2170
        %v4919 = vsel %vm4887, %v4793, %v2172
        %v4920 = vsel %vm4887, %v4794, %v2174
        %v4921 = vsel %vm4887, %v4795, %v2176
        %v4922 = vsel %vm4887, %v4796, %v2178
        %v4923 = vsel %vm4887, %v4797, %v2180
        %v4924 = vsel %vm4887, %v4798, %v2182
        %v4925 = vsel %vm4887, %v4799, %v2184
        %v4926 = vsel %vm4887, %v4800, %v2186
        %v4927 = vsel %vm4887, %v4801, %v2188
        %v4928 = vsel %vm4887, %v4802, %v2190
        %v4929 = vsel %vm4887, %v4803, %v2192
        %v4930 = vsel %vm4887, %v4804, %v2194
        %v4931 = vsel %vm4887, %v4805, %v2196
        %v4932 = vsel %vm4887, %v4806, %v2198
        %v4933 = vsel %vm4887, %v4807, %v2200
        %v4934 = vsel %vm4887, %v4808, %v2202
        %v4935 = vsel %vm4887, %v4809, %v2204
        %v4936 = vsel %vm4887, %v4810, %v2206
        %v4937 = vsel %vm4887, %v4811, %v2208
        %v4938 = vsel %vm4887, %v4812, %v2210
        %v4939 = vsel %vm4887, %v4813, %v2212
        %v4940 = vsel %vm4887, %v4814, %v2214
        %v4941 = vsel %vm4887, %v4815, %v2216
        %v4942 = vsel %vm4887, %v4816, %v2218
        %v4943 = vsel %vm4887, %v4817, %v2220
        %v4944 = vsel %vm4887, %v4818, %v2222
        %v4945 = vsel %vm4887, %v4819, %v2224
        %v4946 = vsel %vm4887, %v4820, %v2226
        %v4947 = vsel %vm4887, %v4821, %v2228
        %v4948 = vsel %vm4887, %v4822, %v2230
        %v4949 = vsel %vm4887, %v4823, %v2232
        %v4950 = vsel %vm4887, %v4824, %v2234
        %v4951 = vsel %vm4887, %v4825, %v2236
        %v4952 = vsel %vm4887, %v4826, %v2238
        %v4953 = vsel %vm4887, %v4827, %v2240
        %v4954 = vsel %vm4887, %v4828, %v2242
        %v4955 = vsel %vm4887, %v4829, %v2244
        %v4956 = vsel %vm4887, %v4830, %v2246
        %v4957 = vsel %vm4887, %v4831, %v2248
        %v4958 = vsel %vm4887, %v4832, %v2250
        %v4959 = vsel %vm4887, %v4833, %v2252
        %v4960 = vsel %vm4887, %v4834, %v2254
        %v4961 = vsel %vm4887, %v4835, %v2256
        %v4962 = vsel %vm4887, %v4836, %v2258
        %v4963 = vsel %vm4887, %v4837, %v2260
        %v4964 = vsel %vm4887, %v4838, %v2262
        %v4965 = vsel %vm4887, %v4839, %v2264
        %v4966 = vsel %vm4887, %v4840, %v2266
        %v4967 = vsel %vm4887, %v4841, %v2268
        %v4968 = vsel %vm4887, %v4842, %v2270
        %v4969 = vsel %vm4887, %v4843, %v2272
        %v4970 = vsel %vm4887, %v4844, %v2274
        %v4971 = vsel %vm4887, %v4845, %v2276
        %v4972 = vsel %vm4887, %v4846, %v2278
        %v4973 = vsel %vm4887, %v4847, %v2280
        %v4974 = vsel %vm4887, %v4848, %v2282
        %v4975 = vsel %vm4887, %v4849, %v2284
        %v4976 = vsel %vm4887, %v4850, %v2286
        %v4977 = vsel %vm4887, %v4851, %v2288
        %v4978 = vsel %vm4887, %v4852, %v2290
        %v4979 = vsel %vm4887, %v4853, %v2292
        %v4980 = vsel %vm4887, %v4854, %v2294
        %v4981 = vsel %vm4887, %v4855, %v2296
        %v4982 = vsel %vm4887, %v4856, %v2298
        %v4983 = vsel %vm4887, %v4857, %v2300
        %v4984 = vsel %vm4887, %v4858, %v2302
        %v4985 = vsel %vm4887, %v4859, %v2304
        %v4986 = vsel %vm4887, %v4860, %v2306
        %v4987 = vsel %vm4887, %v4861, %v2308
        %v4988 = vsel %vm4887, %v4862, %v2310
        %v4989 = vsel %vm4887, %v4863, %v2312
        %v4990 = vsel %vm4887, %v4864, %v2314
        %v4991 = vsel %vm4887, %v4865, %v2316
        %v4992 = vsel %vm4887, %v4866, %v2318
        %v4993 = vsel %vm4887, %v4867, %v2320
        %v4994 = vsel %vm4887, %v4868, %v2322
        %v4995 = vsel %vm4887, %v4869, %v2324
        %v4996 = vsel %vm4887, %v4870, %v2326
        %v4997 = vsel %vm4887, %v4871, %v2328
        %v4998 = vsel %vm4887, %v4872, %v2330
        %v4999 = vsel %vm4887, %v4873, %v2332
        %v5000 = vsel %vm4887, %v4874, %v2334
        %v5001 = vsel %vm4887, %v4875, %v2336
        %v5002 = vsel %vm4887, %v4876, %v2338
        %v5003 = vsel %vm4887, %v4877, %v2340
        %v5004 = vsel %vm4887, %v4878, %v2342
        %v5005 = vsel %vm4887, %v4879, %v2344
        %v5006 = vsel %vm4887, %v4880, %v2346
        %v5007 = vsel %vm4887, %v4881, %v2348
        %v5008 = vsel %vm4887, %v4882, %v2350
        %v5009 = vsel %vm4887, %v4883, %v2352
        %v5010 = vsel %vm4887, %v4884, %v2354
        %v5011 = vsel %vm4887, %v4885, %v2356
        %v5012 = vsel %vm4887, %v4886, %v2358
        %vm5013 = vcmask 23552
        %v5014 = vsel %vm5013, %v4888, %v2485
        %v5015 = vsel %vm5013, %v4888, %v2487
        %v5016 = vsel %vm5013, %v4888, %v2489
        %v5017 = vsel %vm5013, %v4888, %v2491
        %v5018 = vsel %vm5013, %v4889, %v2493
        %v5019 = vsel %vm5013, %v4890, %v2495
        %v5020 = vsel %vm5013, %v4891, %v2497
        %v5021 = vsel %vm5013, %v4892, %v2499
        %v5022 = vsel %vm5013, %v4893, %v2501
        %v5023 = vsel %vm5013, %v4894, %v2503
        %v5024 = vsel %vm5013, %v4895, %v2505
        %v5025 = vsel %vm5013, %v4896, %v2507
        %v5026 = vsel %vm5013, %v4897, %v2509
        %v5027 = vsel %vm5013, %v4898, %v2511
        %v5028 = vsel %vm5013, %v4899, %v2513
        %v5029 = vsel %vm5013, %v4900, %v2515
        %v5030 = vsel %vm5013, %v4901, %v2517
        %v5031 = vsel %vm5013, %v4902, %v2519
        %v5032 = vsel %vm5013, %v4903, %v2521
        %v5033 = vsel %vm5013, %v4904, %v2523
        %v5034 = vsel %vm5013, %v4905, %v2525
        %v5035 = vsel %vm5013, %v4906, %v2527
        %v5036 = vsel %vm5013, %v4907, %v2529
        %v5037 = vsel %vm5013, %v4908, %v2531
        %v5038 = vsel %vm5013, %v4909, %v2533
        %v5039 = vsel %vm5013, %v4910, %v2535
        %v5040 = vsel %vm5013, %v4911, %v2537
        %v5041 = vsel %vm5013, %v4912, %v2539
        %v5042 = vsel %vm5013, %v4913, %v2541
        %v5043 = vsel %vm5013, %v4914, %v2543
        %v5044 = vsel %vm5013, %v4915, %v2545
        %v5045 = vsel %vm5013, %v4916, %v2547
        %v5046 = vsel %vm5013, %v4917, %v2549
        %v5047 = vsel %vm5013, %v4918, %v2551
        %v5048 = vsel %vm5013, %v4919, %v2553
        %v5049 = vsel %vm5013, %v4920, %v2555
        %v5050 = vsel %vm5013, %v4921, %v2557
        %v5051 = vsel %vm5013, %v4922, %v2559
        %v5052 = vsel %vm5013, %v4923, %v2561
        %v5053 = vsel %vm5013, %v4924, %v2563
        %v5054 = vsel %vm5013, %v4925, %v2565
        %v5055 = vsel %vm5013, %v4926, %v2567
        %v5056 = vsel %vm5013, %v4927, %v2569
        %v5057 = vsel %vm5013, %v4928, %v2571
        %v5058 = vsel %vm5013, %v4929, %v2573
        %v5059 = vsel %vm5013, %v4930, %v2575
        %v5060 = vsel %vm5013, %v4931, %v2577
        %v5061 = vsel %vm5013, %v4932, %v2579
        %v5062 = vsel %vm5013, %v4933, %v2581
        %v5063 = vsel %vm5013, %v4934, %v2583
        %v5064 = vsel %vm5013, %v4935, %v2585
        %v5065 = vsel %vm5013, %v4936, %v2587
        %v5066 = vsel %vm5013, %v4937, %v2589
        %v5067 = vsel %vm5013, %v4938, %v2591
        %v5068 = vsel %vm5013, %v4939, %v2593
        %v5069 = vsel %vm5013, %v4940, %v2595
        %v5070 = vsel %vm5013, %v4941, %v2597
        %v5071 = vsel %vm5013, %v4942, %v2599
        %v5072 = vsel %vm5013, %v4943, %v2601
        %v5073 = vsel %vm5013, %v4944, %v2603
        %v5074 = vsel %vm5013, %v4945, %v2605
        %v5075 = vsel %vm5013, %v4946, %v2607
        %v5076 = vsel %vm5013, %v4947, %v2609
        %v5077 = vsel %vm5013, %v4948, %v2611
        %v5078 = vsel %vm5013, %v4949, %v2613
        %v5079 = vsel %vm5013, %v4950, %v2615
        %v5080 = vsel %vm5013, %v4951, %v2617
        %v5081 = vsel %vm5013, %v4952, %v2619
        %v5082 = vsel %vm5013, %v4953, %v2621
        %v5083 = vsel %vm5013, %v4954, %v2623
        %v5084 = vsel %vm5013, %v4955, %v2625
        %v5085 = vsel %vm5013, %v4956, %v2627
        %v5086 = vsel %vm5013, %v4957, %v2629
        %v5087 = vsel %vm5013, %v4958, %v2631
        %v5088 = vsel %vm5013, %v4959, %v2633
        %v5089 = vsel %vm5013, %v4960, %v2635
        %v5090 = vsel %vm5013, %v4961, %v2637
        %v5091 = vsel %vm5013, %v4962, %v2639
        %v5092 = vsel %vm5013, %v4963, %v2641
        %v5093 = vsel %vm5013, %v4964, %v2643
        %v5094 = vsel %vm5013, %v4965, %v2645
        %v5095 = vsel %vm5013, %v4966, %v2647
        %v5096 = vsel %vm5013, %v4967, %v2649
        %v5097 = vsel %vm5013, %v4968, %v2651
        %v5098 = vsel %vm5013, %v4969, %v2653
        %v5099 = vsel %vm5013, %v4970, %v2655
        %v5100 = vsel %vm5013, %v4971, %v2657
        %v5101 = vsel %vm5013, %v4972, %v2659
        %v5102 = vsel %vm5013, %v4973, %v2661
        %v5103 = vsel %vm5013, %v4974, %v2663
        %v5104 = vsel %vm5013, %v4975, %v2665
        %v5105 = vsel %vm5013, %v4976, %v2667
        %v5106 = vsel %vm5013, %v4977, %v2669
        %v5107 = vsel %vm5013, %v4978, %v2671
        %v5108 = vsel %vm5013, %v4979, %v2673
        %v5109 = vsel %vm5013, %v4980, %v2675
        %v5110 = vsel %vm5013, %v4981, %v2677
        %v5111 = vsel %vm5013, %v4982, %v2679
        %v5112 = vsel %vm5013, %v4983, %v2681
        %v5113 = vsel %vm5013, %v4984, %v2683
        %v5114 = vsel %vm5013, %v4985, %v2685
        %v5115 = vsel %vm5013, %v4986, %v2687
        %v5116 = vsel %vm5013, %v4987, %v2689
        %v5117 = vsel %vm5013, %v4988, %v2691
        %v5118 = vsel %vm5013, %v4989, %v2693
        %v5119 = vsel %vm5013, %v4990, %v2695
        %v5120 = vsel %vm5013, %v4991, %v2697
        %v5121 = vsel %vm5013, %v4992, %v2699
        %v5122 = vsel %vm5013, %v4993, %v2701
        %v5123 = vsel %vm5013, %v4994, %v2703
        %v5124 = vsel %vm5013, %v4995, %v2705
        %v5125 = vsel %vm5013, %v4996, %v2707
        %v5126 = vsel %vm5013, %v4997, %v2709
        %v5127 = vsel %vm5013, %v4998, %v2711
        %v5128 = vsel %vm5013, %v4999, %v2713
        %v5129 = vsel %vm5013, %v5000, %v2715
        %v5130 = vsel %vm5013, %v5001, %v2717
        %v5131 = vsel %vm5013, %v5002, %v2719
        %v5132 = vsel %vm5013, %v5003, %v2721
        %v5133 = vsel %vm5013, %v5004, %v2723
        %v5134 = vsel %vm5013, %v5005, %v2725
        %v5135 = vsel %vm5013, %v5006, %v2727
        %v5136 = vsel %vm5013, %v5007, %v2729
        %v5137 = vsel %vm5013, %v5008, %v2731
        %v5138 = vsel %vm5013, %v5009, %v2733
        %v5139 = vsel %vm5013, %v5010, %v2735
        %v5140 = vsel %vm5013, %v5011, %v2737
        %v5141 = vsel %vm5013, %v5012, %v2739
        %vm5142 = vcmask 31744
        %v5143 = vsel %vm5142, %v5014, %v2869
        %v5144 = vsel %vm5142, %v5015, %v2871
        %v5145 = vsel %vm5142, %v5016, %v2873
        %v5146 = vsel %vm5142, %v5017, %v2875
        %v5147 = vsel %vm5142, %v5018, %v2877
        %v5148 = vsel %vm5142, %v5019, %v2879
        %v5149 = vsel %vm5142, %v5020, %v2881
        %v5150 = vsel %vm5142, %v5021, %v2883
        %v5151 = vsel %vm5142, %v5022, %v2885
        %v5152 = vsel %vm5142, %v5023, %v2887
        %v5153 = vsel %vm5142, %v5024, %v2889
        %v5154 = vsel %vm5142, %v5025, %v2891
        %v5155 = vsel %vm5142, %v5026, %v2893
        %v5156 = vsel %vm5142, %v5027, %v2895
        %v5157 = vsel %vm5142, %v5028, %v2897
        %v5158 = vsel %vm5142, %v5029, %v2899
        %v5159 = vsel %vm5142, %v5030, %v2901
        %v5160 = vsel %vm5142, %v5031, %v2903
        %v5161 = vsel %vm5142, %v5032, %v2905
        %v5162 = vsel %vm5142, %v5033, %v2907
        %v5163 = vsel %vm5142, %v5034, %v2909
        %v5164 = vsel %vm5142, %v5035, %v2911
        %v5165 = vsel %vm5142, %v5036, %v2913
        %v5166 = vsel %vm5142, %v5037, %v2915
        %v5167 = vsel %vm5142, %v5038, %v2917
        %v5168 = vsel %vm5142, %v5039, %v2919
        %v5169 = vsel %vm5142, %v5040, %v2921
        %v5170 = vsel %vm5142, %v5041, %v2923
        %v5171 = vsel %vm5142, %v5042, %v2925
        %v5172 = vsel %vm5142, %v5043, %v2927
        %v5173 = vsel %vm5142, %v5044, %v2929
        %v5174 = vsel %vm5142, %v5045, %v2931
        %v5175 = vsel %vm5142, %v5046, %v2933
        %v5176 = vsel %vm5142, %v5047, %v2935
        %v5177 = vsel %vm5142, %v5048, %v2937
        %v5178 = vsel %vm5142, %v5049, %v2939
        %v5179 = vsel %vm5142, %v5050, %v2941
        %v5180 = vsel %vm5142, %v5051, %v2943
        %v5181 = vsel %vm5142, %v5052, %v2945
        %v5182 = vsel %vm5142, %v5053, %v2947
        %v5183 = vsel %vm5142, %v5054, %v2949
        %v5184 = vsel %vm5142, %v5055, %v2951
        %v5185 = vsel %vm5142, %v5056, %v2953
        %v5186 = vsel %vm5142, %v5057, %v2955
        %v5187 = vsel %vm5142, %v5058, %v2957
        %v5188 = vsel %vm5142, %v5059, %v2959
        %v5189 = vsel %vm5142, %v5060, %v2961
        %v5190 = vsel %vm5142, %v5061, %v2963
        %v5191 = vsel %vm5142, %v5062, %v2965
        %v5192 = vsel %vm5142, %v5063, %v2967
        %v5193 = vsel %vm5142, %v5064, %v2969
        %v5194 = vsel %vm5142, %v5065, %v2971
        %v5195 = vsel %vm5142, %v5066, %v2973
        %v5196 = vsel %vm5142, %v5067, %v2975
        %v5197 = vsel %vm5142, %v5068, %v2977
        %v5198 = vsel %vm5142, %v5069, %v2979
        %v5199 = vsel %vm5142, %v5070, %v2981
        %v5200 = vsel %vm5142, %v5071, %v2983
        %v5201 = vsel %vm5142, %v5072, %v2985
        %v5202 = vsel %vm5142, %v5073, %v2987
        %v5203 = vsel %vm5142, %v5074, %v2989
        %v5204 = vsel %vm5142, %v5075, %v2991
        %v5205 = vsel %vm5142, %v5076, %v2993
        %v5206 = vsel %vm5142, %v5077, %v2995
        %v5207 = vsel %vm5142, %v5078, %v2997
        %v5208 = vsel %vm5142, %v5079, %v2999
        %v5209 = vsel %vm5142, %v5080, %v3001
        %v5210 = vsel %vm5142, %v5081, %v3003
        %v5211 = vsel %vm5142, %v5082, %v3005
        %v5212 = vsel %vm5142, %v5083, %v3007
        %v5213 = vsel %vm5142, %v5084, %v3009
        %v5214 = vsel %vm5142, %v5085, %v3011
        %v5215 = vsel %vm5142, %v5086, %v3013
        %v5216 = vsel %vm5142, %v5087, %v3015
        %v5217 = vsel %vm5142, %v5088, %v3017
        %v5218 = vsel %vm5142, %v5089, %v3019
        %v5219 = vsel %vm5142, %v5090, %v3021
        %v5220 = vsel %vm5142, %v5091, %v3023
        %v5221 = vsel %vm5142, %v5092, %v3025
        %v5222 = vsel %vm5142, %v5093, %v3027
        %v5223 = vsel %vm5142, %v5094, %v3029
        %v5224 = vsel %vm5142, %v5095, %v3031
        %v5225 = vsel %vm5142, %v5096, %v3033
        %v5226 = vsel %vm5142, %v5097, %v3035
        %v5227 = vsel %vm5142, %v5098, %v3037
        %v5228 = vsel %vm5142, %v5099, %v3039
        %v5229 = vsel %vm5142, %v5100, %v3041
        %v5230 = vsel %vm5142, %v5101, %v3043
        %v5231 = vsel %vm5142, %v5102, %v3045
        %v5232 = vsel %vm5142, %v5103, %v3047
        %v5233 = vsel %vm5142, %v5104, %v3049
        %v5234 = vsel %vm5142, %v5105, %v3051
        %v5235 = vsel %vm5142, %v5106, %v3053
        %v5236 = vsel %vm5142, %v5107, %v3055
        %v5237 = vsel %vm5142, %v5108, %v3057
        %v5238 = vsel %vm5142, %v5109, %v3059
        %v5239 = vsel %vm5142, %v5110, %v3061
        %v5240 = vsel %vm5142, %v5111, %v3063
        %v5241 = vsel %vm5142, %v5112, %v3065
        %v5242 = vsel %vm5142, %v5113, %v3067
        %v5243 = vsel %vm5142, %v5114, %v3069
        %v5244 = vsel %vm5142, %v5115, %v3071
        %v5245 = vsel %vm5142, %v5116, %v3073
        %v5246 = vsel %vm5142, %v5117, %v3075
        %v5247 = vsel %vm5142, %v5118, %v3077
        %v5248 = vsel %vm5142, %v5119, %v3079
        %v5249 = vsel %vm5142, %v5120, %v3081
        %v5250 = vsel %vm5142, %v5121, %v3083
        %v5251 = vsel %vm5142, %v5122, %v3085
        %v5252 = vsel %vm5142, %v5123, %v3087
        %v5253 = vsel %vm5142, %v5124, %v3089
        %v5254 = vsel %vm5142, %v5125, %v3091
        %v5255 = vsel %vm5142, %v5126, %v3093
        %v5256 = vsel %vm5142, %v5127, %v3095
        %v5257 = vsel %vm5142, %v5128, %v3097
        %v5258 = vsel %vm5142, %v5129, %v3099
        %v5259 = vsel %vm5142, %v5130, %v3101
        %v5260 = vsel %vm5142, %v5131, %v3103
        %v5261 = vsel %vm5142, %v5132, %v3105
        %v5262 = vsel %vm5142, %v5133, %v3107
        %v5263 = vsel %vm5142, %v5134, %v3109
        %v5264 = vsel %vm5142, %v5135, %v3111
        %v5265 = vsel %vm5142, %v5136, %v3113
        %v5266 = vsel %vm5142, %v5137, %v3115
        %v5267 = vsel %vm5142, %v5138, %v3117
        %v5268 = vsel %vm5142, %v5139, %v3119
        %v5269 = vsel %vm5142, %v5140, %v3121
        %v5270 = vsel %vm5142, %v5141, %v3123
        %vm5271 = vcmask 39936
        %v5272 = vsel %vm5271, %v5143, %v3253
        %v5273 = vsel %vm5271, %v5144, %v3255
        %v5274 = vsel %vm5271, %v5145, %v3257
        %v5275 = vsel %vm5271, %v5146, %v3259
        %v5276 = vsel %vm5271, %v5147, %v3261
        %v5277 = vsel %vm5271, %v5148, %v3263
        %v5278 = vsel %vm5271, %v5149, %v3265
        %v5279 = vsel %vm5271, %v5150, %v3267
        %v5280 = vsel %vm5271, %v5151, %v3269
        %v5281 = vsel %vm5271, %v5152, %v3271
        %v5282 = vsel %vm5271, %v5153, %v3273
        %v5283 = vsel %vm5271, %v5154, %v3275
        %v5284 = vsel %vm5271, %v5155, %v3277
        %v5285 = vsel %vm5271, %v5156, %v3279
        %v5286 = vsel %vm5271, %v5157, %v3281
        %v5287 = vsel %vm5271, %v5158, %v3283
        %v5288 = vsel %vm5271, %v5159, %v3285
        %v5289 = vsel %vm5271, %v5160, %v3287
        %v5290 = vsel %vm5271, %v5161, %v3289
        %v5291 = vsel %vm5271, %v5162, %v3291
        %v5292 = vsel %vm5271, %v5163, %v3293
        %v5293 = vsel %vm5271, %v5164, %v3295
        %v5294 = vsel %vm5271, %v5165, %v3297
        %v5295 = vsel %vm5271, %v5166, %v3299
        %v5296 = vsel %vm5271, %v5167, %v3301
        %v5297 = vsel %vm5271, %v5168, %v3303
        %v5298 = vsel %vm5271, %v5169, %v3305
        %v5299 = vsel %vm5271, %v5170, %v3307
        %v5300 = vsel %vm5271, %v5171, %v3309
        %v5301 = vsel %vm5271, %v5172, %v3311
        %v5302 = vsel %vm5271, %v5173, %v3313
        %v5303 = vsel %vm5271, %v5174, %v3315
        %v5304 = vsel %vm5271, %v5175, %v3317
        %v5305 = vsel %vm5271, %v5176, %v3319
        %v5306 = vsel %vm5271, %v5177, %v3321
        %v5307 = vsel %vm5271, %v5178, %v3323
        %v5308 = vsel %vm5271, %v5179, %v3325
        %v5309 = vsel %vm5271, %v5180, %v3327
        %v5310 = vsel %vm5271, %v5181, %v3329
        %v5311 = vsel %vm5271, %v5182, %v3331
        %v5312 = vsel %vm5271, %v5183, %v3333
        %v5313 = vsel %vm5271, %v5184, %v3335
        %v5314 = vsel %vm5271, %v5185, %v3337
        %v5315 = vsel %vm5271, %v5186, %v3339
        %v5316 = vsel %vm5271, %v5187, %v3341
        %v5317 = vsel %vm5271, %v5188, %v3343
        %v5318 = vsel %vm5271, %v5189, %v3345
        %v5319 = vsel %vm5271, %v5190, %v3347
        %v5320 = vsel %vm5271, %v5191, %v3349
        %v5321 = vsel %vm5271, %v5192, %v3351
        %v5322 = vsel %vm5271, %v5193, %v3353
        %v5323 = vsel %vm5271, %v5194, %v3355
        %v5324 = vsel %vm5271, %v5195, %v3357
        %v5325 = vsel %vm5271, %v5196, %v3359
        %v5326 = vsel %vm5271, %v5197, %v3361
        %v5327 = vsel %vm5271, %v5198, %v3363
        %v5328 = vsel %vm5271, %v5199, %v3365
        %v5329 = vsel %vm5271, %v5200, %v3367
        %v5330 = vsel %vm5271, %v5201, %v3369
        %v5331 = vsel %vm5271, %v5202, %v3371
        %v5332 = vsel %vm5271, %v5203, %v3373
        %v5333 = vsel %vm5271, %v5204, %v3375
        %v5334 = vsel %vm5271, %v5205, %v3377
        %v5335 = vsel %vm5271, %v5206, %v3379
        %v5336 = vsel %vm5271, %v5207, %v3381
        %v5337 = vsel %vm5271, %v5208, %v3383
        %v5338 = vsel %vm5271, %v5209, %v3385
        %v5339 = vsel %vm5271, %v5210, %v3387
        %v5340 = vsel %vm5271, %v5211, %v3389
        %v5341 = vsel %vm5271, %v5212, %v3391
        %v5342 = vsel %vm5271, %v5213, %v3393
        %v5343 = vsel %vm5271, %v5214, %v3395
        %v5344 = vsel %vm5271, %v5215, %v3397
        %v5345 = vsel %vm5271, %v5216, %v3399
        %v5346 = vsel %vm5271, %v5217, %v3401
        %v5347 = vsel %vm5271, %v5218, %v3403
        %v5348 = vsel %vm5271, %v5219, %v3405
        %v5349 = vsel %vm5271, %v5220, %v3407
        %v5350 = vsel %vm5271, %v5221, %v3409
        %v5351 = vsel %vm5271, %v5222, %v3411
        %v5352 = vsel %vm5271, %v5223, %v3413
        %v5353 = vsel %vm5271, %v5224, %v3415
        %v5354 = vsel %vm5271, %v5225, %v3417
        %v5355 = vsel %vm5271, %v5226, %v3419
        %v5356 = vsel %vm5271, %v5227, %v3421
        %v5357 = vsel %vm5271, %v5228, %v3423
        %v5358 = vsel %vm5271, %v5229, %v3425
        %v5359 = vsel %vm5271, %v5230, %v3427
        %v5360 = vsel %vm5271, %v5231, %v3429
        %v5361 = vsel %vm5271, %v5232, %v3431
        %v5362 = vsel %vm5271, %v5233, %v3433
        %v5363 = vsel %vm5271, %v5234, %v3435
        %v5364 = vsel %vm5271, %v5235, %v3437
        %v5365 = vsel %vm5271, %v5236, %v3439
        %v5366 = vsel %vm5271, %v5237, %v3441
        %v5367 = vsel %vm5271, %v5238, %v3443
        %v5368 = vsel %vm5271, %v5239, %v3445
        %v5369 = vsel %vm5271, %v5240, %v3447
        %v5370 = vsel %vm5271, %v5241, %v3449
        %v5371 = vsel %vm5271, %v5242, %v3451
        %v5372 = vsel %vm5271, %v5243, %v3453
        %v5373 = vsel %vm5271, %v5244, %v3455
        %v5374 = vsel %vm5271, %v5245, %v3457
        %v5375 = vsel %vm5271, %v5246, %v3459
        %v5376 = vsel %vm5271, %v5247, %v3461
        %v5377 = vsel %vm5271, %v5248, %v3463
        %v5378 = vsel %vm5271, %v5249, %v3465
        %v5379 = vsel %vm5271, %v5250, %v3467
        %v5380 = vsel %vm5271, %v5251, %v3469
        %v5381 = vsel %vm5271, %v5252, %v3471
        %v5382 = vsel %vm5271, %v5253, %v3473
        %v5383 = vsel %vm5271, %v5254, %v3475
        %v5384 = vsel %vm5271, %v5255, %v3477
        %v5385 = vsel %vm5271, %v5256, %v3479
        %v5386 = vsel %vm5271, %v5257, %v3481
        %v5387 = vsel %vm5271, %v5258, %v3483
        %v5388 = vsel %vm5271, %v5259, %v3485
        %v5389 = vsel %vm5271, %v5260, %v3487
        %v5390 = vsel %vm5271, %v5261, %v3489
        %v5391 = vsel %vm5271, %v5262, %v3491
        %v5392 = vsel %vm5271, %v5263, %v3493
        %v5393 = vsel %vm5271, %v5264, %v3495
        %v5394 = vsel %vm5271, %v5265, %v3497
        %v5395 = vsel %vm5271, %v5266, %v3499
        %v5396 = vsel %vm5271, %v5267, %v3501
        %v5397 = vsel %vm5271, %v5268, %v3503
        %v5398 = vsel %vm5271, %v5269, %v3505
        %v5399 = vsel %vm5271, %v5270, %v3507
        %vm5400 = vcmask 48128
        %v5401 = vsel %vm5400, %v5272, %v3637
        %v5402 = vsel %vm5400, %v5273, %v3639
        %v5403 = vsel %vm5400, %v5274, %v3641
        %v5404 = vsel %vm5400, %v5275, %v3643
        %v5405 = vsel %vm5400, %v5276, %v3645
        %v5406 = vsel %vm5400, %v5277, %v3647
        %v5407 = vsel %vm5400, %v5278, %v3649
        %v5408 = vsel %vm5400, %v5279, %v3651
        %v5409 = vsel %vm5400, %v5280, %v3653
        %v5410 = vsel %vm5400, %v5281, %v3655
        %v5411 = vsel %vm5400, %v5282, %v3657
        %v5412 = vsel %vm5400, %v5283, %v3659
        %v5413 = vsel %vm5400, %v5284, %v3661
        %v5414 = vsel %vm5400, %v5285, %v3663
        %v5415 = vsel %vm5400, %v5286, %v3665
        %v5416 = vsel %vm5400, %v5287, %v3667
        %v5417 = vsel %vm5400, %v5288, %v3669
        %v5418 = vsel %vm5400, %v5289, %v3671
        %v5419 = vsel %vm5400, %v5290, %v3673
        %v5420 = vsel %vm5400, %v5291, %v3675
        %v5421 = vsel %vm5400, %v5292, %v3677
        %v5422 = vsel %vm5400, %v5293, %v3679
        %v5423 = vsel %vm5400, %v5294, %v3681
        %v5424 = vsel %vm5400, %v5295, %v3683
        %v5425 = vsel %vm5400, %v5296, %v3685
        %v5426 = vsel %vm5400, %v5297, %v3687
        %v5427 = vsel %vm5400, %v5298, %v3689
        %v5428 = vsel %vm5400, %v5299, %v3691
        %v5429 = vsel %vm5400, %v5300, %v3693
        %v5430 = vsel %vm5400, %v5301, %v3695
        %v5431 = vsel %vm5400, %v5302, %v3697
        %v5432 = vsel %vm5400, %v5303, %v3699
        %v5433 = vsel %vm5400, %v5304, %v3701
        %v5434 = vsel %vm5400, %v5305, %v3703
        %v5435 = vsel %vm5400, %v5306, %v3705
        %v5436 = vsel %vm5400, %v5307, %v3707
        %v5437 = vsel %vm5400, %v5308, %v3709
        %v5438 = vsel %vm5400, %v5309, %v3711
        %v5439 = vsel %vm5400, %v5310, %v3713
        %v5440 = vsel %vm5400, %v5311, %v3715
        %v5441 = vsel %vm5400, %v5312, %v3717
        %v5442 = vsel %vm5400, %v5313, %v3719
        %v5443 = vsel %vm5400, %v5314, %v3721
        %v5444 = vsel %vm5400, %v5315, %v3723
        %v5445 = vsel %vm5400, %v5316, %v3725
        %v5446 = vsel %vm5400, %v5317, %v3727
        %v5447 = vsel %vm5400, %v5318, %v3729
        %v5448 = vsel %vm5400, %v5319, %v3731
        %v5449 = vsel %vm5400, %v5320, %v3733
        %v5450 = vsel %vm5400, %v5321, %v3735
        %v5451 = vsel %vm5400, %v5322, %v3737
        %v5452 = vsel %vm5400, %v5323, %v3739
        %v5453 = vsel %vm5400, %v5324, %v3741
        %v5454 = vsel %vm5400, %v5325, %v3743
        %v5455 = vsel %vm5400, %v5326, %v3745
        %v5456 = vsel %vm5400, %v5327, %v3747
        %v5457 = vsel %vm5400, %v5328, %v3749
        %v5458 = vsel %vm5400, %v5329, %v3751
        %v5459 = vsel %vm5400, %v5330, %v3753
        %v5460 = vsel %vm5400, %v5331, %v3755
        %v5461 = vsel %vm5400, %v5332, %v3757
        %v5462 = vsel %vm5400, %v5333, %v3759
        %v5463 = vsel %vm5400, %v5334, %v3761
        %v5464 = vsel %vm5400, %v5335, %v3763
        %v5465 = vsel %vm5400, %v5336, %v3765
        %v5466 = vsel %vm5400, %v5337, %v3767
        %v5467 = vsel %vm5400, %v5338, %v3769
        %v5468 = vsel %vm5400, %v5339, %v3771
        %v5469 = vsel %vm5400, %v5340, %v3773
        %v5470 = vsel %vm5400, %v5341, %v3775
        %v5471 = vsel %vm5400, %v5342, %v3777
        %v5472 = vsel %vm5400, %v5343, %v3779
        %v5473 = vsel %vm5400, %v5344, %v3781
        %v5474 = vsel %vm5400, %v5345, %v3783
        %v5475 = vsel %vm5400, %v5346, %v3785
        %v5476 = vsel %vm5400, %v5347, %v3787
        %v5477 = vsel %vm5400, %v5348, %v3789
        %v5478 = vsel %vm5400, %v5349, %v3791
        %v5479 = vsel %vm5400, %v5350, %v3793
        %v5480 = vsel %vm5400, %v5351, %v3795
        %v5481 = vsel %vm5400, %v5352, %v3797
        %v5482 = vsel %vm5400, %v5353, %v3799
        %v5483 = vsel %vm5400, %v5354, %v3801
        %v5484 = vsel %vm5400, %v5355, %v3803
        %v5485 = vsel %vm5400, %v5356, %v3805
        %v5486 = vsel %vm5400, %v5357, %v3807
        %v5487 = vsel %vm5400, %v5358, %v3809
        %v5488 = vsel %vm5400, %v5359, %v3811
        %v5489 = vsel %vm5400, %v5360, %v3813
        %v5490 = vsel %vm5400, %v5361, %v3815
        %v5491 = vsel %vm5400, %v5362, %v3817
        %v5492 = vsel %vm5400, %v5363, %v3819
        %v5493 = vsel %vm5400, %v5364, %v3821
        %v5494 = vsel %vm5400, %v5365, %v3823
        %v5495 = vsel %vm5400, %v5366, %v3825
        %v5496 = vsel %vm5400, %v5367, %v3827
        %v5497 = vsel %vm5400, %v5368, %v3829
        %v5498 = vsel %vm5400, %v5369, %v3831
        %v5499 = vsel %vm5400, %v5370, %v3833
        %v5500 = vsel %vm5400, %v5371, %v3835
        %v5501 = vsel %vm5400, %v5372, %v3837
        %v5502 = vsel %vm5400, %v5373, %v3839
        %v5503 = vsel %vm5400, %v5374, %v3841
        %v5504 = vsel %vm5400, %v5375, %v3843
        %v5505 = vsel %vm5400, %v5376, %v3845
        %v5506 = vsel %vm5400, %v5377, %v3847
        %v5507 = vsel %vm5400, %v5378, %v3849
        %v5508 = vsel %vm5400, %v5379, %v3851
        %v5509 = vsel %vm5400, %v5380, %v3853
        %v5510 = vsel %vm5400, %v5381, %v3855
        %v5511 = vsel %vm5400, %v5382, %v3857
        %v5512 = vsel %vm5400, %v5383, %v3859
        %v5513 = vsel %vm5400, %v5384, %v3861
        %v5514 = vsel %vm5400, %v5385, %v3863
        %v5515 = vsel %vm5400, %v5386, %v3865
        %v5516 = vsel %vm5400, %v5387, %v3867
        %v5517 = vsel %vm5400, %v5388, %v3869
        %v5518 = vsel %vm5400, %v5389, %v3871
        %v5519 = vsel %vm5400, %v5390, %v3873
        %v5520 = vsel %vm5400, %v5391, %v3875
        %v5521 = vsel %vm5400, %v5392, %v3877
        %v5522 = vsel %vm5400, %v5393, %v3879
        %v5523 = vsel %vm5400, %v5394, %v3881
        %v5524 = vsel %vm5400, %v5395, %v3883
        %v5525 = vsel %vm5400, %v5396, %v3885
        %v5526 = vsel %vm5400, %v5397, %v3885
        %v5527 = vsel %vm5400, %v5398, %v3885
        %v5528 = vsel %vm5400, %v5399, %v3885
        %vm5529 = vcmask 56320
        %v5530 = vsel %vm5529, %v5401, %v4012
        %v5531 = vsel %vm5529, %v5402, %v4014
        %v5532 = vsel %vm5529, %v5403, %v4016
        %v5533 = vsel %vm5529, %v5404, %v4018
        %v5534 = vsel %vm5529, %v5405, %v4020
        %v5535 = vsel %vm5529, %v5406, %v4022
        %v5536 = vsel %vm5529, %v5407, %v4024
        %v5537 = vsel %vm5529, %v5408, %v4026
        %v5538 = vsel %vm5529, %v5409, %v4028
        %v5539 = vsel %vm5529, %v5410, %v4030
        %v5540 = vsel %vm5529, %v5411, %v4032
        %v5541 = vsel %vm5529, %v5412, %v4034
        %v5542 = vsel %vm5529, %v5413, %v4036
        %v5543 = vsel %vm5529, %v5414, %v4038
        %v5544 = vsel %vm5529, %v5415, %v4040
        %v5545 = vsel %vm5529, %v5416, %v4042
        %v5546 = vsel %vm5529, %v5417, %v4044
        %v5547 = vsel %vm5529, %v5418, %v4046
        %v5548 = vsel %vm5529, %v5419, %v4048
        %v5549 = vsel %vm5529, %v5420, %v4050
        %v5550 = vsel %vm5529, %v5421, %v4052
        %v5551 = vsel %vm5529, %v5422, %v4054
        %v5552 = vsel %vm5529, %v5423, %v4056
        %v5553 = vsel %vm5529, %v5424, %v4058
        %v5554 = vsel %vm5529, %v5425, %v4060
        %v5555 = vsel %vm5529, %v5426, %v4062
        %v5556 = vsel %vm5529, %v5427, %v4064
        %v5557 = vsel %vm5529, %v5428, %v4066
        %v5558 = vsel %vm5529, %v5429, %v4068
        %v5559 = vsel %vm5529, %v5430, %v4070
        %v5560 = vsel %vm5529, %v5431, %v4072
        %v5561 = vsel %vm5529, %v5432, %v4074
        %v5562 = vsel %vm5529, %v5433, %v4076
        %v5563 = vsel %vm5529, %v5434, %v4078
        %v5564 = vsel %vm5529, %v5435, %v4080
        %v5565 = vsel %vm5529, %v5436, %v4082
        %v5566 = vsel %vm5529, %v5437, %v4084
        %v5567 = vsel %vm5529, %v5438, %v4086
        %v5568 = vsel %vm5529, %v5439, %v4088
        %v5569 = vsel %vm5529, %v5440, %v4090
        %v5570 = vsel %vm5529, %v5441, %v4092
        %v5571 = vsel %vm5529, %v5442, %v4094
        %v5572 = vsel %vm5529, %v5443, %v4096
        %v5573 = vsel %vm5529, %v5444, %v4098
        %v5574 = vsel %vm5529, %v5445, %v4100
        %v5575 = vsel %vm5529, %v5446, %v4102
        %v5576 = vsel %vm5529, %v5447, %v4104
        %v5577 = vsel %vm5529, %v5448, %v4106
        %v5578 = vsel %vm5529, %v5449, %v4108
        %v5579 = vsel %vm5529, %v5450, %v4110
        %v5580 = vsel %vm5529, %v5451, %v4112
        %v5581 = vsel %vm5529, %v5452, %v4114
        %v5582 = vsel %vm5529, %v5453, %v4116
        %v5583 = vsel %vm5529, %v5454, %v4118
        %v5584 = vsel %vm5529, %v5455, %v4120
        %v5585 = vsel %vm5529, %v5456, %v4122
        %v5586 = vsel %vm5529, %v5457, %v4124
        %v5587 = vsel %vm5529, %v5458, %v4126
        %v5588 = vsel %vm5529, %v5459, %v4128
        %v5589 = vsel %vm5529, %v5460, %v4130
        %v5590 = vsel %vm5529, %v5461, %v4132
        %v5591 = vsel %vm5529, %v5462, %v4134
        %v5592 = vsel %vm5529, %v5463, %v4136
        %v5593 = vsel %vm5529, %v5464, %v4138
        %v5594 = vsel %vm5529, %v5465, %v4140
        %v5595 = vsel %vm5529, %v5466, %v4142
        %v5596 = vsel %vm5529, %v5467, %v4144
        %v5597 = vsel %vm5529, %v5468, %v4146
        %v5598 = vsel %vm5529, %v5469, %v4148
        %v5599 = vsel %vm5529, %v5470, %v4150
        %v5600 = vsel %vm5529, %v5471, %v4152
        %v5601 = vsel %vm5529, %v5472, %v4154
        %v5602 = vsel %vm5529, %v5473, %v4156
        %v5603 = vsel %vm5529, %v5474, %v4158
        %v5604 = vsel %vm5529, %v5475, %v4160
        %v5605 = vsel %vm5529, %v5476, %v4162
        %v5606 = vsel %vm5529, %v5477, %v4164
        %v5607 = vsel %vm5529, %v5478, %v4166
        %v5608 = vsel %vm5529, %v5479, %v4168
        %v5609 = vsel %vm5529, %v5480, %v4170
        %v5610 = vsel %vm5529, %v5481, %v4172
        %v5611 = vsel %vm5529, %v5482, %v4174
        %v5612 = vsel %vm5529, %v5483, %v4176
        %v5613 = vsel %vm5529, %v5484, %v4178
        %v5614 = vsel %vm5529, %v5485, %v4180
        %v5615 = vsel %vm5529, %v5486, %v4182
        %v5616 = vsel %vm5529, %v5487, %v4184
        %v5617 = vsel %vm5529, %v5488, %v4186
        %v5618 = vsel %vm5529, %v5489, %v4188
        %v5619 = vsel %vm5529, %v5490, %v4190
        %v5620 = vsel %vm5529, %v5491, %v4192
        %v5621 = vsel %vm5529, %v5492, %v4194
        %v5622 = vsel %vm5529, %v5493, %v4196
        %v5623 = vsel %vm5529, %v5494, %v4198
        %v5624 = vsel %vm5529, %v5495, %v4200
        %v5625 = vsel %vm5529, %v5496, %v4202
        %v5626 = vsel %vm5529, %v5497, %v4204
        %v5627 = vsel %vm5529, %v5498, %v4206
        %v5628 = vsel %vm5529, %v5499, %v4208
        %v5629 = vsel %vm5529, %v5500, %v4210
        %v5630 = vsel %vm5529, %v5501, %v4212
        %v5631 = vsel %vm5529, %v5502, %v4214
        %v5632 = vsel %vm5529, %v5503, %v4216
        %v5633 = vsel %vm5529, %v5504, %v4218
        %v5634 = vsel %vm5529, %v5505, %v4220
        %v5635 = vsel %vm5529, %v5506, %v4222
        %v5636 = vsel %vm5529, %v5507, %v4224
        %v5637 = vsel %vm5529, %v5508, %v4226
        %v5638 = vsel %vm5529, %v5509, %v4228
        %v5639 = vsel %vm5529, %v5510, %v4230
        %v5640 = vsel %vm5529, %v5511, %v4232
        %v5641 = vsel %vm5529, %v5512, %v4234
        %v5642 = vsel %vm5529, %v5513, %v4236
        %v5643 = vsel %vm5529, %v5514, %v4238
        %v5644 = vsel %vm5529, %v5515, %v4240
        %v5645 = vsel %vm5529, %v5516, %v4242
        %v5646 = vsel %vm5529, %v5517, %v4244
        %v5647 = vsel %vm5529, %v5518, %v4246
        %v5648 = vsel %vm5529, %v5519, %v4248
        %v5649 = vsel %vm5529, %v5520, %v4250
        %v5650 = vsel %vm5529, %v5521, %v4252
        %v5651 = vsel %vm5529, %v5522, %v4254
        %v5652 = vsel %vm5529, %v5523, %v4256
        %v5653 = vsel %vm5529, %v5524, %v4258
        %v5654 = vsel %vm5529, %v5525, %v4260
        %v5655 = vsel %vm5529, %v5526, %v4260
        %v5656 = vsel %vm5529, %v5527, %v4260
        %v5657 = vsel %vm5529, %v5528, %v4260
        %vm5658 = vcmask 64512
        %v5659 = vsel %vm5658, %v5530, %v4387
        %v5660 = vsel %vm5658, %v5531, %v4389
        %v5661 = vsel %vm5658, %v5532, %v4391
        %v5662 = vsel %vm5658, %v5533, %v4393
        %v5663 = vsel %vm5658, %v5534, %v4395
        %v5664 = vsel %vm5658, %v5535, %v4397
        %v5665 = vsel %vm5658, %v5536, %v4399
        %v5666 = vsel %vm5658, %v5537, %v4401
        %v5667 = vsel %vm5658, %v5538, %v4403
        %v5668 = vsel %vm5658, %v5539, %v4405
        %v5669 = vsel %vm5658, %v5540, %v4407
        %v5670 = vsel %vm5658, %v5541, %v4409
        %v5671 = vsel %vm5658, %v5542, %v4411
        %v5672 = vsel %vm5658, %v5543, %v4413
        %v5673 = vsel %vm5658, %v5544, %v4415
        %v5674 = vsel %vm5658, %v5545, %v4417
        %v5675 = vsel %vm5658, %v5546, %v4419
        %v5676 = vsel %vm5658, %v5547, %v4421
        %v5677 = vsel %vm5658, %v5548, %v4423
        %v5678 = vsel %vm5658, %v5549, %v4425
        %v5679 = vsel %vm5658, %v5550, %v4427
        %v5680 = vsel %vm5658, %v5551, %v4429
        %v5681 = vsel %vm5658, %v5552, %v4431
        %v5682 = vsel %vm5658, %v5553, %v4433
        %v5683 = vsel %vm5658, %v5554, %v4435
        %v5684 = vsel %vm5658, %v5555, %v4437
        %v5685 = vsel %vm5658, %v5556, %v4439
        %v5686 = vsel %vm5658, %v5557, %v4441
        %v5687 = vsel %vm5658, %v5558, %v4443
        %v5688 = vsel %vm5658, %v5559, %v4445
        %v5689 = vsel %vm5658, %v5560, %v4447
        %v5690 = vsel %vm5658, %v5561, %v4449
        %v5691 = vsel %vm5658, %v5562, %v4451
        %v5692 = vsel %vm5658, %v5563, %v4453
        %v5693 = vsel %vm5658, %v5564, %v4455
        %v5694 = vsel %vm5658, %v5565, %v4457
        %v5695 = vsel %vm5658, %v5566, %v4459
        %v5696 = vsel %vm5658, %v5567, %v4461
        %v5697 = vsel %vm5658, %v5568, %v4463
        %v5698 = vsel %vm5658, %v5569, %v4465
        %v5699 = vsel %vm5658, %v5570, %v4467
        %v5700 = vsel %vm5658, %v5571, %v4469
        %v5701 = vsel %vm5658, %v5572, %v4471
        %v5702 = vsel %vm5658, %v5573, %v4473
        %v5703 = vsel %vm5658, %v5574, %v4475
        %v5704 = vsel %vm5658, %v5575, %v4477
        %v5705 = vsel %vm5658, %v5576, %v4479
        %v5706 = vsel %vm5658, %v5577, %v4481
        %v5707 = vsel %vm5658, %v5578, %v4483
        %v5708 = vsel %vm5658, %v5579, %v4485
        %v5709 = vsel %vm5658, %v5580, %v4487
        %v5710 = vsel %vm5658, %v5581, %v4489
        %v5711 = vsel %vm5658, %v5582, %v4491
        %v5712 = vsel %vm5658, %v5583, %v4493
        %v5713 = vsel %vm5658, %v5584, %v4495
        %v5714 = vsel %vm5658, %v5585, %v4497
        %v5715 = vsel %vm5658, %v5586, %v4499
        %v5716 = vsel %vm5658, %v5587, %v4501
        %v5717 = vsel %vm5658, %v5588, %v4503
        %v5718 = vsel %vm5658, %v5589, %v4505
        %v5719 = vsel %vm5658, %v5590, %v4507
        %v5720 = vsel %vm5658, %v5591, %v4509
        %v5721 = vsel %vm5658, %v5592, %v4511
        %v5722 = vsel %vm5658, %v5593, %v4513
        %v5723 = vsel %vm5658, %v5594, %v4515
        %v5724 = vsel %vm5658, %v5595, %v4517
        %v5725 = vsel %vm5658, %v5596, %v4519
        %v5726 = vsel %vm5658, %v5597, %v4521
        %v5727 = vsel %vm5658, %v5598, %v4523
        %v5728 = vsel %vm5658, %v5599, %v4525
        %v5729 = vsel %vm5658, %v5600, %v4527
        %v5730 = vsel %vm5658, %v5601, %v4529
        %v5731 = vsel %vm5658, %v5602, %v4531
        %v5732 = vsel %vm5658, %v5603, %v4533
        %v5733 = vsel %vm5658, %v5604, %v4535
        %v5734 = vsel %vm5658, %v5605, %v4537
        %v5735 = vsel %vm5658, %v5606, %v4539
        %v5736 = vsel %vm5658, %v5607, %v4541
        %v5737 = vsel %vm5658, %v5608, %v4543
        %v5738 = vsel %vm5658, %v5609, %v4545
        %v5739 = vsel %vm5658, %v5610, %v4547
        %v5740 = vsel %vm5658, %v5611, %v4549
        %v5741 = vsel %vm5658, %v5612, %v4551
        %v5742 = vsel %vm5658, %v5613, %v4553
        %v5743 = vsel %vm5658, %v5614, %v4555
        %v5744 = vsel %vm5658, %v5615, %v4557
        %v5745 = vsel %vm5658, %v5616, %v4559
        %v5746 = vsel %vm5658, %v5617, %v4561
        %v5747 = vsel %vm5658, %v5618, %v4563
        %v5748 = vsel %vm5658, %v5619, %v4565
        %v5749 = vsel %vm5658, %v5620, %v4567
        %v5750 = vsel %vm5658, %v5621, %v4569
        %v5751 = vsel %vm5658, %v5622, %v4571
        %v5752 = vsel %vm5658, %v5623, %v4573
        %v5753 = vsel %vm5658, %v5624, %v4575
        %v5754 = vsel %vm5658, %v5625, %v4577
        %v5755 = vsel %vm5658, %v5626, %v4579
        %v5756 = vsel %vm5658, %v5627, %v4581
        %v5757 = vsel %vm5658, %v5628, %v4583
        %v5758 = vsel %vm5658, %v5629, %v4585
        %v5759 = vsel %vm5658, %v5630, %v4587
        %v5760 = vsel %vm5658, %v5631, %v4589
        %v5761 = vsel %vm5658, %v5632, %v4591
        %v5762 = vsel %vm5658, %v5633, %v4593
        %v5763 = vsel %vm5658, %v5634, %v4595
        %v5764 = vsel %vm5658, %v5635, %v4597
        %v5765 = vsel %vm5658, %v5636, %v4599
        %v5766 = vsel %vm5658, %v5637, %v4601
        %v5767 = vsel %vm5658, %v5638, %v4603
        %v5768 = vsel %vm5658, %v5639, %v4605
        %v5769 = vsel %vm5658, %v5640, %v4607
        %v5770 = vsel %vm5658, %v5641, %v4609
        %v5771 = vsel %vm5658, %v5642, %v4611
        %v5772 = vsel %vm5658, %v5643, %v4613
        %v5773 = vsel %vm5658, %v5644, %v4615
        %v5774 = vsel %vm5658, %v5645, %v4617
        %v5775 = vsel %vm5658, %v5646, %v4619
        %v5776 = vsel %vm5658, %v5647, %v4621
        %v5777 = vsel %vm5658, %v5648, %v4623
        %v5778 = vsel %vm5658, %v5649, %v4625
        %v5779 = vsel %vm5658, %v5650, %v4627
        %v5780 = vsel %vm5658, %v5651, %v4629
        %v5781 = vsel %vm5658, %v5652, %v4631
        %v5782 = vsel %vm5658, %v5653, %v4633
        %v5783 = vsel %vm5658, %v5654, %v4635
        %v5784 = vsel %vm5658, %v5655, %v4635
        %v5785 = vsel %vm5658, %v5656, %v4635
        %v5786 = vsel %vm5658, %v5657, %v4635
        %v5787 = vpack.c.bf16 %v5660, %v5659
        %v5788 = vpack.c.bf16 %v5662, %v5661
        %v5789 = vpack.c.bf16 %v5664, %v5663
        %v5790 = vpack.c.bf16 %v5666, %v5665
        %v5791 = vpack.c.bf16 %v5668, %v5667
        %v5792 = vpack.c.bf16 %v5670, %v5669
        %v5793 = vpack.c.bf16 %v5672, %v5671
        %v5794 = vpack.c.bf16 %v5674, %v5673
        %v5795 = vpack.c.bf16 %v5676, %v5675
        %v5796 = vpack.c.bf16 %v5678, %v5677
        %v5797 = vpack.c.bf16 %v5680, %v5679
        %v5798 = vpack.c.bf16 %v5682, %v5681
        %v5799 = vpack.c.bf16 %v5684, %v5683
        %v5800 = vpack.c.bf16 %v5686, %v5685
        %v5801 = vpack.c.bf16 %v5688, %v5687
        %v5802 = vpack.c.bf16 %v5690, %v5689
        %v5803 = vpack.c.bf16 %v5692, %v5691
        %v5804 = vpack.c.bf16 %v5694, %v5693
        %v5805 = vpack.c.bf16 %v5696, %v5695
        %v5806 = vpack.c.bf16 %v5698, %v5697
        %v5807 = vpack.c.bf16 %v5700, %v5699
        %v5808 = vpack.c.bf16 %v5702, %v5701
        %v5809 = vpack.c.bf16 %v5704, %v5703
        %v5810 = vpack.c.bf16 %v5706, %v5705
        %v5811 = vpack.c.bf16 %v5708, %v5707
        %v5812 = vpack.c.bf16 %v5710, %v5709
        %v5813 = vpack.c.bf16 %v5712, %v5711
        %v5814 = vpack.c.bf16 %v5714, %v5713
        %v5815 = vpack.c.bf16 %v5716, %v5715
        %v5816 = vpack.c.bf16 %v5718, %v5717
        %v5817 = vpack.c.bf16 %v5720, %v5719
        %v5818 = vpack.c.bf16 %v5722, %v5721
        %v5819 = vpack.c.bf16 %v5724, %v5723
        %v5820 = vpack.c.bf16 %v5726, %v5725
        %v5821 = vpack.c.bf16 %v5728, %v5727
        %v5822 = vpack.c.bf16 %v5730, %v5729
        %v5823 = vpack.c.bf16 %v5732, %v5731
        %v5824 = vpack.c.bf16 %v5734, %v5733
        %v5825 = vpack.c.bf16 %v5736, %v5735
        %v5826 = vpack.c.bf16 %v5738, %v5737
        %v5827 = vpack.c.bf16 %v5740, %v5739
        %v5828 = vpack.c.bf16 %v5742, %v5741
        %v5829 = vpack.c.bf16 %v5744, %v5743
        %v5830 = vpack.c.bf16 %v5746, %v5745
        %v5831 = vpack.c.bf16 %v5748, %v5747
        %v5832 = vpack.c.bf16 %v5750, %v5749
        %v5833 = vpack.c.bf16 %v5752, %v5751
        %v5834 = vpack.c.bf16 %v5754, %v5753
        %v5835 = vpack.c.bf16 %v5756, %v5755
        %v5836 = vpack.c.bf16 %v5758, %v5757
        %v5837 = vpack.c.bf16 %v5760, %v5759
        %v5838 = vpack.c.bf16 %v5762, %v5761
        %v5839 = vpack.c.bf16 %v5764, %v5763
        %v5840 = vpack.c.bf16 %v5766, %v5765
        %v5841 = vpack.c.bf16 %v5768, %v5767
        %v5842 = vpack.c.bf16 %v5770, %v5769
        %v5843 = vpack.c.bf16 %v5772, %v5771
        %v5844 = vpack.c.bf16 %v5774, %v5773
        %v5845 = vpack.c.bf16 %v5776, %v5775
        %v5846 = vpack.c.bf16 %v5778, %v5777
        %v5847 = vpack.c.bf16 %v5780, %v5779
        %v5848 = vpack.c.bf16 %v5782, %v5781
        %v5849 = vpack.c.bf16 %v5784, %v5783
        %v5850 = vpack.c.bf16 %v5786, %v5785
        %v5851 = vld [vmem:[%s1] sm:$0xf]
        %v5852 = vld [vmem:[%s1 + $0x4] sm:$0x1]
        %v5853 = vld [vmem:[%s2] sm:$0x1]
        %v5855 = vperm.slane %v5853, 0
        %v5859 = vunpack.c.l.b16 %v5851
        %v5860 = vunpack.c.l.b16 %v5852
        %v5861 = vpack.c.b16 %v5860, %v5859
        %vm5862 = vcmask 72704
        %v5864 = vsel %vm5862, %v5787, 0
        %v5867 = vsel %vm5862, %v5788, 0
        %v5870 = vsel %vm5862, %v5789, 0
        %v5873 = vsel %vm5862, %v5790, 0
        %v5876 = vsel %vm5862, %v5791, 0
        %v5879 = vsel %vm5862, %v5792, 0
        %v5882 = vsel %vm5862, %v5793, 0
        %v5885 = vsel %vm5862, %v5794, 0
        %v5888 = vsel %vm5862, %v5795, 0
        %v5891 = vsel %vm5862, %v5796, 0
        %v5894 = vsel %vm5862, %v5797, 0
        %v5897 = vsel %vm5862, %v5798, 0
        %v5900 = vsel %vm5862, %v5799, 0
        %v5903 = vsel %vm5862, %v5800, 0
        %v5906 = vsel %vm5862, %v5801, 0
        %v5909 = vsel %vm5862, %v5802, 0
        %v5912 = vsel %vm5862, %v5803, 0
        %v5915 = vsel %vm5862, %v5804, 0
        %v5918 = vsel %vm5862, %v5805, 0
        %v5921 = vsel %vm5862, %v5806, 0
        %v5924 = vsel %vm5862, %v5807, 0
        %v5927 = vsel %vm5862, %v5808, 0
        %v5930 = vsel %vm5862, %v5809, 0
        %v5933 = vsel %vm5862, %v5810, 0
        %v5936 = vsel %vm5862, %v5811, 0
        %v5939 = vsel %vm5862, %v5812, 0
        %v5942 = vsel %vm5862, %v5813, 0
        %v5945 = vsel %vm5862, %v5814, 0
        %v5948 = vsel %vm5862, %v5815, 0
        %v5951 = vsel %vm5862, %v5816, 0
        %v5954 = vsel %vm5862, %v5817, 0
        %v5957 = vsel %vm5862, %v5818, 0
        %v5960 = vsel %vm5862, %v5819, 0
        %v5963 = vsel %vm5862, %v5820, 0
        %v5966 = vsel %vm5862, %v5821, 0
        %v5969 = vsel %vm5862, %v5822, 0
        %v5972 = vsel %vm5862, %v5823, 0
        %v5975 = vsel %vm5862, %v5824, 0
        %v5978 = vsel %vm5862, %v5825, 0
        %v5981 = vsel %vm5862, %v5826, 0
        %v5984 = vsel %vm5862, %v5827, 0
        %v5987 = vsel %vm5862, %v5828, 0
        %v5990 = vsel %vm5862, %v5829, 0
        %v5993 = vsel %vm5862, %v5830, 0
        %v5996 = vsel %vm5862, %v5831, 0
        %v5999 = vsel %vm5862, %v5832, 0
        %v6002 = vsel %vm5862, %v5833, 0
        %v6005 = vsel %vm5862, %v5834, 0
        %v6008 = vsel %vm5862, %v5835, 0
        %v6011 = vsel %vm5862, %v5836, 0
        %v6014 = vsel %vm5862, %v5837, 0
        %v6017 = vsel %vm5862, %v5838, 0
        %v6020 = vsel %vm5862, %v5839, 0
        %v6023 = vsel %vm5862, %v5840, 0
        %v6026 = vsel %vm5862, %v5841, 0
        %v6029 = vsel %vm5862, %v5842, 0
        %v6032 = vsel %vm5862, %v5843, 0
        %v6035 = vsel %vm5862, %v5844, 0
        %v6038 = vsel %vm5862, %v5845, 0
        %v6041 = vsel %vm5862, %v5846, 0
        %v6044 = vsel %vm5862, %v5847, 0
        %v6047 = vsel %vm5862, %v5848, 0
        %v6050 = vsel %vm5862, %v5849, 0
        %v6053 = vsel %vm5862, %v5850, 0
        %vm6055 = vcmask 1043456
        %vm6056 = vcmask 1044480
        %v6057 = vsel %vm6055, 4294967295, 65535
        %v6058 = vsel %vm6056, %v6057, 0
        %v6060 = vand.u32 %v5861, %v6058
        %6062 = vmatpush.bf16.msra.mxu0 0
        %6063 = vmatpush.bf16.msra.mxu0 0
        %6064 = vmatpush.bf16.msra.mxu0 0
        %6065 = vmatpush.bf16.msra.mxu0 0
        %6066 = vmatpush.bf16.msra.mxu0 0
        %6067 = vmatpush.bf16.msra.mxu0 0
        %6068 = vmatpush.bf16.msra.mxu0 0
        %6069 = vmatpush.bf16.msra.mxu0 %v6060
        %6070 = vmatmul.bf16.gmra.mxu0 %v5864
        %v6071 = vpop.f32.mrf.mxu0
        %v6072 = vadd.f32 %v5855, %v6071
        %v6073 = vpop.f32.mrf.mxu0
        %v6074 = vadd.f32 %v5855, %v6073
        %6075 = vmatmul.bf16.gmra.mxu0 %v5867
        %v6076 = vpop.f32.mrf.mxu0
        %v6077 = vadd.f32 %v5855, %v6076
        %v6078 = vpop.f32.mrf.mxu0
        %v6079 = vadd.f32 %v5855, %v6078
        %6080 = vmatmul.bf16.gmra.mxu0 %v5870
        %v6081 = vpop.f32.mrf.mxu0
        %v6082 = vadd.f32 %v5855, %v6081
        %v6083 = vpop.f32.mrf.mxu0
        %v6084 = vadd.f32 %v5855, %v6083
        %6085 = vmatmul.bf16.gmra.mxu0 %v5873
        %v6086 = vpop.f32.mrf.mxu0
        %v6087 = vadd.f32 %v5855, %v6086
        %v6088 = vpop.f32.mrf.mxu0
        %v6089 = vadd.f32 %v5855, %v6088
        %6090 = vmatmul.bf16.gmra.mxu0 %v5876
        %v6091 = vpop.f32.mrf.mxu0
        %v6092 = vadd.f32 %v5855, %v6091
        %v6093 = vpop.f32.mrf.mxu0
        %v6094 = vadd.f32 %v5855, %v6093
        %6095 = vmatmul.bf16.gmra.mxu0 %v5879
        %v6096 = vpop.f32.mrf.mxu0
        %v6097 = vadd.f32 %v5855, %v6096
        %v6098 = vpop.f32.mrf.mxu0
        %v6099 = vadd.f32 %v5855, %v6098
        %6100 = vmatmul.bf16.gmra.mxu0 %v5882
        %v6101 = vpop.f32.mrf.mxu0
        %v6102 = vadd.f32 %v5855, %v6101
        %v6103 = vpop.f32.mrf.mxu0
        %v6104 = vadd.f32 %v5855, %v6103
        %6105 = vmatmul.bf16.gmra.mxu0 %v5885
        %v6106 = vpop.f32.mrf.mxu0
        %v6107 = vadd.f32 %v5855, %v6106
        %v6108 = vpop.f32.mrf.mxu0
        %v6109 = vadd.f32 %v5855, %v6108
        %6110 = vmatmul.bf16.gmra.mxu0 %v5888
        %v6111 = vpop.f32.mrf.mxu0
        %v6112 = vadd.f32 %v5855, %v6111
        %v6113 = vpop.f32.mrf.mxu0
        %v6114 = vadd.f32 %v5855, %v6113
        %6115 = vmatmul.bf16.gmra.mxu0 %v5891
        %v6116 = vpop.f32.mrf.mxu0
        %v6117 = vadd.f32 %v5855, %v6116
        %v6118 = vpop.f32.mrf.mxu0
        %v6119 = vadd.f32 %v5855, %v6118
        %6120 = vmatmul.bf16.gmra.mxu0 %v5894
        %v6121 = vpop.f32.mrf.mxu0
        %v6122 = vadd.f32 %v5855, %v6121
        %v6123 = vpop.f32.mrf.mxu0
        %v6124 = vadd.f32 %v5855, %v6123
        %6125 = vmatmul.bf16.gmra.mxu0 %v5897
        %v6126 = vpop.f32.mrf.mxu0
        %v6127 = vadd.f32 %v5855, %v6126
        %v6128 = vpop.f32.mrf.mxu0
        %v6129 = vadd.f32 %v5855, %v6128
        %6130 = vmatmul.bf16.gmra.mxu0 %v5900
        %v6131 = vpop.f32.mrf.mxu0
        %v6132 = vadd.f32 %v5855, %v6131
        %v6133 = vpop.f32.mrf.mxu0
        %v6134 = vadd.f32 %v5855, %v6133
        %6135 = vmatmul.bf16.gmra.mxu0 %v5903
        %v6136 = vpop.f32.mrf.mxu0
        %v6137 = vadd.f32 %v5855, %v6136
        %v6138 = vpop.f32.mrf.mxu0
        %v6139 = vadd.f32 %v5855, %v6138
        %6140 = vmatmul.bf16.gmra.mxu0 %v5906
        %v6141 = vpop.f32.mrf.mxu0
        %v6142 = vadd.f32 %v5855, %v6141
        %v6143 = vpop.f32.mrf.mxu0
        %v6144 = vadd.f32 %v5855, %v6143
        %6145 = vmatmul.bf16.gmra.mxu0 %v5909
        %v6146 = vpop.f32.mrf.mxu0
        %v6147 = vadd.f32 %v5855, %v6146
        %v6148 = vpop.f32.mrf.mxu0
        %v6149 = vadd.f32 %v5855, %v6148
        %6150 = vmatmul.bf16.gmra.mxu0 %v5912
        %v6151 = vpop.f32.mrf.mxu0
        %v6152 = vadd.f32 %v5855, %v6151
        %v6153 = vpop.f32.mrf.mxu0
        %v6154 = vadd.f32 %v5855, %v6153
        %6155 = vmatmul.bf16.gmra.mxu0 %v5915
        %v6156 = vpop.f32.mrf.mxu0
        %v6157 = vadd.f32 %v5855, %v6156
        %v6158 = vpop.f32.mrf.mxu0
        %v6159 = vadd.f32 %v5855, %v6158
        %6160 = vmatmul.bf16.gmra.mxu0 %v5918
        %v6161 = vpop.f32.mrf.mxu0
        %v6162 = vadd.f32 %v5855, %v6161
        %v6163 = vpop.f32.mrf.mxu0
        %v6164 = vadd.f32 %v5855, %v6163
        %6165 = vmatmul.bf16.gmra.mxu0 %v5921
        %v6166 = vpop.f32.mrf.mxu0
        %v6167 = vadd.f32 %v5855, %v6166
        %v6168 = vpop.f32.mrf.mxu0
        %v6169 = vadd.f32 %v5855, %v6168
        %6170 = vmatmul.bf16.gmra.mxu0 %v5924
        %v6171 = vpop.f32.mrf.mxu0
        %v6172 = vadd.f32 %v5855, %v6171
        %v6173 = vpop.f32.mrf.mxu0
        %v6174 = vadd.f32 %v5855, %v6173
        %6175 = vmatmul.bf16.gmra.mxu0 %v5927
        %v6176 = vpop.f32.mrf.mxu0
        %v6177 = vadd.f32 %v5855, %v6176
        %v6178 = vpop.f32.mrf.mxu0
        %v6179 = vadd.f32 %v5855, %v6178
        %6180 = vmatmul.bf16.gmra.mxu0 %v5930
        %v6181 = vpop.f32.mrf.mxu0
        %v6182 = vadd.f32 %v5855, %v6181
        %v6183 = vpop.f32.mrf.mxu0
        %v6184 = vadd.f32 %v5855, %v6183
        %6185 = vmatmul.bf16.gmra.mxu0 %v5933
        %v6186 = vpop.f32.mrf.mxu0
        %v6187 = vadd.f32 %v5855, %v6186
        %v6188 = vpop.f32.mrf.mxu0
        %v6189 = vadd.f32 %v5855, %v6188
        %6190 = vmatmul.bf16.gmra.mxu0 %v5936
        %v6191 = vpop.f32.mrf.mxu0
        %v6192 = vadd.f32 %v5855, %v6191
        %v6193 = vpop.f32.mrf.mxu0
        %v6194 = vadd.f32 %v5855, %v6193
        %6195 = vmatmul.bf16.gmra.mxu0 %v5939
        %v6196 = vpop.f32.mrf.mxu0
        %v6197 = vadd.f32 %v5855, %v6196
        %v6198 = vpop.f32.mrf.mxu0
        %v6199 = vadd.f32 %v5855, %v6198
        %6200 = vmatmul.bf16.gmra.mxu0 %v5942
        %v6201 = vpop.f32.mrf.mxu0
        %v6202 = vadd.f32 %v5855, %v6201
        %v6203 = vpop.f32.mrf.mxu0
        %v6204 = vadd.f32 %v5855, %v6203
        %6205 = vmatmul.bf16.gmra.mxu0 %v5945
        %v6206 = vpop.f32.mrf.mxu0
        %v6207 = vadd.f32 %v5855, %v6206
        %v6208 = vpop.f32.mrf.mxu0
        %v6209 = vadd.f32 %v5855, %v6208
        %6210 = vmatmul.bf16.gmra.mxu0 %v5948
        %v6211 = vpop.f32.mrf.mxu0
        %v6212 = vadd.f32 %v5855, %v6211
        %v6213 = vpop.f32.mrf.mxu0
        %v6214 = vadd.f32 %v5855, %v6213
        %6215 = vmatmul.bf16.gmra.mxu0 %v5951
        %v6216 = vpop.f32.mrf.mxu0
        %v6217 = vadd.f32 %v5855, %v6216
        %v6218 = vpop.f32.mrf.mxu0
        %v6219 = vadd.f32 %v5855, %v6218
        %6220 = vmatmul.bf16.gmra.mxu0 %v5954
        %v6221 = vpop.f32.mrf.mxu0
        %v6222 = vadd.f32 %v5855, %v6221
        %v6223 = vpop.f32.mrf.mxu0
        %v6224 = vadd.f32 %v5855, %v6223
        %6225 = vmatmul.bf16.gmra.mxu0 %v5957
        %v6226 = vpop.f32.mrf.mxu0
        %v6227 = vadd.f32 %v5855, %v6226
        %v6228 = vpop.f32.mrf.mxu0
        %v6229 = vadd.f32 %v5855, %v6228
        %6230 = vmatmul.bf16.gmra.mxu0 %v5960
        %v6231 = vpop.f32.mrf.mxu0
        %v6232 = vadd.f32 %v5855, %v6231
        %v6233 = vpop.f32.mrf.mxu0
        %v6234 = vadd.f32 %v5855, %v6233
        %6235 = vmatmul.bf16.gmra.mxu0 %v5963
        %v6236 = vpop.f32.mrf.mxu0
        %v6237 = vadd.f32 %v5855, %v6236
        %v6238 = vpop.f32.mrf.mxu0
        %v6239 = vadd.f32 %v5855, %v6238
        %6240 = vmatmul.bf16.gmra.mxu0 %v5966
        %v6241 = vpop.f32.mrf.mxu0
        %v6242 = vadd.f32 %v5855, %v6241
        %v6243 = vpop.f32.mrf.mxu0
        %v6244 = vadd.f32 %v5855, %v6243
        %6245 = vmatmul.bf16.gmra.mxu0 %v5969
        %v6246 = vpop.f32.mrf.mxu0
        %v6247 = vadd.f32 %v5855, %v6246
        %v6248 = vpop.f32.mrf.mxu0
        %v6249 = vadd.f32 %v5855, %v6248
        %6250 = vmatmul.bf16.gmra.mxu0 %v5972
        %v6251 = vpop.f32.mrf.mxu0
        %v6252 = vadd.f32 %v5855, %v6251
        %v6253 = vpop.f32.mrf.mxu0
        %v6254 = vadd.f32 %v5855, %v6253
        %6255 = vmatmul.bf16.gmra.mxu0 %v5975
        %v6256 = vpop.f32.mrf.mxu0
        %v6257 = vadd.f32 %v5855, %v6256
        %v6258 = vpop.f32.mrf.mxu0
        %v6259 = vadd.f32 %v5855, %v6258
        %6260 = vmatmul.bf16.gmra.mxu0 %v5978
        %v6261 = vpop.f32.mrf.mxu0
        %v6262 = vadd.f32 %v5855, %v6261
        %v6263 = vpop.f32.mrf.mxu0
        %v6264 = vadd.f32 %v5855, %v6263
        %6265 = vmatmul.bf16.gmra.mxu0 %v5981
        %v6266 = vpop.f32.mrf.mxu0
        %v6267 = vadd.f32 %v5855, %v6266
        %v6268 = vpop.f32.mrf.mxu0
        %v6269 = vadd.f32 %v5855, %v6268
        %6270 = vmatmul.bf16.gmra.mxu0 %v5984
        %v6271 = vpop.f32.mrf.mxu0
        %v6272 = vadd.f32 %v5855, %v6271
        %v6273 = vpop.f32.mrf.mxu0
        %v6274 = vadd.f32 %v5855, %v6273
        %6275 = vmatmul.bf16.gmra.mxu0 %v5987
        %v6276 = vpop.f32.mrf.mxu0
        %v6277 = vadd.f32 %v5855, %v6276
        %v6278 = vpop.f32.mrf.mxu0
        %v6279 = vadd.f32 %v5855, %v6278
        %6280 = vmatmul.bf16.gmra.mxu0 %v5990
        %v6281 = vpop.f32.mrf.mxu0
        %v6282 = vadd.f32 %v5855, %v6281
        %v6283 = vpop.f32.mrf.mxu0
        %v6284 = vadd.f32 %v5855, %v6283
        %6285 = vmatmul.bf16.gmra.mxu0 %v5993
        %v6286 = vpop.f32.mrf.mxu0
        %v6287 = vadd.f32 %v5855, %v6286
        %v6288 = vpop.f32.mrf.mxu0
        %v6289 = vadd.f32 %v5855, %v6288
        %6290 = vmatmul.bf16.gmra.mxu0 %v5996
        %v6291 = vpop.f32.mrf.mxu0
        %v6292 = vadd.f32 %v5855, %v6291
        %v6293 = vpop.f32.mrf.mxu0
        %v6294 = vadd.f32 %v5855, %v6293
        %6295 = vmatmul.bf16.gmra.mxu0 %v5999
        %v6296 = vpop.f32.mrf.mxu0
        %v6297 = vadd.f32 %v5855, %v6296
        %v6298 = vpop.f32.mrf.mxu0
        %v6299 = vadd.f32 %v5855, %v6298
        %6300 = vmatmul.bf16.gmra.mxu0 %v6002
        %v6301 = vpop.f32.mrf.mxu0
        %v6302 = vadd.f32 %v5855, %v6301
        %v6303 = vpop.f32.mrf.mxu0
        %v6304 = vadd.f32 %v5855, %v6303
        %6305 = vmatmul.bf16.gmra.mxu0 %v6005
        %v6306 = vpop.f32.mrf.mxu0
        %v6307 = vadd.f32 %v5855, %v6306
        %v6308 = vpop.f32.mrf.mxu0
        %v6309 = vadd.f32 %v5855, %v6308
        %6310 = vmatmul.bf16.gmra.mxu0 %v6008
        %v6311 = vpop.f32.mrf.mxu0
        %v6312 = vadd.f32 %v5855, %v6311
        %v6313 = vpop.f32.mrf.mxu0
        %v6314 = vadd.f32 %v5855, %v6313
        %6315 = vmatmul.bf16.gmra.mxu0 %v6011
        %v6316 = vpop.f32.mrf.mxu0
        %v6317 = vadd.f32 %v5855, %v6316
        %v6318 = vpop.f32.mrf.mxu0
        %v6319 = vadd.f32 %v5855, %v6318
        %6320 = vmatmul.bf16.gmra.mxu0 %v6014
        %v6321 = vpop.f32.mrf.mxu0
        %v6322 = vadd.f32 %v5855, %v6321
        %v6323 = vpop.f32.mrf.mxu0
        %v6324 = vadd.f32 %v5855, %v6323
        %6325 = vmatmul.bf16.gmra.mxu0 %v6017
        %v6326 = vpop.f32.mrf.mxu0
        %v6327 = vadd.f32 %v5855, %v6326
        %v6328 = vpop.f32.mrf.mxu0
        %v6329 = vadd.f32 %v5855, %v6328
        %6330 = vmatmul.bf16.gmra.mxu0 %v6020
        %v6331 = vpop.f32.mrf.mxu0
        %v6332 = vadd.f32 %v5855, %v6331
        %v6333 = vpop.f32.mrf.mxu0
        %v6334 = vadd.f32 %v5855, %v6333
        %6335 = vmatmul.bf16.gmra.mxu0 %v6023
        %v6336 = vpop.f32.mrf.mxu0
        %v6337 = vadd.f32 %v5855, %v6336
        %v6338 = vpop.f32.mrf.mxu0
        %v6339 = vadd.f32 %v5855, %v6338
        %6340 = vmatmul.bf16.gmra.mxu0 %v6026
        %v6341 = vpop.f32.mrf.mxu0
        %v6342 = vadd.f32 %v5855, %v6341
        %v6343 = vpop.f32.mrf.mxu0
        %v6344 = vadd.f32 %v5855, %v6343
        %6345 = vmatmul.bf16.gmra.mxu0 %v6029
        %v6346 = vpop.f32.mrf.mxu0
        %v6347 = vadd.f32 %v5855, %v6346
        %v6348 = vpop.f32.mrf.mxu0
        %v6349 = vadd.f32 %v5855, %v6348
        %6350 = vmatmul.bf16.gmra.mxu0 %v6032
        %v6351 = vpop.f32.mrf.mxu0
        %v6352 = vadd.f32 %v5855, %v6351
        %v6353 = vpop.f32.mrf.mxu0
        %v6354 = vadd.f32 %v5855, %v6353
        %6355 = vmatmul.bf16.gmra.mxu0 %v6035
        %v6356 = vpop.f32.mrf.mxu0
        %v6357 = vadd.f32 %v5855, %v6356
        %v6358 = vpop.f32.mrf.mxu0
        %v6359 = vadd.f32 %v5855, %v6358
        %6360 = vmatmul.bf16.gmra.mxu0 %v6038
        %v6361 = vpop.f32.mrf.mxu0
        %v6362 = vadd.f32 %v5855, %v6361
        %v6363 = vpop.f32.mrf.mxu0
        %v6364 = vadd.f32 %v5855, %v6363
        %6365 = vmatmul.bf16.gmra.mxu0 %v6041
        %v6366 = vpop.f32.mrf.mxu0
        %v6367 = vadd.f32 %v5855, %v6366
        %v6368 = vpop.f32.mrf.mxu0
        %v6369 = vadd.f32 %v5855, %v6368
        %6370 = vmatmul.bf16.gmra.mxu0 %v6044
        %v6371 = vpop.f32.mrf.mxu0
        %v6372 = vadd.f32 %v5855, %v6371
        %v6373 = vpop.f32.mrf.mxu0
        %v6374 = vadd.f32 %v5855, %v6373
        %6375 = vmatmul.bf16.gmra.mxu0 %v6047
        %v6376 = vpop.f32.mrf.mxu0
        %v6377 = vadd.f32 %v5855, %v6376
        %v6378 = vpop.f32.mrf.mxu0
        %v6379 = vadd.f32 %v5855, %v6378
        %6380 = vmatmul.bf16.gmra.mxu0 %v6050
        %v6381 = vpop.f32.mrf.mxu0
        %v6382 = vadd.f32 %v5855, %v6381
        %v6383 = vpop.f32.mrf.mxu0
        %v6384 = vadd.f32 %v5855, %v6383
        %6385 = vmatmul.bf16.gmra.mxu0 %v6053
        %v6386 = vpop.f32.mrf.mxu0
        %v6387 = vadd.f32 %v5855, %v6386
        %v6388 = vpop.f32.mrf.mxu0
        %v6389 = vadd.f32 %v5855, %v6388
        %6390 = vdwg.mxu0
        %v6391 = vmax.f32 %v6072, 0.0
        %v6392 = vmax.f32 %v6074, 0.0
        %v6393 = vmax.f32 %v6077, 0.0
        %v6394 = vmax.f32 %v6079, 0.0
        %v6395 = vmax.f32 %v6082, 0.0
        %v6396 = vmax.f32 %v6084, 0.0
        %v6397 = vmax.f32 %v6087, 0.0
        %v6398 = vmax.f32 %v6089, 0.0
        %v6399 = vmax.f32 %v6092, 0.0
        %v6400 = vmax.f32 %v6094, 0.0
        %v6401 = vmax.f32 %v6097, 0.0
        %v6402 = vmax.f32 %v6099, 0.0
        %v6403 = vmax.f32 %v6102, 0.0
        %v6404 = vmax.f32 %v6104, 0.0
        %v6405 = vmax.f32 %v6107, 0.0
        %v6406 = vmax.f32 %v6109, 0.0
        %v6407 = vmax.f32 %v6112, 0.0
        %v6408 = vmax.f32 %v6114, 0.0
        %v6409 = vmax.f32 %v6117, 0.0
        %v6410 = vmax.f32 %v6119, 0.0
        %v6411 = vmax.f32 %v6122, 0.0
        %v6412 = vmax.f32 %v6124, 0.0
        %v6413 = vmax.f32 %v6127, 0.0
        %v6414 = vmax.f32 %v6129, 0.0
        %v6415 = vmax.f32 %v6132, 0.0
        %v6416 = vmax.f32 %v6134, 0.0
        %v6417 = vmax.f32 %v6137, 0.0
        %v6418 = vmax.f32 %v6139, 0.0
        %v6419 = vmax.f32 %v6142, 0.0
        %v6420 = vmax.f32 %v6144, 0.0
        %v6421 = vmax.f32 %v6147, 0.0
        %v6422 = vmax.f32 %v6149, 0.0
        %v6423 = vmax.f32 %v6152, 0.0
        %v6424 = vmax.f32 %v6154, 0.0
        %v6425 = vmax.f32 %v6157, 0.0
        %v6426 = vmax.f32 %v6159, 0.0
        %v6427 = vmax.f32 %v6162, 0.0
        %v6428 = vmax.f32 %v6164, 0.0
        %v6429 = vmax.f32 %v6167, 0.0
        %v6430 = vmax.f32 %v6169, 0.0
        %v6431 = vmax.f32 %v6172, 0.0
        %v6432 = vmax.f32 %v6174, 0.0
        %v6433 = vmax.f32 %v6177, 0.0
        %v6434 = vmax.f32 %v6179, 0.0
        %v6435 = vmax.f32 %v6182, 0.0
        %v6436 = vmax.f32 %v6184, 0.0
        %v6437 = vmax.f32 %v6187, 0.0
        %v6438 = vmax.f32 %v6189, 0.0
        %v6439 = vmax.f32 %v6192, 0.0
        %v6440 = vmax.f32 %v6194, 0.0
        %v6441 = vmax.f32 %v6197, 0.0
        %v6442 = vmax.f32 %v6199, 0.0
        %v6443 = vmax.f32 %v6202, 0.0
        %v6444 = vmax.f32 %v6204, 0.0
        %v6445 = vmax.f32 %v6207, 0.0
        %v6446 = vmax.f32 %v6209, 0.0
        %v6447 = vmax.f32 %v6212, 0.0
        %v6448 = vmax.f32 %v6214, 0.0
        %v6449 = vmax.f32 %v6217, 0.0
        %v6450 = vmax.f32 %v6219, 0.0
        %v6451 = vmax.f32 %v6222, 0.0
        %v6452 = vmax.f32 %v6224, 0.0
        %v6453 = vmax.f32 %v6227, 0.0
        %v6454 = vmax.f32 %v6229, 0.0
        %v6455 = vmax.f32 %v6232, 0.0
        %v6456 = vmax.f32 %v6234, 0.0
        %v6457 = vmax.f32 %v6237, 0.0
        %v6458 = vmax.f32 %v6239, 0.0
        %v6459 = vmax.f32 %v6242, 0.0
        %v6460 = vmax.f32 %v6244, 0.0
        %v6461 = vmax.f32 %v6247, 0.0
        %v6462 = vmax.f32 %v6249, 0.0
        %v6463 = vmax.f32 %v6252, 0.0
        %v6464 = vmax.f32 %v6254, 0.0
        %v6465 = vmax.f32 %v6257, 0.0
        %v6466 = vmax.f32 %v6259, 0.0
        %v6467 = vmax.f32 %v6262, 0.0
        %v6468 = vmax.f32 %v6264, 0.0
        %v6469 = vmax.f32 %v6267, 0.0
        %v6470 = vmax.f32 %v6269, 0.0
        %v6471 = vmax.f32 %v6272, 0.0
        %v6472 = vmax.f32 %v6274, 0.0
        %v6473 = vmax.f32 %v6277, 0.0
        %v6474 = vmax.f32 %v6279, 0.0
        %v6475 = vmax.f32 %v6282, 0.0
        %v6476 = vmax.f32 %v6284, 0.0
        %v6477 = vmax.f32 %v6287, 0.0
        %v6478 = vmax.f32 %v6289, 0.0
        %v6479 = vmax.f32 %v6292, 0.0
        %v6480 = vmax.f32 %v6294, 0.0
        %v6481 = vmax.f32 %v6297, 0.0
        %v6482 = vmax.f32 %v6299, 0.0
        %v6483 = vmax.f32 %v6302, 0.0
        %v6484 = vmax.f32 %v6304, 0.0
        %v6485 = vmax.f32 %v6307, 0.0
        %v6486 = vmax.f32 %v6309, 0.0
        %v6487 = vmax.f32 %v6312, 0.0
        %v6488 = vmax.f32 %v6314, 0.0
        %v6489 = vmax.f32 %v6317, 0.0
        %v6490 = vmax.f32 %v6319, 0.0
        %v6491 = vmax.f32 %v6322, 0.0
        %v6492 = vmax.f32 %v6324, 0.0
        %v6493 = vmax.f32 %v6327, 0.0
        %v6494 = vmax.f32 %v6329, 0.0
        %v6495 = vmax.f32 %v6332, 0.0
        %v6496 = vmax.f32 %v6334, 0.0
        %v6497 = vmax.f32 %v6337, 0.0
        %v6498 = vmax.f32 %v6339, 0.0
        %v6499 = vmax.f32 %v6342, 0.0
        %v6500 = vmax.f32 %v6344, 0.0
        %v6501 = vmax.f32 %v6347, 0.0
        %v6502 = vmax.f32 %v6349, 0.0
        %v6503 = vmax.f32 %v6352, 0.0
        %v6504 = vmax.f32 %v6354, 0.0
        %v6505 = vmax.f32 %v6357, 0.0
        %v6506 = vmax.f32 %v6359, 0.0
        %v6507 = vmax.f32 %v6362, 0.0
        %v6508 = vmax.f32 %v6364, 0.0
        %v6509 = vmax.f32 %v6367, 0.0
        %v6510 = vmax.f32 %v6369, 0.0
        %v6511 = vmax.f32 %v6372, 0.0
        %v6512 = vmax.f32 %v6374, 0.0
        %v6513 = vmax.f32 %v6377, 0.0
        %v6514 = vmax.f32 %v6379, 0.0
        %v6515 = vmax.f32 %v6382, 0.0
        %v6516 = vmax.f32 %v6384, 0.0
        %v6517 = vmax.f32 %v6387, 0.0
        %v6518 = vmax.f32 %v6389, 0.0
        %v6519 = vmax.f32 %v6391, %v6395
        %v6520 = vmax.f32 %v6392, %v6396
        %v6521 = vmax.f32 %v6393, %v6397
        %v6522 = vmax.f32 %v6394, %v6398
        %v6523 = vmax.f32 %v6399, %v6403
        %v6524 = vmax.f32 %v6400, %v6404
        %v6525 = vmax.f32 %v6401, %v6405
        %v6526 = vmax.f32 %v6402, %v6406
        %v6527 = vmax.f32 %v6407, %v6411
        %v6528 = vmax.f32 %v6408, %v6412
        %v6529 = vmax.f32 %v6409, %v6413
        %v6530 = vmax.f32 %v6410, %v6414
        %v6531 = vmax.f32 %v6415, %v6419
        %v6532 = vmax.f32 %v6416, %v6420
        %v6533 = vmax.f32 %v6417, %v6421
        %v6534 = vmax.f32 %v6418, %v6422
        %v6535 = vmax.f32 %v6423, %v6427
        %v6536 = vmax.f32 %v6424, %v6428
        %v6537 = vmax.f32 %v6425, %v6429
        %v6538 = vmax.f32 %v6426, %v6430
        %v6539 = vmax.f32 %v6431, %v6435
        %v6540 = vmax.f32 %v6432, %v6436
        %v6541 = vmax.f32 %v6433, %v6437
        %v6542 = vmax.f32 %v6434, %v6438
        %v6543 = vmax.f32 %v6439, %v6443
        %v6544 = vmax.f32 %v6440, %v6444
        %v6545 = vmax.f32 %v6441, %v6445
        %v6546 = vmax.f32 %v6442, %v6446
        %v6547 = vmax.f32 %v6447, %v6451
        %v6548 = vmax.f32 %v6448, %v6452
        %v6549 = vmax.f32 %v6449, %v6453
        %v6550 = vmax.f32 %v6450, %v6454
        %v6551 = vmax.f32 %v6455, %v6459
        %v6552 = vmax.f32 %v6456, %v6460
        %v6553 = vmax.f32 %v6457, %v6461
        %v6554 = vmax.f32 %v6458, %v6462
        %v6555 = vmax.f32 %v6463, %v6467
        %v6556 = vmax.f32 %v6464, %v6468
        %v6557 = vmax.f32 %v6465, %v6469
        %v6558 = vmax.f32 %v6466, %v6470
        %v6559 = vmax.f32 %v6471, %v6475
        %v6560 = vmax.f32 %v6472, %v6476
        %v6561 = vmax.f32 %v6473, %v6477
        %v6562 = vmax.f32 %v6474, %v6478
        %v6563 = vmax.f32 %v6479, %v6483
        %v6564 = vmax.f32 %v6480, %v6484
        %v6565 = vmax.f32 %v6481, %v6485
        %v6566 = vmax.f32 %v6482, %v6486
        %v6567 = vmax.f32 %v6487, %v6491
        %v6568 = vmax.f32 %v6488, %v6492
        %v6569 = vmax.f32 %v6489, %v6493
        %v6570 = vmax.f32 %v6490, %v6494
        %v6571 = vmax.f32 %v6495, %v6499
        %v6572 = vmax.f32 %v6496, %v6500
        %v6573 = vmax.f32 %v6497, %v6501
        %v6574 = vmax.f32 %v6498, %v6502
        %v6575 = vmax.f32 %v6503, %v6507
        %v6576 = vmax.f32 %v6504, %v6508
        %v6577 = vmax.f32 %v6505, %v6509
        %v6578 = vmax.f32 %v6506, %v6510
        %v6579 = vmax.f32 %v6511, %v6515
        %v6580 = vmax.f32 %v6512, %v6516
        %v6581 = vmax.f32 %v6513, %v6517
        %v6582 = vmax.f32 %v6514, %v6518
        %v6647 = vrot.slane %v6519, 2
        %v6648 = vrot.slane %v6519, 4
        %v6649 = vrot.slane %v6519, 6
        %v6650 = vrot.slane %v6520, 2
        %v6651 = vrot.slane %v6520, 4
        %v6652 = vrot.slane %v6520, 6
        %v6653 = vrot.slane %v6521, 2
        %v6654 = vrot.slane %v6521, 4
        %v6655 = vrot.slane %v6521, 6
        %v6656 = vrot.slane %v6522, 2
        %v6657 = vrot.slane %v6522, 4
        %v6658 = vrot.slane %v6522, 6
        %v6659 = vrot.slane %v6523, 2
        %v6660 = vrot.slane %v6523, 4
        %v6661 = vrot.slane %v6523, 6
        %v6662 = vrot.slane %v6524, 2
        %v6663 = vrot.slane %v6524, 4
        %v6664 = vrot.slane %v6524, 6
        %v6665 = vrot.slane %v6525, 2
        %v6666 = vrot.slane %v6525, 4
        %v6667 = vrot.slane %v6525, 6
        %v6668 = vrot.slane %v6526, 2
        %v6669 = vrot.slane %v6526, 4
        %v6670 = vrot.slane %v6526, 6
        %v6671 = vrot.slane %v6527, 2
        %v6672 = vrot.slane %v6527, 4
        %v6673 = vrot.slane %v6527, 6
        %v6674 = vrot.slane %v6528, 2
        %v6675 = vrot.slane %v6528, 4
        %v6676 = vrot.slane %v6528, 6
        %v6677 = vrot.slane %v6529, 2
        %v6678 = vrot.slane %v6529, 4
        %v6679 = vrot.slane %v6529, 6
        %v6680 = vrot.slane %v6530, 2
        %v6681 = vrot.slane %v6530, 4
        %v6682 = vrot.slane %v6530, 6
        %v6683 = vrot.slane %v6531, 2
        %v6684 = vrot.slane %v6531, 4
        %v6685 = vrot.slane %v6531, 6
        %v6686 = vrot.slane %v6532, 2
        %v6687 = vrot.slane %v6532, 4
        %v6688 = vrot.slane %v6532, 6
        %v6689 = vrot.slane %v6533, 2
        %v6690 = vrot.slane %v6533, 4
        %v6691 = vrot.slane %v6533, 6
        %v6692 = vrot.slane %v6534, 2
        %v6693 = vrot.slane %v6534, 4
        %v6694 = vrot.slane %v6534, 6
        %v6695 = vrot.slane %v6535, 2
        %v6696 = vrot.slane %v6535, 4
        %v6697 = vrot.slane %v6535, 6
        %v6698 = vrot.slane %v6536, 2
        %v6699 = vrot.slane %v6536, 4
        %v6700 = vrot.slane %v6536, 6
        %v6701 = vrot.slane %v6537, 2
        %v6702 = vrot.slane %v6537, 4
        %v6703 = vrot.slane %v6537, 6
        %v6704 = vrot.slane %v6538, 2
        %v6705 = vrot.slane %v6538, 4
        %v6706 = vrot.slane %v6538, 6
        %v6707 = vrot.slane %v6539, 2
        %v6708 = vrot.slane %v6539, 4
        %v6709 = vrot.slane %v6539, 6
        %v6710 = vrot.slane %v6540, 2
        %v6711 = vrot.slane %v6540, 4
        %v6712 = vrot.slane %v6540, 6
        %v6713 = vrot.slane %v6541, 2
        %v6714 = vrot.slane %v6541, 4
        %v6715 = vrot.slane %v6541, 6
        %v6716 = vrot.slane %v6542, 2
        %v6717 = vrot.slane %v6542, 4
        %v6718 = vrot.slane %v6542, 6
        %v6719 = vrot.slane %v6543, 2
        %v6720 = vrot.slane %v6543, 4
        %v6721 = vrot.slane %v6543, 6
        %v6722 = vrot.slane %v6544, 2
        %v6723 = vrot.slane %v6544, 4
        %v6724 = vrot.slane %v6544, 6
        %v6725 = vrot.slane %v6545, 2
        %v6726 = vrot.slane %v6545, 4
        %v6727 = vrot.slane %v6545, 6
        %v6728 = vrot.slane %v6546, 2
        %v6729 = vrot.slane %v6546, 4
        %v6730 = vrot.slane %v6546, 6
        %v6731 = vrot.slane %v6547, 2
        %v6732 = vrot.slane %v6547, 4
        %v6733 = vrot.slane %v6547, 6
        %v6734 = vrot.slane %v6548, 2
        %v6735 = vrot.slane %v6548, 4
        %v6736 = vrot.slane %v6548, 6
        %v6737 = vrot.slane %v6549, 2
        %v6738 = vrot.slane %v6549, 4
        %v6739 = vrot.slane %v6549, 6
        %v6740 = vrot.slane %v6550, 2
        %v6741 = vrot.slane %v6550, 4
        %v6742 = vrot.slane %v6550, 6
        %v6743 = vrot.slane %v6551, 2
        %v6744 = vrot.slane %v6551, 4
        %v6745 = vrot.slane %v6551, 6
        %v6746 = vrot.slane %v6552, 2
        %v6747 = vrot.slane %v6552, 4
        %v6748 = vrot.slane %v6552, 6
        %v6749 = vrot.slane %v6553, 2
        %v6750 = vrot.slane %v6553, 4
        %v6751 = vrot.slane %v6553, 6
        %v6752 = vrot.slane %v6554, 2
        %v6753 = vrot.slane %v6554, 4
        %v6754 = vrot.slane %v6554, 6
        %v6755 = vrot.slane %v6555, 2
        %v6756 = vrot.slane %v6555, 4
        %v6757 = vrot.slane %v6555, 6
        %v6758 = vrot.slane %v6556, 2
        %v6759 = vrot.slane %v6556, 4
        %v6760 = vrot.slane %v6556, 6
        %v6761 = vrot.slane %v6557, 2
        %v6762 = vrot.slane %v6557, 4
        %v6763 = vrot.slane %v6557, 6
        %v6764 = vrot.slane %v6558, 2
        %v6765 = vrot.slane %v6558, 4
        %v6766 = vrot.slane %v6558, 6
        %v6767 = vrot.slane %v6559, 2
        %v6768 = vrot.slane %v6559, 4
        %v6769 = vrot.slane %v6559, 6
        %v6770 = vrot.slane %v6560, 2
        %v6771 = vrot.slane %v6560, 4
        %v6772 = vrot.slane %v6560, 6
        %v6773 = vrot.slane %v6561, 2
        %v6774 = vrot.slane %v6561, 4
        %v6775 = vrot.slane %v6561, 6
        %v6776 = vrot.slane %v6562, 2
        %v6777 = vrot.slane %v6562, 4
        %v6778 = vrot.slane %v6562, 6
        %v6779 = vrot.slane %v6563, 2
        %v6780 = vrot.slane %v6563, 4
        %v6781 = vrot.slane %v6563, 6
        %v6782 = vrot.slane %v6564, 2
        %v6783 = vrot.slane %v6564, 4
        %v6784 = vrot.slane %v6564, 6
        %v6785 = vrot.slane %v6565, 2
        %v6786 = vrot.slane %v6565, 4
        %v6787 = vrot.slane %v6565, 6
        %v6788 = vrot.slane %v6566, 2
        %v6789 = vrot.slane %v6566, 4
        %v6790 = vrot.slane %v6566, 6
        %v6791 = vrot.slane %v6567, 2
        %v6792 = vrot.slane %v6567, 4
        %v6793 = vrot.slane %v6567, 6
        %v6794 = vrot.slane %v6568, 2
        %v6795 = vrot.slane %v6568, 4
        %v6796 = vrot.slane %v6568, 6
        %v6797 = vrot.slane %v6569, 2
        %v6798 = vrot.slane %v6569, 4
        %v6799 = vrot.slane %v6569, 6
        %v6800 = vrot.slane %v6570, 2
        %v6801 = vrot.slane %v6570, 4
        %v6802 = vrot.slane %v6570, 6
        %v6803 = vrot.slane %v6571, 2
        %v6804 = vrot.slane %v6571, 4
        %v6805 = vrot.slane %v6571, 6
        %v6806 = vrot.slane %v6572, 2
        %v6807 = vrot.slane %v6572, 4
        %v6808 = vrot.slane %v6572, 6
        %v6809 = vrot.slane %v6573, 2
        %v6810 = vrot.slane %v6573, 4
        %v6811 = vrot.slane %v6573, 6
        %v6812 = vrot.slane %v6574, 2
        %v6813 = vrot.slane %v6574, 4
        %v6814 = vrot.slane %v6574, 6
        %v6815 = vrot.slane %v6575, 2
        %v6816 = vrot.slane %v6575, 4
        %v6817 = vrot.slane %v6575, 6
        %v6818 = vrot.slane %v6576, 2
        %v6819 = vrot.slane %v6576, 4
        %v6820 = vrot.slane %v6576, 6
        %v6821 = vrot.slane %v6577, 2
        %v6822 = vrot.slane %v6577, 4
        %v6823 = vrot.slane %v6577, 6
        %v6824 = vrot.slane %v6578, 2
        %v6825 = vrot.slane %v6578, 4
        %v6826 = vrot.slane %v6578, 6
        %v6827 = vrot.slane %v6579, 2
        %v6828 = vrot.slane %v6579, 4
        %v6829 = vrot.slane %v6579, 6
        %v6830 = vrot.slane %v6580, 2
        %v6831 = vrot.slane %v6580, 4
        %v6832 = vrot.slane %v6580, 6
        %v6833 = vrot.slane %v6581, 2
        %v6834 = vrot.slane %v6581, 4
        %v6835 = vrot.slane %v6581, 6
        %v6836 = vrot.slane %v6582, 2
        %v6837 = vrot.slane %v6582, 4
        %v6838 = vrot.slane %v6582, 6
        %v7031 = vrot.slane %v6519, 7
        %v7032 = vrot.slane %v7031, 2
        %v7033 = vrot.slane %v6647, 7
        %v7034 = vrot.slane %v7033, 2
        %v7035 = vrot.slane %v6648, 7
        %v7036 = vrot.slane %v7035, 2
        %v7037 = vrot.slane %v6649, 7
        %v7038 = vrot.slane %v7037, 2
        %v7039 = vrot.slane %v6520, 7
        %v7040 = vrot.slane %v7039, 2
        %v7041 = vrot.slane %v6650, 7
        %v7042 = vrot.slane %v7041, 2
        %v7043 = vrot.slane %v6651, 7
        %v7044 = vrot.slane %v7043, 2
        %v7045 = vrot.slane %v6652, 7
        %v7046 = vrot.slane %v7045, 2
        %v7047 = vrot.slane %v6521, 7
        %v7048 = vrot.slane %v7047, 2
        %v7049 = vrot.slane %v6653, 7
        %v7050 = vrot.slane %v7049, 2
        %v7051 = vrot.slane %v6654, 7
        %v7052 = vrot.slane %v7051, 2
        %v7053 = vrot.slane %v6655, 7
        %v7054 = vrot.slane %v7053, 2
        %v7055 = vrot.slane %v6522, 7
        %v7056 = vrot.slane %v7055, 2
        %v7057 = vrot.slane %v6656, 7
        %v7058 = vrot.slane %v7057, 2
        %v7059 = vrot.slane %v6657, 7
        %v7060 = vrot.slane %v7059, 2
        %v7061 = vrot.slane %v6658, 7
        %v7062 = vrot.slane %v7061, 2
        %v7063 = vrot.slane %v6523, 7
        %v7064 = vrot.slane %v7063, 2
        %v7065 = vrot.slane %v6659, 7
        %v7066 = vrot.slane %v7065, 2
        %v7067 = vrot.slane %v6660, 7
        %v7068 = vrot.slane %v7067, 2
        %v7069 = vrot.slane %v6661, 7
        %v7070 = vrot.slane %v7069, 2
        %v7071 = vrot.slane %v6524, 7
        %v7072 = vrot.slane %v7071, 2
        %v7073 = vrot.slane %v6662, 7
        %v7074 = vrot.slane %v7073, 2
        %v7075 = vrot.slane %v6663, 7
        %v7076 = vrot.slane %v7075, 2
        %v7077 = vrot.slane %v6664, 7
        %v7078 = vrot.slane %v7077, 2
        %v7079 = vrot.slane %v6525, 7
        %v7080 = vrot.slane %v7079, 2
        %v7081 = vrot.slane %v6665, 7
        %v7082 = vrot.slane %v7081, 2
        %v7083 = vrot.slane %v6666, 7
        %v7084 = vrot.slane %v7083, 2
        %v7085 = vrot.slane %v6667, 7
        %v7086 = vrot.slane %v7085, 2
        %v7087 = vrot.slane %v6526, 7
        %v7088 = vrot.slane %v7087, 2
        %v7089 = vrot.slane %v6668, 7
        %v7090 = vrot.slane %v7089, 2
        %v7091 = vrot.slane %v6669, 7
        %v7092 = vrot.slane %v7091, 2
        %v7093 = vrot.slane %v6670, 7
        %v7094 = vrot.slane %v7093, 2
        %v7095 = vrot.slane %v6527, 7
        %v7096 = vrot.slane %v7095, 2
        %v7097 = vrot.slane %v6671, 7
        %v7098 = vrot.slane %v7097, 2
        %v7099 = vrot.slane %v6672, 7
        %v7100 = vrot.slane %v7099, 2
        %v7101 = vrot.slane %v6673, 7
        %v7102 = vrot.slane %v7101, 2
        %v7103 = vrot.slane %v6528, 7
        %v7104 = vrot.slane %v7103, 2
        %v7105 = vrot.slane %v6674, 7
        %v7106 = vrot.slane %v7105, 2
        %v7107 = vrot.slane %v6675, 7
        %v7108 = vrot.slane %v7107, 2
        %v7109 = vrot.slane %v6676, 7
        %v7110 = vrot.slane %v7109, 2
        %v7111 = vrot.slane %v6529, 7
        %v7112 = vrot.slane %v7111, 2
        %v7113 = vrot.slane %v6677, 7
        %v7114 = vrot.slane %v7113, 2
        %v7115 = vrot.slane %v6678, 7
        %v7116 = vrot.slane %v7115, 2
        %v7117 = vrot.slane %v6679, 7
        %v7118 = vrot.slane %v7117, 2
        %v7119 = vrot.slane %v6530, 7
        %v7120 = vrot.slane %v7119, 2
        %v7121 = vrot.slane %v6680, 7
        %v7122 = vrot.slane %v7121, 2
        %v7123 = vrot.slane %v6681, 7
        %v7124 = vrot.slane %v7123, 2
        %v7125 = vrot.slane %v6682, 7
        %v7126 = vrot.slane %v7125, 2
        %v7127 = vrot.slane %v6531, 7
        %v7128 = vrot.slane %v7127, 2
        %v7129 = vrot.slane %v6683, 7
        %v7130 = vrot.slane %v7129, 2
        %v7131 = vrot.slane %v6684, 7
        %v7132 = vrot.slane %v7131, 2
        %v7133 = vrot.slane %v6685, 7
        %v7134 = vrot.slane %v7133, 2
        %v7135 = vrot.slane %v6532, 7
        %v7136 = vrot.slane %v7135, 2
        %v7137 = vrot.slane %v6686, 7
        %v7138 = vrot.slane %v7137, 2
        %v7139 = vrot.slane %v6687, 7
        %v7140 = vrot.slane %v7139, 2
        %v7141 = vrot.slane %v6688, 7
        %v7142 = vrot.slane %v7141, 2
        %v7143 = vrot.slane %v6533, 7
        %v7144 = vrot.slane %v7143, 2
        %v7145 = vrot.slane %v6689, 7
        %v7146 = vrot.slane %v7145, 2
        %v7147 = vrot.slane %v6690, 7
        %v7148 = vrot.slane %v7147, 2
        %v7149 = vrot.slane %v6691, 7
        %v7150 = vrot.slane %v7149, 2
        %v7151 = vrot.slane %v6534, 7
        %v7152 = vrot.slane %v7151, 2
        %v7153 = vrot.slane %v6692, 7
        %v7154 = vrot.slane %v7153, 2
        %v7155 = vrot.slane %v6693, 7
        %v7156 = vrot.slane %v7155, 2
        %v7157 = vrot.slane %v6694, 7
        %v7158 = vrot.slane %v7157, 2
        %v7159 = vrot.slane %v6535, 7
        %v7160 = vrot.slane %v7159, 2
        %v7161 = vrot.slane %v6695, 7
        %v7162 = vrot.slane %v7161, 2
        %v7163 = vrot.slane %v6696, 7
        %v7164 = vrot.slane %v7163, 2
        %v7165 = vrot.slane %v6697, 7
        %v7166 = vrot.slane %v7165, 2
        %v7167 = vrot.slane %v6536, 7
        %v7168 = vrot.slane %v7167, 2
        %v7169 = vrot.slane %v6698, 7
        %v7170 = vrot.slane %v7169, 2
        %v7171 = vrot.slane %v6699, 7
        %v7172 = vrot.slane %v7171, 2
        %v7173 = vrot.slane %v6700, 7
        %v7174 = vrot.slane %v7173, 2
        %v7175 = vrot.slane %v6537, 7
        %v7176 = vrot.slane %v7175, 2
        %v7177 = vrot.slane %v6701, 7
        %v7178 = vrot.slane %v7177, 2
        %v7179 = vrot.slane %v6702, 7
        %v7180 = vrot.slane %v7179, 2
        %v7181 = vrot.slane %v6703, 7
        %v7182 = vrot.slane %v7181, 2
        %v7183 = vrot.slane %v6538, 7
        %v7184 = vrot.slane %v7183, 2
        %v7185 = vrot.slane %v6704, 7
        %v7186 = vrot.slane %v7185, 2
        %v7187 = vrot.slane %v6705, 7
        %v7188 = vrot.slane %v7187, 2
        %v7189 = vrot.slane %v6706, 7
        %v7190 = vrot.slane %v7189, 2
        %v7191 = vrot.slane %v6539, 7
        %v7192 = vrot.slane %v7191, 2
        %v7193 = vrot.slane %v6707, 7
        %v7194 = vrot.slane %v7193, 2
        %v7195 = vrot.slane %v6708, 7
        %v7196 = vrot.slane %v7195, 2
        %v7197 = vrot.slane %v6709, 7
        %v7198 = vrot.slane %v7197, 2
        %v7199 = vrot.slane %v6540, 7
        %v7200 = vrot.slane %v7199, 2
        %v7201 = vrot.slane %v6710, 7
        %v7202 = vrot.slane %v7201, 2
        %v7203 = vrot.slane %v6711, 7
        %v7204 = vrot.slane %v7203, 2
        %v7205 = vrot.slane %v6712, 7
        %v7206 = vrot.slane %v7205, 2
        %v7207 = vrot.slane %v6541, 7
        %v7208 = vrot.slane %v7207, 2
        %v7209 = vrot.slane %v6713, 7
        %v7210 = vrot.slane %v7209, 2
        %v7211 = vrot.slane %v6714, 7
        %v7212 = vrot.slane %v7211, 2
        %v7213 = vrot.slane %v6715, 7
        %v7214 = vrot.slane %v7213, 2
        %v7215 = vrot.slane %v6542, 7
        %v7216 = vrot.slane %v7215, 2
        %v7217 = vrot.slane %v6716, 7
        %v7218 = vrot.slane %v7217, 2
        %v7219 = vrot.slane %v6717, 7
        %v7220 = vrot.slane %v7219, 2
        %v7221 = vrot.slane %v6718, 7
        %v7222 = vrot.slane %v7221, 2
        %v7223 = vrot.slane %v6543, 7
        %v7224 = vrot.slane %v7223, 2
        %v7225 = vrot.slane %v6719, 7
        %v7226 = vrot.slane %v7225, 2
        %v7227 = vrot.slane %v6720, 7
        %v7228 = vrot.slane %v7227, 2
        %v7229 = vrot.slane %v6721, 7
        %v7230 = vrot.slane %v7229, 2
        %v7231 = vrot.slane %v6544, 7
        %v7232 = vrot.slane %v7231, 2
        %v7233 = vrot.slane %v6722, 7
        %v7234 = vrot.slane %v7233, 2
        %v7235 = vrot.slane %v6723, 7
        %v7236 = vrot.slane %v7235, 2
        %v7237 = vrot.slane %v6724, 7
        %v7238 = vrot.slane %v7237, 2
        %v7239 = vrot.slane %v6545, 7
        %v7240 = vrot.slane %v7239, 2
        %v7241 = vrot.slane %v6725, 7
        %v7242 = vrot.slane %v7241, 2
        %v7243 = vrot.slane %v6726, 7
        %v7244 = vrot.slane %v7243, 2
        %v7245 = vrot.slane %v6727, 7
        %v7246 = vrot.slane %v7245, 2
        %v7247 = vrot.slane %v6546, 7
        %v7248 = vrot.slane %v7247, 2
        %v7249 = vrot.slane %v6728, 7
        %v7250 = vrot.slane %v7249, 2
        %v7251 = vrot.slane %v6729, 7
        %v7252 = vrot.slane %v7251, 2
        %v7253 = vrot.slane %v6730, 7
        %v7254 = vrot.slane %v7253, 2
        %v7255 = vrot.slane %v6547, 7
        %v7256 = vrot.slane %v7255, 2
        %v7257 = vrot.slane %v6731, 7
        %v7258 = vrot.slane %v7257, 2
        %v7259 = vrot.slane %v6732, 7
        %v7260 = vrot.slane %v7259, 2
        %v7261 = vrot.slane %v6733, 7
        %v7262 = vrot.slane %v7261, 2
        %v7263 = vrot.slane %v6548, 7
        %v7264 = vrot.slane %v7263, 2
        %v7265 = vrot.slane %v6734, 7
        %v7266 = vrot.slane %v7265, 2
        %v7267 = vrot.slane %v6735, 7
        %v7268 = vrot.slane %v7267, 2
        %v7269 = vrot.slane %v6736, 7
        %v7270 = vrot.slane %v7269, 2
        %v7271 = vrot.slane %v6549, 7
        %v7272 = vrot.slane %v7271, 2
        %v7273 = vrot.slane %v6737, 7
        %v7274 = vrot.slane %v7273, 2
        %v7275 = vrot.slane %v6738, 7
        %v7276 = vrot.slane %v7275, 2
        %v7277 = vrot.slane %v6739, 7
        %v7278 = vrot.slane %v7277, 2
        %v7279 = vrot.slane %v6550, 7
        %v7280 = vrot.slane %v7279, 2
        %v7281 = vrot.slane %v6740, 7
        %v7282 = vrot.slane %v7281, 2
        %v7283 = vrot.slane %v6741, 7
        %v7284 = vrot.slane %v7283, 2
        %v7285 = vrot.slane %v6742, 7
        %v7286 = vrot.slane %v7285, 2
        %v7287 = vrot.slane %v6551, 7
        %v7288 = vrot.slane %v7287, 2
        %v7289 = vrot.slane %v6743, 7
        %v7290 = vrot.slane %v7289, 2
        %v7291 = vrot.slane %v6744, 7
        %v7292 = vrot.slane %v7291, 2
        %v7293 = vrot.slane %v6745, 7
        %v7294 = vrot.slane %v7293, 2
        %v7295 = vrot.slane %v6552, 7
        %v7296 = vrot.slane %v7295, 2
        %v7297 = vrot.slane %v6746, 7
        %v7298 = vrot.slane %v7297, 2
        %v7299 = vrot.slane %v6747, 7
        %v7300 = vrot.slane %v7299, 2
        %v7301 = vrot.slane %v6748, 7
        %v7302 = vrot.slane %v7301, 2
        %v7303 = vrot.slane %v6553, 7
        %v7304 = vrot.slane %v7303, 2
        %v7305 = vrot.slane %v6749, 7
        %v7306 = vrot.slane %v7305, 2
        %v7307 = vrot.slane %v6750, 7
        %v7308 = vrot.slane %v7307, 2
        %v7309 = vrot.slane %v6751, 7
        %v7310 = vrot.slane %v7309, 2
        %v7311 = vrot.slane %v6554, 7
        %v7312 = vrot.slane %v7311, 2
        %v7313 = vrot.slane %v6752, 7
        %v7314 = vrot.slane %v7313, 2
        %v7315 = vrot.slane %v6753, 7
        %v7316 = vrot.slane %v7315, 2
        %v7317 = vrot.slane %v6754, 7
        %v7318 = vrot.slane %v7317, 2
        %v7319 = vrot.slane %v6555, 7
        %v7320 = vrot.slane %v7319, 2
        %v7321 = vrot.slane %v6755, 7
        %v7322 = vrot.slane %v7321, 2
        %v7323 = vrot.slane %v6756, 7
        %v7324 = vrot.slane %v7323, 2
        %v7325 = vrot.slane %v6757, 7
        %v7326 = vrot.slane %v7325, 2
        %v7327 = vrot.slane %v6556, 7
        %v7328 = vrot.slane %v7327, 2
        %v7329 = vrot.slane %v6758, 7
        %v7330 = vrot.slane %v7329, 2
        %v7331 = vrot.slane %v6759, 7
        %v7332 = vrot.slane %v7331, 2
        %v7333 = vrot.slane %v6760, 7
        %v7334 = vrot.slane %v7333, 2
        %v7335 = vrot.slane %v6557, 7
        %v7336 = vrot.slane %v7335, 2
        %v7337 = vrot.slane %v6761, 7
        %v7338 = vrot.slane %v7337, 2
        %v7339 = vrot.slane %v6762, 7
        %v7340 = vrot.slane %v7339, 2
        %v7341 = vrot.slane %v6763, 7
        %v7342 = vrot.slane %v7341, 2
        %v7343 = vrot.slane %v6558, 7
        %v7344 = vrot.slane %v7343, 2
        %v7345 = vrot.slane %v6764, 7
        %v7346 = vrot.slane %v7345, 2
        %v7347 = vrot.slane %v6765, 7
        %v7348 = vrot.slane %v7347, 2
        %v7349 = vrot.slane %v6766, 7
        %v7350 = vrot.slane %v7349, 2
        %v7351 = vrot.slane %v6559, 7
        %v7352 = vrot.slane %v7351, 2
        %v7353 = vrot.slane %v6767, 7
        %v7354 = vrot.slane %v7353, 2
        %v7355 = vrot.slane %v6768, 7
        %v7356 = vrot.slane %v7355, 2
        %v7357 = vrot.slane %v6769, 7
        %v7358 = vrot.slane %v7357, 2
        %v7359 = vrot.slane %v6560, 7
        %v7360 = vrot.slane %v7359, 2
        %v7361 = vrot.slane %v6770, 7
        %v7362 = vrot.slane %v7361, 2
        %v7363 = vrot.slane %v6771, 7
        %v7364 = vrot.slane %v7363, 2
        %v7365 = vrot.slane %v6772, 7
        %v7366 = vrot.slane %v7365, 2
        %v7367 = vrot.slane %v6561, 7
        %v7368 = vrot.slane %v7367, 2
        %v7369 = vrot.slane %v6773, 7
        %v7370 = vrot.slane %v7369, 2
        %v7371 = vrot.slane %v6774, 7
        %v7372 = vrot.slane %v7371, 2
        %v7373 = vrot.slane %v6775, 7
        %v7374 = vrot.slane %v7373, 2
        %v7375 = vrot.slane %v6562, 7
        %v7376 = vrot.slane %v7375, 2
        %v7377 = vrot.slane %v6776, 7
        %v7378 = vrot.slane %v7377, 2
        %v7379 = vrot.slane %v6777, 7
        %v7380 = vrot.slane %v7379, 2
        %v7381 = vrot.slane %v6778, 7
        %v7382 = vrot.slane %v7381, 2
        %v7383 = vrot.slane %v6563, 7
        %v7384 = vrot.slane %v7383, 2
        %v7385 = vrot.slane %v6779, 7
        %v7386 = vrot.slane %v7385, 2
        %v7387 = vrot.slane %v6780, 7
        %v7388 = vrot.slane %v7387, 2
        %v7389 = vrot.slane %v6781, 7
        %v7390 = vrot.slane %v7389, 2
        %v7391 = vrot.slane %v6564, 7
        %v7392 = vrot.slane %v7391, 2
        %v7393 = vrot.slane %v6782, 7
        %v7394 = vrot.slane %v7393, 2
        %v7395 = vrot.slane %v6783, 7
        %v7396 = vrot.slane %v7395, 2
        %v7397 = vrot.slane %v6784, 7
        %v7398 = vrot.slane %v7397, 2
        %v7399 = vrot.slane %v6565, 7
        %v7400 = vrot.slane %v7399, 2
        %v7401 = vrot.slane %v6785, 7
        %v7402 = vrot.slane %v7401, 2
        %v7403 = vrot.slane %v6786, 7
        %v7404 = vrot.slane %v7403, 2
        %v7405 = vrot.slane %v6787, 7
        %v7406 = vrot.slane %v7405, 2
        %v7407 = vrot.slane %v6566, 7
        %v7408 = vrot.slane %v7407, 2
        %v7409 = vrot.slane %v6788, 7
        %v7410 = vrot.slane %v7409, 2
        %v7411 = vrot.slane %v6789, 7
        %v7412 = vrot.slane %v7411, 2
        %v7413 = vrot.slane %v6790, 7
        %v7414 = vrot.slane %v7413, 2
        %v7415 = vrot.slane %v6567, 7
        %v7416 = vrot.slane %v7415, 2
        %v7417 = vrot.slane %v6791, 7
        %v7418 = vrot.slane %v7417, 2
        %v7419 = vrot.slane %v6792, 7
        %v7420 = vrot.slane %v7419, 2
        %v7421 = vrot.slane %v6793, 7
        %v7422 = vrot.slane %v7421, 2
        %v7423 = vrot.slane %v6568, 7
        %v7424 = vrot.slane %v7423, 2
        %v7425 = vrot.slane %v6794, 7
        %v7426 = vrot.slane %v7425, 2
        %v7427 = vrot.slane %v6795, 7
        %v7428 = vrot.slane %v7427, 2
        %v7429 = vrot.slane %v6796, 7
        %v7430 = vrot.slane %v7429, 2
        %v7431 = vrot.slane %v6569, 7
        %v7432 = vrot.slane %v7431, 2
        %v7433 = vrot.slane %v6797, 7
        %v7434 = vrot.slane %v7433, 2
        %v7435 = vrot.slane %v6798, 7
        %v7436 = vrot.slane %v7435, 2
        %v7437 = vrot.slane %v6799, 7
        %v7438 = vrot.slane %v7437, 2
        %v7439 = vrot.slane %v6570, 7
        %v7440 = vrot.slane %v7439, 2
        %v7441 = vrot.slane %v6800, 7
        %v7442 = vrot.slane %v7441, 2
        %v7443 = vrot.slane %v6801, 7
        %v7444 = vrot.slane %v7443, 2
        %v7445 = vrot.slane %v6802, 7
        %v7446 = vrot.slane %v7445, 2
        %v7447 = vrot.slane %v6571, 7
        %v7448 = vrot.slane %v7447, 2
        %v7449 = vrot.slane %v6803, 7
        %v7450 = vrot.slane %v7449, 2
        %v7451 = vrot.slane %v6804, 7
        %v7452 = vrot.slane %v7451, 2
        %v7453 = vrot.slane %v6805, 7
        %v7454 = vrot.slane %v7453, 2
        %v7455 = vrot.slane %v6572, 7
        %v7456 = vrot.slane %v7455, 2
        %v7457 = vrot.slane %v6806, 7
        %v7458 = vrot.slane %v7457, 2
        %v7459 = vrot.slane %v6807, 7
        %v7460 = vrot.slane %v7459, 2
        %v7461 = vrot.slane %v6808, 7
        %v7462 = vrot.slane %v7461, 2
        %v7463 = vrot.slane %v6573, 7
        %v7464 = vrot.slane %v7463, 2
        %v7465 = vrot.slane %v6809, 7
        %v7466 = vrot.slane %v7465, 2
        %v7467 = vrot.slane %v6810, 7
        %v7468 = vrot.slane %v7467, 2
        %v7469 = vrot.slane %v6811, 7
        %v7470 = vrot.slane %v7469, 2
        %v7471 = vrot.slane %v6574, 7
        %v7472 = vrot.slane %v7471, 2
        %v7473 = vrot.slane %v6812, 7
        %v7474 = vrot.slane %v7473, 2
        %v7475 = vrot.slane %v6813, 7
        %v7476 = vrot.slane %v7475, 2
        %v7477 = vrot.slane %v6814, 7
        %v7478 = vrot.slane %v7477, 2
        %v7479 = vrot.slane %v6575, 7
        %v7480 = vrot.slane %v7479, 2
        %v7481 = vrot.slane %v6815, 7
        %v7482 = vrot.slane %v7481, 2
        %v7483 = vrot.slane %v6816, 7
        %v7484 = vrot.slane %v7483, 2
        %v7485 = vrot.slane %v6817, 7
        %v7486 = vrot.slane %v7485, 2
        %v7487 = vrot.slane %v6576, 7
        %v7488 = vrot.slane %v7487, 2
        %v7489 = vrot.slane %v6818, 7
        %v7490 = vrot.slane %v7489, 2
        %v7491 = vrot.slane %v6819, 7
        %v7492 = vrot.slane %v7491, 2
        %v7493 = vrot.slane %v6820, 7
        %v7494 = vrot.slane %v7493, 2
        %v7495 = vrot.slane %v6577, 7
        %v7496 = vrot.slane %v7495, 2
        %v7497 = vrot.slane %v6821, 7
        %v7498 = vrot.slane %v7497, 2
        %v7499 = vrot.slane %v6822, 7
        %v7500 = vrot.slane %v7499, 2
        %v7501 = vrot.slane %v6823, 7
        %v7502 = vrot.slane %v7501, 2
        %v7503 = vrot.slane %v6578, 7
        %v7504 = vrot.slane %v7503, 2
        %v7505 = vrot.slane %v6824, 7
        %v7506 = vrot.slane %v7505, 2
        %v7507 = vrot.slane %v6825, 7
        %v7508 = vrot.slane %v7507, 2
        %v7509 = vrot.slane %v6826, 7
        %v7510 = vrot.slane %v7509, 2
        %v7511 = vrot.slane %v6579, 7
        %v7512 = vrot.slane %v7511, 2
        %v7513 = vrot.slane %v6827, 7
        %v7514 = vrot.slane %v7513, 2
        %v7515 = vrot.slane %v6828, 7
        %v7516 = vrot.slane %v7515, 2
        %v7517 = vrot.slane %v6829, 7
        %v7518 = vrot.slane %v7517, 2
        %v7519 = vrot.slane %v6580, 7
        %v7520 = vrot.slane %v7519, 2
        %v7521 = vrot.slane %v6830, 7
        %v7522 = vrot.slane %v7521, 2
        %v7523 = vrot.slane %v6831, 7
        %v7524 = vrot.slane %v7523, 2
        %v7525 = vrot.slane %v6832, 7
        %v7526 = vrot.slane %v7525, 2
        %v7527 = vrot.slane %v6581, 7
        %v7528 = vrot.slane %v7527, 2
        %v7529 = vrot.slane %v6833, 7
        %v7530 = vrot.slane %v7529, 2
        %v7531 = vrot.slane %v6834, 7
        %v7532 = vrot.slane %v7531, 2
        %v7533 = vrot.slane %v6835, 7
        %v7534 = vrot.slane %v7533, 2
        %v7535 = vrot.slane %v6582, 7
        %v7536 = vrot.slane %v7535, 2
        %v7537 = vrot.slane %v6836, 7
        %v7538 = vrot.slane %v7537, 2
        %v7539 = vrot.slane %v6837, 7
        %v7540 = vrot.slane %v7539, 2
        %v7541 = vrot.slane %v6838, 7
        %v7542 = vrot.slane %v7541, 2
        %v7799 = vmax.f32 %v6519, %v7032
        %v7800 = vmax.f32 %v6647, %v7034
        %v7801 = vmax.f32 %v6648, %v7036
        %v7802 = vmax.f32 %v6649, %v7038
        %v7803 = vmax.f32 %v6520, %v7040
        %v7804 = vmax.f32 %v6650, %v7042
        %v7805 = vmax.f32 %v6651, %v7044
        %v7806 = vmax.f32 %v6652, %v7046
        %v7807 = vmax.f32 %v6521, %v7048
        %v7808 = vmax.f32 %v6653, %v7050
        %v7809 = vmax.f32 %v6654, %v7052
        %v7810 = vmax.f32 %v6655, %v7054
        %v7811 = vmax.f32 %v6522, %v7056
        %v7812 = vmax.f32 %v6656, %v7058
        %v7813 = vmax.f32 %v6657, %v7060
        %v7814 = vmax.f32 %v6658, %v7062
        %v7815 = vmax.f32 %v6523, %v7064
        %v7816 = vmax.f32 %v6659, %v7066
        %v7817 = vmax.f32 %v6660, %v7068
        %v7818 = vmax.f32 %v6661, %v7070
        %v7819 = vmax.f32 %v6524, %v7072
        %v7820 = vmax.f32 %v6662, %v7074
        %v7821 = vmax.f32 %v6663, %v7076
        %v7822 = vmax.f32 %v6664, %v7078
        %v7823 = vmax.f32 %v6525, %v7080
        %v7824 = vmax.f32 %v6665, %v7082
        %v7825 = vmax.f32 %v6666, %v7084
        %v7826 = vmax.f32 %v6667, %v7086
        %v7827 = vmax.f32 %v6526, %v7088
        %v7828 = vmax.f32 %v6668, %v7090
        %v7829 = vmax.f32 %v6669, %v7092
        %v7830 = vmax.f32 %v6670, %v7094
        %v7831 = vmax.f32 %v6527, %v7096
        %v7832 = vmax.f32 %v6671, %v7098
        %v7833 = vmax.f32 %v6672, %v7100
        %v7834 = vmax.f32 %v6673, %v7102
        %v7835 = vmax.f32 %v6528, %v7104
        %v7836 = vmax.f32 %v6674, %v7106
        %v7837 = vmax.f32 %v6675, %v7108
        %v7838 = vmax.f32 %v6676, %v7110
        %v7839 = vmax.f32 %v6529, %v7112
        %v7840 = vmax.f32 %v6677, %v7114
        %v7841 = vmax.f32 %v6678, %v7116
        %v7842 = vmax.f32 %v6679, %v7118
        %v7843 = vmax.f32 %v6530, %v7120
        %v7844 = vmax.f32 %v6680, %v7122
        %v7845 = vmax.f32 %v6681, %v7124
        %v7846 = vmax.f32 %v6682, %v7126
        %v7847 = vmax.f32 %v6531, %v7128
        %v7848 = vmax.f32 %v6683, %v7130
        %v7849 = vmax.f32 %v6684, %v7132
        %v7850 = vmax.f32 %v6685, %v7134
        %v7851 = vmax.f32 %v6532, %v7136
        %v7852 = vmax.f32 %v6686, %v7138
        %v7853 = vmax.f32 %v6687, %v7140
        %v7854 = vmax.f32 %v6688, %v7142
        %v7855 = vmax.f32 %v6533, %v7144
        %v7856 = vmax.f32 %v6689, %v7146
        %v7857 = vmax.f32 %v6690, %v7148
        %v7858 = vmax.f32 %v6691, %v7150
        %v7859 = vmax.f32 %v6534, %v7152
        %v7860 = vmax.f32 %v6692, %v7154
        %v7861 = vmax.f32 %v6693, %v7156
        %v7862 = vmax.f32 %v6694, %v7158
        %v7863 = vmax.f32 %v6535, %v7160
        %v7864 = vmax.f32 %v6695, %v7162
        %v7865 = vmax.f32 %v6696, %v7164
        %v7866 = vmax.f32 %v6697, %v7166
        %v7867 = vmax.f32 %v6536, %v7168
        %v7868 = vmax.f32 %v6698, %v7170
        %v7869 = vmax.f32 %v6699, %v7172
        %v7870 = vmax.f32 %v6700, %v7174
        %v7871 = vmax.f32 %v6537, %v7176
        %v7872 = vmax.f32 %v6701, %v7178
        %v7873 = vmax.f32 %v6702, %v7180
        %v7874 = vmax.f32 %v6703, %v7182
        %v7875 = vmax.f32 %v6538, %v7184
        %v7876 = vmax.f32 %v6704, %v7186
        %v7877 = vmax.f32 %v6705, %v7188
        %v7878 = vmax.f32 %v6706, %v7190
        %v7879 = vmax.f32 %v6539, %v7192
        %v7880 = vmax.f32 %v6707, %v7194
        %v7881 = vmax.f32 %v6708, %v7196
        %v7882 = vmax.f32 %v6709, %v7198
        %v7883 = vmax.f32 %v6540, %v7200
        %v7884 = vmax.f32 %v6710, %v7202
        %v7885 = vmax.f32 %v6711, %v7204
        %v7886 = vmax.f32 %v6712, %v7206
        %v7887 = vmax.f32 %v6541, %v7208
        %v7888 = vmax.f32 %v6713, %v7210
        %v7889 = vmax.f32 %v6714, %v7212
        %v7890 = vmax.f32 %v6715, %v7214
        %v7891 = vmax.f32 %v6542, %v7216
        %v7892 = vmax.f32 %v6716, %v7218
        %v7893 = vmax.f32 %v6717, %v7220
        %v7894 = vmax.f32 %v6718, %v7222
        %v7895 = vmax.f32 %v6543, %v7224
        %v7896 = vmax.f32 %v6719, %v7226
        %v7897 = vmax.f32 %v6720, %v7228
        %v7898 = vmax.f32 %v6721, %v7230
        %v7899 = vmax.f32 %v6544, %v7232
        %v7900 = vmax.f32 %v6722, %v7234
        %v7901 = vmax.f32 %v6723, %v7236
        %v7902 = vmax.f32 %v6724, %v7238
        %v7903 = vmax.f32 %v6545, %v7240
        %v7904 = vmax.f32 %v6725, %v7242
        %v7905 = vmax.f32 %v6726, %v7244
        %v7906 = vmax.f32 %v6727, %v7246
        %v7907 = vmax.f32 %v6546, %v7248
        %v7908 = vmax.f32 %v6728, %v7250
        %v7909 = vmax.f32 %v6729, %v7252
        %v7910 = vmax.f32 %v6730, %v7254
        %v7911 = vmax.f32 %v6547, %v7256
        %v7912 = vmax.f32 %v6731, %v7258
        %v7913 = vmax.f32 %v6732, %v7260
        %v7914 = vmax.f32 %v6733, %v7262
        %v7915 = vmax.f32 %v6548, %v7264
        %v7916 = vmax.f32 %v6734, %v7266
        %v7917 = vmax.f32 %v6735, %v7268
        %v7918 = vmax.f32 %v6736, %v7270
        %v7919 = vmax.f32 %v6549, %v7272
        %v7920 = vmax.f32 %v6737, %v7274
        %v7921 = vmax.f32 %v6738, %v7276
        %v7922 = vmax.f32 %v6739, %v7278
        %v7923 = vmax.f32 %v6550, %v7280
        %v7924 = vmax.f32 %v6740, %v7282
        %v7925 = vmax.f32 %v6741, %v7284
        %v7926 = vmax.f32 %v6742, %v7286
        %v7927 = vmax.f32 %v6551, %v7288
        %v7928 = vmax.f32 %v6743, %v7290
        %v7929 = vmax.f32 %v6744, %v7292
        %v7930 = vmax.f32 %v6745, %v7294
        %v7931 = vmax.f32 %v6552, %v7296
        %v7932 = vmax.f32 %v6746, %v7298
        %v7933 = vmax.f32 %v6747, %v7300
        %v7934 = vmax.f32 %v6748, %v7302
        %v7935 = vmax.f32 %v6553, %v7304
        %v7936 = vmax.f32 %v6749, %v7306
        %v7937 = vmax.f32 %v6750, %v7308
        %v7938 = vmax.f32 %v6751, %v7310
        %v7939 = vmax.f32 %v6554, %v7312
        %v7940 = vmax.f32 %v6752, %v7314
        %v7941 = vmax.f32 %v6753, %v7316
        %v7942 = vmax.f32 %v6754, %v7318
        %v7943 = vmax.f32 %v6555, %v7320
        %v7944 = vmax.f32 %v6755, %v7322
        %v7945 = vmax.f32 %v6756, %v7324
        %v7946 = vmax.f32 %v6757, %v7326
        %v7947 = vmax.f32 %v6556, %v7328
        %v7948 = vmax.f32 %v6758, %v7330
        %v7949 = vmax.f32 %v6759, %v7332
        %v7950 = vmax.f32 %v6760, %v7334
        %v7951 = vmax.f32 %v6557, %v7336
        %v7952 = vmax.f32 %v6761, %v7338
        %v7953 = vmax.f32 %v6762, %v7340
        %v7954 = vmax.f32 %v6763, %v7342
        %v7955 = vmax.f32 %v6558, %v7344
        %v7956 = vmax.f32 %v6764, %v7346
        %v7957 = vmax.f32 %v6765, %v7348
        %v7958 = vmax.f32 %v6766, %v7350
        %v7959 = vmax.f32 %v6559, %v7352
        %v7960 = vmax.f32 %v6767, %v7354
        %v7961 = vmax.f32 %v6768, %v7356
        %v7962 = vmax.f32 %v6769, %v7358
        %v7963 = vmax.f32 %v6560, %v7360
        %v7964 = vmax.f32 %v6770, %v7362
        %v7965 = vmax.f32 %v6771, %v7364
        %v7966 = vmax.f32 %v6772, %v7366
        %v7967 = vmax.f32 %v6561, %v7368
        %v7968 = vmax.f32 %v6773, %v7370
        %v7969 = vmax.f32 %v6774, %v7372
        %v7970 = vmax.f32 %v6775, %v7374
        %v7971 = vmax.f32 %v6562, %v7376
        %v7972 = vmax.f32 %v6776, %v7378
        %v7973 = vmax.f32 %v6777, %v7380
        %v7974 = vmax.f32 %v6778, %v7382
        %v7975 = vmax.f32 %v6563, %v7384
        %v7976 = vmax.f32 %v6779, %v7386
        %v7977 = vmax.f32 %v6780, %v7388
        %v7978 = vmax.f32 %v6781, %v7390
        %v7979 = vmax.f32 %v6564, %v7392
        %v7980 = vmax.f32 %v6782, %v7394
        %v7981 = vmax.f32 %v6783, %v7396
        %v7982 = vmax.f32 %v6784, %v7398
        %v7983 = vmax.f32 %v6565, %v7400
        %v7984 = vmax.f32 %v6785, %v7402
        %v7985 = vmax.f32 %v6786, %v7404
        %v7986 = vmax.f32 %v6787, %v7406
        %v7987 = vmax.f32 %v6566, %v7408
        %v7988 = vmax.f32 %v6788, %v7410
        %v7989 = vmax.f32 %v6789, %v7412
        %v7990 = vmax.f32 %v6790, %v7414
        %v7991 = vmax.f32 %v6567, %v7416
        %v7992 = vmax.f32 %v6791, %v7418
        %v7993 = vmax.f32 %v6792, %v7420
        %v7994 = vmax.f32 %v6793, %v7422
        %v7995 = vmax.f32 %v6568, %v7424
        %v7996 = vmax.f32 %v6794, %v7426
        %v7997 = vmax.f32 %v6795, %v7428
        %v7998 = vmax.f32 %v6796, %v7430
        %v7999 = vmax.f32 %v6569, %v7432
        %v8000 = vmax.f32 %v6797, %v7434
        %v8001 = vmax.f32 %v6798, %v7436
        %v8002 = vmax.f32 %v6799, %v7438
        %v8003 = vmax.f32 %v6570, %v7440
        %v8004 = vmax.f32 %v6800, %v7442
        %v8005 = vmax.f32 %v6801, %v7444
        %v8006 = vmax.f32 %v6802, %v7446
        %v8007 = vmax.f32 %v6571, %v7448
        %v8008 = vmax.f32 %v6803, %v7450
        %v8009 = vmax.f32 %v6804, %v7452
        %v8010 = vmax.f32 %v6805, %v7454
        %v8011 = vmax.f32 %v6572, %v7456
        %v8012 = vmax.f32 %v6806, %v7458
        %v8013 = vmax.f32 %v6807, %v7460
        %v8014 = vmax.f32 %v6808, %v7462
        %v8015 = vmax.f32 %v6573, %v7464
        %v8016 = vmax.f32 %v6809, %v7466
        %v8017 = vmax.f32 %v6810, %v7468
        %v8018 = vmax.f32 %v6811, %v7470
        %v8019 = vmax.f32 %v6574, %v7472
        %v8020 = vmax.f32 %v6812, %v7474
        %v8021 = vmax.f32 %v6813, %v7476
        %v8022 = vmax.f32 %v6814, %v7478
        %v8023 = vmax.f32 %v6575, %v7480
        %v8024 = vmax.f32 %v6815, %v7482
        %v8025 = vmax.f32 %v6816, %v7484
        %v8026 = vmax.f32 %v6817, %v7486
        %v8027 = vmax.f32 %v6576, %v7488
        %v8028 = vmax.f32 %v6818, %v7490
        %v8029 = vmax.f32 %v6819, %v7492
        %v8030 = vmax.f32 %v6820, %v7494
        %v8031 = vmax.f32 %v6577, %v7496
        %v8032 = vmax.f32 %v6821, %v7498
        %v8033 = vmax.f32 %v6822, %v7500
        %v8034 = vmax.f32 %v6823, %v7502
        %v8035 = vmax.f32 %v6578, %v7504
        %v8036 = vmax.f32 %v6824, %v7506
        %v8037 = vmax.f32 %v6825, %v7508
        %v8038 = vmax.f32 %v6826, %v7510
        %v8039 = vmax.f32 %v6579, %v7512
        %v8040 = vmax.f32 %v6827, %v7514
        %v8041 = vmax.f32 %v6828, %v7516
        %v8042 = vmax.f32 %v6829, %v7518
        %v8043 = vmax.f32 %v6580, %v7520
        %v8044 = vmax.f32 %v6830, %v7522
        %v8045 = vmax.f32 %v6831, %v7524
        %v8046 = vmax.f32 %v6832, %v7526
        %v8047 = vmax.f32 %v6581, %v7528
        %v8048 = vmax.f32 %v6833, %v7530
        %v8049 = vmax.f32 %v6834, %v7532
        %v8050 = vmax.f32 %v6835, %v7534
        %v8051 = vmax.f32 %v6582, %v7536
        %v8052 = vmax.f32 %v6836, %v7538
        %v8053 = vmax.f32 %v6837, %v7540
        %v8054 = vmax.f32 %v6838, %v7542
        %v8311 = vperm.slane %v7799, 0
        %v8312 = vperm.slane %v7800, 0
        %v8313 = vperm.slane %v7801, 0
        %v8314 = vperm.slane %v7802, 0
        %v8315 = vperm.slane %v7803, 0
        %v8316 = vperm.slane %v7804, 0
        %v8317 = vperm.slane %v7805, 0
        %v8318 = vperm.slane %v7806, 0
        %v8319 = vperm.slane %v7807, 0
        %v8320 = vperm.slane %v7808, 0
        %v8321 = vperm.slane %v7809, 0
        %v8322 = vperm.slane %v7810, 0
        %v8323 = vperm.slane %v7811, 0
        %v8324 = vperm.slane %v7812, 0
        %v8325 = vperm.slane %v7813, 0
        %v8326 = vperm.slane %v7814, 0
        %v8327 = vperm.slane %v7815, 0
        %v8328 = vperm.slane %v7816, 0
        %v8329 = vperm.slane %v7817, 0
        %v8330 = vperm.slane %v7818, 0
        %v8331 = vperm.slane %v7819, 0
        %v8332 = vperm.slane %v7820, 0
        %v8333 = vperm.slane %v7821, 0
        %v8334 = vperm.slane %v7822, 0
        %v8335 = vperm.slane %v7823, 0
        %v8336 = vperm.slane %v7824, 0
        %v8337 = vperm.slane %v7825, 0
        %v8338 = vperm.slane %v7826, 0
        %v8339 = vperm.slane %v7827, 0
        %v8340 = vperm.slane %v7828, 0
        %v8341 = vperm.slane %v7829, 0
        %v8342 = vperm.slane %v7830, 0
        %v8343 = vperm.slane %v7831, 0
        %v8344 = vperm.slane %v7832, 0
        %v8345 = vperm.slane %v7833, 0
        %v8346 = vperm.slane %v7834, 0
        %v8347 = vperm.slane %v7835, 0
        %v8348 = vperm.slane %v7836, 0
        %v8349 = vperm.slane %v7837, 0
        %v8350 = vperm.slane %v7838, 0
        %v8351 = vperm.slane %v7839, 0
        %v8352 = vperm.slane %v7840, 0
        %v8353 = vperm.slane %v7841, 0
        %v8354 = vperm.slane %v7842, 0
        %v8355 = vperm.slane %v7843, 0
        %v8356 = vperm.slane %v7844, 0
        %v8357 = vperm.slane %v7845, 0
        %v8358 = vperm.slane %v7846, 0
        %v8359 = vperm.slane %v7847, 0
        %v8360 = vperm.slane %v7848, 0
        %v8361 = vperm.slane %v7849, 0
        %v8362 = vperm.slane %v7850, 0
        %v8363 = vperm.slane %v7851, 0
        %v8364 = vperm.slane %v7852, 0
        %v8365 = vperm.slane %v7853, 0
        %v8366 = vperm.slane %v7854, 0
        %v8367 = vperm.slane %v7855, 0
        %v8368 = vperm.slane %v7856, 0
        %v8369 = vperm.slane %v7857, 0
        %v8370 = vperm.slane %v7858, 0
        %v8371 = vperm.slane %v7859, 0
        %v8372 = vperm.slane %v7860, 0
        %v8373 = vperm.slane %v7861, 0
        %v8374 = vperm.slane %v7862, 0
        %v8375 = vperm.slane %v7863, 0
        %v8376 = vperm.slane %v7864, 0
        %v8377 = vperm.slane %v7865, 0
        %v8378 = vperm.slane %v7866, 0
        %v8379 = vperm.slane %v7867, 0
        %v8380 = vperm.slane %v7868, 0
        %v8381 = vperm.slane %v7869, 0
        %v8382 = vperm.slane %v7870, 0
        %v8383 = vperm.slane %v7871, 0
        %v8384 = vperm.slane %v7872, 0
        %v8385 = vperm.slane %v7873, 0
        %v8386 = vperm.slane %v7874, 0
        %v8387 = vperm.slane %v7875, 0
        %v8388 = vperm.slane %v7876, 0
        %v8389 = vperm.slane %v7877, 0
        %v8390 = vperm.slane %v7878, 0
        %v8391 = vperm.slane %v7879, 0
        %v8392 = vperm.slane %v7880, 0
        %v8393 = vperm.slane %v7881, 0
        %v8394 = vperm.slane %v7882, 0
        %v8395 = vperm.slane %v7883, 0
        %v8396 = vperm.slane %v7884, 0
        %v8397 = vperm.slane %v7885, 0
        %v8398 = vperm.slane %v7886, 0
        %v8399 = vperm.slane %v7887, 0
        %v8400 = vperm.slane %v7888, 0
        %v8401 = vperm.slane %v7889, 0
        %v8402 = vperm.slane %v7890, 0
        %v8403 = vperm.slane %v7891, 0
        %v8404 = vperm.slane %v7892, 0
        %v8405 = vperm.slane %v7893, 0
        %v8406 = vperm.slane %v7894, 0
        %v8407 = vperm.slane %v7895, 0
        %v8408 = vperm.slane %v7896, 0
        %v8409 = vperm.slane %v7897, 0
        %v8410 = vperm.slane %v7898, 0
        %v8411 = vperm.slane %v7899, 0
        %v8412 = vperm.slane %v7900, 0
        %v8413 = vperm.slane %v7901, 0
        %v8414 = vperm.slane %v7902, 0
        %v8415 = vperm.slane %v7903, 0
        %v8416 = vperm.slane %v7904, 0
        %v8417 = vperm.slane %v7905, 0
        %v8418 = vperm.slane %v7906, 0
        %v8419 = vperm.slane %v7907, 0
        %v8420 = vperm.slane %v7908, 0
        %v8421 = vperm.slane %v7909, 0
        %v8422 = vperm.slane %v7910, 0
        %v8423 = vperm.slane %v7911, 0
        %v8424 = vperm.slane %v7912, 0
        %v8425 = vperm.slane %v7913, 0
        %v8426 = vperm.slane %v7914, 0
        %v8427 = vperm.slane %v7915, 0
        %v8428 = vperm.slane %v7916, 0
        %v8429 = vperm.slane %v7917, 0
        %v8430 = vperm.slane %v7918, 0
        %v8431 = vperm.slane %v7919, 0
        %v8432 = vperm.slane %v7920, 0
        %v8433 = vperm.slane %v7921, 0
        %v8434 = vperm.slane %v7922, 0
        %v8435 = vperm.slane %v7923, 0
        %v8436 = vperm.slane %v7924, 0
        %v8437 = vperm.slane %v7925, 0
        %v8438 = vperm.slane %v7926, 0
        %v8439 = vperm.slane %v7927, 0
        %v8440 = vperm.slane %v7928, 0
        %v8441 = vperm.slane %v7929, 0
        %v8442 = vperm.slane %v7930, 0
        %v8443 = vperm.slane %v7931, 0
        %v8444 = vperm.slane %v7932, 0
        %v8445 = vperm.slane %v7933, 0
        %v8446 = vperm.slane %v7934, 0
        %v8447 = vperm.slane %v7935, 0
        %v8448 = vperm.slane %v7936, 0
        %v8449 = vperm.slane %v7937, 0
        %v8450 = vperm.slane %v7938, 0
        %v8451 = vperm.slane %v7939, 0
        %v8452 = vperm.slane %v7940, 0
        %v8453 = vperm.slane %v7941, 0
        %v8454 = vperm.slane %v7942, 0
        %v8455 = vperm.slane %v7943, 0
        %v8456 = vperm.slane %v7944, 0
        %v8457 = vperm.slane %v7945, 0
        %v8458 = vperm.slane %v7946, 0
        %v8459 = vperm.slane %v7947, 0
        %v8460 = vperm.slane %v7948, 0
        %v8461 = vperm.slane %v7949, 0
        %v8462 = vperm.slane %v7950, 0
        %v8463 = vperm.slane %v7951, 0
        %v8464 = vperm.slane %v7952, 0
        %v8465 = vperm.slane %v7953, 0
        %v8466 = vperm.slane %v7954, 0
        %v8467 = vperm.slane %v7955, 0
        %v8468 = vperm.slane %v7956, 0
        %v8469 = vperm.slane %v7957, 0
        %v8470 = vperm.slane %v7958, 0
        %v8471 = vperm.slane %v7959, 0
        %v8472 = vperm.slane %v7960, 0
        %v8473 = vperm.slane %v7961, 0
        %v8474 = vperm.slane %v7962, 0
        %v8475 = vperm.slane %v7963, 0
        %v8476 = vperm.slane %v7964, 0
        %v8477 = vperm.slane %v7965, 0
        %v8478 = vperm.slane %v7966, 0
        %v8479 = vperm.slane %v7967, 0
        %v8480 = vperm.slane %v7968, 0
        %v8481 = vperm.slane %v7969, 0
        %v8482 = vperm.slane %v7970, 0
        %v8483 = vperm.slane %v7971, 0
        %v8484 = vperm.slane %v7972, 0
        %v8485 = vperm.slane %v7973, 0
        %v8486 = vperm.slane %v7974, 0
        %v8487 = vperm.slane %v7975, 0
        %v8488 = vperm.slane %v7976, 0
        %v8489 = vperm.slane %v7977, 0
        %v8490 = vperm.slane %v7978, 0
        %v8491 = vperm.slane %v7979, 0
        %v8492 = vperm.slane %v7980, 0
        %v8493 = vperm.slane %v7981, 0
        %v8494 = vperm.slane %v7982, 0
        %v8495 = vperm.slane %v7983, 0
        %v8496 = vperm.slane %v7984, 0
        %v8497 = vperm.slane %v7985, 0
        %v8498 = vperm.slane %v7986, 0
        %v8499 = vperm.slane %v7987, 0
        %v8500 = vperm.slane %v7988, 0
        %v8501 = vperm.slane %v7989, 0
        %v8502 = vperm.slane %v7990, 0
        %v8503 = vperm.slane %v7991, 0
        %v8504 = vperm.slane %v7992, 0
        %v8505 = vperm.slane %v7993, 0
        %v8506 = vperm.slane %v7994, 0
        %v8507 = vperm.slane %v7995, 0
        %v8508 = vperm.slane %v7996, 0
        %v8509 = vperm.slane %v7997, 0
        %v8510 = vperm.slane %v7998, 0
        %v8511 = vperm.slane %v7999, 0
        %v8512 = vperm.slane %v8000, 0
        %v8513 = vperm.slane %v8001, 0
        %v8514 = vperm.slane %v8002, 0
        %v8515 = vperm.slane %v8003, 0
        %v8516 = vperm.slane %v8004, 0
        %v8517 = vperm.slane %v8005, 0
        %v8518 = vperm.slane %v8006, 0
        %v8519 = vperm.slane %v8007, 0
        %v8520 = vperm.slane %v8008, 0
        %v8521 = vperm.slane %v8009, 0
        %v8522 = vperm.slane %v8010, 0
        %v8523 = vperm.slane %v8011, 0
        %v8524 = vperm.slane %v8012, 0
        %v8525 = vperm.slane %v8013, 0
        %v8526 = vperm.slane %v8014, 0
        %v8527 = vperm.slane %v8015, 0
        %v8528 = vperm.slane %v8016, 0
        %v8529 = vperm.slane %v8017, 0
        %v8530 = vperm.slane %v8018, 0
        %v8531 = vperm.slane %v8019, 0
        %v8532 = vperm.slane %v8020, 0
        %v8533 = vperm.slane %v8021, 0
        %v8534 = vperm.slane %v8022, 0
        %v8535 = vperm.slane %v8023, 0
        %v8536 = vperm.slane %v8024, 0
        %v8537 = vperm.slane %v8025, 0
        %v8538 = vperm.slane %v8026, 0
        %v8539 = vperm.slane %v8027, 0
        %v8540 = vperm.slane %v8028, 0
        %v8541 = vperm.slane %v8029, 0
        %v8542 = vperm.slane %v8030, 0
        %v8543 = vperm.slane %v8031, 0
        %v8544 = vperm.slane %v8032, 0
        %v8545 = vperm.slane %v8033, 0
        %v8546 = vperm.slane %v8034, 0
        %v8547 = vperm.slane %v8035, 0
        %v8548 = vperm.slane %v8036, 0
        %v8549 = vperm.slane %v8037, 0
        %v8550 = vperm.slane %v8038, 0
        %v8551 = vperm.slane %v8039, 0
        %v8552 = vperm.slane %v8040, 0
        %v8553 = vperm.slane %v8041, 0
        %v8554 = vperm.slane %v8042, 0
        %v8555 = vperm.slane %v8043, 0
        %v8556 = vperm.slane %v8044, 0
        %v8557 = vperm.slane %v8045, 0
        %v8558 = vperm.slane %v8046, 0
        %v8559 = vperm.slane %v8047, 0
        %v8560 = vperm.slane %v8048, 0
        %v8561 = vperm.slane %v8049, 0
        %v8562 = vperm.slane %v8050, 0
        %v8563 = vperm.slane %v8051, 0
        %v8564 = vperm.slane %v8052, 0
        %v8565 = vperm.slane %v8053, 0
        %v8566 = vperm.slane %v8054, 0
        %vm8567 = vcmask 1042434
        %v8568 = vsel %vm8567, %v8312, %v8311
        %vm8569 = vcmask 1043459
        %v8570 = vsel %vm8569, %v8313, %v8568
        %vm8571 = vcmask 1044484
        %v8572 = vsel %vm8571, %v8314, %v8570
        %vm8573 = vcmask 1045509
        %v8574 = vsel %vm8573, %v8315, %v8572
        %vm8575 = vcmask 1046534
        %v8576 = vsel %vm8575, %v8316, %v8574
        %vm8577 = vcmask 1047559
        %v8578 = vsel %vm8577, %v8317, %v8576
        %vm8579 = vcmask 1041409
        %v8580 = vsel %vm8579, %v8319, %v8318
        %v8581 = vsel %vm8567, %v8320, %v8580
        %v8582 = vsel %vm8569, %v8321, %v8581
        %v8583 = vsel %vm8571, %v8322, %v8582
        %v8584 = vsel %vm8573, %v8323, %v8583
        %v8585 = vsel %vm8575, %v8324, %v8584
        %v8586 = vsel %vm8577, %v8325, %v8585
        %v8587 = vsel %vm8567, %v8328, %v8327
        %v8588 = vsel %vm8569, %v8329, %v8587
        %v8589 = vsel %vm8571, %v8330, %v8588
        %v8590 = vsel %vm8573, %v8331, %v8589
        %v8591 = vsel %vm8575, %v8332, %v8590
        %v8592 = vsel %vm8577, %v8333, %v8591
        %v8593 = vsel %vm8579, %v8335, %v8334
        %v8594 = vsel %vm8567, %v8336, %v8593
        %v8595 = vsel %vm8569, %v8337, %v8594
        %v8596 = vsel %vm8571, %v8338, %v8595
        %v8597 = vsel %vm8573, %v8339, %v8596
        %v8598 = vsel %vm8575, %v8340, %v8597
        %v8599 = vsel %vm8577, %v8341, %v8598
        %v8600 = vsel %vm8567, %v8344, %v8343
        %v8601 = vsel %vm8569, %v8345, %v8600
        %v8602 = vsel %vm8571, %v8346, %v8601
        %v8603 = vsel %vm8573, %v8347, %v8602
        %v8604 = vsel %vm8575, %v8348, %v8603
        %v8605 = vsel %vm8577, %v8349, %v8604
        %v8606 = vsel %vm8579, %v8351, %v8350
        %v8607 = vsel %vm8567, %v8352, %v8606
        %v8608 = vsel %vm8569, %v8353, %v8607
        %v8609 = vsel %vm8571, %v8354, %v8608
        %v8610 = vsel %vm8573, %v8355, %v8609
        %v8611 = vsel %vm8575, %v8356, %v8610
        %v8612 = vsel %vm8577, %v8357, %v8611
        %v8613 = vsel %vm8567, %v8360, %v8359
        %v8614 = vsel %vm8569, %v8361, %v8613
        %v8615 = vsel %vm8571, %v8362, %v8614
        %v8616 = vsel %vm8573, %v8363, %v8615
        %v8617 = vsel %vm8575, %v8364, %v8616
        %v8618 = vsel %vm8577, %v8365, %v8617
        %v8619 = vsel %vm8579, %v8367, %v8366
        %v8620 = vsel %vm8567, %v8368, %v8619
        %v8621 = vsel %vm8569, %v8369, %v8620
        %v8622 = vsel %vm8571, %v8370, %v8621
        %v8623 = vsel %vm8573, %v8371, %v8622
        %v8624 = vsel %vm8575, %v8372, %v8623
        %v8625 = vsel %vm8577, %v8373, %v8624
        %v8626 = vsel %vm8567, %v8376, %v8375
        %v8627 = vsel %vm8569, %v8377, %v8626
        %v8628 = vsel %vm8571, %v8378, %v8627
        %v8629 = vsel %vm8573, %v8379, %v8628
        %v8630 = vsel %vm8575, %v8380, %v8629
        %v8631 = vsel %vm8577, %v8381, %v8630
        %v8632 = vsel %vm8579, %v8383, %v8382
        %v8633 = vsel %vm8567, %v8384, %v8632
        %v8634 = vsel %vm8569, %v8385, %v8633
        %v8635 = vsel %vm8571, %v8386, %v8634
        %v8636 = vsel %vm8573, %v8387, %v8635
        %v8637 = vsel %vm8575, %v8388, %v8636
        %v8638 = vsel %vm8577, %v8389, %v8637
        %v8639 = vsel %vm8567, %v8392, %v8391
        %v8640 = vsel %vm8569, %v8393, %v8639
        %v8641 = vsel %vm8571, %v8394, %v8640
        %v8642 = vsel %vm8573, %v8395, %v8641
        %v8643 = vsel %vm8575, %v8396, %v8642
        %v8644 = vsel %vm8577, %v8397, %v8643
        %v8645 = vsel %vm8579, %v8399, %v8398
        %v8646 = vsel %vm8567, %v8400, %v8645
        %v8647 = vsel %vm8569, %v8401, %v8646
        %v8648 = vsel %vm8571, %v8402, %v8647
        %v8649 = vsel %vm8573, %v8403, %v8648
        %v8650 = vsel %vm8575, %v8404, %v8649
        %v8651 = vsel %vm8577, %v8405, %v8650
        %v8652 = vsel %vm8567, %v8408, %v8407
        %v8653 = vsel %vm8569, %v8409, %v8652
        %v8654 = vsel %vm8571, %v8410, %v8653
        %v8655 = vsel %vm8573, %v8411, %v8654
        %v8656 = vsel %vm8575, %v8412, %v8655
        %v8657 = vsel %vm8577, %v8413, %v8656
        %v8658 = vsel %vm8579, %v8415, %v8414
        %v8659 = vsel %vm8567, %v8416, %v8658
        %v8660 = vsel %vm8569, %v8417, %v8659
        %v8661 = vsel %vm8571, %v8418, %v8660
        %v8662 = vsel %vm8573, %v8419, %v8661
        %v8663 = vsel %vm8575, %v8420, %v8662
        %v8664 = vsel %vm8577, %v8421, %v8663
        %v8665 = vsel %vm8567, %v8424, %v8423
        %v8666 = vsel %vm8569, %v8425, %v8665
        %v8667 = vsel %vm8571, %v8426, %v8666
        %v8668 = vsel %vm8573, %v8427, %v8667
        %v8669 = vsel %vm8575, %v8428, %v8668
        %v8670 = vsel %vm8577, %v8429, %v8669
        %v8671 = vsel %vm8579, %v8431, %v8430
        %v8672 = vsel %vm8567, %v8432, %v8671
        %v8673 = vsel %vm8569, %v8433, %v8672
        %v8674 = vsel %vm8571, %v8434, %v8673
        %v8675 = vsel %vm8573, %v8435, %v8674
        %v8676 = vsel %vm8575, %v8436, %v8675
        %v8677 = vsel %vm8577, %v8437, %v8676
        %v8678 = vsel %vm8567, %v8440, %v8439
        %v8679 = vsel %vm8569, %v8441, %v8678
        %v8680 = vsel %vm8571, %v8442, %v8679
        %v8681 = vsel %vm8573, %v8443, %v8680
        %v8682 = vsel %vm8575, %v8444, %v8681
        %v8683 = vsel %vm8577, %v8445, %v8682
        %v8684 = vsel %vm8579, %v8447, %v8446
        %v8685 = vsel %vm8567, %v8448, %v8684
        %v8686 = vsel %vm8569, %v8449, %v8685
        %v8687 = vsel %vm8571, %v8450, %v8686
        %v8688 = vsel %vm8573, %v8451, %v8687
        %v8689 = vsel %vm8575, %v8452, %v8688
        %v8690 = vsel %vm8577, %v8453, %v8689
        %v8691 = vsel %vm8567, %v8456, %v8455
        %v8692 = vsel %vm8569, %v8457, %v8691
        %v8693 = vsel %vm8571, %v8458, %v8692
        %v8694 = vsel %vm8573, %v8459, %v8693
        %v8695 = vsel %vm8575, %v8460, %v8694
        %v8696 = vsel %vm8577, %v8461, %v8695
        %v8697 = vsel %vm8579, %v8463, %v8462
        %v8698 = vsel %vm8567, %v8464, %v8697
        %v8699 = vsel %vm8569, %v8465, %v8698
        %v8700 = vsel %vm8571, %v8466, %v8699
        %v8701 = vsel %vm8573, %v8467, %v8700
        %v8702 = vsel %vm8575, %v8468, %v8701
        %v8703 = vsel %vm8577, %v8469, %v8702
        %v8704 = vsel %vm8567, %v8472, %v8471
        %v8705 = vsel %vm8569, %v8473, %v8704
        %v8706 = vsel %vm8571, %v8474, %v8705
        %v8707 = vsel %vm8573, %v8475, %v8706
        %v8708 = vsel %vm8575, %v8476, %v8707
        %v8709 = vsel %vm8577, %v8477, %v8708
        %v8710 = vsel %vm8579, %v8479, %v8478
        %v8711 = vsel %vm8567, %v8480, %v8710
        %v8712 = vsel %vm8569, %v8481, %v8711
        %v8713 = vsel %vm8571, %v8482, %v8712
        %v8714 = vsel %vm8573, %v8483, %v8713
        %v8715 = vsel %vm8575, %v8484, %v8714
        %v8716 = vsel %vm8577, %v8485, %v8715
        %v8717 = vsel %vm8567, %v8488, %v8487
        %v8718 = vsel %vm8569, %v8489, %v8717
        %v8719 = vsel %vm8571, %v8490, %v8718
        %v8720 = vsel %vm8573, %v8491, %v8719
        %v8721 = vsel %vm8575, %v8492, %v8720
        %v8722 = vsel %vm8577, %v8493, %v8721
        %v8723 = vsel %vm8579, %v8495, %v8494
        %v8724 = vsel %vm8567, %v8496, %v8723
        %v8725 = vsel %vm8569, %v8497, %v8724
        %v8726 = vsel %vm8571, %v8498, %v8725
        %v8727 = vsel %vm8573, %v8499, %v8726
        %v8728 = vsel %vm8575, %v8500, %v8727
        %v8729 = vsel %vm8577, %v8501, %v8728
        %v8730 = vsel %vm8567, %v8504, %v8503
        %v8731 = vsel %vm8569, %v8505, %v8730
        %v8732 = vsel %vm8571, %v8506, %v8731
        %v8733 = vsel %vm8573, %v8507, %v8732
        %v8734 = vsel %vm8575, %v8508, %v8733
        %v8735 = vsel %vm8577, %v8509, %v8734
        %v8736 = vsel %vm8579, %v8511, %v8510
        %v8737 = vsel %vm8567, %v8512, %v8736
        %v8738 = vsel %vm8569, %v8513, %v8737
        %v8739 = vsel %vm8571, %v8514, %v8738
        %v8740 = vsel %vm8573, %v8515, %v8739
        %v8741 = vsel %vm8575, %v8516, %v8740
        %v8742 = vsel %vm8577, %v8517, %v8741
        %v8743 = vsel %vm8567, %v8520, %v8519
        %v8744 = vsel %vm8569, %v8521, %v8743
        %v8745 = vsel %vm8571, %v8522, %v8744
        %v8746 = vsel %vm8573, %v8523, %v8745
        %v8747 = vsel %vm8575, %v8524, %v8746
        %v8748 = vsel %vm8577, %v8525, %v8747
        %v8749 = vsel %vm8579, %v8527, %v8526
        %v8750 = vsel %vm8567, %v8528, %v8749
        %v8751 = vsel %vm8569, %v8529, %v8750
        %v8752 = vsel %vm8571, %v8530, %v8751
        %v8753 = vsel %vm8573, %v8531, %v8752
        %v8754 = vsel %vm8575, %v8532, %v8753
        %v8755 = vsel %vm8577, %v8533, %v8754
        %v8756 = vsel %vm8567, %v8536, %v8535
        %v8757 = vsel %vm8569, %v8537, %v8756
        %v8758 = vsel %vm8571, %v8538, %v8757
        %v8759 = vsel %vm8573, %v8539, %v8758
        %v8760 = vsel %vm8575, %v8540, %v8759
        %v8761 = vsel %vm8577, %v8541, %v8760
        %v8762 = vsel %vm8579, %v8543, %v8542
        %v8763 = vsel %vm8567, %v8544, %v8762
        %v8764 = vsel %vm8569, %v8545, %v8763
        %v8765 = vsel %vm8571, %v8546, %v8764
        %v8766 = vsel %vm8573, %v8547, %v8765
        %v8767 = vsel %vm8575, %v8548, %v8766
        %v8768 = vsel %vm8577, %v8549, %v8767
        %v8769 = vsel %vm8567, %v8552, %v8551
        %v8770 = vsel %vm8569, %v8553, %v8769
        %v8771 = vsel %vm8571, %v8554, %v8770
        %v8772 = vsel %vm8573, %v8555, %v8771
        %v8773 = vsel %vm8575, %v8556, %v8772
        %v8774 = vsel %vm8577, %v8557, %v8773
        %v8775 = vsel %vm8579, %v8559, %v8558
        %v8776 = vsel %vm8567, %v8560, %v8775
        %v8777 = vsel %vm8569, %v8561, %v8776
        %v8778 = vsel %vm8571, %v8562, %v8777
        %v8779 = vsel %vm8573, %v8563, %v8778
        %v8780 = vsel %vm8575, %v8564, %v8779
        %v8781 = vsel %vm8577, %v8565, %v8780
        %v8830 = vsel %vm641, 0.0, %v8578
        %v8831 = vsel %vm641, 0.0, %v8592
        %v8832 = vsel %vm641, 0.0, %v8605
        %v8833 = vsel %vm641, 0.0, %v8618
        %v8834 = vsel %vm641, 0.0, %v8631
        %v8835 = vsel %vm641, 0.0, %v8644
        %v8836 = vsel %vm641, 0.0, %v8657
        %v8837 = vsel %vm641, 0.0, %v8670
        %v8838 = vsel %vm641, 0.0, %v8683
        %v8839 = vsel %vm641, 0.0, %v8696
        %v8840 = vsel %vm641, 0.0, %v8709
        %v8841 = vsel %vm641, 0.0, %v8722
        %v8842 = vsel %vm641, 0.0, %v8735
        %v8843 = vsel %vm641, 0.0, %v8748
        %v8844 = vsel %vm641, 0.0, %v8761
        %v8845 = vsel %vm641, 0.0, %v8774
        %v8846 = vsel %vm641, %v8326, 0.0
        %v8847 = vsel %vm641, %v8342, 0.0
        %v8848 = vsel %vm641, %v8358, 0.0
        %v8849 = vsel %vm641, %v8374, 0.0
        %v8850 = vsel %vm641, %v8390, 0.0
        %v8851 = vsel %vm641, %v8406, 0.0
        %v8852 = vsel %vm641, %v8422, 0.0
        %v8853 = vsel %vm641, %v8438, 0.0
        %v8854 = vsel %vm641, %v8454, 0.0
        %v8855 = vsel %vm641, %v8470, 0.0
        %v8856 = vsel %vm641, %v8486, 0.0
        %v8857 = vsel %vm641, %v8502, 0.0
        %v8858 = vsel %vm641, %v8518, 0.0
        %v8859 = vsel %vm641, %v8534, 0.0
        %v8860 = vsel %vm641, %v8550, 0.0
        %v8861 = vsel %vm641, %v8566, 0.0
        %v8862 = vpack.c.bf16 0.0, 0.0
        %v8863 = vpack.c.bf16 %v8586, %v8830
        %v8864 = vpack.c.bf16 %v8599, %v8831
        %v8865 = vpack.c.bf16 %v8612, %v8832
        %v8866 = vpack.c.bf16 %v8625, %v8833
        %v8867 = vpack.c.bf16 %v8638, %v8834
        %v8868 = vpack.c.bf16 %v8651, %v8835
        %v8869 = vpack.c.bf16 %v8664, %v8836
        %v8870 = vpack.c.bf16 %v8677, %v8837
        %v8871 = vpack.c.bf16 %v8690, %v8838
        %v8872 = vpack.c.bf16 %v8703, %v8839
        %v8873 = vpack.c.bf16 %v8716, %v8840
        %v8874 = vpack.c.bf16 %v8729, %v8841
        %v8875 = vpack.c.bf16 %v8742, %v8842
        %v8876 = vpack.c.bf16 %v8755, %v8843
        %v8877 = vpack.c.bf16 %v8768, %v8844
        %v8878 = vld [vmem:[%s3] sm:$0xf]
        %v8879 = vld [vmem:[%s3 + $0x4] sm:$0xf]
        %v8910 = vrot.slane %v8830, 1
        %v8911 = vrot.slane %v8586, 1
        %v8912 = vsel %vm1150, %v8910, %v8911
        %v8913 = vrot.slane %v8846, 1
        %v8914 = vsel %vm1150, %v8911, %v8913
        %v8915 = vrot.slane %v8831, 1
        %v8916 = vrot.slane %v8599, 1
        %v8917 = vsel %vm1150, %v8915, %v8916
        %v8918 = vrot.slane %v8847, 1
        %v8919 = vsel %vm1150, %v8916, %v8918
        %v8920 = vrot.slane %v8832, 1
        %v8921 = vrot.slane %v8612, 1
        %v8922 = vsel %vm1150, %v8920, %v8921
        %v8923 = vrot.slane %v8848, 1
        %v8924 = vsel %vm1150, %v8921, %v8923
        %v8925 = vrot.slane %v8833, 1
        %v8926 = vrot.slane %v8625, 1
        %v8927 = vsel %vm1150, %v8925, %v8926
        %v8928 = vrot.slane %v8849, 1
        %v8929 = vsel %vm1150, %v8926, %v8928
        %v8930 = vrot.slane %v8834, 1
        %v8931 = vrot.slane %v8638, 1
        %v8932 = vsel %vm1150, %v8930, %v8931
        %v8933 = vrot.slane %v8850, 1
        %v8934 = vsel %vm1150, %v8931, %v8933
        %v8935 = vrot.slane %v8835, 1
        %v8936 = vrot.slane %v8651, 1
        %v8937 = vsel %vm1150, %v8935, %v8936
        %v8938 = vrot.slane %v8851, 1
        %v8939 = vsel %vm1150, %v8936, %v8938
        %v8940 = vrot.slane %v8836, 1
        %v8941 = vrot.slane %v8664, 1
        %v8942 = vsel %vm1150, %v8940, %v8941
        %v8943 = vrot.slane %v8852, 1
        %v8944 = vsel %vm1150, %v8941, %v8943
        %v8945 = vrot.slane %v8837, 1
        %v8946 = vrot.slane %v8677, 1
        %v8947 = vsel %vm1150, %v8945, %v8946
        %v8948 = vrot.slane %v8853, 1
        %v8949 = vsel %vm1150, %v8946, %v8948
        %v8950 = vrot.slane %v8838, 1
        %v8951 = vrot.slane %v8690, 1
        %v8952 = vsel %vm1150, %v8950, %v8951
        %v8953 = vrot.slane %v8854, 1
        %v8954 = vsel %vm1150, %v8951, %v8953
        %v8955 = vrot.slane %v8839, 1
        %v8956 = vrot.slane %v8703, 1
        %v8957 = vsel %vm1150, %v8955, %v8956
        %v8958 = vrot.slane %v8855, 1
        %v8959 = vsel %vm1150, %v8956, %v8958
        %v8960 = vrot.slane %v8840, 1
        %v8961 = vrot.slane %v8716, 1
        %v8962 = vsel %vm1150, %v8960, %v8961
        %v8963 = vrot.slane %v8856, 1
        %v8964 = vsel %vm1150, %v8961, %v8963
        %v8965 = vrot.slane %v8841, 1
        %v8966 = vrot.slane %v8729, 1
        %v8967 = vsel %vm1150, %v8965, %v8966
        %v8968 = vrot.slane %v8857, 1
        %v8969 = vsel %vm1150, %v8966, %v8968
        %v8970 = vrot.slane %v8842, 1
        %v8971 = vrot.slane %v8742, 1
        %v8972 = vsel %vm1150, %v8970, %v8971
        %v8973 = vrot.slane %v8858, 1
        %v8974 = vsel %vm1150, %v8971, %v8973
        %v8975 = vrot.slane %v8843, 1
        %v8976 = vrot.slane %v8755, 1
        %v8977 = vsel %vm1150, %v8975, %v8976
        %v8978 = vrot.slane %v8859, 1
        %v8979 = vsel %vm1150, %v8976, %v8978
        %v8980 = vrot.slane %v8844, 1
        %v8981 = vrot.slane %v8768, 1
        %v8982 = vsel %vm1150, %v8980, %v8981
        %v8983 = vrot.slane %v8860, 1
        %v8984 = vsel %vm1150, %v8981, %v8983
        %v9016 = vpack.c.bf16 %v1152, %v1152
        %v9017 = vpack.c.bf16 %v8914, %v8912
        %v9018 = vpack.c.bf16 %v8919, %v8917
        %v9019 = vpack.c.bf16 %v8924, %v8922
        %v9020 = vpack.c.bf16 %v8929, %v8927
        %v9021 = vpack.c.bf16 %v8934, %v8932
        %v9022 = vpack.c.bf16 %v8939, %v8937
        %v9023 = vpack.c.bf16 %v8944, %v8942
        %v9024 = vpack.c.bf16 %v8949, %v8947
        %v9025 = vpack.c.bf16 %v8954, %v8952
        %v9026 = vpack.c.bf16 %v8959, %v8957
        %v9027 = vpack.c.bf16 %v8964, %v8962
        %v9028 = vpack.c.bf16 %v8969, %v8967
        %v9029 = vpack.c.bf16 %v8974, %v8972
        %v9030 = vpack.c.bf16 %v8979, %v8977
        %v9031 = vpack.c.bf16 %v8984, %v8982
        %s9032 = scalar_lea.vmem %s3, 8
        %v9033 = vld [vmem:[%s9032] sm:$0xf]
        %v9034 = vld [vmem:[%s9032 + $0x4] sm:$0xf]
        %v9037 = vunpack.c.l.b16 %v9033
        %v9038 = vunpack.c.l.b16 %v9034
        %v9039 = vpack.c.b16 %v9038, %v9037
        %vm9041 = vcmask 130048
        %v9043 = vsel %vm9041, %v9016, 0
        %v9046 = vsel %vm9041, %v9017, 0
        %v9049 = vsel %vm9041, %v9018, 0
        %v9052 = vsel %vm9041, %v9019, 0
        %v9055 = vsel %vm9041, %v9020, 0
        %v9058 = vsel %vm9041, %v9021, 0
        %v9061 = vsel %vm9041, %v9022, 0
        %v9064 = vsel %vm9041, %v9023, 0
        %v9067 = vsel %vm9041, %v9024, 0
        %v9070 = vsel %vm9041, %v9025, 0
        %v9073 = vsel %vm9041, %v9026, 0
        %v9076 = vsel %vm9041, %v9027, 0
        %v9079 = vsel %vm9041, %v9028, 0
        %v9082 = vsel %vm9041, %v9029, 0
        %v9085 = vsel %vm9041, %v9030, 0
        %v9088 = vsel %vm9041, %v9031, 0
        %9090 = vmatpush.bf16.msra.mxu0 0
        %9091 = vmatpush.bf16.msra.mxu0 0
        %9092 = vmatpush.bf16.msra.mxu0 0
        %9093 = vmatpush.bf16.msra.mxu0 0
        %9094 = vmatpush.bf16.msra.mxu0 0
        %9095 = vmatpush.bf16.msra.mxu0 0
        %9096 = vmatpush.bf16.msra.mxu0 0
        %9097 = vmatpush.bf16.msra.mxu0 %v9039
        %9098 = vmatmul.bf16.gmra.mxu0 %v9043
        %v9099 = vpop.f32.mrf.mxu0
        %v9100 = vadd.f32 0.0, %v9099
        %v9101 = vpop.f32.mrf.mxu0
        %v9102 = vadd.f32 0.0, %v9101
        %9103 = vmatmul.bf16.gmra.mxu0 %v9046
        %v9104 = vpop.f32.mrf.mxu0
        %v9105 = vadd.f32 0.0, %v9104
        %v9106 = vpop.f32.mrf.mxu0
        %v9107 = vadd.f32 0.0, %v9106
        %9108 = vmatmul.bf16.gmra.mxu0 %v9049
        %v9109 = vpop.f32.mrf.mxu0
        %v9110 = vadd.f32 0.0, %v9109
        %v9111 = vpop.f32.mrf.mxu0
        %v9112 = vadd.f32 0.0, %v9111
        %9113 = vmatmul.bf16.gmra.mxu0 %v9052
        %v9114 = vpop.f32.mrf.mxu0
        %v9115 = vadd.f32 0.0, %v9114
        %v9116 = vpop.f32.mrf.mxu0
        %v9117 = vadd.f32 0.0, %v9116
        %9118 = vmatmul.bf16.gmra.mxu0 %v9055
        %v9119 = vpop.f32.mrf.mxu0
        %v9120 = vadd.f32 0.0, %v9119
        %v9121 = vpop.f32.mrf.mxu0
        %v9122 = vadd.f32 0.0, %v9121
        %9123 = vmatmul.bf16.gmra.mxu0 %v9058
        %v9124 = vpop.f32.mrf.mxu0
        %v9125 = vadd.f32 0.0, %v9124
        %v9126 = vpop.f32.mrf.mxu0
        %v9127 = vadd.f32 0.0, %v9126
        %9128 = vmatmul.bf16.gmra.mxu0 %v9061
        %v9129 = vpop.f32.mrf.mxu0
        %v9130 = vadd.f32 0.0, %v9129
        %v9131 = vpop.f32.mrf.mxu0
        %v9132 = vadd.f32 0.0, %v9131
        %9133 = vmatmul.bf16.gmra.mxu0 %v9064
        %v9134 = vpop.f32.mrf.mxu0
        %v9135 = vadd.f32 0.0, %v9134
        %v9136 = vpop.f32.mrf.mxu0
        %v9137 = vadd.f32 0.0, %v9136
        %9138 = vmatmul.bf16.gmra.mxu0 %v9067
        %v9139 = vpop.f32.mrf.mxu0
        %v9140 = vadd.f32 0.0, %v9139
        %v9141 = vpop.f32.mrf.mxu0
        %v9142 = vadd.f32 0.0, %v9141
        %9143 = vmatmul.bf16.gmra.mxu0 %v9070
        %v9144 = vpop.f32.mrf.mxu0
        %v9145 = vadd.f32 0.0, %v9144
        %v9146 = vpop.f32.mrf.mxu0
        %v9147 = vadd.f32 0.0, %v9146
        %9148 = vmatmul.bf16.gmra.mxu0 %v9073
        %v9149 = vpop.f32.mrf.mxu0
        %v9150 = vadd.f32 0.0, %v9149
        %v9151 = vpop.f32.mrf.mxu0
        %v9152 = vadd.f32 0.0, %v9151
        %9153 = vmatmul.bf16.gmra.mxu0 %v9076
        %v9154 = vpop.f32.mrf.mxu0
        %v9155 = vadd.f32 0.0, %v9154
        %v9156 = vpop.f32.mrf.mxu0
        %v9157 = vadd.f32 0.0, %v9156
        %9158 = vmatmul.bf16.gmra.mxu0 %v9079
        %v9159 = vpop.f32.mrf.mxu0
        %v9160 = vadd.f32 0.0, %v9159
        %v9161 = vpop.f32.mrf.mxu0
        %v9162 = vadd.f32 0.0, %v9161
        %9163 = vmatmul.bf16.gmra.mxu0 %v9082
        %v9164 = vpop.f32.mrf.mxu0
        %v9165 = vadd.f32 0.0, %v9164
        %v9166 = vpop.f32.mrf.mxu0
        %v9167 = vadd.f32 0.0, %v9166
        %9168 = vmatmul.bf16.gmra.mxu0 %v9085
        %v9169 = vpop.f32.mrf.mxu0
        %v9170 = vadd.f32 0.0, %v9169
        %v9171 = vpop.f32.mrf.mxu0
        %v9172 = vadd.f32 0.0, %v9171
        %9173 = vmatmul.bf16.gmra.mxu0 %v9088
        %v9174 = vpop.f32.mrf.mxu0
        %v9175 = vadd.f32 0.0, %v9174
        %v9176 = vpop.f32.mrf.mxu0
        %v9177 = vadd.f32 0.0, %v9176
        %9178 = vdwg.mxu0
        %v9181 = vunpack.c.l.b16 %v8878
        %v9182 = vunpack.c.l.b16 %v8879
        %v9183 = vpack.c.b16 %v9182, %v9181
        %v9186 = vsel %vm9041, %v8862, 0
        %v9189 = vsel %vm9041, %v8863, 0
        %v9192 = vsel %vm9041, %v8864, 0
        %v9195 = vsel %vm9041, %v8865, 0
        %v9198 = vsel %vm9041, %v8866, 0
        %v9201 = vsel %vm9041, %v8867, 0
        %v9204 = vsel %vm9041, %v8868, 0
        %v9207 = vsel %vm9041, %v8869, 0
        %v9210 = vsel %vm9041, %v8870, 0
        %v9213 = vsel %vm9041, %v8871, 0
        %v9216 = vsel %vm9041, %v8872, 0
        %v9219 = vsel %vm9041, %v8873, 0
        %v9222 = vsel %vm9041, %v8874, 0
        %v9225 = vsel %vm9041, %v8875, 0
        %v9228 = vsel %vm9041, %v8876, 0
        %v9231 = vsel %vm9041, %v8877, 0
        %9233 = vmatpush.bf16.msra.mxu0 0
        %9234 = vmatpush.bf16.msra.mxu0 0
        %9235 = vmatpush.bf16.msra.mxu0 0
        %9236 = vmatpush.bf16.msra.mxu0 0
        %9237 = vmatpush.bf16.msra.mxu0 0
        %9238 = vmatpush.bf16.msra.mxu0 0
        %9239 = vmatpush.bf16.msra.mxu0 0
        %9240 = vmatpush.bf16.msra.mxu0 %v9183
        %9241 = vmatmul.bf16.gmra.mxu0 %v9186
        %v9242 = vpop.f32.mrf.mxu0
        %v9243 = vadd.f32 %v9100, %v9242
        %v9244 = vpop.f32.mrf.mxu0
        %v9245 = vadd.f32 %v9102, %v9244
        %9246 = vmatmul.bf16.gmra.mxu0 %v9189
        %v9247 = vpop.f32.mrf.mxu0
        %v9248 = vadd.f32 %v9105, %v9247
        %v9249 = vpop.f32.mrf.mxu0
        %v9250 = vadd.f32 %v9107, %v9249
        %9251 = vmatmul.bf16.gmra.mxu0 %v9192
        %v9252 = vpop.f32.mrf.mxu0
        %v9253 = vadd.f32 %v9110, %v9252
        %v9254 = vpop.f32.mrf.mxu0
        %v9255 = vadd.f32 %v9112, %v9254
        %9256 = vmatmul.bf16.gmra.mxu0 %v9195
        %v9257 = vpop.f32.mrf.mxu0
        %v9258 = vadd.f32 %v9115, %v9257
        %v9259 = vpop.f32.mrf.mxu0
        %v9260 = vadd.f32 %v9117, %v9259
        %9261 = vmatmul.bf16.gmra.mxu0 %v9198
        %v9262 = vpop.f32.mrf.mxu0
        %v9263 = vadd.f32 %v9120, %v9262
        %v9264 = vpop.f32.mrf.mxu0
        %v9265 = vadd.f32 %v9122, %v9264
        %9266 = vmatmul.bf16.gmra.mxu0 %v9201
        %v9267 = vpop.f32.mrf.mxu0
        %v9268 = vadd.f32 %v9125, %v9267
        %v9269 = vpop.f32.mrf.mxu0
        %v9270 = vadd.f32 %v9127, %v9269
        %9271 = vmatmul.bf16.gmra.mxu0 %v9204
        %v9272 = vpop.f32.mrf.mxu0
        %v9273 = vadd.f32 %v9130, %v9272
        %v9274 = vpop.f32.mrf.mxu0
        %v9275 = vadd.f32 %v9132, %v9274
        %9276 = vmatmul.bf16.gmra.mxu0 %v9207
        %v9277 = vpop.f32.mrf.mxu0
        %v9278 = vadd.f32 %v9135, %v9277
        %v9279 = vpop.f32.mrf.mxu0
        %v9280 = vadd.f32 %v9137, %v9279
        %9281 = vmatmul.bf16.gmra.mxu0 %v9210
        %v9282 = vpop.f32.mrf.mxu0
        %v9283 = vadd.f32 %v9140, %v9282
        %v9284 = vpop.f32.mrf.mxu0
        %v9285 = vadd.f32 %v9142, %v9284
        %9286 = vmatmul.bf16.gmra.mxu0 %v9213
        %v9287 = vpop.f32.mrf.mxu0
        %v9288 = vadd.f32 %v9145, %v9287
        %v9289 = vpop.f32.mrf.mxu0
        %v9290 = vadd.f32 %v9147, %v9289
        %9291 = vmatmul.bf16.gmra.mxu0 %v9216
        %v9292 = vpop.f32.mrf.mxu0
        %v9293 = vadd.f32 %v9150, %v9292
        %v9294 = vpop.f32.mrf.mxu0
        %v9295 = vadd.f32 %v9152, %v9294
        %9296 = vmatmul.bf16.gmra.mxu0 %v9219
        %v9297 = vpop.f32.mrf.mxu0
        %v9298 = vadd.f32 %v9155, %v9297
        %v9299 = vpop.f32.mrf.mxu0
        %v9300 = vadd.f32 %v9157, %v9299
        %9301 = vmatmul.bf16.gmra.mxu0 %v9222
        %v9302 = vpop.f32.mrf.mxu0
        %v9303 = vadd.f32 %v9160, %v9302
        %v9304 = vpop.f32.mrf.mxu0
        %v9305 = vadd.f32 %v9162, %v9304
        %9306 = vmatmul.bf16.gmra.mxu0 %v9225
        %v9307 = vpop.f32.mrf.mxu0
        %v9308 = vadd.f32 %v9165, %v9307
        %v9309 = vpop.f32.mrf.mxu0
        %v9310 = vadd.f32 %v9167, %v9309
        %9311 = vmatmul.bf16.gmra.mxu0 %v9228
        %v9312 = vpop.f32.mrf.mxu0
        %v9313 = vadd.f32 %v9170, %v9312
        %v9314 = vpop.f32.mrf.mxu0
        %v9315 = vadd.f32 %v9172, %v9314
        %9316 = vmatmul.bf16.gmra.mxu0 %v9231
        %v9317 = vpop.f32.mrf.mxu0
        %v9318 = vadd.f32 %v9175, %v9317
        %v9319 = vpop.f32.mrf.mxu0
        %v9320 = vadd.f32 %v9177, %v9319
        %9321 = vdwg.mxu0
        %v9322 = vrot.slane %v8830, 2
        %v9323 = vrot.slane %v8586, 2
        %v9324 = vsel %vm1432, %v9322, %v9323
        %v9325 = vrot.slane %v8846, 2
        %v9326 = vsel %vm1432, %v9323, %v9325
        %v9327 = vrot.slane %v8831, 2
        %v9328 = vrot.slane %v8599, 2
        %v9329 = vsel %vm1432, %v9327, %v9328
        %v9330 = vrot.slane %v8847, 2
        %v9331 = vsel %vm1432, %v9328, %v9330
        %v9332 = vrot.slane %v8832, 2
        %v9333 = vrot.slane %v8612, 2
        %v9334 = vsel %vm1432, %v9332, %v9333
        %v9335 = vrot.slane %v8848, 2
        %v9336 = vsel %vm1432, %v9333, %v9335
        %v9337 = vrot.slane %v8833, 2
        %v9338 = vrot.slane %v8625, 2
        %v9339 = vsel %vm1432, %v9337, %v9338
        %v9340 = vrot.slane %v8849, 2
        %v9341 = vsel %vm1432, %v9338, %v9340
        %v9342 = vrot.slane %v8834, 2
        %v9343 = vrot.slane %v8638, 2
        %v9344 = vsel %vm1432, %v9342, %v9343
        %v9345 = vrot.slane %v8850, 2
        %v9346 = vsel %vm1432, %v9343, %v9345
        %v9347 = vrot.slane %v8835, 2
        %v9348 = vrot.slane %v8651, 2
        %v9349 = vsel %vm1432, %v9347, %v9348
        %v9350 = vrot.slane %v8851, 2
        %v9351 = vsel %vm1432, %v9348, %v9350
        %v9352 = vrot.slane %v8836, 2
        %v9353 = vrot.slane %v8664, 2
        %v9354 = vsel %vm1432, %v9352, %v9353
        %v9355 = vrot.slane %v8852, 2
        %v9356 = vsel %vm1432, %v9353, %v9355
        %v9357 = vrot.slane %v8837, 2
        %v9358 = vrot.slane %v8677, 2
        %v9359 = vsel %vm1432, %v9357, %v9358
        %v9360 = vrot.slane %v8853, 2
        %v9361 = vsel %vm1432, %v9358, %v9360
        %v9362 = vrot.slane %v8838, 2
        %v9363 = vrot.slane %v8690, 2
        %v9364 = vsel %vm1432, %v9362, %v9363
        %v9365 = vrot.slane %v8854, 2
        %v9366 = vsel %vm1432, %v9363, %v9365
        %v9367 = vrot.slane %v8839, 2
        %v9368 = vrot.slane %v8703, 2
        %v9369 = vsel %vm1432, %v9367, %v9368
        %v9370 = vrot.slane %v8855, 2
        %v9371 = vsel %vm1432, %v9368, %v9370
        %v9372 = vrot.slane %v8840, 2
        %v9373 = vrot.slane %v8716, 2
        %v9374 = vsel %vm1432, %v9372, %v9373
        %v9375 = vrot.slane %v8856, 2
        %v9376 = vsel %vm1432, %v9373, %v9375
        %v9377 = vrot.slane %v8841, 2
        %v9378 = vrot.slane %v8729, 2
        %v9379 = vsel %vm1432, %v9377, %v9378
        %v9380 = vrot.slane %v8857, 2
        %v9381 = vsel %vm1432, %v9378, %v9380
        %v9382 = vrot.slane %v8842, 2
        %v9383 = vrot.slane %v8742, 2
        %v9384 = vsel %vm1432, %v9382, %v9383
        %v9385 = vrot.slane %v8858, 2
        %v9386 = vsel %vm1432, %v9383, %v9385
        %v9387 = vrot.slane %v8843, 2
        %v9388 = vrot.slane %v8755, 2
        %v9389 = vsel %vm1432, %v9387, %v9388
        %v9390 = vrot.slane %v8859, 2
        %v9391 = vsel %vm1432, %v9388, %v9390
        %v9392 = vrot.slane %v8844, 2
        %v9393 = vrot.slane %v8768, 2
        %v9394 = vsel %vm1432, %v9392, %v9393
        %v9395 = vrot.slane %v8860, 2
        %v9396 = vsel %vm1432, %v9393, %v9395
        %v9428 = vpack.c.bf16 %v1434, %v1434
        %v9429 = vpack.c.bf16 %v9326, %v9324
        %v9430 = vpack.c.bf16 %v9331, %v9329
        %v9431 = vpack.c.bf16 %v9336, %v9334
        %v9432 = vpack.c.bf16 %v9341, %v9339
        %v9433 = vpack.c.bf16 %v9346, %v9344
        %v9434 = vpack.c.bf16 %v9351, %v9349
        %v9435 = vpack.c.bf16 %v9356, %v9354
        %v9436 = vpack.c.bf16 %v9361, %v9359
        %v9437 = vpack.c.bf16 %v9366, %v9364
        %v9438 = vpack.c.bf16 %v9371, %v9369
        %v9439 = vpack.c.bf16 %v9376, %v9374
        %v9440 = vpack.c.bf16 %v9381, %v9379
        %v9441 = vpack.c.bf16 %v9386, %v9384
        %v9442 = vpack.c.bf16 %v9391, %v9389
        %v9443 = vpack.c.bf16 %v9396, %v9394
        %s9444 = scalar_lea.vmem %s3, 16
        %v9445 = vld [vmem:[%s9444] sm:$0xf]
        %v9446 = vld [vmem:[%s9444 + $0x4] sm:$0xf]
        %v9449 = vunpack.c.l.b16 %v9445
        %v9450 = vunpack.c.l.b16 %v9446
        %v9451 = vpack.c.b16 %v9450, %v9449
        %v9454 = vsel %vm9041, %v9428, 0
        %v9457 = vsel %vm9041, %v9429, 0
        %v9460 = vsel %vm9041, %v9430, 0
        %v9463 = vsel %vm9041, %v9431, 0
        %v9466 = vsel %vm9041, %v9432, 0
        %v9469 = vsel %vm9041, %v9433, 0
        %v9472 = vsel %vm9041, %v9434, 0
        %v9475 = vsel %vm9041, %v9435, 0
        %v9478 = vsel %vm9041, %v9436, 0
        %v9481 = vsel %vm9041, %v9437, 0
        %v9484 = vsel %vm9041, %v9438, 0
        %v9487 = vsel %vm9041, %v9439, 0
        %v9490 = vsel %vm9041, %v9440, 0
        %v9493 = vsel %vm9041, %v9441, 0
        %v9496 = vsel %vm9041, %v9442, 0
        %v9499 = vsel %vm9041, %v9443, 0
        %9501 = vmatpush.bf16.msra.mxu0 0
        %9502 = vmatpush.bf16.msra.mxu0 0
        %9503 = vmatpush.bf16.msra.mxu0 0
        %9504 = vmatpush.bf16.msra.mxu0 0
        %9505 = vmatpush.bf16.msra.mxu0 0
        %9506 = vmatpush.bf16.msra.mxu0 0
        %9507 = vmatpush.bf16.msra.mxu0 0
        %9508 = vmatpush.bf16.msra.mxu0 %v9451
        %9509 = vmatmul.bf16.gmra.mxu0 %v9454
        %v9510 = vpop.f32.mrf.mxu0
        %v9511 = vadd.f32 0.0, %v9510
        %v9512 = vpop.f32.mrf.mxu0
        %v9513 = vadd.f32 0.0, %v9512
        %9514 = vmatmul.bf16.gmra.mxu0 %v9457
        %v9515 = vpop.f32.mrf.mxu0
        %v9516 = vadd.f32 0.0, %v9515
        %v9517 = vpop.f32.mrf.mxu0
        %v9518 = vadd.f32 0.0, %v9517
        %9519 = vmatmul.bf16.gmra.mxu0 %v9460
        %v9520 = vpop.f32.mrf.mxu0
        %v9521 = vadd.f32 0.0, %v9520
        %v9522 = vpop.f32.mrf.mxu0
        %v9523 = vadd.f32 0.0, %v9522
        %9524 = vmatmul.bf16.gmra.mxu0 %v9463
        %v9525 = vpop.f32.mrf.mxu0
        %v9526 = vadd.f32 0.0, %v9525
        %v9527 = vpop.f32.mrf.mxu0
        %v9528 = vadd.f32 0.0, %v9527
        %9529 = vmatmul.bf16.gmra.mxu0 %v9466
        %v9530 = vpop.f32.mrf.mxu0
        %v9531 = vadd.f32 0.0, %v9530
        %v9532 = vpop.f32.mrf.mxu0
        %v9533 = vadd.f32 0.0, %v9532
        %9534 = vmatmul.bf16.gmra.mxu0 %v9469
        %v9535 = vpop.f32.mrf.mxu0
        %v9536 = vadd.f32 0.0, %v9535
        %v9537 = vpop.f32.mrf.mxu0
        %v9538 = vadd.f32 0.0, %v9537
        %9539 = vmatmul.bf16.gmra.mxu0 %v9472
        %v9540 = vpop.f32.mrf.mxu0
        %v9541 = vadd.f32 0.0, %v9540
        %v9542 = vpop.f32.mrf.mxu0
        %v9543 = vadd.f32 0.0, %v9542
        %9544 = vmatmul.bf16.gmra.mxu0 %v9475
        %v9545 = vpop.f32.mrf.mxu0
        %v9546 = vadd.f32 0.0, %v9545
        %v9547 = vpop.f32.mrf.mxu0
        %v9548 = vadd.f32 0.0, %v9547
        %9549 = vmatmul.bf16.gmra.mxu0 %v9478
        %v9550 = vpop.f32.mrf.mxu0
        %v9551 = vadd.f32 0.0, %v9550
        %v9552 = vpop.f32.mrf.mxu0
        %v9553 = vadd.f32 0.0, %v9552
        %9554 = vmatmul.bf16.gmra.mxu0 %v9481
        %v9555 = vpop.f32.mrf.mxu0
        %v9556 = vadd.f32 0.0, %v9555
        %v9557 = vpop.f32.mrf.mxu0
        %v9558 = vadd.f32 0.0, %v9557
        %9559 = vmatmul.bf16.gmra.mxu0 %v9484
        %v9560 = vpop.f32.mrf.mxu0
        %v9561 = vadd.f32 0.0, %v9560
        %v9562 = vpop.f32.mrf.mxu0
        %v9563 = vadd.f32 0.0, %v9562
        %9564 = vmatmul.bf16.gmra.mxu0 %v9487
        %v9565 = vpop.f32.mrf.mxu0
        %v9566 = vadd.f32 0.0, %v9565
        %v9567 = vpop.f32.mrf.mxu0
        %v9568 = vadd.f32 0.0, %v9567
        %9569 = vmatmul.bf16.gmra.mxu0 %v9490
        %v9570 = vpop.f32.mrf.mxu0
        %v9571 = vadd.f32 0.0, %v9570
        %v9572 = vpop.f32.mrf.mxu0
        %v9573 = vadd.f32 0.0, %v9572
        %9574 = vmatmul.bf16.gmra.mxu0 %v9493
        %v9575 = vpop.f32.mrf.mxu0
        %v9576 = vadd.f32 0.0, %v9575
        %v9577 = vpop.f32.mrf.mxu0
        %v9578 = vadd.f32 0.0, %v9577
        %9579 = vmatmul.bf16.gmra.mxu0 %v9496
        %v9580 = vpop.f32.mrf.mxu0
        %v9581 = vadd.f32 0.0, %v9580
        %v9582 = vpop.f32.mrf.mxu0
        %v9583 = vadd.f32 0.0, %v9582
        %9584 = vmatmul.bf16.gmra.mxu0 %v9499
        %v9585 = vpop.f32.mrf.mxu0
        %v9586 = vadd.f32 0.0, %v9585
        %v9587 = vpop.f32.mrf.mxu0
        %v9588 = vadd.f32 0.0, %v9587
        %9589 = vdwg.mxu0
        %v9590 = vadd.f32 %v9243, %v9511
        %v9591 = vadd.f32 %v9245, %v9513
        %v9592 = vadd.f32 %v9248, %v9516
        %v9593 = vadd.f32 %v9250, %v9518
        %v9594 = vadd.f32 %v9253, %v9521
        %v9595 = vadd.f32 %v9255, %v9523
        %v9596 = vadd.f32 %v9258, %v9526
        %v9597 = vadd.f32 %v9260, %v9528
        %v9598 = vadd.f32 %v9263, %v9531
        %v9599 = vadd.f32 %v9265, %v9533
        %v9600 = vadd.f32 %v9268, %v9536
        %v9601 = vadd.f32 %v9270, %v9538
        %v9602 = vadd.f32 %v9273, %v9541
        %v9603 = vadd.f32 %v9275, %v9543
        %v9604 = vadd.f32 %v9278, %v9546
        %v9605 = vadd.f32 %v9280, %v9548
        %v9606 = vadd.f32 %v9283, %v9551
        %v9607 = vadd.f32 %v9285, %v9553
        %v9608 = vadd.f32 %v9288, %v9556
        %v9609 = vadd.f32 %v9290, %v9558
        %v9610 = vadd.f32 %v9293, %v9561
        %v9611 = vadd.f32 %v9295, %v9563
        %v9612 = vadd.f32 %v9298, %v9566
        %v9613 = vadd.f32 %v9300, %v9568
        %v9614 = vadd.f32 %v9303, %v9571
        %v9615 = vadd.f32 %v9305, %v9573
        %v9616 = vadd.f32 %v9308, %v9576
        %v9617 = vadd.f32 %v9310, %v9578
        %v9618 = vadd.f32 %v9313, %v9581
        %v9619 = vadd.f32 %v9315, %v9583
        %v9620 = vadd.f32 %v9318, %v9586
        %v9621 = vadd.f32 %v9320, %v9588
        %v9622 = vpack.c.bf16 %v8781, %v8845
        %s9623 = scalar_lea.vmem %s3, 24
        %v9624 = vld [vmem:[%s9623] sm:$0xf]
        %v9625 = vld [vmem:[%s9623 + $0x4] sm:$0xf]
        %v9628 = vunpack.c.l.b16 %v9624
        %v9629 = vunpack.c.l.b16 %v9625
        %v9630 = vpack.c.b16 %v9629, %v9628
        %v9633 = vsel %vm9041, %v9622, 0
        %9635 = vmatpush.bf16.msra.mxu0 0
        %9636 = vmatpush.bf16.msra.mxu0 0
        %9637 = vmatpush.bf16.msra.mxu0 0
        %9638 = vmatpush.bf16.msra.mxu0 0
        %9639 = vmatpush.bf16.msra.mxu0 0
        %9640 = vmatpush.bf16.msra.mxu0 0
        %9641 = vmatpush.bf16.msra.mxu0 0
        %9642 = vmatpush.bf16.msra.mxu0 %v9630
        %9643 = vmatmul.bf16.gmra.mxu0 %v9189
        %v9644 = vpop.f32.mrf.mxu0
        %v9645 = vadd.f32 0.0, %v9644
        %v9646 = vpop.f32.mrf.mxu0
        %v9647 = vadd.f32 0.0, %v9646
        %9648 = vmatmul.bf16.gmra.mxu0 %v9192
        %v9649 = vpop.f32.mrf.mxu0
        %v9650 = vadd.f32 0.0, %v9649
        %v9651 = vpop.f32.mrf.mxu0
        %v9652 = vadd.f32 0.0, %v9651
        %9653 = vmatmul.bf16.gmra.mxu0 %v9195
        %v9654 = vpop.f32.mrf.mxu0
        %v9655 = vadd.f32 0.0, %v9654
        %v9656 = vpop.f32.mrf.mxu0
        %v9657 = vadd.f32 0.0, %v9656
        %9658 = vmatmul.bf16.gmra.mxu0 %v9198
        %v9659 = vpop.f32.mrf.mxu0
        %v9660 = vadd.f32 0.0, %v9659
        %v9661 = vpop.f32.mrf.mxu0
        %v9662 = vadd.f32 0.0, %v9661
        %9663 = vmatmul.bf16.gmra.mxu0 %v9201
        %v9664 = vpop.f32.mrf.mxu0
        %v9665 = vadd.f32 0.0, %v9664
        %v9666 = vpop.f32.mrf.mxu0
        %v9667 = vadd.f32 0.0, %v9666
        %9668 = vmatmul.bf16.gmra.mxu0 %v9204
        %v9669 = vpop.f32.mrf.mxu0
        %v9670 = vadd.f32 0.0, %v9669
        %v9671 = vpop.f32.mrf.mxu0
        %v9672 = vadd.f32 0.0, %v9671
        %9673 = vmatmul.bf16.gmra.mxu0 %v9207
        %v9674 = vpop.f32.mrf.mxu0
        %v9675 = vadd.f32 0.0, %v9674
        %v9676 = vpop.f32.mrf.mxu0
        %v9677 = vadd.f32 0.0, %v9676
        %9678 = vmatmul.bf16.gmra.mxu0 %v9210
        %v9679 = vpop.f32.mrf.mxu0
        %v9680 = vadd.f32 0.0, %v9679
        %v9681 = vpop.f32.mrf.mxu0
        %v9682 = vadd.f32 0.0, %v9681
        %9683 = vmatmul.bf16.gmra.mxu0 %v9213
        %v9684 = vpop.f32.mrf.mxu0
        %v9685 = vadd.f32 0.0, %v9684
        %v9686 = vpop.f32.mrf.mxu0
        %v9687 = vadd.f32 0.0, %v9686
        %9688 = vmatmul.bf16.gmra.mxu0 %v9216
        %v9689 = vpop.f32.mrf.mxu0
        %v9690 = vadd.f32 0.0, %v9689
        %v9691 = vpop.f32.mrf.mxu0
        %v9692 = vadd.f32 0.0, %v9691
        %9693 = vmatmul.bf16.gmra.mxu0 %v9219
        %v9694 = vpop.f32.mrf.mxu0
        %v9695 = vadd.f32 0.0, %v9694
        %v9696 = vpop.f32.mrf.mxu0
        %v9697 = vadd.f32 0.0, %v9696
        %9698 = vmatmul.bf16.gmra.mxu0 %v9222
        %v9699 = vpop.f32.mrf.mxu0
        %v9700 = vadd.f32 0.0, %v9699
        %v9701 = vpop.f32.mrf.mxu0
        %v9702 = vadd.f32 0.0, %v9701
        %9703 = vmatmul.bf16.gmra.mxu0 %v9225
        %v9704 = vpop.f32.mrf.mxu0
        %v9705 = vadd.f32 0.0, %v9704
        %v9706 = vpop.f32.mrf.mxu0
        %v9707 = vadd.f32 0.0, %v9706
        %9708 = vmatmul.bf16.gmra.mxu0 %v9228
        %v9709 = vpop.f32.mrf.mxu0
        %v9710 = vadd.f32 0.0, %v9709
        %v9711 = vpop.f32.mrf.mxu0
        %v9712 = vadd.f32 0.0, %v9711
        %9713 = vmatmul.bf16.gmra.mxu0 %v9231
        %v9714 = vpop.f32.mrf.mxu0
        %v9715 = vadd.f32 0.0, %v9714
        %v9716 = vpop.f32.mrf.mxu0
        %v9717 = vadd.f32 0.0, %v9716
        %9718 = vmatmul.bf16.gmra.mxu0 %v9633
        %v9719 = vpop.f32.mrf.mxu0
        %v9720 = vadd.f32 0.0, %v9719
        %v9721 = vpop.f32.mrf.mxu0
        %v9722 = vadd.f32 0.0, %v9721
        %9723 = vdwg.mxu0
        %v9724 = vadd.f32 %v9590, %v9645
        %v9725 = vadd.f32 %v9591, %v9647
        %v9726 = vadd.f32 %v9592, %v9650
        %v9727 = vadd.f32 %v9593, %v9652
        %v9728 = vadd.f32 %v9594, %v9655
        %v9729 = vadd.f32 %v9595, %v9657
        %v9730 = vadd.f32 %v9596, %v9660
        %v9731 = vadd.f32 %v9597, %v9662
        %v9732 = vadd.f32 %v9598, %v9665
        %v9733 = vadd.f32 %v9599, %v9667
        %v9734 = vadd.f32 %v9600, %v9670
        %v9735 = vadd.f32 %v9601, %v9672
        %v9736 = vadd.f32 %v9602, %v9675
        %v9737 = vadd.f32 %v9603, %v9677
        %v9738 = vadd.f32 %v9604, %v9680
        %v9739 = vadd.f32 %v9605, %v9682
        %v9740 = vadd.f32 %v9606, %v9685
        %v9741 = vadd.f32 %v9607, %v9687
        %v9742 = vadd.f32 %v9608, %v9690
        %v9743 = vadd.f32 %v9609, %v9692
        %v9744 = vadd.f32 %v9610, %v9695
        %v9745 = vadd.f32 %v9611, %v9697
        %v9746 = vadd.f32 %v9612, %v9700
        %v9747 = vadd.f32 %v9613, %v9702
        %v9748 = vadd.f32 %v9614, %v9705
        %v9749 = vadd.f32 %v9615, %v9707
        %v9750 = vadd.f32 %v9616, %v9710
        %v9751 = vadd.f32 %v9617, %v9712
        %v9752 = vadd.f32 %v9618, %v9715
        %v9753 = vadd.f32 %v9619, %v9717
        %v9754 = vadd.f32 %v9620, %v9720
        %v9755 = vadd.f32 %v9621, %v9722
        %v9758 = vrot.slane %v8845, 1
        %v9759 = vrot.slane %v8781, 1
        %v9760 = vsel %vm1150, %v9758, %v9759
        %v9761 = vrot.slane %v8861, 1
        %v9762 = vsel %vm1150, %v9759, %v9761
        %v9765 = vpack.c.bf16 %v9762, %v9760
        %s9766 = scalar_lea.vmem %s3, 32
        %v9767 = vld [vmem:[%s9766] sm:$0xf]
        %v9768 = vld [vmem:[%s9766 + $0x4] sm:$0xf]
        %v9771 = vunpack.c.l.b16 %v9767
        %v9772 = vunpack.c.l.b16 %v9768
        %v9773 = vpack.c.b16 %v9772, %v9771
        %v9776 = vsel %vm9041, %v9765, 0
        %9778 = vmatpush.bf16.msra.mxu0 0
        %9779 = vmatpush.bf16.msra.mxu0 0
        %9780 = vmatpush.bf16.msra.mxu0 0
        %9781 = vmatpush.bf16.msra.mxu0 0
        %9782 = vmatpush.bf16.msra.mxu0 0
        %9783 = vmatpush.bf16.msra.mxu0 0
        %9784 = vmatpush.bf16.msra.mxu0 0
        %9785 = vmatpush.bf16.msra.mxu0 %v9773
        %9786 = vmatmul.bf16.gmra.mxu0 %v9046
        %v9787 = vpop.f32.mrf.mxu0
        %v9788 = vadd.f32 0.0, %v9787
        %v9789 = vpop.f32.mrf.mxu0
        %v9790 = vadd.f32 0.0, %v9789
        %9791 = vmatmul.bf16.gmra.mxu0 %v9049
        %v9792 = vpop.f32.mrf.mxu0
        %v9793 = vadd.f32 0.0, %v9792
        %v9794 = vpop.f32.mrf.mxu0
        %v9795 = vadd.f32 0.0, %v9794
        %9796 = vmatmul.bf16.gmra.mxu0 %v9052
        %v9797 = vpop.f32.mrf.mxu0
        %v9798 = vadd.f32 0.0, %v9797
        %v9799 = vpop.f32.mrf.mxu0
        %v9800 = vadd.f32 0.0, %v9799
        %9801 = vmatmul.bf16.gmra.mxu0 %v9055
        %v9802 = vpop.f32.mrf.mxu0
        %v9803 = vadd.f32 0.0, %v9802
        %v9804 = vpop.f32.mrf.mxu0
        %v9805 = vadd.f32 0.0, %v9804
        %9806 = vmatmul.bf16.gmra.mxu0 %v9058
        %v9807 = vpop.f32.mrf.mxu0
        %v9808 = vadd.f32 0.0, %v9807
        %v9809 = vpop.f32.mrf.mxu0
        %v9810 = vadd.f32 0.0, %v9809
        %9811 = vmatmul.bf16.gmra.mxu0 %v9061
        %v9812 = vpop.f32.mrf.mxu0
        %v9813 = vadd.f32 0.0, %v9812
        %v9814 = vpop.f32.mrf.mxu0
        %v9815 = vadd.f32 0.0, %v9814
        %9816 = vmatmul.bf16.gmra.mxu0 %v9064
        %v9817 = vpop.f32.mrf.mxu0
        %v9818 = vadd.f32 0.0, %v9817
        %v9819 = vpop.f32.mrf.mxu0
        %v9820 = vadd.f32 0.0, %v9819
        %9821 = vmatmul.bf16.gmra.mxu0 %v9067
        %v9822 = vpop.f32.mrf.mxu0
        %v9823 = vadd.f32 0.0, %v9822
        %v9824 = vpop.f32.mrf.mxu0
        %v9825 = vadd.f32 0.0, %v9824
        %9826 = vmatmul.bf16.gmra.mxu0 %v9070
        %v9827 = vpop.f32.mrf.mxu0
        %v9828 = vadd.f32 0.0, %v9827
        %v9829 = vpop.f32.mrf.mxu0
        %v9830 = vadd.f32 0.0, %v9829
        %9831 = vmatmul.bf16.gmra.mxu0 %v9073
        %v9832 = vpop.f32.mrf.mxu0
        %v9833 = vadd.f32 0.0, %v9832
        %v9834 = vpop.f32.mrf.mxu0
        %v9835 = vadd.f32 0.0, %v9834
        %9836 = vmatmul.bf16.gmra.mxu0 %v9076
        %v9837 = vpop.f32.mrf.mxu0
        %v9838 = vadd.f32 0.0, %v9837
        %v9839 = vpop.f32.mrf.mxu0
        %v9840 = vadd.f32 0.0, %v9839
        %9841 = vmatmul.bf16.gmra.mxu0 %v9079
        %v9842 = vpop.f32.mrf.mxu0
        %v9843 = vadd.f32 0.0, %v9842
        %v9844 = vpop.f32.mrf.mxu0
        %v9845 = vadd.f32 0.0, %v9844
        %9846 = vmatmul.bf16.gmra.mxu0 %v9082
        %v9847 = vpop.f32.mrf.mxu0
        %v9848 = vadd.f32 0.0, %v9847
        %v9849 = vpop.f32.mrf.mxu0
        %v9850 = vadd.f32 0.0, %v9849
        %9851 = vmatmul.bf16.gmra.mxu0 %v9085
        %v9852 = vpop.f32.mrf.mxu0
        %v9853 = vadd.f32 0.0, %v9852
        %v9854 = vpop.f32.mrf.mxu0
        %v9855 = vadd.f32 0.0, %v9854
        %9856 = vmatmul.bf16.gmra.mxu0 %v9088
        %v9857 = vpop.f32.mrf.mxu0
        %v9858 = vadd.f32 0.0, %v9857
        %v9859 = vpop.f32.mrf.mxu0
        %v9860 = vadd.f32 0.0, %v9859
        %9861 = vmatmul.bf16.gmra.mxu0 %v9776
        %v9862 = vpop.f32.mrf.mxu0
        %v9863 = vadd.f32 0.0, %v9862
        %v9864 = vpop.f32.mrf.mxu0
        %v9865 = vadd.f32 0.0, %v9864
        %9866 = vdwg.mxu0
        %v9867 = vadd.f32 %v9724, %v9788
        %v9868 = vadd.f32 %v9725, %v9790
        %v9869 = vadd.f32 %v9726, %v9793
        %v9870 = vadd.f32 %v9727, %v9795
        %v9871 = vadd.f32 %v9728, %v9798
        %v9872 = vadd.f32 %v9729, %v9800
        %v9873 = vadd.f32 %v9730, %v9803
        %v9874 = vadd.f32 %v9731, %v9805
        %v9875 = vadd.f32 %v9732, %v9808
        %v9876 = vadd.f32 %v9733, %v9810
        %v9877 = vadd.f32 %v9734, %v9813
        %v9878 = vadd.f32 %v9735, %v9815
        %v9879 = vadd.f32 %v9736, %v9818
        %v9880 = vadd.f32 %v9737, %v9820
        %v9881 = vadd.f32 %v9738, %v9823
        %v9882 = vadd.f32 %v9739, %v9825
        %v9883 = vadd.f32 %v9740, %v9828
        %v9884 = vadd.f32 %v9741, %v9830
        %v9885 = vadd.f32 %v9742, %v9833
        %v9886 = vadd.f32 %v9743, %v9835
        %v9887 = vadd.f32 %v9744, %v9838
        %v9888 = vadd.f32 %v9745, %v9840
        %v9889 = vadd.f32 %v9746, %v9843
        %v9890 = vadd.f32 %v9747, %v9845
        %v9891 = vadd.f32 %v9748, %v9848
        %v9892 = vadd.f32 %v9749, %v9850
        %v9893 = vadd.f32 %v9750, %v9853
        %v9894 = vadd.f32 %v9751, %v9855
        %v9895 = vadd.f32 %v9752, %v9858
        %v9896 = vadd.f32 %v9753, %v9860
        %v9897 = vadd.f32 %v9754, %v9863
        %v9898 = vadd.f32 %v9755, %v9865
        %v9899 = vrot.slane %v8845, 2
        %v9900 = vrot.slane %v8781, 2
        %v9901 = vsel %vm1432, %v9899, %v9900
        %v9902 = vrot.slane %v8861, 2
        %v9903 = vsel %vm1432, %v9900, %v9902
        %v9906 = vpack.c.bf16 %v9903, %v9901
        %s9907 = scalar_lea.vmem %s3, 40
        %v9908 = vld [vmem:[%s9907] sm:$0xf]
        %v9909 = vld [vmem:[%s9907 + $0x4] sm:$0xf]
        %v9912 = vunpack.c.l.b16 %v9908
        %v9913 = vunpack.c.l.b16 %v9909
        %v9914 = vpack.c.b16 %v9913, %v9912
        %v9917 = vsel %vm9041, %v9906, 0
        %9919 = vmatpush.bf16.msra.mxu0 0
        %9920 = vmatpush.bf16.msra.mxu0 0
        %9921 = vmatpush.bf16.msra.mxu0 0
        %9922 = vmatpush.bf16.msra.mxu0 0
        %9923 = vmatpush.bf16.msra.mxu0 0
        %9924 = vmatpush.bf16.msra.mxu0 0
        %9925 = vmatpush.bf16.msra.mxu0 0
        %9926 = vmatpush.bf16.msra.mxu0 %v9914
        %9927 = vmatmul.bf16.gmra.mxu0 %v9457
        %v9928 = vpop.f32.mrf.mxu0
        %v9929 = vadd.f32 0.0, %v9928
        %v9930 = vpop.f32.mrf.mxu0
        %v9931 = vadd.f32 0.0, %v9930
        %9932 = vmatmul.bf16.gmra.mxu0 %v9460
        %v9933 = vpop.f32.mrf.mxu0
        %v9934 = vadd.f32 0.0, %v9933
        %v9935 = vpop.f32.mrf.mxu0
        %v9936 = vadd.f32 0.0, %v9935
        %9937 = vmatmul.bf16.gmra.mxu0 %v9463
        %v9938 = vpop.f32.mrf.mxu0
        %v9939 = vadd.f32 0.0, %v9938
        %v9940 = vpop.f32.mrf.mxu0
        %v9941 = vadd.f32 0.0, %v9940
        %9942 = vmatmul.bf16.gmra.mxu0 %v9466
        %v9943 = vpop.f32.mrf.mxu0
        %v9944 = vadd.f32 0.0, %v9943
        %v9945 = vpop.f32.mrf.mxu0
        %v9946 = vadd.f32 0.0, %v9945
        %9947 = vmatmul.bf16.gmra.mxu0 %v9469
        %v9948 = vpop.f32.mrf.mxu0
        %v9949 = vadd.f32 0.0, %v9948
        %v9950 = vpop.f32.mrf.mxu0
        %v9951 = vadd.f32 0.0, %v9950
        %9952 = vmatmul.bf16.gmra.mxu0 %v9472
        %v9953 = vpop.f32.mrf.mxu0
        %v9954 = vadd.f32 0.0, %v9953
        %v9955 = vpop.f32.mrf.mxu0
        %v9956 = vadd.f32 0.0, %v9955
        %9957 = vmatmul.bf16.gmra.mxu0 %v9475
        %v9958 = vpop.f32.mrf.mxu0
        %v9959 = vadd.f32 0.0, %v9958
        %v9960 = vpop.f32.mrf.mxu0
        %v9961 = vadd.f32 0.0, %v9960
        %9962 = vmatmul.bf16.gmra.mxu0 %v9478
        %v9963 = vpop.f32.mrf.mxu0
        %v9964 = vadd.f32 0.0, %v9963
        %v9965 = vpop.f32.mrf.mxu0
        %v9966 = vadd.f32 0.0, %v9965
        %9967 = vmatmul.bf16.gmra.mxu0 %v9481
        %v9968 = vpop.f32.mrf.mxu0
        %v9969 = vadd.f32 0.0, %v9968
        %v9970 = vpop.f32.mrf.mxu0
        %v9971 = vadd.f32 0.0, %v9970
        %9972 = vmatmul.bf16.gmra.mxu0 %v9484
        %v9973 = vpop.f32.mrf.mxu0
        %v9974 = vadd.f32 0.0, %v9973
        %v9975 = vpop.f32.mrf.mxu0
        %v9976 = vadd.f32 0.0, %v9975
        %9977 = vmatmul.bf16.gmra.mxu0 %v9487
        %v9978 = vpop.f32.mrf.mxu0
        %v9979 = vadd.f32 0.0, %v9978
        %v9980 = vpop.f32.mrf.mxu0
        %v9981 = vadd.f32 0.0, %v9980
        %9982 = vmatmul.bf16.gmra.mxu0 %v9490
        %v9983 = vpop.f32.mrf.mxu0
        %v9984 = vadd.f32 0.0, %v9983
        %v9985 = vpop.f32.mrf.mxu0
        %v9986 = vadd.f32 0.0, %v9985
        %9987 = vmatmul.bf16.gmra.mxu0 %v9493
        %v9988 = vpop.f32.mrf.mxu0
        %v9989 = vadd.f32 0.0, %v9988
        %v9990 = vpop.f32.mrf.mxu0
        %v9991 = vadd.f32 0.0, %v9990
        %9992 = vmatmul.bf16.gmra.mxu0 %v9496
        %v9993 = vpop.f32.mrf.mxu0
        %v9994 = vadd.f32 0.0, %v9993
        %v9995 = vpop.f32.mrf.mxu0
        %v9996 = vadd.f32 0.0, %v9995
        %9997 = vmatmul.bf16.gmra.mxu0 %v9499
        %v9998 = vpop.f32.mrf.mxu0
        %v9999 = vadd.f32 0.0, %v9998
        %v10000 = vpop.f32.mrf.mxu0
        %v10001 = vadd.f32 0.0, %v10000
        %10002 = vmatmul.bf16.gmra.mxu0 %v9917
        %v10003 = vpop.f32.mrf.mxu0
        %v10004 = vadd.f32 0.0, %v10003
        %v10005 = vpop.f32.mrf.mxu0
        %v10006 = vadd.f32 0.0, %v10005
        %10007 = vdwg.mxu0
        %v10008 = vadd.f32 %v9867, %v9929
        %v10009 = vadd.f32 %v9868, %v9931
        %v10010 = vadd.f32 %v9869, %v9934
        %v10011 = vadd.f32 %v9870, %v9936
        %v10012 = vadd.f32 %v9871, %v9939
        %v10013 = vadd.f32 %v9872, %v9941
        %v10014 = vadd.f32 %v9873, %v9944
        %v10015 = vadd.f32 %v9874, %v9946
        %v10016 = vadd.f32 %v9875, %v9949
        %v10017 = vadd.f32 %v9876, %v9951
        %v10018 = vadd.f32 %v9877, %v9954
        %v10019 = vadd.f32 %v9878, %v9956
        %v10020 = vadd.f32 %v9879, %v9959
        %v10021 = vadd.f32 %v9880, %v9961
        %v10022 = vadd.f32 %v9881, %v9964
        %v10023 = vadd.f32 %v9882, %v9966
        %v10024 = vadd.f32 %v9883, %v9969
        %v10025 = vadd.f32 %v9884, %v9971
        %v10026 = vadd.f32 %v9885, %v9974
        %v10027 = vadd.f32 %v9886, %v9976
        %v10028 = vadd.f32 %v9887, %v9979
        %v10029 = vadd.f32 %v9888, %v9981
        %v10030 = vadd.f32 %v9889, %v9984
        %v10031 = vadd.f32 %v9890, %v9986
        %v10032 = vadd.f32 %v9891, %v9989
        %v10033 = vadd.f32 %v9892, %v9991
        %v10034 = vadd.f32 %v9893, %v9994
        %v10035 = vadd.f32 %v9894, %v9996
        %v10036 = vadd.f32 %v9895, %v9999
        %v10037 = vadd.f32 %v9896, %v10001
        %v10038 = vadd.f32 %v9897, %v10004
        %v10039 = vadd.f32 %v9898, %v10006
        %s10040 = scalar_lea.vmem %s3, 48
        %v10041 = vld [vmem:[%s10040] sm:$0xf]
        %v10042 = vld [vmem:[%s10040 + $0x4] sm:$0xf]
        %v10045 = vunpack.c.l.b16 %v10041
        %v10046 = vunpack.c.l.b16 %v10042
        %v10047 = vpack.c.b16 %v10046, %v10045
        %10049 = vmatpush.bf16.msra.mxu0 0
        %10050 = vmatpush.bf16.msra.mxu0 0
        %10051 = vmatpush.bf16.msra.mxu0 0
        %10052 = vmatpush.bf16.msra.mxu0 0
        %10053 = vmatpush.bf16.msra.mxu0 0
        %10054 = vmatpush.bf16.msra.mxu0 0
        %10055 = vmatpush.bf16.msra.mxu0 0
        %10056 = vmatpush.bf16.msra.mxu0 %v10047
        %10057 = vmatmul.bf16.gmra.mxu0 %v9192
        %v10058 = vpop.f32.mrf.mxu0
        %v10059 = vadd.f32 0.0, %v10058
        %v10060 = vpop.f32.mrf.mxu0
        %v10061 = vadd.f32 0.0, %v10060
        %10062 = vmatmul.bf16.gmra.mxu0 %v9195
        %v10063 = vpop.f32.mrf.mxu0
        %v10064 = vadd.f32 0.0, %v10063
        %v10065 = vpop.f32.mrf.mxu0
        %v10066 = vadd.f32 0.0, %v10065
        %10067 = vmatmul.bf16.gmra.mxu0 %v9198
        %v10068 = vpop.f32.mrf.mxu0
        %v10069 = vadd.f32 0.0, %v10068
        %v10070 = vpop.f32.mrf.mxu0
        %v10071 = vadd.f32 0.0, %v10070
        %10072 = vmatmul.bf16.gmra.mxu0 %v9201
        %v10073 = vpop.f32.mrf.mxu0
        %v10074 = vadd.f32 0.0, %v10073
        %v10075 = vpop.f32.mrf.mxu0
        %v10076 = vadd.f32 0.0, %v10075
        %10077 = vmatmul.bf16.gmra.mxu0 %v9204
        %v10078 = vpop.f32.mrf.mxu0
        %v10079 = vadd.f32 0.0, %v10078
        %v10080 = vpop.f32.mrf.mxu0
        %v10081 = vadd.f32 0.0, %v10080
        %10082 = vmatmul.bf16.gmra.mxu0 %v9207
        %v10083 = vpop.f32.mrf.mxu0
        %v10084 = vadd.f32 0.0, %v10083
        %v10085 = vpop.f32.mrf.mxu0
        %v10086 = vadd.f32 0.0, %v10085
        %10087 = vmatmul.bf16.gmra.mxu0 %v9210
        %v10088 = vpop.f32.mrf.mxu0
        %v10089 = vadd.f32 0.0, %v10088
        %v10090 = vpop.f32.mrf.mxu0
        %v10091 = vadd.f32 0.0, %v10090
        %10092 = vmatmul.bf16.gmra.mxu0 %v9213
        %v10093 = vpop.f32.mrf.mxu0
        %v10094 = vadd.f32 0.0, %v10093
        %v10095 = vpop.f32.mrf.mxu0
        %v10096 = vadd.f32 0.0, %v10095
        %10097 = vmatmul.bf16.gmra.mxu0 %v9216
        %v10098 = vpop.f32.mrf.mxu0
        %v10099 = vadd.f32 0.0, %v10098
        %v10100 = vpop.f32.mrf.mxu0
        %v10101 = vadd.f32 0.0, %v10100
        %10102 = vmatmul.bf16.gmra.mxu0 %v9219
        %v10103 = vpop.f32.mrf.mxu0
        %v10104 = vadd.f32 0.0, %v10103
        %v10105 = vpop.f32.mrf.mxu0
        %v10106 = vadd.f32 0.0, %v10105
        %10107 = vmatmul.bf16.gmra.mxu0 %v9222
        %v10108 = vpop.f32.mrf.mxu0
        %v10109 = vadd.f32 0.0, %v10108
        %v10110 = vpop.f32.mrf.mxu0
        %v10111 = vadd.f32 0.0, %v10110
        %10112 = vmatmul.bf16.gmra.mxu0 %v9225
        %v10113 = vpop.f32.mrf.mxu0
        %v10114 = vadd.f32 0.0, %v10113
        %v10115 = vpop.f32.mrf.mxu0
        %v10116 = vadd.f32 0.0, %v10115
        %10117 = vmatmul.bf16.gmra.mxu0 %v9228
        %v10118 = vpop.f32.mrf.mxu0
        %v10119 = vadd.f32 0.0, %v10118
        %v10120 = vpop.f32.mrf.mxu0
        %v10121 = vadd.f32 0.0, %v10120
        %10122 = vmatmul.bf16.gmra.mxu0 %v9231
        %v10123 = vpop.f32.mrf.mxu0
        %v10124 = vadd.f32 0.0, %v10123
        %v10125 = vpop.f32.mrf.mxu0
        %v10126 = vadd.f32 0.0, %v10125
        %10127 = vmatmul.bf16.gmra.mxu0 %v9633
        %v10128 = vpop.f32.mrf.mxu0
        %v10129 = vadd.f32 0.0, %v10128
        %v10130 = vpop.f32.mrf.mxu0
        %v10131 = vadd.f32 0.0, %v10130
        %10132 = vmatmul.bf16.gmra.mxu0 %v9186
        %v10133 = vpop.f32.mrf.mxu0
        %v10134 = vadd.f32 0.0, %v10133
        %v10135 = vpop.f32.mrf.mxu0
        %v10136 = vadd.f32 0.0, %v10135
        %10137 = vdwg.mxu0
        %v10138 = vadd.f32 %v10008, %v10059
        %v10139 = vadd.f32 %v10009, %v10061
        %v10140 = vadd.f32 %v10010, %v10064
        %v10141 = vadd.f32 %v10011, %v10066
        %v10142 = vadd.f32 %v10012, %v10069
        %v10143 = vadd.f32 %v10013, %v10071
        %v10144 = vadd.f32 %v10014, %v10074
        %v10145 = vadd.f32 %v10015, %v10076
        %v10146 = vadd.f32 %v10016, %v10079
        %v10147 = vadd.f32 %v10017, %v10081
        %v10148 = vadd.f32 %v10018, %v10084
        %v10149 = vadd.f32 %v10019, %v10086
        %v10150 = vadd.f32 %v10020, %v10089
        %v10151 = vadd.f32 %v10021, %v10091
        %v10152 = vadd.f32 %v10022, %v10094
        %v10153 = vadd.f32 %v10023, %v10096
        %v10154 = vadd.f32 %v10024, %v10099
        %v10155 = vadd.f32 %v10025, %v10101
        %v10156 = vadd.f32 %v10026, %v10104
        %v10157 = vadd.f32 %v10027, %v10106
        %v10158 = vadd.f32 %v10028, %v10109
        %v10159 = vadd.f32 %v10029, %v10111
        %v10160 = vadd.f32 %v10030, %v10114
        %v10161 = vadd.f32 %v10031, %v10116
        %v10162 = vadd.f32 %v10032, %v10119
        %v10163 = vadd.f32 %v10033, %v10121
        %v10164 = vadd.f32 %v10034, %v10124
        %v10165 = vadd.f32 %v10035, %v10126
        %v10166 = vadd.f32 %v10036, %v10129
        %v10167 = vadd.f32 %v10037, %v10131
        %v10168 = vadd.f32 %v10038, %v10134
        %v10169 = vadd.f32 %v10039, %v10136
        %s10170 = scalar_lea.vmem %s3, 56
        %v10171 = vld [vmem:[%s10170] sm:$0xf]
        %v10172 = vld [vmem:[%s10170 + $0x4] sm:$0xf]
        %v10175 = vunpack.c.l.b16 %v10171
        %v10176 = vunpack.c.l.b16 %v10172
        %v10177 = vpack.c.b16 %v10176, %v10175
        %10179 = vmatpush.bf16.msra.mxu0 0
        %10180 = vmatpush.bf16.msra.mxu0 0
        %10181 = vmatpush.bf16.msra.mxu0 0
        %10182 = vmatpush.bf16.msra.mxu0 0
        %10183 = vmatpush.bf16.msra.mxu0 0
        %10184 = vmatpush.bf16.msra.mxu0 0
        %10185 = vmatpush.bf16.msra.mxu0 0
        %10186 = vmatpush.bf16.msra.mxu0 %v10177
        %10187 = vmatmul.bf16.gmra.mxu0 %v9049
        %v10188 = vpop.f32.mrf.mxu0
        %v10189 = vadd.f32 0.0, %v10188
        %v10190 = vpop.f32.mrf.mxu0
        %v10191 = vadd.f32 0.0, %v10190
        %10192 = vmatmul.bf16.gmra.mxu0 %v9052
        %v10193 = vpop.f32.mrf.mxu0
        %v10194 = vadd.f32 0.0, %v10193
        %v10195 = vpop.f32.mrf.mxu0
        %v10196 = vadd.f32 0.0, %v10195
        %10197 = vmatmul.bf16.gmra.mxu0 %v9055
        %v10198 = vpop.f32.mrf.mxu0
        %v10199 = vadd.f32 0.0, %v10198
        %v10200 = vpop.f32.mrf.mxu0
        %v10201 = vadd.f32 0.0, %v10200
        %10202 = vmatmul.bf16.gmra.mxu0 %v9058
        %v10203 = vpop.f32.mrf.mxu0
        %v10204 = vadd.f32 0.0, %v10203
        %v10205 = vpop.f32.mrf.mxu0
        %v10206 = vadd.f32 0.0, %v10205
        %10207 = vmatmul.bf16.gmra.mxu0 %v9061
        %v10208 = vpop.f32.mrf.mxu0
        %v10209 = vadd.f32 0.0, %v10208
        %v10210 = vpop.f32.mrf.mxu0
        %v10211 = vadd.f32 0.0, %v10210
        %10212 = vmatmul.bf16.gmra.mxu0 %v9064
        %v10213 = vpop.f32.mrf.mxu0
        %v10214 = vadd.f32 0.0, %v10213
        %v10215 = vpop.f32.mrf.mxu0
        %v10216 = vadd.f32 0.0, %v10215
        %10217 = vmatmul.bf16.gmra.mxu0 %v9067
        %v10218 = vpop.f32.mrf.mxu0
        %v10219 = vadd.f32 0.0, %v10218
        %v10220 = vpop.f32.mrf.mxu0
        %v10221 = vadd.f32 0.0, %v10220
        %10222 = vmatmul.bf16.gmra.mxu0 %v9070
        %v10223 = vpop.f32.mrf.mxu0
        %v10224 = vadd.f32 0.0, %v10223
        %v10225 = vpop.f32.mrf.mxu0
        %v10226 = vadd.f32 0.0, %v10225
        %10227 = vmatmul.bf16.gmra.mxu0 %v9073
        %v10228 = vpop.f32.mrf.mxu0
        %v10229 = vadd.f32 0.0, %v10228
        %v10230 = vpop.f32.mrf.mxu0
        %v10231 = vadd.f32 0.0, %v10230
        %10232 = vmatmul.bf16.gmra.mxu0 %v9076
        %v10233 = vpop.f32.mrf.mxu0
        %v10234 = vadd.f32 0.0, %v10233
        %v10235 = vpop.f32.mrf.mxu0
        %v10236 = vadd.f32 0.0, %v10235
        %10237 = vmatmul.bf16.gmra.mxu0 %v9079
        %v10238 = vpop.f32.mrf.mxu0
        %v10239 = vadd.f32 0.0, %v10238
        %v10240 = vpop.f32.mrf.mxu0
        %v10241 = vadd.f32 0.0, %v10240
        %10242 = vmatmul.bf16.gmra.mxu0 %v9082
        %v10243 = vpop.f32.mrf.mxu0
        %v10244 = vadd.f32 0.0, %v10243
        %v10245 = vpop.f32.mrf.mxu0
        %v10246 = vadd.f32 0.0, %v10245
        %10247 = vmatmul.bf16.gmra.mxu0 %v9085
        %v10248 = vpop.f32.mrf.mxu0
        %v10249 = vadd.f32 0.0, %v10248
        %v10250 = vpop.f32.mrf.mxu0
        %v10251 = vadd.f32 0.0, %v10250
        %10252 = vmatmul.bf16.gmra.mxu0 %v9088
        %v10253 = vpop.f32.mrf.mxu0
        %v10254 = vadd.f32 0.0, %v10253
        %v10255 = vpop.f32.mrf.mxu0
        %v10256 = vadd.f32 0.0, %v10255
        %10257 = vmatmul.bf16.gmra.mxu0 %v9776
        %v10258 = vpop.f32.mrf.mxu0
        %v10259 = vadd.f32 0.0, %v10258
        %v10260 = vpop.f32.mrf.mxu0
        %v10261 = vadd.f32 0.0, %v10260
        %10262 = vmatmul.bf16.gmra.mxu0 %v9043
        %v10263 = vpop.f32.mrf.mxu0
        %v10264 = vadd.f32 0.0, %v10263
        %v10265 = vpop.f32.mrf.mxu0
        %v10266 = vadd.f32 0.0, %v10265
        %10267 = vdwg.mxu0
        %v10268 = vadd.f32 %v10138, %v10189
        %v10269 = vadd.f32 %v10139, %v10191
        %v10270 = vadd.f32 %v10140, %v10194
        %v10271 = vadd.f32 %v10141, %v10196
        %v10272 = vadd.f32 %v10142, %v10199
        %v10273 = vadd.f32 %v10143, %v10201
        %v10274 = vadd.f32 %v10144, %v10204
        %v10275 = vadd.f32 %v10145, %v10206
        %v10276 = vadd.f32 %v10146, %v10209
        %v10277 = vadd.f32 %v10147, %v10211
        %v10278 = vadd.f32 %v10148, %v10214
        %v10279 = vadd.f32 %v10149, %v10216
        %v10280 = vadd.f32 %v10150, %v10219
        %v10281 = vadd.f32 %v10151, %v10221
        %v10282 = vadd.f32 %v10152, %v10224
        %v10283 = vadd.f32 %v10153, %v10226
        %v10284 = vadd.f32 %v10154, %v10229
        %v10285 = vadd.f32 %v10155, %v10231
        %v10286 = vadd.f32 %v10156, %v10234
        %v10287 = vadd.f32 %v10157, %v10236
        %v10288 = vadd.f32 %v10158, %v10239
        %v10289 = vadd.f32 %v10159, %v10241
        %v10290 = vadd.f32 %v10160, %v10244
        %v10291 = vadd.f32 %v10161, %v10246
        %v10292 = vadd.f32 %v10162, %v10249
        %v10293 = vadd.f32 %v10163, %v10251
        %v10294 = vadd.f32 %v10164, %v10254
        %v10295 = vadd.f32 %v10165, %v10256
        %v10296 = vadd.f32 %v10166, %v10259
        %v10297 = vadd.f32 %v10167, %v10261
        %v10298 = vadd.f32 %v10168, %v10264
        %v10299 = vadd.f32 %v10169, %v10266
        %s10300 = scalar_lea.vmem %s3, 64
        %v10301 = vld [vmem:[%s10300] sm:$0xf]
        %v10302 = vld [vmem:[%s10300 + $0x4] sm:$0xf]
        %v10305 = vunpack.c.l.b16 %v10301
        %v10306 = vunpack.c.l.b16 %v10302
        %v10307 = vpack.c.b16 %v10306, %v10305
        %10309 = vmatpush.bf16.msra.mxu0 0
        %10310 = vmatpush.bf16.msra.mxu0 0
        %10311 = vmatpush.bf16.msra.mxu0 0
        %10312 = vmatpush.bf16.msra.mxu0 0
        %10313 = vmatpush.bf16.msra.mxu0 0
        %10314 = vmatpush.bf16.msra.mxu0 0
        %10315 = vmatpush.bf16.msra.mxu0 0
        %10316 = vmatpush.bf16.msra.mxu0 %v10307
        %10317 = vmatmul.bf16.gmra.mxu0 %v9460
        %v10318 = vpop.f32.mrf.mxu0
        %v10319 = vadd.f32 0.0, %v10318
        %v10320 = vpop.f32.mrf.mxu0
        %v10321 = vadd.f32 0.0, %v10320
        %10322 = vmatmul.bf16.gmra.mxu0 %v9463
        %v10323 = vpop.f32.mrf.mxu0
        %v10324 = vadd.f32 0.0, %v10323
        %v10325 = vpop.f32.mrf.mxu0
        %v10326 = vadd.f32 0.0, %v10325
        %10327 = vmatmul.bf16.gmra.mxu0 %v9466
        %v10328 = vpop.f32.mrf.mxu0
        %v10329 = vadd.f32 0.0, %v10328
        %v10330 = vpop.f32.mrf.mxu0
        %v10331 = vadd.f32 0.0, %v10330
        %10332 = vmatmul.bf16.gmra.mxu0 %v9469
        %v10333 = vpop.f32.mrf.mxu0
        %v10334 = vadd.f32 0.0, %v10333
        %v10335 = vpop.f32.mrf.mxu0
        %v10336 = vadd.f32 0.0, %v10335
        %10337 = vmatmul.bf16.gmra.mxu0 %v9472
        %v10338 = vpop.f32.mrf.mxu0
        %v10339 = vadd.f32 0.0, %v10338
        %v10340 = vpop.f32.mrf.mxu0
        %v10341 = vadd.f32 0.0, %v10340
        %10342 = vmatmul.bf16.gmra.mxu0 %v9475
        %v10343 = vpop.f32.mrf.mxu0
        %v10344 = vadd.f32 0.0, %v10343
        %v10345 = vpop.f32.mrf.mxu0
        %v10346 = vadd.f32 0.0, %v10345
        %10347 = vmatmul.bf16.gmra.mxu0 %v9478
        %v10348 = vpop.f32.mrf.mxu0
        %v10349 = vadd.f32 0.0, %v10348
        %v10350 = vpop.f32.mrf.mxu0
        %v10351 = vadd.f32 0.0, %v10350
        %10352 = vmatmul.bf16.gmra.mxu0 %v9481
        %v10353 = vpop.f32.mrf.mxu0
        %v10354 = vadd.f32 0.0, %v10353
        %v10355 = vpop.f32.mrf.mxu0
        %v10356 = vadd.f32 0.0, %v10355
        %10357 = vmatmul.bf16.gmra.mxu0 %v9484
        %v10358 = vpop.f32.mrf.mxu0
        %v10359 = vadd.f32 0.0, %v10358
        %v10360 = vpop.f32.mrf.mxu0
        %v10361 = vadd.f32 0.0, %v10360
        %10362 = vmatmul.bf16.gmra.mxu0 %v9487
        %v10363 = vpop.f32.mrf.mxu0
        %v10364 = vadd.f32 0.0, %v10363
        %v10365 = vpop.f32.mrf.mxu0
        %v10366 = vadd.f32 0.0, %v10365
        %10367 = vmatmul.bf16.gmra.mxu0 %v9490
        %v10368 = vpop.f32.mrf.mxu0
        %v10369 = vadd.f32 0.0, %v10368
        %v10370 = vpop.f32.mrf.mxu0
        %v10371 = vadd.f32 0.0, %v10370
        %10372 = vmatmul.bf16.gmra.mxu0 %v9493
        %v10373 = vpop.f32.mrf.mxu0
        %v10374 = vadd.f32 0.0, %v10373
        %v10375 = vpop.f32.mrf.mxu0
        %v10376 = vadd.f32 0.0, %v10375
        %10377 = vmatmul.bf16.gmra.mxu0 %v9496
        %v10378 = vpop.f32.mrf.mxu0
        %v10379 = vadd.f32 0.0, %v10378
        %v10380 = vpop.f32.mrf.mxu0
        %v10381 = vadd.f32 0.0, %v10380
        %10382 = vmatmul.bf16.gmra.mxu0 %v9499
        %v10383 = vpop.f32.mrf.mxu0
        %v10384 = vadd.f32 0.0, %v10383
        %v10385 = vpop.f32.mrf.mxu0
        %v10386 = vadd.f32 0.0, %v10385
        %10387 = vmatmul.bf16.gmra.mxu0 %v9917
        %v10388 = vpop.f32.mrf.mxu0
        %v10389 = vadd.f32 0.0, %v10388
        %v10390 = vpop.f32.mrf.mxu0
        %v10391 = vadd.f32 0.0, %v10390
        %10392 = vmatmul.bf16.gmra.mxu0 %v9454
        %v10393 = vpop.f32.mrf.mxu0
        %v10394 = vadd.f32 0.0, %v10393
        %v10395 = vpop.f32.mrf.mxu0
        %v10396 = vadd.f32 0.0, %v10395
        %10397 = vdwg.mxu0
        %v10398 = vadd.f32 %v10268, %v10319
        %v10399 = vadd.f32 %v10269, %v10321
        %v10400 = vadd.f32 %v10270, %v10324
        %v10401 = vadd.f32 %v10271, %v10326
        %v10402 = vadd.f32 %v10272, %v10329
        %v10403 = vadd.f32 %v10273, %v10331
        %v10404 = vadd.f32 %v10274, %v10334
        %v10405 = vadd.f32 %v10275, %v10336
        %v10406 = vadd.f32 %v10276, %v10339
        %v10407 = vadd.f32 %v10277, %v10341
        %v10408 = vadd.f32 %v10278, %v10344
        %v10409 = vadd.f32 %v10279, %v10346
        %v10410 = vadd.f32 %v10280, %v10349
        %v10411 = vadd.f32 %v10281, %v10351
        %v10412 = vadd.f32 %v10282, %v10354
        %v10413 = vadd.f32 %v10283, %v10356
        %v10414 = vadd.f32 %v10284, %v10359
        %v10415 = vadd.f32 %v10285, %v10361
        %v10416 = vadd.f32 %v10286, %v10364
        %v10417 = vadd.f32 %v10287, %v10366
        %v10418 = vadd.f32 %v10288, %v10369
        %v10419 = vadd.f32 %v10289, %v10371
        %v10420 = vadd.f32 %v10290, %v10374
        %v10421 = vadd.f32 %v10291, %v10376
        %v10422 = vadd.f32 %v10292, %v10379
        %v10423 = vadd.f32 %v10293, %v10381
        %v10424 = vadd.f32 %v10294, %v10384
        %v10425 = vadd.f32 %v10295, %v10386
        %v10426 = vadd.f32 %v10296, %v10389
        %v10427 = vadd.f32 %v10297, %v10391
        %v10428 = vadd.f32 %v10298, %v10394
        %v10429 = vadd.f32 %v10299, %v10396
        %v10430 = vld [vmem:[%s4] sm:$0x1]
        %v10432 = vperm.slane %v10430, 0
        %v10434 = vadd.f32 %v10398, %v10432
        %v10435 = vadd.f32 %v10399, %v10432
        %v10436 = vadd.f32 %v10400, %v10432
        %v10437 = vadd.f32 %v10401, %v10432
        %v10438 = vadd.f32 %v10402, %v10432
        %v10439 = vadd.f32 %v10403, %v10432
        %v10440 = vadd.f32 %v10404, %v10432
        %v10441 = vadd.f32 %v10405, %v10432
        %v10442 = vadd.f32 %v10406, %v10432
        %v10443 = vadd.f32 %v10407, %v10432
        %v10444 = vadd.f32 %v10408, %v10432
        %v10445 = vadd.f32 %v10409, %v10432
        %v10446 = vadd.f32 %v10410, %v10432
        %v10447 = vadd.f32 %v10411, %v10432
        %v10448 = vadd.f32 %v10412, %v10432
        %v10449 = vadd.f32 %v10413, %v10432
        %v10450 = vadd.f32 %v10414, %v10432
        %v10451 = vadd.f32 %v10415, %v10432
        %v10452 = vadd.f32 %v10416, %v10432
        %v10453 = vadd.f32 %v10417, %v10432
        %v10454 = vadd.f32 %v10418, %v10432
        %v10455 = vadd.f32 %v10419, %v10432
        %v10456 = vadd.f32 %v10420, %v10432
        %v10457 = vadd.f32 %v10421, %v10432
        %v10458 = vadd.f32 %v10422, %v10432
        %v10459 = vadd.f32 %v10423, %v10432
        %v10460 = vadd.f32 %v10424, %v10432
        %v10461 = vadd.f32 %v10425, %v10432
        %v10462 = vadd.f32 %v10426, %v10432
        %v10463 = vadd.f32 %v10427, %v10432
        %v10464 = vadd.f32 %v10428, %v10432
        %v10465 = vadd.f32 %v10429, %v10432
        %v10466 = vmax.f32 %v10434, 0.0
        %v10467 = vmax.f32 %v10435, 0.0
        %v10468 = vmax.f32 %v10436, 0.0
        %v10469 = vmax.f32 %v10437, 0.0
        %v10470 = vmax.f32 %v10438, 0.0
        %v10471 = vmax.f32 %v10439, 0.0
        %v10472 = vmax.f32 %v10440, 0.0
        %v10473 = vmax.f32 %v10441, 0.0
        %v10474 = vmax.f32 %v10442, 0.0
        %v10475 = vmax.f32 %v10443, 0.0
        %v10476 = vmax.f32 %v10444, 0.0
        %v10477 = vmax.f32 %v10445, 0.0
        %v10478 = vmax.f32 %v10446, 0.0
        %v10479 = vmax.f32 %v10447, 0.0
        %v10480 = vmax.f32 %v10448, 0.0
        %v10481 = vmax.f32 %v10449, 0.0
        %v10482 = vmax.f32 %v10450, 0.0
        %v10483 = vmax.f32 %v10451, 0.0
        %v10484 = vmax.f32 %v10452, 0.0
        %v10485 = vmax.f32 %v10453, 0.0
        %v10486 = vmax.f32 %v10454, 0.0
        %v10487 = vmax.f32 %v10455, 0.0
        %v10488 = vmax.f32 %v10456, 0.0
        %v10489 = vmax.f32 %v10457, 0.0
        %v10490 = vmax.f32 %v10458, 0.0
        %v10491 = vmax.f32 %v10459, 0.0
        %v10492 = vmax.f32 %v10460, 0.0
        %v10493 = vmax.f32 %v10461, 0.0
        %v10494 = vmax.f32 %v10462, 0.0
        %v10495 = vmax.f32 %v10463, 0.0
        %v10496 = vmax.f32 %v10464, 0.0
        %v10497 = vmax.f32 %v10465, 0.0
        %v10498 = vmax.f32 %v10466, %v10468
        %v10499 = vmax.f32 %v10467, %v10469
        %v10500 = vmax.f32 %v10470, %v10472
        %v10501 = vmax.f32 %v10471, %v10473
        %v10502 = vmax.f32 %v10474, %v10476
        %v10503 = vmax.f32 %v10475, %v10477
        %v10504 = vmax.f32 %v10478, %v10480
        %v10505 = vmax.f32 %v10479, %v10481
        %v10506 = vmax.f32 %v10482, %v10484
        %v10507 = vmax.f32 %v10483, %v10485
        %v10508 = vmax.f32 %v10486, %v10488
        %v10509 = vmax.f32 %v10487, %v10489
        %v10510 = vmax.f32 %v10490, %v10492
        %v10511 = vmax.f32 %v10491, %v10493
        %v10512 = vmax.f32 %v10494, %v10496
        %v10513 = vmax.f32 %v10495, %v10497
        %v10530 = vrot.slane %v10498, 2
        %v10531 = vrot.slane %v10498, 4
        %v10532 = vrot.slane %v10498, 6
        %v10533 = vrot.slane %v10499, 2
        %v10534 = vrot.slane %v10499, 4
        %v10535 = vrot.slane %v10499, 6
        %v10536 = vrot.slane %v10500, 2
        %v10537 = vrot.slane %v10500, 4
        %v10538 = vrot.slane %v10500, 6
        %v10539 = vrot.slane %v10501, 2
        %v10540 = vrot.slane %v10501, 4
        %v10541 = vrot.slane %v10501, 6
        %v10542 = vrot.slane %v10502, 2
        %v10543 = vrot.slane %v10502, 4
        %v10544 = vrot.slane %v10502, 6
        %v10545 = vrot.slane %v10503, 2
        %v10546 = vrot.slane %v10503, 4
        %v10547 = vrot.slane %v10503, 6
        %v10548 = vrot.slane %v10504, 2
        %v10549 = vrot.slane %v10504, 4
        %v10550 = vrot.slane %v10504, 6
        %v10551 = vrot.slane %v10505, 2
        %v10552 = vrot.slane %v10505, 4
        %v10553 = vrot.slane %v10505, 6
        %v10554 = vrot.slane %v10506, 2
        %v10555 = vrot.slane %v10506, 4
        %v10556 = vrot.slane %v10506, 6
        %v10557 = vrot.slane %v10507, 2
        %v10558 = vrot.slane %v10507, 4
        %v10559 = vrot.slane %v10507, 6
        %v10560 = vrot.slane %v10508, 2
        %v10561 = vrot.slane %v10508, 4
        %v10562 = vrot.slane %v10508, 6
        %v10563 = vrot.slane %v10509, 2
        %v10564 = vrot.slane %v10509, 4
        %v10565 = vrot.slane %v10509, 6
        %v10566 = vrot.slane %v10510, 2
        %v10567 = vrot.slane %v10510, 4
        %v10568 = vrot.slane %v10510, 6
        %v10569 = vrot.slane %v10511, 2
        %v10570 = vrot.slane %v10511, 4
        %v10571 = vrot.slane %v10511, 6
        %v10572 = vrot.slane %v10512, 2
        %v10573 = vrot.slane %v10512, 4
        %v10574 = vrot.slane %v10512, 6
        %v10575 = vrot.slane %v10513, 2
        %v10576 = vrot.slane %v10513, 4
        %v10577 = vrot.slane %v10513, 6
        %v10626 = vrot.slane %v10498, 7
        %v10627 = vrot.slane %v10626, 2
        %v10628 = vrot.slane %v10530, 7
        %v10629 = vrot.slane %v10628, 2
        %v10630 = vrot.slane %v10531, 7
        %v10631 = vrot.slane %v10630, 2
        %v10632 = vrot.slane %v10532, 7
        %v10633 = vrot.slane %v10632, 2
        %v10634 = vrot.slane %v10499, 7
        %v10635 = vrot.slane %v10634, 2
        %v10636 = vrot.slane %v10533, 7
        %v10637 = vrot.slane %v10636, 2
        %v10638 = vrot.slane %v10534, 7
        %v10639 = vrot.slane %v10638, 2
        %v10640 = vrot.slane %v10535, 7
        %v10641 = vrot.slane %v10640, 2
        %v10642 = vrot.slane %v10500, 7
        %v10643 = vrot.slane %v10642, 2
        %v10644 = vrot.slane %v10536, 7
        %v10645 = vrot.slane %v10644, 2
        %v10646 = vrot.slane %v10537, 7
        %v10647 = vrot.slane %v10646, 2
        %v10648 = vrot.slane %v10538, 7
        %v10649 = vrot.slane %v10648, 2
        %v10650 = vrot.slane %v10501, 7
        %v10651 = vrot.slane %v10650, 2
        %v10652 = vrot.slane %v10539, 7
        %v10653 = vrot.slane %v10652, 2
        %v10654 = vrot.slane %v10540, 7
        %v10655 = vrot.slane %v10654, 2
        %v10656 = vrot.slane %v10541, 7
        %v10657 = vrot.slane %v10656, 2
        %v10658 = vrot.slane %v10502, 7
        %v10659 = vrot.slane %v10658, 2
        %v10660 = vrot.slane %v10542, 7
        %v10661 = vrot.slane %v10660, 2
        %v10662 = vrot.slane %v10543, 7
        %v10663 = vrot.slane %v10662, 2
        %v10664 = vrot.slane %v10544, 7
        %v10665 = vrot.slane %v10664, 2
        %v10666 = vrot.slane %v10503, 7
        %v10667 = vrot.slane %v10666, 2
        %v10668 = vrot.slane %v10545, 7
        %v10669 = vrot.slane %v10668, 2
        %v10670 = vrot.slane %v10546, 7
        %v10671 = vrot.slane %v10670, 2
        %v10672 = vrot.slane %v10547, 7
        %v10673 = vrot.slane %v10672, 2
        %v10674 = vrot.slane %v10504, 7
        %v10675 = vrot.slane %v10674, 2
        %v10676 = vrot.slane %v10548, 7
        %v10677 = vrot.slane %v10676, 2
        %v10678 = vrot.slane %v10549, 7
        %v10679 = vrot.slane %v10678, 2
        %v10680 = vrot.slane %v10550, 7
        %v10681 = vrot.slane %v10680, 2
        %v10682 = vrot.slane %v10505, 7
        %v10683 = vrot.slane %v10682, 2
        %v10684 = vrot.slane %v10551, 7
        %v10685 = vrot.slane %v10684, 2
        %v10686 = vrot.slane %v10552, 7
        %v10687 = vrot.slane %v10686, 2
        %v10688 = vrot.slane %v10553, 7
        %v10689 = vrot.slane %v10688, 2
        %v10690 = vrot.slane %v10506, 7
        %v10691 = vrot.slane %v10690, 2
        %v10692 = vrot.slane %v10554, 7
        %v10693 = vrot.slane %v10692, 2
        %v10694 = vrot.slane %v10555, 7
        %v10695 = vrot.slane %v10694, 2
        %v10696 = vrot.slane %v10556, 7
        %v10697 = vrot.slane %v10696, 2
        %v10698 = vrot.slane %v10507, 7
        %v10699 = vrot.slane %v10698, 2
        %v10700 = vrot.slane %v10557, 7
        %v10701 = vrot.slane %v10700, 2
        %v10702 = vrot.slane %v10558, 7
        %v10703 = vrot.slane %v10702, 2
        %v10704 = vrot.slane %v10559, 7
        %v10705 = vrot.slane %v10704, 2
        %v10706 = vrot.slane %v10508, 7
        %v10707 = vrot.slane %v10706, 2
        %v10708 = vrot.slane %v10560, 7
        %v10709 = vrot.slane %v10708, 2
        %v10710 = vrot.slane %v10561, 7
        %v10711 = vrot.slane %v10710, 2
        %v10712 = vrot.slane %v10562, 7
        %v10713 = vrot.slane %v10712, 2
        %v10714 = vrot.slane %v10509, 7
        %v10715 = vrot.slane %v10714, 2
        %v10716 = vrot.slane %v10563, 7
        %v10717 = vrot.slane %v10716, 2
        %v10718 = vrot.slane %v10564, 7
        %v10719 = vrot.slane %v10718, 2
        %v10720 = vrot.slane %v10565, 7
        %v10721 = vrot.slane %v10720, 2
        %v10722 = vrot.slane %v10510, 7
        %v10723 = vrot.slane %v10722, 2
        %v10724 = vrot.slane %v10566, 7
        %v10725 = vrot.slane %v10724, 2
        %v10726 = vrot.slane %v10567, 7
        %v10727 = vrot.slane %v10726, 2
        %v10728 = vrot.slane %v10568, 7
        %v10729 = vrot.slane %v10728, 2
        %v10730 = vrot.slane %v10511, 7
        %v10731 = vrot.slane %v10730, 2
        %v10732 = vrot.slane %v10569, 7
        %v10733 = vrot.slane %v10732, 2
        %v10734 = vrot.slane %v10570, 7
        %v10735 = vrot.slane %v10734, 2
        %v10736 = vrot.slane %v10571, 7
        %v10737 = vrot.slane %v10736, 2
        %v10738 = vrot.slane %v10512, 7
        %v10739 = vrot.slane %v10738, 2
        %v10740 = vrot.slane %v10572, 7
        %v10741 = vrot.slane %v10740, 2
        %v10742 = vrot.slane %v10573, 7
        %v10743 = vrot.slane %v10742, 2
        %v10744 = vrot.slane %v10574, 7
        %v10745 = vrot.slane %v10744, 2
        %v10746 = vrot.slane %v10513, 7
        %v10747 = vrot.slane %v10746, 2
        %v10748 = vrot.slane %v10575, 7
        %v10749 = vrot.slane %v10748, 2
        %v10750 = vrot.slane %v10576, 7
        %v10751 = vrot.slane %v10750, 2
        %v10752 = vrot.slane %v10577, 7
        %v10753 = vrot.slane %v10752, 2
        %v10818 = vmax.f32 %v10498, %v10627
        %v10819 = vmax.f32 %v10530, %v10629
        %v10820 = vmax.f32 %v10531, %v10631
        %v10821 = vmax.f32 %v10532, %v10633
        %v10822 = vmax.f32 %v10499, %v10635
        %v10823 = vmax.f32 %v10533, %v10637
        %v10824 = vmax.f32 %v10534, %v10639
        %v10825 = vmax.f32 %v10535, %v10641
        %v10826 = vmax.f32 %v10500, %v10643
        %v10827 = vmax.f32 %v10536, %v10645
        %v10828 = vmax.f32 %v10537, %v10647
        %v10829 = vmax.f32 %v10538, %v10649
        %v10830 = vmax.f32 %v10501, %v10651
        %v10831 = vmax.f32 %v10539, %v10653
        %v10832 = vmax.f32 %v10540, %v10655
        %v10833 = vmax.f32 %v10541, %v10657
        %v10834 = vmax.f32 %v10502, %v10659
        %v10835 = vmax.f32 %v10542, %v10661
        %v10836 = vmax.f32 %v10543, %v10663
        %v10837 = vmax.f32 %v10544, %v10665
        %v10838 = vmax.f32 %v10503, %v10667
        %v10839 = vmax.f32 %v10545, %v10669
        %v10840 = vmax.f32 %v10546, %v10671
        %v10841 = vmax.f32 %v10547, %v10673
        %v10842 = vmax.f32 %v10504, %v10675
        %v10843 = vmax.f32 %v10548, %v10677
        %v10844 = vmax.f32 %v10549, %v10679
        %v10845 = vmax.f32 %v10550, %v10681
        %v10846 = vmax.f32 %v10505, %v10683
        %v10847 = vmax.f32 %v10551, %v10685
        %v10848 = vmax.f32 %v10552, %v10687
        %v10849 = vmax.f32 %v10553, %v10689
        %v10850 = vmax.f32 %v10506, %v10691
        %v10851 = vmax.f32 %v10554, %v10693
        %v10852 = vmax.f32 %v10555, %v10695
        %v10853 = vmax.f32 %v10556, %v10697
        %v10854 = vmax.f32 %v10507, %v10699
        %v10855 = vmax.f32 %v10557, %v10701
        %v10856 = vmax.f32 %v10558, %v10703
        %v10857 = vmax.f32 %v10559, %v10705
        %v10858 = vmax.f32 %v10508, %v10707
        %v10859 = vmax.f32 %v10560, %v10709
        %v10860 = vmax.f32 %v10561, %v10711
        %v10861 = vmax.f32 %v10562, %v10713
        %v10862 = vmax.f32 %v10509, %v10715
        %v10863 = vmax.f32 %v10563, %v10717
        %v10864 = vmax.f32 %v10564, %v10719
        %v10865 = vmax.f32 %v10565, %v10721
        %v10866 = vmax.f32 %v10510, %v10723
        %v10867 = vmax.f32 %v10566, %v10725
        %v10868 = vmax.f32 %v10567, %v10727
        %v10869 = vmax.f32 %v10568, %v10729
        %v10870 = vmax.f32 %v10511, %v10731
        %v10871 = vmax.f32 %v10569, %v10733
        %v10872 = vmax.f32 %v10570, %v10735
        %v10873 = vmax.f32 %v10571, %v10737
        %v10874 = vmax.f32 %v10512, %v10739
        %v10875 = vmax.f32 %v10572, %v10741
        %v10876 = vmax.f32 %v10573, %v10743
        %v10877 = vmax.f32 %v10574, %v10745
        %v10878 = vmax.f32 %v10513, %v10747
        %v10879 = vmax.f32 %v10575, %v10749
        %v10880 = vmax.f32 %v10576, %v10751
        %v10881 = vmax.f32 %v10577, %v10753
        %v10946 = vperm.slane %v10818, 0
        %v10947 = vperm.slane %v10819, 0
        %v10948 = vperm.slane %v10820, 0
        %v10949 = vperm.slane %v10821, 0
        %v10950 = vperm.slane %v10822, 0
        %v10951 = vperm.slane %v10823, 0
        %v10952 = vperm.slane %v10824, 0
        %v10953 = vperm.slane %v10825, 0
        %v10954 = vperm.slane %v10826, 0
        %v10955 = vperm.slane %v10827, 0
        %v10956 = vperm.slane %v10828, 0
        %v10957 = vperm.slane %v10829, 0
        %v10958 = vperm.slane %v10830, 0
        %v10959 = vperm.slane %v10831, 0
        %v10960 = vperm.slane %v10832, 0
        %v10961 = vperm.slane %v10833, 0
        %v10962 = vperm.slane %v10834, 0
        %v10963 = vperm.slane %v10835, 0
        %v10964 = vperm.slane %v10836, 0
        %v10965 = vperm.slane %v10837, 0
        %v10966 = vperm.slane %v10838, 0
        %v10967 = vperm.slane %v10839, 0
        %v10968 = vperm.slane %v10840, 0
        %v10969 = vperm.slane %v10841, 0
        %v10970 = vperm.slane %v10842, 0
        %v10971 = vperm.slane %v10843, 0
        %v10972 = vperm.slane %v10844, 0
        %v10973 = vperm.slane %v10845, 0
        %v10974 = vperm.slane %v10846, 0
        %v10975 = vperm.slane %v10847, 0
        %v10976 = vperm.slane %v10848, 0
        %v10977 = vperm.slane %v10849, 0
        %v10978 = vperm.slane %v10850, 0
        %v10979 = vperm.slane %v10851, 0
        %v10980 = vperm.slane %v10852, 0
        %v10981 = vperm.slane %v10853, 0
        %v10982 = vperm.slane %v10854, 0
        %v10983 = vperm.slane %v10855, 0
        %v10984 = vperm.slane %v10856, 0
        %v10985 = vperm.slane %v10857, 0
        %v10986 = vperm.slane %v10858, 0
        %v10987 = vperm.slane %v10859, 0
        %v10988 = vperm.slane %v10860, 0
        %v10989 = vperm.slane %v10861, 0
        %v10990 = vperm.slane %v10862, 0
        %v10991 = vperm.slane %v10863, 0
        %v10992 = vperm.slane %v10864, 0
        %v10993 = vperm.slane %v10865, 0
        %v10994 = vperm.slane %v10866, 0
        %v10995 = vperm.slane %v10867, 0
        %v10996 = vperm.slane %v10868, 0
        %v10997 = vperm.slane %v10869, 0
        %v10998 = vperm.slane %v10870, 0
        %v10999 = vperm.slane %v10871, 0
        %v11000 = vperm.slane %v10872, 0
        %v11001 = vperm.slane %v10873, 0
        %v11002 = vperm.slane %v10874, 0
        %v11003 = vperm.slane %v10875, 0
        %v11004 = vperm.slane %v10876, 0
        %v11005 = vperm.slane %v10877, 0
        %v11006 = vperm.slane %v10878, 0
        %v11007 = vperm.slane %v10879, 0
        %v11008 = vperm.slane %v10880, 0
        %v11009 = vperm.slane %v10881, 0
        %v11010 = vsel %vm8567, %v10947, %v10946
        %v11011 = vsel %vm8569, %v10948, %v11010
        %v11012 = vsel %vm8571, %v10949, %v11011
        %v11013 = vsel %vm8573, %v10950, %v11012
        %v11014 = vsel %vm8575, %v10951, %v11013
        %v11015 = vsel %vm8577, %v10952, %v11014
        %v11016 = vsel %vm8567, %v10955, %v10954
        %v11017 = vsel %vm8569, %v10956, %v11016
        %v11018 = vsel %vm8571, %v10957, %v11017
        %v11019 = vsel %vm8573, %v10958, %v11018
        %v11020 = vsel %vm8575, %v10959, %v11019
        %v11021 = vsel %vm8577, %v10960, %v11020
        %v11022 = vsel %vm8567, %v10963, %v10962
        %v11023 = vsel %vm8569, %v10964, %v11022
        %v11024 = vsel %vm8571, %v10965, %v11023
        %v11025 = vsel %vm8573, %v10966, %v11024
        %v11026 = vsel %vm8575, %v10967, %v11025
        %v11027 = vsel %vm8577, %v10968, %v11026
        %v11028 = vsel %vm8567, %v10971, %v10970
        %v11029 = vsel %vm8569, %v10972, %v11028
        %v11030 = vsel %vm8571, %v10973, %v11029
        %v11031 = vsel %vm8573, %v10974, %v11030
        %v11032 = vsel %vm8575, %v10975, %v11031
        %v11033 = vsel %vm8577, %v10976, %v11032
        %v11034 = vsel %vm8567, %v10979, %v10978
        %v11035 = vsel %vm8569, %v10980, %v11034
        %v11036 = vsel %vm8571, %v10981, %v11035
        %v11037 = vsel %vm8573, %v10982, %v11036
        %v11038 = vsel %vm8575, %v10983, %v11037
        %v11039 = vsel %vm8577, %v10984, %v11038
        %v11040 = vsel %vm8567, %v10987, %v10986
        %v11041 = vsel %vm8569, %v10988, %v11040
        %v11042 = vsel %vm8571, %v10989, %v11041
        %v11043 = vsel %vm8573, %v10990, %v11042
        %v11044 = vsel %vm8575, %v10991, %v11043
        %v11045 = vsel %vm8577, %v10992, %v11044
        %v11046 = vsel %vm8567, %v10995, %v10994
        %v11047 = vsel %vm8569, %v10996, %v11046
        %v11048 = vsel %vm8571, %v10997, %v11047
        %v11049 = vsel %vm8573, %v10998, %v11048
        %v11050 = vsel %vm8575, %v10999, %v11049
        %v11051 = vsel %vm8577, %v11000, %v11050
        %v11052 = vsel %vm8567, %v11003, %v11002
        %v11053 = vsel %vm8569, %v11004, %v11052
        %v11054 = vsel %vm8571, %v11005, %v11053
        %v11055 = vsel %vm8573, %v11006, %v11054
        %v11056 = vsel %vm8575, %v11007, %v11055
        %v11057 = vsel %vm8577, %v11008, %v11056
        %v11074 = vsel %vm641, 0.0, %v11015
        %v11075 = vsel %vm641, 0.0, %v11021
        %v11076 = vsel %vm641, 0.0, %v11027
        %v11077 = vsel %vm641, 0.0, %v11033
        %v11078 = vsel %vm641, 0.0, %v11039
        %v11079 = vsel %vm641, 0.0, %v11045
        %v11080 = vsel %vm641, 0.0, %v11051
        %v11081 = vsel %vm641, 0.0, %v11057
        %v11082 = vsel %vm641, %v10953, 0.0
        %v11083 = vsel %vm641, %v10961, 0.0
        %v11084 = vsel %vm641, %v10969, 0.0
        %v11085 = vsel %vm641, %v10977, 0.0
        %v11086 = vsel %vm641, %v10985, 0.0
        %v11087 = vsel %vm641, %v10993, 0.0
        %v11088 = vsel %vm641, %v11001, 0.0
        %v11089 = vsel %vm641, %v11009, 0.0
        %v11090 = vpack.c.bf16 %v11074, 0.0
        %v11091 = vpack.c.bf16 %v11076, %v11075
        %v11092 = vpack.c.bf16 %v11078, %v11077
        %v11093 = vpack.c.bf16 %v11080, %v11079
        %v11094 = vld [vmem:[%s5] sm:$0xf]
        %v11095 = vld [vmem:[%s5 + $0x4] sm:$0xf]
        %v11096 = vld [vmem:[%s5 + $0x8] sm:$0xf]
        %v11097 = vld [vmem:[%s5 + $0xc] sm:$0xf]
        %v11112 = vrot.slane %v11074, 1
        %v11113 = vrot.slane %v11082, 1
        %v11114 = vsel %vm1150, %v11112, %v11113
        %v11115 = vrot.slane %v11075, 1
        %v11116 = vrot.slane %v11083, 1
        %v11117 = vsel %vm1150, %v11115, %v11116
        %v11118 = vrot.slane %v11076, 1
        %v11119 = vrot.slane %v11084, 1
        %v11120 = vsel %vm1150, %v11118, %v11119
        %v11121 = vrot.slane %v11077, 1
        %v11122 = vrot.slane %v11085, 1
        %v11123 = vsel %vm1150, %v11121, %v11122
        %v11124 = vrot.slane %v11078, 1
        %v11125 = vrot.slane %v11086, 1
        %v11126 = vsel %vm1150, %v11124, %v11125
        %v11127 = vrot.slane %v11079, 1
        %v11128 = vrot.slane %v11087, 1
        %v11129 = vsel %vm1150, %v11127, %v11128
        %v11130 = vrot.slane %v11080, 1
        %v11131 = vrot.slane %v11088, 1
        %v11132 = vsel %vm1150, %v11130, %v11131
        %v11140 = vpack.c.bf16 %v11114, %v1152
        %v11141 = vpack.c.bf16 %v11120, %v11117
        %v11142 = vpack.c.bf16 %v11126, %v11123
        %v11143 = vpack.c.bf16 %v11132, %v11129
        %s11144 = scalar_lea.vmem %s5, 16
        %v11145 = vld [vmem:[%s11144] sm:$0xf]
        %v11146 = vld [vmem:[%s11144 + $0x4] sm:$0xf]
        %v11147 = vld [vmem:[%s11144 + $0x8] sm:$0xf]
        %v11148 = vld [vmem:[%s11144 + $0xc] sm:$0xf]
        %v11153 = vunpack.c.l.b16 %v11145
        %v11154 = vunpack.c.l.b16 %v11146
        %v11155 = vunpack.c.l.b16 %v11147
        %v11156 = vunpack.c.l.b16 %v11148
        %v11157 = vpack.c.b16 %v11154, %v11153
        %v11158 = vpack.c.b16 %v11156, %v11155
        %vm11161 = vcmask 261120
        %v11163 = vsel %vm11161, %v11140, 0
        %v11166 = vsel %vm11161, %v11141, 0
        %v11169 = vsel %vm11161, %v11142, 0
        %v11172 = vsel %vm11161, %v11143, 0
        %11174 = vmatpush.bf16.msra.mxu0 0
        %11175 = vmatpush.bf16.msra.mxu0 0
        %11176 = vmatpush.bf16.msra.mxu0 0
        %11177 = vmatpush.bf16.msra.mxu0 0
        %11178 = vmatpush.bf16.msra.mxu0 0
        %11179 = vmatpush.bf16.msra.mxu0 0
        %11180 = vmatpush.bf16.msra.mxu0 %v11158
        %11181 = vmatpush.bf16.msra.mxu0 %v11157
        %11182 = vmatmul.bf16.gmra.mxu0 %v11163
        %v11183 = vpop.f32.mrf.mxu0
        %v11184 = vadd.f32 0.0, %v11183
        %v11185 = vpop.f32.mrf.mxu0
        %v11186 = vadd.f32 0.0, %v11185
        %11187 = vmatmul.bf16.gmra.mxu0 %v11166
        %v11188 = vpop.f32.mrf.mxu0
        %v11189 = vadd.f32 0.0, %v11188
        %v11190 = vpop.f32.mrf.mxu0
        %v11191 = vadd.f32 0.0, %v11190
        %11192 = vmatmul.bf16.gmra.mxu0 %v11169
        %v11193 = vpop.f32.mrf.mxu0
        %v11194 = vadd.f32 0.0, %v11193
        %v11195 = vpop.f32.mrf.mxu0
        %v11196 = vadd.f32 0.0, %v11195
        %11197 = vmatmul.bf16.gmra.mxu0 %v11172
        %v11198 = vpop.f32.mrf.mxu0
        %v11199 = vadd.f32 0.0, %v11198
        %v11200 = vpop.f32.mrf.mxu0
        %v11201 = vadd.f32 0.0, %v11200
        %11202 = vdwg.mxu0
        %v11207 = vunpack.c.l.b16 %v11094
        %v11208 = vunpack.c.l.b16 %v11095
        %v11209 = vunpack.c.l.b16 %v11096
        %v11210 = vunpack.c.l.b16 %v11097
        %v11211 = vpack.c.b16 %v11208, %v11207
        %v11212 = vpack.c.b16 %v11210, %v11209
        %v11216 = vsel %vm11161, %v11090, 0
        %v11219 = vsel %vm11161, %v11091, 0
        %v11222 = vsel %vm11161, %v11092, 0
        %v11225 = vsel %vm11161, %v11093, 0
        %11227 = vmatpush.bf16.msra.mxu0 0
        %11228 = vmatpush.bf16.msra.mxu0 0
        %11229 = vmatpush.bf16.msra.mxu0 0
        %11230 = vmatpush.bf16.msra.mxu0 0
        %11231 = vmatpush.bf16.msra.mxu0 0
        %11232 = vmatpush.bf16.msra.mxu0 0
        %11233 = vmatpush.bf16.msra.mxu0 %v11212
        %11234 = vmatpush.bf16.msra.mxu0 %v11211
        %11235 = vmatmul.bf16.gmra.mxu0 %v11216
        %v11236 = vpop.f32.mrf.mxu0
        %v11237 = vadd.f32 %v11184, %v11236
        %v11238 = vpop.f32.mrf.mxu0
        %v11239 = vadd.f32 %v11186, %v11238
        %11240 = vmatmul.bf16.gmra.mxu0 %v11219
        %v11241 = vpop.f32.mrf.mxu0
        %v11242 = vadd.f32 %v11189, %v11241
        %v11243 = vpop.f32.mrf.mxu0
        %v11244 = vadd.f32 %v11191, %v11243
        %11245 = vmatmul.bf16.gmra.mxu0 %v11222
        %v11246 = vpop.f32.mrf.mxu0
        %v11247 = vadd.f32 %v11194, %v11246
        %v11248 = vpop.f32.mrf.mxu0
        %v11249 = vadd.f32 %v11196, %v11248
        %11250 = vmatmul.bf16.gmra.mxu0 %v11225
        %v11251 = vpop.f32.mrf.mxu0
        %v11252 = vadd.f32 %v11199, %v11251
        %v11253 = vpop.f32.mrf.mxu0
        %v11254 = vadd.f32 %v11201, %v11253
        %11255 = vdwg.mxu0
        %v11256 = vrot.slane %v11074, 2
        %v11257 = vrot.slane %v11082, 2
        %v11258 = vsel %vm1432, %v11256, %v11257
        %v11259 = vrot.slane %v11075, 2
        %v11260 = vrot.slane %v11083, 2
        %v11261 = vsel %vm1432, %v11259, %v11260
        %v11262 = vrot.slane %v11076, 2
        %v11263 = vrot.slane %v11084, 2
        %v11264 = vsel %vm1432, %v11262, %v11263
        %v11265 = vrot.slane %v11077, 2
        %v11266 = vrot.slane %v11085, 2
        %v11267 = vsel %vm1432, %v11265, %v11266
        %v11268 = vrot.slane %v11078, 2
        %v11269 = vrot.slane %v11086, 2
        %v11270 = vsel %vm1432, %v11268, %v11269
        %v11271 = vrot.slane %v11079, 2
        %v11272 = vrot.slane %v11087, 2
        %v11273 = vsel %vm1432, %v11271, %v11272
        %v11274 = vrot.slane %v11080, 2
        %v11275 = vrot.slane %v11088, 2
        %v11276 = vsel %vm1432, %v11274, %v11275
        %v11284 = vpack.c.bf16 %v11258, %v1434
        %v11285 = vpack.c.bf16 %v11264, %v11261
        %v11286 = vpack.c.bf16 %v11270, %v11267
        %v11287 = vpack.c.bf16 %v11276, %v11273
        %s11288 = scalar_lea.vmem %s5, 32
        %v11289 = vld [vmem:[%s11288] sm:$0xf]
        %v11290 = vld [vmem:[%s11288 + $0x4] sm:$0xf]
        %v11291 = vld [vmem:[%s11288 + $0x8] sm:$0xf]
        %v11292 = vld [vmem:[%s11288 + $0xc] sm:$0xf]
        %v11297 = vunpack.c.l.b16 %v11289
        %v11298 = vunpack.c.l.b16 %v11290
        %v11299 = vunpack.c.l.b16 %v11291
        %v11300 = vunpack.c.l.b16 %v11292
        %v11301 = vpack.c.b16 %v11298, %v11297
        %v11302 = vpack.c.b16 %v11300, %v11299
        %v11306 = vsel %vm11161, %v11284, 0
        %v11309 = vsel %vm11161, %v11285, 0
        %v11312 = vsel %vm11161, %v11286, 0
        %v11315 = vsel %vm11161, %v11287, 0
        %11317 = vmatpush.bf16.msra.mxu0 0
        %11318 = vmatpush.bf16.msra.mxu0 0
        %11319 = vmatpush.bf16.msra.mxu0 0
        %11320 = vmatpush.bf16.msra.mxu0 0
        %11321 = vmatpush.bf16.msra.mxu0 0
        %11322 = vmatpush.bf16.msra.mxu0 0
        %11323 = vmatpush.bf16.msra.mxu0 %v11302
        %11324 = vmatpush.bf16.msra.mxu0 %v11301
        %11325 = vmatmul.bf16.gmra.mxu0 %v11306
        %v11326 = vpop.f32.mrf.mxu0
        %v11327 = vadd.f32 0.0, %v11326
        %v11328 = vpop.f32.mrf.mxu0
        %v11329 = vadd.f32 0.0, %v11328
        %11330 = vmatmul.bf16.gmra.mxu0 %v11309
        %v11331 = vpop.f32.mrf.mxu0
        %v11332 = vadd.f32 0.0, %v11331
        %v11333 = vpop.f32.mrf.mxu0
        %v11334 = vadd.f32 0.0, %v11333
        %11335 = vmatmul.bf16.gmra.mxu0 %v11312
        %v11336 = vpop.f32.mrf.mxu0
        %v11337 = vadd.f32 0.0, %v11336
        %v11338 = vpop.f32.mrf.mxu0
        %v11339 = vadd.f32 0.0, %v11338
        %11340 = vmatmul.bf16.gmra.mxu0 %v11315
        %v11341 = vpop.f32.mrf.mxu0
        %v11342 = vadd.f32 0.0, %v11341
        %v11343 = vpop.f32.mrf.mxu0
        %v11344 = vadd.f32 0.0, %v11343
        %11345 = vdwg.mxu0
        %v11346 = vadd.f32 %v11237, %v11327
        %v11347 = vadd.f32 %v11239, %v11329
        %v11348 = vadd.f32 %v11242, %v11332
        %v11349 = vadd.f32 %v11244, %v11334
        %v11350 = vadd.f32 %v11247, %v11337
        %v11351 = vadd.f32 %v11249, %v11339
        %v11352 = vadd.f32 %v11252, %v11342
        %v11353 = vadd.f32 %v11254, %v11344
        %v11354 = vpack.c.bf16 %v11075, %v11074
        %v11355 = vpack.c.bf16 %v11077, %v11076
        %v11356 = vpack.c.bf16 %v11079, %v11078
        %v11357 = vpack.c.bf16 %v11081, %v11080
        %s11358 = scalar_lea.vmem %s5, 48
        %v11359 = vld [vmem:[%s11358] sm:$0xf]
        %v11360 = vld [vmem:[%s11358 + $0x4] sm:$0xf]
        %v11361 = vld [vmem:[%s11358 + $0x8] sm:$0xf]
        %v11362 = vld [vmem:[%s11358 + $0xc] sm:$0xf]
        %v11367 = vunpack.c.l.b16 %v11359
        %v11368 = vunpack.c.l.b16 %v11360
        %v11369 = vunpack.c.l.b16 %v11361
        %v11370 = vunpack.c.l.b16 %v11362
        %v11371 = vpack.c.b16 %v11368, %v11367
        %v11372 = vpack.c.b16 %v11370, %v11369
        %v11376 = vsel %vm11161, %v11354, 0
        %v11379 = vsel %vm11161, %v11355, 0
        %v11382 = vsel %vm11161, %v11356, 0
        %v11385 = vsel %vm11161, %v11357, 0
        %11387 = vmatpush.bf16.msra.mxu0 0
        %11388 = vmatpush.bf16.msra.mxu0 0
        %11389 = vmatpush.bf16.msra.mxu0 0
        %11390 = vmatpush.bf16.msra.mxu0 0
        %11391 = vmatpush.bf16.msra.mxu0 0
        %11392 = vmatpush.bf16.msra.mxu0 0
        %11393 = vmatpush.bf16.msra.mxu0 %v11372
        %11394 = vmatpush.bf16.msra.mxu0 %v11371
        %11395 = vmatmul.bf16.gmra.mxu0 %v11376
        %v11396 = vpop.f32.mrf.mxu0
        %v11397 = vadd.f32 0.0, %v11396
        %v11398 = vpop.f32.mrf.mxu0
        %v11399 = vadd.f32 0.0, %v11398
        %11400 = vmatmul.bf16.gmra.mxu0 %v11379
        %v11401 = vpop.f32.mrf.mxu0
        %v11402 = vadd.f32 0.0, %v11401
        %v11403 = vpop.f32.mrf.mxu0
        %v11404 = vadd.f32 0.0, %v11403
        %11405 = vmatmul.bf16.gmra.mxu0 %v11382
        %v11406 = vpop.f32.mrf.mxu0
        %v11407 = vadd.f32 0.0, %v11406
        %v11408 = vpop.f32.mrf.mxu0
        %v11409 = vadd.f32 0.0, %v11408
        %11410 = vmatmul.bf16.gmra.mxu0 %v11385
        %v11411 = vpop.f32.mrf.mxu0
        %v11412 = vadd.f32 0.0, %v11411
        %v11413 = vpop.f32.mrf.mxu0
        %v11414 = vadd.f32 0.0, %v11413
        %11415 = vdwg.mxu0
        %v11416 = vadd.f32 %v11346, %v11397
        %v11417 = vadd.f32 %v11347, %v11399
        %v11418 = vadd.f32 %v11348, %v11402
        %v11419 = vadd.f32 %v11349, %v11404
        %v11420 = vadd.f32 %v11350, %v11407
        %v11421 = vadd.f32 %v11351, %v11409
        %v11422 = vadd.f32 %v11352, %v11412
        %v11423 = vadd.f32 %v11353, %v11414
        %v11426 = vrot.slane %v11081, 1
        %v11427 = vrot.slane %v11089, 1
        %v11428 = vsel %vm1150, %v11426, %v11427
        %v11430 = vpack.c.bf16 %v11117, %v11114
        %v11431 = vpack.c.bf16 %v11123, %v11120
        %v11432 = vpack.c.bf16 %v11129, %v11126
        %v11433 = vpack.c.bf16 %v11428, %v11132
        %s11434 = scalar_lea.vmem %s5, 64
        %v11435 = vld [vmem:[%s11434] sm:$0xf]
        %v11436 = vld [vmem:[%s11434 + $0x4] sm:$0xf]
        %v11437 = vld [vmem:[%s11434 + $0x8] sm:$0xf]
        %v11438 = vld [vmem:[%s11434 + $0xc] sm:$0xf]
        %v11443 = vunpack.c.l.b16 %v11435
        %v11444 = vunpack.c.l.b16 %v11436
        %v11445 = vunpack.c.l.b16 %v11437
        %v11446 = vunpack.c.l.b16 %v11438
        %v11447 = vpack.c.b16 %v11444, %v11443
        %v11448 = vpack.c.b16 %v11446, %v11445
        %v11452 = vsel %vm11161, %v11430, 0
        %v11455 = vsel %vm11161, %v11431, 0
        %v11458 = vsel %vm11161, %v11432, 0
        %v11461 = vsel %vm11161, %v11433, 0
        %11463 = vmatpush.bf16.msra.mxu0 0
        %11464 = vmatpush.bf16.msra.mxu0 0
        %11465 = vmatpush.bf16.msra.mxu0 0
        %11466 = vmatpush.bf16.msra.mxu0 0
        %11467 = vmatpush.bf16.msra.mxu0 0
        %11468 = vmatpush.bf16.msra.mxu0 0
        %11469 = vmatpush.bf16.msra.mxu0 %v11448
        %11470 = vmatpush.bf16.msra.mxu0 %v11447
        %11471 = vmatmul.bf16.gmra.mxu0 %v11452
        %v11472 = vpop.f32.mrf.mxu0
        %v11473 = vadd.f32 0.0, %v11472
        %v11474 = vpop.f32.mrf.mxu0
        %v11475 = vadd.f32 0.0, %v11474
        %11476 = vmatmul.bf16.gmra.mxu0 %v11455
        %v11477 = vpop.f32.mrf.mxu0
        %v11478 = vadd.f32 0.0, %v11477
        %v11479 = vpop.f32.mrf.mxu0
        %v11480 = vadd.f32 0.0, %v11479
        %11481 = vmatmul.bf16.gmra.mxu0 %v11458
        %v11482 = vpop.f32.mrf.mxu0
        %v11483 = vadd.f32 0.0, %v11482
        %v11484 = vpop.f32.mrf.mxu0
        %v11485 = vadd.f32 0.0, %v11484
        %11486 = vmatmul.bf16.gmra.mxu0 %v11461
        %v11487 = vpop.f32.mrf.mxu0
        %v11488 = vadd.f32 0.0, %v11487
        %v11489 = vpop.f32.mrf.mxu0
        %v11490 = vadd.f32 0.0, %v11489
        %11491 = vdwg.mxu0
        %v11492 = vadd.f32 %v11416, %v11473
        %v11493 = vadd.f32 %v11417, %v11475
        %v11494 = vadd.f32 %v11418, %v11478
        %v11495 = vadd.f32 %v11419, %v11480
        %v11496 = vadd.f32 %v11420, %v11483
        %v11497 = vadd.f32 %v11421, %v11485
        %v11498 = vadd.f32 %v11422, %v11488
        %v11499 = vadd.f32 %v11423, %v11490
        %v11500 = vrot.slane %v11081, 2
        %v11501 = vrot.slane %v11089, 2
        %v11502 = vsel %vm1432, %v11500, %v11501
        %v11504 = vpack.c.bf16 %v11261, %v11258
        %v11505 = vpack.c.bf16 %v11267, %v11264
        %v11506 = vpack.c.bf16 %v11273, %v11270
        %v11507 = vpack.c.bf16 %v11502, %v11276
        %s11508 = scalar_lea.vmem %s5, 80
        %v11509 = vld [vmem:[%s11508] sm:$0xf]
        %v11510 = vld [vmem:[%s11508 + $0x4] sm:$0xf]
        %v11511 = vld [vmem:[%s11508 + $0x8] sm:$0xf]
        %v11512 = vld [vmem:[%s11508 + $0xc] sm:$0xf]
        %v11517 = vunpack.c.l.b16 %v11509
        %v11518 = vunpack.c.l.b16 %v11510
        %v11519 = vunpack.c.l.b16 %v11511
        %v11520 = vunpack.c.l.b16 %v11512
        %v11521 = vpack.c.b16 %v11518, %v11517
        %v11522 = vpack.c.b16 %v11520, %v11519
        %v11526 = vsel %vm11161, %v11504, 0
        %v11529 = vsel %vm11161, %v11505, 0
        %v11532 = vsel %vm11161, %v11506, 0
        %v11535 = vsel %vm11161, %v11507, 0
        %11537 = vmatpush.bf16.msra.mxu0 0
        %11538 = vmatpush.bf16.msra.mxu0 0
        %11539 = vmatpush.bf16.msra.mxu0 0
        %11540 = vmatpush.bf16.msra.mxu0 0
        %11541 = vmatpush.bf16.msra.mxu0 0
        %11542 = vmatpush.bf16.msra.mxu0 0
        %11543 = vmatpush.bf16.msra.mxu0 %v11522
        %11544 = vmatpush.bf16.msra.mxu0 %v11521
        %11545 = vmatmul.bf16.gmra.mxu0 %v11526
        %v11546 = vpop.f32.mrf.mxu0
        %v11547 = vadd.f32 0.0, %v11546
        %v11548 = vpop.f32.mrf.mxu0
        %v11549 = vadd.f32 0.0, %v11548
        %11550 = vmatmul.bf16.gmra.mxu0 %v11529
        %v11551 = vpop.f32.mrf.mxu0
        %v11552 = vadd.f32 0.0, %v11551
        %v11553 = vpop.f32.mrf.mxu0
        %v11554 = vadd.f32 0.0, %v11553
        %11555 = vmatmul.bf16.gmra.mxu0 %v11532
        %v11556 = vpop.f32.mrf.mxu0
        %v11557 = vadd.f32 0.0, %v11556
        %v11558 = vpop.f32.mrf.mxu0
        %v11559 = vadd.f32 0.0, %v11558
        %11560 = vmatmul.bf16.gmra.mxu0 %v11535
        %v11561 = vpop.f32.mrf.mxu0
        %v11562 = vadd.f32 0.0, %v11561
        %v11563 = vpop.f32.mrf.mxu0
        %v11564 = vadd.f32 0.0, %v11563
        %11565 = vdwg.mxu0
        %v11566 = vadd.f32 %v11492, %v11547
        %v11567 = vadd.f32 %v11493, %v11549
        %v11568 = vadd.f32 %v11494, %v11552
        %v11569 = vadd.f32 %v11495, %v11554
        %v11570 = vadd.f32 %v11496, %v11557
        %v11571 = vadd.f32 %v11497, %v11559
        %v11572 = vadd.f32 %v11498, %v11562
        %v11573 = vadd.f32 %v11499, %v11564
        %v11574 = vpack.c.bf16 0.0, %v11081
        %s11575 = scalar_lea.vmem %s5, 96
        %v11576 = vld [vmem:[%s11575] sm:$0xf]
        %v11577 = vld [vmem:[%s11575 + $0x4] sm:$0xf]
        %v11578 = vld [vmem:[%s11575 + $0x8] sm:$0xf]
        %v11579 = vld [vmem:[%s11575 + $0xc] sm:$0xf]
        %v11584 = vunpack.c.l.b16 %v11576
        %v11585 = vunpack.c.l.b16 %v11577
        %v11586 = vunpack.c.l.b16 %v11578
        %v11587 = vunpack.c.l.b16 %v11579
        %v11588 = vpack.c.b16 %v11585, %v11584
        %v11589 = vpack.c.b16 %v11587, %v11586
        %v11593 = vsel %vm11161, %v11574, 0
        %11595 = vmatpush.bf16.msra.mxu0 0
        %11596 = vmatpush.bf16.msra.mxu0 0
        %11597 = vmatpush.bf16.msra.mxu0 0
        %11598 = vmatpush.bf16.msra.mxu0 0
        %11599 = vmatpush.bf16.msra.mxu0 0
        %11600 = vmatpush.bf16.msra.mxu0 0
        %11601 = vmatpush.bf16.msra.mxu0 %v11589
        %11602 = vmatpush.bf16.msra.mxu0 %v11588
        %11603 = vmatmul.bf16.gmra.mxu0 %v11219
        %v11604 = vpop.f32.mrf.mxu0
        %v11605 = vadd.f32 0.0, %v11604
        %v11606 = vpop.f32.mrf.mxu0
        %v11607 = vadd.f32 0.0, %v11606
        %11608 = vmatmul.bf16.gmra.mxu0 %v11222
        %v11609 = vpop.f32.mrf.mxu0
        %v11610 = vadd.f32 0.0, %v11609
        %v11611 = vpop.f32.mrf.mxu0
        %v11612 = vadd.f32 0.0, %v11611
        %11613 = vmatmul.bf16.gmra.mxu0 %v11225
        %v11614 = vpop.f32.mrf.mxu0
        %v11615 = vadd.f32 0.0, %v11614
        %v11616 = vpop.f32.mrf.mxu0
        %v11617 = vadd.f32 0.0, %v11616
        %11618 = vmatmul.bf16.gmra.mxu0 %v11593
        %v11619 = vpop.f32.mrf.mxu0
        %v11620 = vadd.f32 0.0, %v11619
        %v11621 = vpop.f32.mrf.mxu0
        %v11622 = vadd.f32 0.0, %v11621
        %11623 = vdwg.mxu0
        %v11624 = vadd.f32 %v11566, %v11605
        %v11625 = vadd.f32 %v11567, %v11607
        %v11626 = vadd.f32 %v11568, %v11610
        %v11627 = vadd.f32 %v11569, %v11612
        %v11628 = vadd.f32 %v11570, %v11615
        %v11629 = vadd.f32 %v11571, %v11617
        %v11630 = vadd.f32 %v11572, %v11620
        %v11631 = vadd.f32 %v11573, %v11622
        %v11632 = vpack.c.bf16 %v1152, %v11428
        %s11633 = scalar_lea.vmem %s5, 112
        %v11634 = vld [vmem:[%s11633] sm:$0xf]
        %v11635 = vld [vmem:[%s11633 + $0x4] sm:$0xf]
        %v11636 = vld [vmem:[%s11633 + $0x8] sm:$0xf]
        %v11637 = vld [vmem:[%s11633 + $0xc] sm:$0xf]
        %v11642 = vunpack.c.l.b16 %v11634
        %v11643 = vunpack.c.l.b16 %v11635
        %v11644 = vunpack.c.l.b16 %v11636
        %v11645 = vunpack.c.l.b16 %v11637
        %v11646 = vpack.c.b16 %v11643, %v11642
        %v11647 = vpack.c.b16 %v11645, %v11644
        %v11651 = vsel %vm11161, %v11632, 0
        %11653 = vmatpush.bf16.msra.mxu0 0
        %11654 = vmatpush.bf16.msra.mxu0 0
        %11655 = vmatpush.bf16.msra.mxu0 0
        %11656 = vmatpush.bf16.msra.mxu0 0
        %11657 = vmatpush.bf16.msra.mxu0 0
        %11658 = vmatpush.bf16.msra.mxu0 0
        %11659 = vmatpush.bf16.msra.mxu0 %v11647
        %11660 = vmatpush.bf16.msra.mxu0 %v11646
        %11661 = vmatmul.bf16.gmra.mxu0 %v11166
        %v11662 = vpop.f32.mrf.mxu0
        %v11663 = vadd.f32 0.0, %v11662
        %v11664 = vpop.f32.mrf.mxu0
        %v11665 = vadd.f32 0.0, %v11664
        %11666 = vmatmul.bf16.gmra.mxu0 %v11169
        %v11667 = vpop.f32.mrf.mxu0
        %v11668 = vadd.f32 0.0, %v11667
        %v11669 = vpop.f32.mrf.mxu0
        %v11670 = vadd.f32 0.0, %v11669
        %11671 = vmatmul.bf16.gmra.mxu0 %v11172
        %v11672 = vpop.f32.mrf.mxu0
        %v11673 = vadd.f32 0.0, %v11672
        %v11674 = vpop.f32.mrf.mxu0
        %v11675 = vadd.f32 0.0, %v11674
        %11676 = vmatmul.bf16.gmra.mxu0 %v11651
        %v11677 = vpop.f32.mrf.mxu0
        %v11678 = vadd.f32 0.0, %v11677
        %v11679 = vpop.f32.mrf.mxu0
        %v11680 = vadd.f32 0.0, %v11679
        %11681 = vdwg.mxu0
        %v11682 = vadd.f32 %v11624, %v11663
        %v11683 = vadd.f32 %v11625, %v11665
        %v11684 = vadd.f32 %v11626, %v11668
        %v11685 = vadd.f32 %v11627, %v11670
        %v11686 = vadd.f32 %v11628, %v11673
        %v11687 = vadd.f32 %v11629, %v11675
        %v11688 = vadd.f32 %v11630, %v11678
        %v11689 = vadd.f32 %v11631, %v11680
        %v11690 = vpack.c.bf16 %v1434, %v11502
        %s11691 = scalar_lea.vmem %s5, 128
        %v11692 = vld [vmem:[%s11691] sm:$0xf]
        %v11693 = vld [vmem:[%s11691 + $0x4] sm:$0xf]
        %v11694 = vld [vmem:[%s11691 + $0x8] sm:$0xf]
        %v11695 = vld [vmem:[%s11691 + $0xc] sm:$0xf]
        %v11700 = vunpack.c.l.b16 %v11692
        %v11701 = vunpack.c.l.b16 %v11693
        %v11702 = vunpack.c.l.b16 %v11694
        %v11703 = vunpack.c.l.b16 %v11695
        %v11704 = vpack.c.b16 %v11701, %v11700
        %v11705 = vpack.c.b16 %v11703, %v11702
        %v11709 = vsel %vm11161, %v11690, 0
        %11711 = vmatpush.bf16.msra.mxu0 0
        %11712 = vmatpush.bf16.msra.mxu0 0
        %11713 = vmatpush.bf16.msra.mxu0 0
        %11714 = vmatpush.bf16.msra.mxu0 0
        %11715 = vmatpush.bf16.msra.mxu0 0
        %11716 = vmatpush.bf16.msra.mxu0 0
        %11717 = vmatpush.bf16.msra.mxu0 %v11705
        %11718 = vmatpush.bf16.msra.mxu0 %v11704
        %11719 = vmatmul.bf16.gmra.mxu0 %v11309
        %v11720 = vpop.f32.mrf.mxu0
        %v11721 = vadd.f32 0.0, %v11720
        %v11722 = vpop.f32.mrf.mxu0
        %v11723 = vadd.f32 0.0, %v11722
        %11724 = vmatmul.bf16.gmra.mxu0 %v11312
        %v11725 = vpop.f32.mrf.mxu0
        %v11726 = vadd.f32 0.0, %v11725
        %v11727 = vpop.f32.mrf.mxu0
        %v11728 = vadd.f32 0.0, %v11727
        %11729 = vmatmul.bf16.gmra.mxu0 %v11315
        %v11730 = vpop.f32.mrf.mxu0
        %v11731 = vadd.f32 0.0, %v11730
        %v11732 = vpop.f32.mrf.mxu0
        %v11733 = vadd.f32 0.0, %v11732
        %11734 = vmatmul.bf16.gmra.mxu0 %v11709
        %v11735 = vpop.f32.mrf.mxu0
        %v11736 = vadd.f32 0.0, %v11735
        %v11737 = vpop.f32.mrf.mxu0
        %v11738 = vadd.f32 0.0, %v11737
        %11739 = vdwg.mxu0
        %v11740 = vadd.f32 %v11682, %v11721
        %v11741 = vadd.f32 %v11683, %v11723
        %v11742 = vadd.f32 %v11684, %v11726
        %v11743 = vadd.f32 %v11685, %v11728
        %v11744 = vadd.f32 %v11686, %v11731
        %v11745 = vadd.f32 %v11687, %v11733
        %v11746 = vadd.f32 %v11688, %v11736
        %v11747 = vadd.f32 %v11689, %v11738
        %v11748 = vld [vmem:[%s6] sm:$0x1]
        %v11750 = vperm.slane %v11748, 0
        %v11752 = vadd.f32 %v11740, %v11750
        %v11753 = vadd.f32 %v11741, %v11750
        %v11754 = vadd.f32 %v11742, %v11750
        %v11755 = vadd.f32 %v11743, %v11750
        %v11756 = vadd.f32 %v11744, %v11750
        %v11757 = vadd.f32 %v11745, %v11750
        %v11758 = vadd.f32 %v11746, %v11750
        %v11759 = vadd.f32 %v11747, %v11750
        %v11760 = vmax.f32 %v11752, 0.0
        %v11761 = vmax.f32 %v11753, 0.0
        %v11762 = vmax.f32 %v11754, 0.0
        %v11763 = vmax.f32 %v11755, 0.0
        %v11764 = vmax.f32 %v11756, 0.0
        %v11765 = vmax.f32 %v11757, 0.0
        %v11766 = vmax.f32 %v11758, 0.0
        %v11767 = vmax.f32 %v11759, 0.0
        %v11768 = vmax.f32 %v11760, %v11761
        %v11769 = vmax.f32 %v11762, %v11763
        %v11770 = vmax.f32 %v11764, %v11765
        %v11771 = vmax.f32 %v11766, %v11767
        %v11776 = vrot.slane %v11768, 2
        %v11777 = vrot.slane %v11768, 4
        %v11778 = vrot.slane %v11768, 6
        %v11779 = vrot.slane %v11769, 2
        %v11780 = vrot.slane %v11769, 4
        %v11781 = vrot.slane %v11769, 6
        %v11782 = vrot.slane %v11770, 2
        %v11783 = vrot.slane %v11770, 4
        %v11784 = vrot.slane %v11770, 6
        %v11785 = vrot.slane %v11771, 2
        %v11786 = vrot.slane %v11771, 4
        %v11787 = vrot.slane %v11771, 6
        %v11800 = vrot.slane %v11768, 7
        %v11801 = vrot.slane %v11800, 2
        %v11802 = vrot.slane %v11776, 7
        %v11803 = vrot.slane %v11802, 2
        %v11804 = vrot.slane %v11777, 7
        %v11805 = vrot.slane %v11804, 2
        %v11806 = vrot.slane %v11778, 7
        %v11807 = vrot.slane %v11806, 2
        %v11808 = vrot.slane %v11769, 7
        %v11809 = vrot.slane %v11808, 2
        %v11810 = vrot.slane %v11779, 7
        %v11811 = vrot.slane %v11810, 2
        %v11812 = vrot.slane %v11780, 7
        %v11813 = vrot.slane %v11812, 2
        %v11814 = vrot.slane %v11781, 7
        %v11815 = vrot.slane %v11814, 2
        %v11816 = vrot.slane %v11770, 7
        %v11817 = vrot.slane %v11816, 2
        %v11818 = vrot.slane %v11782, 7
        %v11819 = vrot.slane %v11818, 2
        %v11820 = vrot.slane %v11783, 7
        %v11821 = vrot.slane %v11820, 2
        %v11822 = vrot.slane %v11784, 7
        %v11823 = vrot.slane %v11822, 2
        %v11824 = vrot.slane %v11771, 7
        %v11825 = vrot.slane %v11824, 2
        %v11826 = vrot.slane %v11785, 7
        %v11827 = vrot.slane %v11826, 2
        %v11828 = vrot.slane %v11786, 7
        %v11829 = vrot.slane %v11828, 2
        %v11830 = vrot.slane %v11787, 7
        %v11831 = vrot.slane %v11830, 2
        %v11848 = vmax.f32 %v11768, %v11801
        %v11849 = vmax.f32 %v11776, %v11803
        %v11850 = vmax.f32 %v11777, %v11805
        %v11851 = vmax.f32 %v11778, %v11807
        %v11852 = vmax.f32 %v11769, %v11809
        %v11853 = vmax.f32 %v11779, %v11811
        %v11854 = vmax.f32 %v11780, %v11813
        %v11855 = vmax.f32 %v11781, %v11815
        %v11856 = vmax.f32 %v11770, %v11817
        %v11857 = vmax.f32 %v11782, %v11819
        %v11858 = vmax.f32 %v11783, %v11821
        %v11859 = vmax.f32 %v11784, %v11823
        %v11860 = vmax.f32 %v11771, %v11825
        %v11861 = vmax.f32 %v11785, %v11827
        %v11862 = vmax.f32 %v11786, %v11829
        %v11863 = vmax.f32 %v11787, %v11831
        %v11864 = vpack.c.bf16 %v11848, %v11848
        %v11865 = vld [vmem:[%s7] sm:$0xff]
        %v11866 = vld [vmem:[%s7 + $0x8] sm:$0xff]
        %v11867 = vld [vmem:[%s7 + $0x10] sm:$0xff]
        %v11868 = vld [vmem:[%s7 + $0x18] sm:$0xff]
        %v11869 = vld [vmem:[%s7 + $0x20] sm:$0xff]
        %v11870 = vld [vmem:[%s7 + $0x28] sm:$0xff]
        %v11871 = vld [vmem:[%s7 + $0x30] sm:$0xff]
        %v11872 = vld [vmem:[%s7 + $0x38] sm:$0xff]
        %v11873 = vpack.c.bf16 %v11849, %v11849
        %s11874 = scalar_lea.vmem %s7, 64
        %v11875 = vld [vmem:[%s11874] sm:$0xff]
        %v11876 = vld [vmem:[%s11874 + $0x8] sm:$0xff]
        %v11877 = vld [vmem:[%s11874 + $0x10] sm:$0xff]
        %v11878 = vld [vmem:[%s11874 + $0x18] sm:$0xff]
        %v11879 = vld [vmem:[%s11874 + $0x20] sm:$0xff]
        %v11880 = vld [vmem:[%s11874 + $0x28] sm:$0xff]
        %v11881 = vld [vmem:[%s11874 + $0x30] sm:$0xff]
        %v11882 = vld [vmem:[%s11874 + $0x38] sm:$0xff]
        %v11891 = vunpack.c.l.b16 %v11875
        %v11892 = vunpack.c.h.b16 %v11875
        %v11893 = vunpack.c.l.b16 %v11876
        %v11894 = vunpack.c.h.b16 %v11876
        %v11895 = vunpack.c.l.b16 %v11877
        %v11896 = vunpack.c.h.b16 %v11877
        %v11897 = vunpack.c.l.b16 %v11878
        %v11898 = vunpack.c.h.b16 %v11878
        %v11899 = vunpack.c.l.b16 %v11879
        %v11900 = vunpack.c.h.b16 %v11879
        %v11901 = vunpack.c.l.b16 %v11880
        %v11902 = vunpack.c.h.b16 %v11880
        %v11903 = vunpack.c.l.b16 %v11881
        %v11904 = vunpack.c.h.b16 %v11881
        %v11905 = vunpack.c.l.b16 %v11882
        %v11906 = vunpack.c.h.b16 %v11882
        %v11907 = vpack.c.b16 %v11893, %v11891
        %v11908 = vpack.c.b16 %v11894, %v11892
        %v11909 = vpack.c.b16 %v11897, %v11895
        %v11910 = vpack.c.b16 %v11898, %v11896
        %v11911 = vpack.c.b16 %v11901, %v11899
        %v11912 = vpack.c.b16 %v11902, %v11900
        %v11913 = vpack.c.b16 %v11905, %v11903
        %v11914 = vpack.c.b16 %v11906, %v11904
        %vm11923 = vcmask 523264
        %v11925 = vsel %vm11923, %v11873, 0
        %11927 = vmatpush.bf16.msra.mxu0 0
        %11928 = vmatpush.bf16.msra.mxu0 0
        %11929 = vmatpush.bf16.msra.mxu0 0
        %11930 = vmatpush.bf16.msra.mxu0 0
        %11931 = vmatpush.bf16.msra.mxu0 %v11913
        %11932 = vmatpush.bf16.msra.mxu0 %v11911
        %11933 = vmatpush.bf16.msra.mxu0 %v11909
        %11934 = vmatpush.bf16.msra.mxu0 %v11907
        %11935 = vmatmul.bf16.gmra.mxu0 %v11925
        %v11936 = vpop.f32.mrf.mxu0
        %v11937 = vadd.f32 0.0, %v11936
        %v11938 = vpop.f32.mrf.mxu0
        %11939 = vdwg.mxu0
        %11940 = vmatpush.bf16.msra.mxu0 0
        %11941 = vmatpush.bf16.msra.mxu0 0
        %11942 = vmatpush.bf16.msra.mxu0 0
        %11943 = vmatpush.bf16.msra.mxu0 0
        %11944 = vmatpush.bf16.msra.mxu0 %v11914
        %11945 = vmatpush.bf16.msra.mxu0 %v11912
        %11946 = vmatpush.bf16.msra.mxu0 %v11910
        %11947 = vmatpush.bf16.msra.mxu0 %v11908
        %11948 = vmatmul.bf16.gmra.mxu0 %v11925
        %v11949 = vpop.f32.mrf.mxu0
        %v11950 = vadd.f32 0.0, %v11949
        %v11951 = vpop.f32.mrf.mxu0
        %11952 = vdwg.mxu0
        %v11961 = vunpack.c.l.b16 %v11865
        %v11962 = vunpack.c.h.b16 %v11865
        %v11963 = vunpack.c.l.b16 %v11866
        %v11964 = vunpack.c.h.b16 %v11866
        %v11965 = vunpack.c.l.b16 %v11867
        %v11966 = vunpack.c.h.b16 %v11867
        %v11967 = vunpack.c.l.b16 %v11868
        %v11968 = vunpack.c.h.b16 %v11868
        %v11969 = vunpack.c.l.b16 %v11869
        %v11970 = vunpack.c.h.b16 %v11869
        %v11971 = vunpack.c.l.b16 %v11870
        %v11972 = vunpack.c.h.b16 %v11870
        %v11973 = vunpack.c.l.b16 %v11871
        %v11974 = vunpack.c.h.b16 %v11871
        %v11975 = vunpack.c.l.b16 %v11872
        %v11976 = vunpack.c.h.b16 %v11872
        %v11977 = vpack.c.b16 %v11963, %v11961
        %v11978 = vpack.c.b16 %v11964, %v11962
        %v11979 = vpack.c.b16 %v11967, %v11965
        %v11980 = vpack.c.b16 %v11968, %v11966
        %v11981 = vpack.c.b16 %v11971, %v11969
        %v11982 = vpack.c.b16 %v11972, %v11970
        %v11983 = vpack.c.b16 %v11975, %v11973
        %v11984 = vpack.c.b16 %v11976, %v11974
        %v11994 = vsel %vm11923, %v11864, 0
        %11996 = vmatpush.bf16.msra.mxu0 0
        %11997 = vmatpush.bf16.msra.mxu0 0
        %11998 = vmatpush.bf16.msra.mxu0 0
        %11999 = vmatpush.bf16.msra.mxu0 0
        %12000 = vmatpush.bf16.msra.mxu0 %v11983
        %12001 = vmatpush.bf16.msra.mxu0 %v11981
        %12002 = vmatpush.bf16.msra.mxu0 %v11979
        %12003 = vmatpush.bf16.msra.mxu0 %v11977
        %12004 = vmatmul.bf16.gmra.mxu0 %v11994
        %v12005 = vpop.f32.mrf.mxu0
        %v12006 = vadd.f32 %v11937, %v12005
        %v12007 = vpop.f32.mrf.mxu0
        %12008 = vdwg.mxu0
        %12009 = vmatpush.bf16.msra.mxu0 0
        %12010 = vmatpush.bf16.msra.mxu0 0
        %12011 = vmatpush.bf16.msra.mxu0 0
        %12012 = vmatpush.bf16.msra.mxu0 0
        %12013 = vmatpush.bf16.msra.mxu0 %v11984
        %12014 = vmatpush.bf16.msra.mxu0 %v11982
        %12015 = vmatpush.bf16.msra.mxu0 %v11980
        %12016 = vmatpush.bf16.msra.mxu0 %v11978
        %12017 = vmatmul.bf16.gmra.mxu0 %v11994
        %v12018 = vpop.f32.mrf.mxu0
        %v12019 = vadd.f32 %v11950, %v12018
        %v12020 = vpop.f32.mrf.mxu0
        %12021 = vdwg.mxu0
        %v12022 = vpack.c.bf16 %v11850, %v11850
        %s12023 = scalar_lea.vmem %s7, 128
        %v12024 = vld [vmem:[%s12023] sm:$0xff]
        %v12025 = vld [vmem:[%s12023 + $0x8] sm:$0xff]
        %v12026 = vld [vmem:[%s12023 + $0x10] sm:$0xff]
        %v12027 = vld [vmem:[%s12023 + $0x18] sm:$0xff]
        %v12028 = vld [vmem:[%s12023 + $0x20] sm:$0xff]
        %v12029 = vld [vmem:[%s12023 + $0x28] sm:$0xff]
        %v12030 = vld [vmem:[%s12023 + $0x30] sm:$0xff]
        %v12031 = vld [vmem:[%s12023 + $0x38] sm:$0xff]
        %v12040 = vunpack.c.l.b16 %v12024
        %v12041 = vunpack.c.h.b16 %v12024
        %v12042 = vunpack.c.l.b16 %v12025
        %v12043 = vunpack.c.h.b16 %v12025
        %v12044 = vunpack.c.l.b16 %v12026
        %v12045 = vunpack.c.h.b16 %v12026
        %v12046 = vunpack.c.l.b16 %v12027
        %v12047 = vunpack.c.h.b16 %v12027
        %v12048 = vunpack.c.l.b16 %v12028
        %v12049 = vunpack.c.h.b16 %v12028
        %v12050 = vunpack.c.l.b16 %v12029
        %v12051 = vunpack.c.h.b16 %v12029
        %v12052 = vunpack.c.l.b16 %v12030
        %v12053 = vunpack.c.h.b16 %v12030
        %v12054 = vunpack.c.l.b16 %v12031
        %v12055 = vunpack.c.h.b16 %v12031
        %v12056 = vpack.c.b16 %v12042, %v12040
        %v12057 = vpack.c.b16 %v12043, %v12041
        %v12058 = vpack.c.b16 %v12046, %v12044
        %v12059 = vpack.c.b16 %v12047, %v12045
        %v12060 = vpack.c.b16 %v12050, %v12048
        %v12061 = vpack.c.b16 %v12051, %v12049
        %v12062 = vpack.c.b16 %v12054, %v12052
        %v12063 = vpack.c.b16 %v12055, %v12053
        %v12073 = vsel %vm11923, %v12022, 0
        %12075 = vmatpush.bf16.msra.mxu0 0
        %12076 = vmatpush.bf16.msra.mxu0 0
        %12077 = vmatpush.bf16.msra.mxu0 0
        %12078 = vmatpush.bf16.msra.mxu0 0
        %12079 = vmatpush.bf16.msra.mxu0 %v12062
        %12080 = vmatpush.bf16.msra.mxu0 %v12060
        %12081 = vmatpush.bf16.msra.mxu0 %v12058
        %12082 = vmatpush.bf16.msra.mxu0 %v12056
        %12083 = vmatmul.bf16.gmra.mxu0 %v12073
        %v12084 = vpop.f32.mrf.mxu0
        %v12085 = vadd.f32 0.0, %v12084
        %v12086 = vpop.f32.mrf.mxu0
        %12087 = vdwg.mxu0
        %12088 = vmatpush.bf16.msra.mxu0 0
        %12089 = vmatpush.bf16.msra.mxu0 0
        %12090 = vmatpush.bf16.msra.mxu0 0
        %12091 = vmatpush.bf16.msra.mxu0 0
        %12092 = vmatpush.bf16.msra.mxu0 %v12063
        %12093 = vmatpush.bf16.msra.mxu0 %v12061
        %12094 = vmatpush.bf16.msra.mxu0 %v12059
        %12095 = vmatpush.bf16.msra.mxu0 %v12057
        %12096 = vmatmul.bf16.gmra.mxu0 %v12073
        %v12097 = vpop.f32.mrf.mxu0
        %v12098 = vadd.f32 0.0, %v12097
        %v12099 = vpop.f32.mrf.mxu0
        %12100 = vdwg.mxu0
        %v12101 = vadd.f32 %v12006, %v12085
        %v12102 = vadd.f32 %v12019, %v12098
        %v12103 = vpack.c.bf16 %v11851, %v11851
        %s12104 = scalar_lea.vmem %s7, 192
        %v12105 = vld [vmem:[%s12104] sm:$0xff]
        %v12106 = vld [vmem:[%s12104 + $0x8] sm:$0xff]
        %v12107 = vld [vmem:[%s12104 + $0x10] sm:$0xff]
        %v12108 = vld [vmem:[%s12104 + $0x18] sm:$0xff]
        %v12109 = vld [vmem:[%s12104 + $0x20] sm:$0xff]
        %v12110 = vld [vmem:[%s12104 + $0x28] sm:$0xff]
        %v12111 = vld [vmem:[%s12104 + $0x30] sm:$0xff]
        %v12112 = vld [vmem:[%s12104 + $0x38] sm:$0xff]
        %v12121 = vunpack.c.l.b16 %v12105
        %v12122 = vunpack.c.h.b16 %v12105
        %v12123 = vunpack.c.l.b16 %v12106
        %v12124 = vunpack.c.h.b16 %v12106
        %v12125 = vunpack.c.l.b16 %v12107
        %v12126 = vunpack.c.h.b16 %v12107
        %v12127 = vunpack.c.l.b16 %v12108
        %v12128 = vunpack.c.h.b16 %v12108
        %v12129 = vunpack.c.l.b16 %v12109
        %v12130 = vunpack.c.h.b16 %v12109
        %v12131 = vunpack.c.l.b16 %v12110
        %v12132 = vunpack.c.h.b16 %v12110
        %v12133 = vunpack.c.l.b16 %v12111
        %v12134 = vunpack.c.h.b16 %v12111
        %v12135 = vunpack.c.l.b16 %v12112
        %v12136 = vunpack.c.h.b16 %v12112
        %v12137 = vpack.c.b16 %v12123, %v12121
        %v12138 = vpack.c.b16 %v12124, %v12122
        %v12139 = vpack.c.b16 %v12127, %v12125
        %v12140 = vpack.c.b16 %v12128, %v12126
        %v12141 = vpack.c.b16 %v12131, %v12129
        %v12142 = vpack.c.b16 %v12132, %v12130
        %v12143 = vpack.c.b16 %v12135, %v12133
        %v12144 = vpack.c.b16 %v12136, %v12134
        %v12154 = vsel %vm11923, %v12103, 0
        %12156 = vmatpush.bf16.msra.mxu0 0
        %12157 = vmatpush.bf16.msra.mxu0 0
        %12158 = vmatpush.bf16.msra.mxu0 0
        %12159 = vmatpush.bf16.msra.mxu0 0
        %12160 = vmatpush.bf16.msra.mxu0 %v12143
        %12161 = vmatpush.bf16.msra.mxu0 %v12141
        %12162 = vmatpush.bf16.msra.mxu0 %v12139
        %12163 = vmatpush.bf16.msra.mxu0 %v12137
        %12164 = vmatmul.bf16.gmra.mxu0 %v12154
        %v12165 = vpop.f32.mrf.mxu0
        %v12166 = vadd.f32 0.0, %v12165
        %v12167 = vpop.f32.mrf.mxu0
        %12168 = vdwg.mxu0
        %12169 = vmatpush.bf16.msra.mxu0 0
        %12170 = vmatpush.bf16.msra.mxu0 0
        %12171 = vmatpush.bf16.msra.mxu0 0
        %12172 = vmatpush.bf16.msra.mxu0 0
        %12173 = vmatpush.bf16.msra.mxu0 %v12144
        %12174 = vmatpush.bf16.msra.mxu0 %v12142
        %12175 = vmatpush.bf16.msra.mxu0 %v12140
        %12176 = vmatpush.bf16.msra.mxu0 %v12138
        %12177 = vmatmul.bf16.gmra.mxu0 %v12154
        %v12178 = vpop.f32.mrf.mxu0
        %v12179 = vadd.f32 0.0, %v12178
        %v12180 = vpop.f32.mrf.mxu0
        %12181 = vdwg.mxu0
        %v12182 = vadd.f32 %v12101, %v12166
        %v12183 = vadd.f32 %v12102, %v12179
        %v12184 = vpack.c.bf16 %v11852, %v11852
        %s12185 = scalar_lea.vmem %s7, 256
        %v12186 = vld [vmem:[%s12185] sm:$0xff]
        %v12187 = vld [vmem:[%s12185 + $0x8] sm:$0xff]
        %v12188 = vld [vmem:[%s12185 + $0x10] sm:$0xff]
        %v12189 = vld [vmem:[%s12185 + $0x18] sm:$0xff]
        %v12190 = vld [vmem:[%s12185 + $0x20] sm:$0xff]
        %v12191 = vld [vmem:[%s12185 + $0x28] sm:$0xff]
        %v12192 = vld [vmem:[%s12185 + $0x30] sm:$0xff]
        %v12193 = vld [vmem:[%s12185 + $0x38] sm:$0xff]
        %v12202 = vunpack.c.l.b16 %v12186
        %v12203 = vunpack.c.h.b16 %v12186
        %v12204 = vunpack.c.l.b16 %v12187
        %v12205 = vunpack.c.h.b16 %v12187
        %v12206 = vunpack.c.l.b16 %v12188
        %v12207 = vunpack.c.h.b16 %v12188
        %v12208 = vunpack.c.l.b16 %v12189
        %v12209 = vunpack.c.h.b16 %v12189
        %v12210 = vunpack.c.l.b16 %v12190
        %v12211 = vunpack.c.h.b16 %v12190
        %v12212 = vunpack.c.l.b16 %v12191
        %v12213 = vunpack.c.h.b16 %v12191
        %v12214 = vunpack.c.l.b16 %v12192
        %v12215 = vunpack.c.h.b16 %v12192
        %v12216 = vunpack.c.l.b16 %v12193
        %v12217 = vunpack.c.h.b16 %v12193
        %v12218 = vpack.c.b16 %v12204, %v12202
        %v12219 = vpack.c.b16 %v12205, %v12203
        %v12220 = vpack.c.b16 %v12208, %v12206
        %v12221 = vpack.c.b16 %v12209, %v12207
        %v12222 = vpack.c.b16 %v12212, %v12210
        %v12223 = vpack.c.b16 %v12213, %v12211
        %v12224 = vpack.c.b16 %v12216, %v12214
        %v12225 = vpack.c.b16 %v12217, %v12215
        %v12235 = vsel %vm11923, %v12184, 0
        %12237 = vmatpush.bf16.msra.mxu0 0
        %12238 = vmatpush.bf16.msra.mxu0 0
        %12239 = vmatpush.bf16.msra.mxu0 0
        %12240 = vmatpush.bf16.msra.mxu0 0
        %12241 = vmatpush.bf16.msra.mxu0 %v12224
        %12242 = vmatpush.bf16.msra.mxu0 %v12222
        %12243 = vmatpush.bf16.msra.mxu0 %v12220
        %12244 = vmatpush.bf16.msra.mxu0 %v12218
        %12245 = vmatmul.bf16.gmra.mxu0 %v12235
        %v12246 = vpop.f32.mrf.mxu0
        %v12247 = vadd.f32 0.0, %v12246
        %v12248 = vpop.f32.mrf.mxu0
        %12249 = vdwg.mxu0
        %12250 = vmatpush.bf16.msra.mxu0 0
        %12251 = vmatpush.bf16.msra.mxu0 0
        %12252 = vmatpush.bf16.msra.mxu0 0
        %12253 = vmatpush.bf16.msra.mxu0 0
        %12254 = vmatpush.bf16.msra.mxu0 %v12225
        %12255 = vmatpush.bf16.msra.mxu0 %v12223
        %12256 = vmatpush.bf16.msra.mxu0 %v12221
        %12257 = vmatpush.bf16.msra.mxu0 %v12219
        %12258 = vmatmul.bf16.gmra.mxu0 %v12235
        %v12259 = vpop.f32.mrf.mxu0
        %v12260 = vadd.f32 0.0, %v12259
        %v12261 = vpop.f32.mrf.mxu0
        %12262 = vdwg.mxu0
        %v12263 = vadd.f32 %v12182, %v12247
        %v12264 = vadd.f32 %v12183, %v12260
        %v12265 = vpack.c.bf16 %v11853, %v11853
        %s12266 = scalar_lea.vmem %s7, 320
        %v12267 = vld [vmem:[%s12266] sm:$0xff]
        %v12268 = vld [vmem:[%s12266 + $0x8] sm:$0xff]
        %v12269 = vld [vmem:[%s12266 + $0x10] sm:$0xff]
        %v12270 = vld [vmem:[%s12266 + $0x18] sm:$0xff]
        %v12271 = vld [vmem:[%s12266 + $0x20] sm:$0xff]
        %v12272 = vld [vmem:[%s12266 + $0x28] sm:$0xff]
        %v12273 = vld [vmem:[%s12266 + $0x30] sm:$0xff]
        %v12274 = vld [vmem:[%s12266 + $0x38] sm:$0xff]
        %v12283 = vunpack.c.l.b16 %v12267
        %v12284 = vunpack.c.h.b16 %v12267
        %v12285 = vunpack.c.l.b16 %v12268
        %v12286 = vunpack.c.h.b16 %v12268
        %v12287 = vunpack.c.l.b16 %v12269
        %v12288 = vunpack.c.h.b16 %v12269
        %v12289 = vunpack.c.l.b16 %v12270
        %v12290 = vunpack.c.h.b16 %v12270
        %v12291 = vunpack.c.l.b16 %v12271
        %v12292 = vunpack.c.h.b16 %v12271
        %v12293 = vunpack.c.l.b16 %v12272
        %v12294 = vunpack.c.h.b16 %v12272
        %v12295 = vunpack.c.l.b16 %v12273
        %v12296 = vunpack.c.h.b16 %v12273
        %v12297 = vunpack.c.l.b16 %v12274
        %v12298 = vunpack.c.h.b16 %v12274
        %v12299 = vpack.c.b16 %v12285, %v12283
        %v12300 = vpack.c.b16 %v12286, %v12284
        %v12301 = vpack.c.b16 %v12289, %v12287
        %v12302 = vpack.c.b16 %v12290, %v12288
        %v12303 = vpack.c.b16 %v12293, %v12291
        %v12304 = vpack.c.b16 %v12294, %v12292
        %v12305 = vpack.c.b16 %v12297, %v12295
        %v12306 = vpack.c.b16 %v12298, %v12296
        %v12316 = vsel %vm11923, %v12265, 0
        %12318 = vmatpush.bf16.msra.mxu0 0
        %12319 = vmatpush.bf16.msra.mxu0 0
        %12320 = vmatpush.bf16.msra.mxu0 0
        %12321 = vmatpush.bf16.msra.mxu0 0
        %12322 = vmatpush.bf16.msra.mxu0 %v12305
        %12323 = vmatpush.bf16.msra.mxu0 %v12303
        %12324 = vmatpush.bf16.msra.mxu0 %v12301
        %12325 = vmatpush.bf16.msra.mxu0 %v12299
        %12326 = vmatmul.bf16.gmra.mxu0 %v12316
        %v12327 = vpop.f32.mrf.mxu0
        %v12328 = vadd.f32 0.0, %v12327
        %v12329 = vpop.f32.mrf.mxu0
        %12330 = vdwg.mxu0
        %12331 = vmatpush.bf16.msra.mxu0 0
        %12332 = vmatpush.bf16.msra.mxu0 0
        %12333 = vmatpush.bf16.msra.mxu0 0
        %12334 = vmatpush.bf16.msra.mxu0 0
        %12335 = vmatpush.bf16.msra.mxu0 %v12306
        %12336 = vmatpush.bf16.msra.mxu0 %v12304
        %12337 = vmatpush.bf16.msra.mxu0 %v12302
        %12338 = vmatpush.bf16.msra.mxu0 %v12300
        %12339 = vmatmul.bf16.gmra.mxu0 %v12316
        %v12340 = vpop.f32.mrf.mxu0
        %v12341 = vadd.f32 0.0, %v12340
        %v12342 = vpop.f32.mrf.mxu0
        %12343 = vdwg.mxu0
        %v12344 = vadd.f32 %v12263, %v12328
        %v12345 = vadd.f32 %v12264, %v12341
        %v12346 = vpack.c.bf16 %v11854, %v11854
        %s12347 = scalar_lea.vmem %s7, 384
        %v12348 = vld [vmem:[%s12347] sm:$0xff]
        %v12349 = vld [vmem:[%s12347 + $0x8] sm:$0xff]
        %v12350 = vld [vmem:[%s12347 + $0x10] sm:$0xff]
        %v12351 = vld [vmem:[%s12347 + $0x18] sm:$0xff]
        %v12352 = vld [vmem:[%s12347 + $0x20] sm:$0xff]
        %v12353 = vld [vmem:[%s12347 + $0x28] sm:$0xff]
        %v12354 = vld [vmem:[%s12347 + $0x30] sm:$0xff]
        %v12355 = vld [vmem:[%s12347 + $0x38] sm:$0xff]
        %v12364 = vunpack.c.l.b16 %v12348
        %v12365 = vunpack.c.h.b16 %v12348
        %v12366 = vunpack.c.l.b16 %v12349
        %v12367 = vunpack.c.h.b16 %v12349
        %v12368 = vunpack.c.l.b16 %v12350
        %v12369 = vunpack.c.h.b16 %v12350
        %v12370 = vunpack.c.l.b16 %v12351
        %v12371 = vunpack.c.h.b16 %v12351
        %v12372 = vunpack.c.l.b16 %v12352
        %v12373 = vunpack.c.h.b16 %v12352
        %v12374 = vunpack.c.l.b16 %v12353
        %v12375 = vunpack.c.h.b16 %v12353
        %v12376 = vunpack.c.l.b16 %v12354
        %v12377 = vunpack.c.h.b16 %v12354
        %v12378 = vunpack.c.l.b16 %v12355
        %v12379 = vunpack.c.h.b16 %v12355
        %v12380 = vpack.c.b16 %v12366, %v12364
        %v12381 = vpack.c.b16 %v12367, %v12365
        %v12382 = vpack.c.b16 %v12370, %v12368
        %v12383 = vpack.c.b16 %v12371, %v12369
        %v12384 = vpack.c.b16 %v12374, %v12372
        %v12385 = vpack.c.b16 %v12375, %v12373
        %v12386 = vpack.c.b16 %v12378, %v12376
        %v12387 = vpack.c.b16 %v12379, %v12377
        %v12397 = vsel %vm11923, %v12346, 0
        %12399 = vmatpush.bf16.msra.mxu0 0
        %12400 = vmatpush.bf16.msra.mxu0 0
        %12401 = vmatpush.bf16.msra.mxu0 0
        %12402 = vmatpush.bf16.msra.mxu0 0
        %12403 = vmatpush.bf16.msra.mxu0 %v12386
        %12404 = vmatpush.bf16.msra.mxu0 %v12384
        %12405 = vmatpush.bf16.msra.mxu0 %v12382
        %12406 = vmatpush.bf16.msra.mxu0 %v12380
        %12407 = vmatmul.bf16.gmra.mxu0 %v12397
        %v12408 = vpop.f32.mrf.mxu0
        %v12409 = vadd.f32 0.0, %v12408
        %v12410 = vpop.f32.mrf.mxu0
        %12411 = vdwg.mxu0
        %12412 = vmatpush.bf16.msra.mxu0 0
        %12413 = vmatpush.bf16.msra.mxu0 0
        %12414 = vmatpush.bf16.msra.mxu0 0
        %12415 = vmatpush.bf16.msra.mxu0 0
        %12416 = vmatpush.bf16.msra.mxu0 %v12387
        %12417 = vmatpush.bf16.msra.mxu0 %v12385
        %12418 = vmatpush.bf16.msra.mxu0 %v12383
        %12419 = vmatpush.bf16.msra.mxu0 %v12381
        %12420 = vmatmul.bf16.gmra.mxu0 %v12397
        %v12421 = vpop.f32.mrf.mxu0
        %v12422 = vadd.f32 0.0, %v12421
        %v12423 = vpop.f32.mrf.mxu0
        %12424 = vdwg.mxu0
        %v12425 = vadd.f32 %v12344, %v12409
        %v12426 = vadd.f32 %v12345, %v12422
        %v12427 = vpack.c.bf16 %v11855, %v11855
        %s12428 = scalar_lea.vmem %s7, 448
        %v12429 = vld [vmem:[%s12428] sm:$0xff]
        %v12430 = vld [vmem:[%s12428 + $0x8] sm:$0xff]
        %v12431 = vld [vmem:[%s12428 + $0x10] sm:$0xff]
        %v12432 = vld [vmem:[%s12428 + $0x18] sm:$0xff]
        %v12433 = vld [vmem:[%s12428 + $0x20] sm:$0xff]
        %v12434 = vld [vmem:[%s12428 + $0x28] sm:$0xff]
        %v12435 = vld [vmem:[%s12428 + $0x30] sm:$0xff]
        %v12436 = vld [vmem:[%s12428 + $0x38] sm:$0xff]
        %v12445 = vunpack.c.l.b16 %v12429
        %v12446 = vunpack.c.h.b16 %v12429
        %v12447 = vunpack.c.l.b16 %v12430
        %v12448 = vunpack.c.h.b16 %v12430
        %v12449 = vunpack.c.l.b16 %v12431
        %v12450 = vunpack.c.h.b16 %v12431
        %v12451 = vunpack.c.l.b16 %v12432
        %v12452 = vunpack.c.h.b16 %v12432
        %v12453 = vunpack.c.l.b16 %v12433
        %v12454 = vunpack.c.h.b16 %v12433
        %v12455 = vunpack.c.l.b16 %v12434
        %v12456 = vunpack.c.h.b16 %v12434
        %v12457 = vunpack.c.l.b16 %v12435
        %v12458 = vunpack.c.h.b16 %v12435
        %v12459 = vunpack.c.l.b16 %v12436
        %v12460 = vunpack.c.h.b16 %v12436
        %v12461 = vpack.c.b16 %v12447, %v12445
        %v12462 = vpack.c.b16 %v12448, %v12446
        %v12463 = vpack.c.b16 %v12451, %v12449
        %v12464 = vpack.c.b16 %v12452, %v12450
        %v12465 = vpack.c.b16 %v12455, %v12453
        %v12466 = vpack.c.b16 %v12456, %v12454
        %v12467 = vpack.c.b16 %v12459, %v12457
        %v12468 = vpack.c.b16 %v12460, %v12458
        %v12478 = vsel %vm11923, %v12427, 0
        %12480 = vmatpush.bf16.msra.mxu0 0
        %12481 = vmatpush.bf16.msra.mxu0 0
        %12482 = vmatpush.bf16.msra.mxu0 0
        %12483 = vmatpush.bf16.msra.mxu0 0
        %12484 = vmatpush.bf16.msra.mxu0 %v12467
        %12485 = vmatpush.bf16.msra.mxu0 %v12465
        %12486 = vmatpush.bf16.msra.mxu0 %v12463
        %12487 = vmatpush.bf16.msra.mxu0 %v12461
        %12488 = vmatmul.bf16.gmra.mxu0 %v12478
        %v12489 = vpop.f32.mrf.mxu0
        %v12490 = vadd.f32 0.0, %v12489
        %v12491 = vpop.f32.mrf.mxu0
        %12492 = vdwg.mxu0
        %12493 = vmatpush.bf16.msra.mxu0 0
        %12494 = vmatpush.bf16.msra.mxu0 0
        %12495 = vmatpush.bf16.msra.mxu0 0
        %12496 = vmatpush.bf16.msra.mxu0 0
        %12497 = vmatpush.bf16.msra.mxu0 %v12468
        %12498 = vmatpush.bf16.msra.mxu0 %v12466
        %12499 = vmatpush.bf16.msra.mxu0 %v12464
        %12500 = vmatpush.bf16.msra.mxu0 %v12462
        %12501 = vmatmul.bf16.gmra.mxu0 %v12478
        %v12502 = vpop.f32.mrf.mxu0
        %v12503 = vadd.f32 0.0, %v12502
        %v12504 = vpop.f32.mrf.mxu0
        %12505 = vdwg.mxu0
        %v12506 = vadd.f32 %v12425, %v12490
        %v12507 = vadd.f32 %v12426, %v12503
        %v12508 = vpack.c.bf16 %v11856, %v11856
        %s12509 = scalar_lea.vmem %s7, 512
        %v12510 = vld [vmem:[%s12509] sm:$0xff]
        %v12511 = vld [vmem:[%s12509 + $0x8] sm:$0xff]
        %v12512 = vld [vmem:[%s12509 + $0x10] sm:$0xff]
        %v12513 = vld [vmem:[%s12509 + $0x18] sm:$0xff]
        %v12514 = vld [vmem:[%s12509 + $0x20] sm:$0xff]
        %v12515 = vld [vmem:[%s12509 + $0x28] sm:$0xff]
        %v12516 = vld [vmem:[%s12509 + $0x30] sm:$0xff]
        %v12517 = vld [vmem:[%s12509 + $0x38] sm:$0xff]
        %v12526 = vunpack.c.l.b16 %v12510
        %v12527 = vunpack.c.h.b16 %v12510
        %v12528 = vunpack.c.l.b16 %v12511
        %v12529 = vunpack.c.h.b16 %v12511
        %v12530 = vunpack.c.l.b16 %v12512
        %v12531 = vunpack.c.h.b16 %v12512
        %v12532 = vunpack.c.l.b16 %v12513
        %v12533 = vunpack.c.h.b16 %v12513
        %v12534 = vunpack.c.l.b16 %v12514
        %v12535 = vunpack.c.h.b16 %v12514
        %v12536 = vunpack.c.l.b16 %v12515
        %v12537 = vunpack.c.h.b16 %v12515
        %v12538 = vunpack.c.l.b16 %v12516
        %v12539 = vunpack.c.h.b16 %v12516
        %v12540 = vunpack.c.l.b16 %v12517
        %v12541 = vunpack.c.h.b16 %v12517
        %v12542 = vpack.c.b16 %v12528, %v12526
        %v12543 = vpack.c.b16 %v12529, %v12527
        %v12544 = vpack.c.b16 %v12532, %v12530
        %v12545 = vpack.c.b16 %v12533, %v12531
        %v12546 = vpack.c.b16 %v12536, %v12534
        %v12547 = vpack.c.b16 %v12537, %v12535
        %v12548 = vpack.c.b16 %v12540, %v12538
        %v12549 = vpack.c.b16 %v12541, %v12539
        %v12559 = vsel %vm11923, %v12508, 0
        %12561 = vmatpush.bf16.msra.mxu0 0
        %12562 = vmatpush.bf16.msra.mxu0 0
        %12563 = vmatpush.bf16.msra.mxu0 0
        %12564 = vmatpush.bf16.msra.mxu0 0
        %12565 = vmatpush.bf16.msra.mxu0 %v12548
        %12566 = vmatpush.bf16.msra.mxu0 %v12546
        %12567 = vmatpush.bf16.msra.mxu0 %v12544
        %12568 = vmatpush.bf16.msra.mxu0 %v12542
        %12569 = vmatmul.bf16.gmra.mxu0 %v12559
        %v12570 = vpop.f32.mrf.mxu0
        %v12571 = vadd.f32 0.0, %v12570
        %v12572 = vpop.f32.mrf.mxu0
        %12573 = vdwg.mxu0
        %12574 = vmatpush.bf16.msra.mxu0 0
        %12575 = vmatpush.bf16.msra.mxu0 0
        %12576 = vmatpush.bf16.msra.mxu0 0
        %12577 = vmatpush.bf16.msra.mxu0 0
        %12578 = vmatpush.bf16.msra.mxu0 %v12549
        %12579 = vmatpush.bf16.msra.mxu0 %v12547
        %12580 = vmatpush.bf16.msra.mxu0 %v12545
        %12581 = vmatpush.bf16.msra.mxu0 %v12543
        %12582 = vmatmul.bf16.gmra.mxu0 %v12559
        %v12583 = vpop.f32.mrf.mxu0
        %v12584 = vadd.f32 0.0, %v12583
        %v12585 = vpop.f32.mrf.mxu0
        %12586 = vdwg.mxu0
        %v12587 = vadd.f32 %v12506, %v12571
        %v12588 = vadd.f32 %v12507, %v12584
        %v12589 = vpack.c.bf16 %v11857, %v11857
        %s12590 = scalar_lea.vmem %s7, 576
        %v12591 = vld [vmem:[%s12590] sm:$0xff]
        %v12592 = vld [vmem:[%s12590 + $0x8] sm:$0xff]
        %v12593 = vld [vmem:[%s12590 + $0x10] sm:$0xff]
        %v12594 = vld [vmem:[%s12590 + $0x18] sm:$0xff]
        %v12595 = vld [vmem:[%s12590 + $0x20] sm:$0xff]
        %v12596 = vld [vmem:[%s12590 + $0x28] sm:$0xff]
        %v12597 = vld [vmem:[%s12590 + $0x30] sm:$0xff]
        %v12598 = vld [vmem:[%s12590 + $0x38] sm:$0xff]
        %v12607 = vunpack.c.l.b16 %v12591
        %v12608 = vunpack.c.h.b16 %v12591
        %v12609 = vunpack.c.l.b16 %v12592
        %v12610 = vunpack.c.h.b16 %v12592
        %v12611 = vunpack.c.l.b16 %v12593
        %v12612 = vunpack.c.h.b16 %v12593
        %v12613 = vunpack.c.l.b16 %v12594
        %v12614 = vunpack.c.h.b16 %v12594
        %v12615 = vunpack.c.l.b16 %v12595
        %v12616 = vunpack.c.h.b16 %v12595
        %v12617 = vunpack.c.l.b16 %v12596
        %v12618 = vunpack.c.h.b16 %v12596
        %v12619 = vunpack.c.l.b16 %v12597
        %v12620 = vunpack.c.h.b16 %v12597
        %v12621 = vunpack.c.l.b16 %v12598
        %v12622 = vunpack.c.h.b16 %v12598
        %v12623 = vpack.c.b16 %v12609, %v12607
        %v12624 = vpack.c.b16 %v12610, %v12608
        %v12625 = vpack.c.b16 %v12613, %v12611
        %v12626 = vpack.c.b16 %v12614, %v12612
        %v12627 = vpack.c.b16 %v12617, %v12615
        %v12628 = vpack.c.b16 %v12618, %v12616
        %v12629 = vpack.c.b16 %v12621, %v12619
        %v12630 = vpack.c.b16 %v12622, %v12620
        %v12640 = vsel %vm11923, %v12589, 0
        %12642 = vmatpush.bf16.msra.mxu0 0
        %12643 = vmatpush.bf16.msra.mxu0 0
        %12644 = vmatpush.bf16.msra.mxu0 0
        %12645 = vmatpush.bf16.msra.mxu0 0
        %12646 = vmatpush.bf16.msra.mxu0 %v12629
        %12647 = vmatpush.bf16.msra.mxu0 %v12627
        %12648 = vmatpush.bf16.msra.mxu0 %v12625
        %12649 = vmatpush.bf16.msra.mxu0 %v12623
        %12650 = vmatmul.bf16.gmra.mxu0 %v12640
        %v12651 = vpop.f32.mrf.mxu0
        %v12652 = vadd.f32 0.0, %v12651
        %v12653 = vpop.f32.mrf.mxu0
        %12654 = vdwg.mxu0
        %12655 = vmatpush.bf16.msra.mxu0 0
        %12656 = vmatpush.bf16.msra.mxu0 0
        %12657 = vmatpush.bf16.msra.mxu0 0
        %12658 = vmatpush.bf16.msra.mxu0 0
        %12659 = vmatpush.bf16.msra.mxu0 %v12630
        %12660 = vmatpush.bf16.msra.mxu0 %v12628
        %12661 = vmatpush.bf16.msra.mxu0 %v12626
        %12662 = vmatpush.bf16.msra.mxu0 %v12624
        %12663 = vmatmul.bf16.gmra.mxu0 %v12640
        %v12664 = vpop.f32.mrf.mxu0
        %v12665 = vadd.f32 0.0, %v12664
        %v12666 = vpop.f32.mrf.mxu0
        %12667 = vdwg.mxu0
        %v12668 = vadd.f32 %v12587, %v12652
        %v12669 = vadd.f32 %v12588, %v12665
        %v12670 = vpack.c.bf16 %v11858, %v11858
        %s12671 = scalar_lea.vmem %s7, 640
        %v12672 = vld [vmem:[%s12671] sm:$0xff]
        %v12673 = vld [vmem:[%s12671 + $0x8] sm:$0xff]
        %v12674 = vld [vmem:[%s12671 + $0x10] sm:$0xff]
        %v12675 = vld [vmem:[%s12671 + $0x18] sm:$0xff]
        %v12676 = vld [vmem:[%s12671 + $0x20] sm:$0xff]
        %v12677 = vld [vmem:[%s12671 + $0x28] sm:$0xff]
        %v12678 = vld [vmem:[%s12671 + $0x30] sm:$0xff]
        %v12679 = vld [vmem:[%s12671 + $0x38] sm:$0xff]
        %v12688 = vunpack.c.l.b16 %v12672
        %v12689 = vunpack.c.h.b16 %v12672
        %v12690 = vunpack.c.l.b16 %v12673
        %v12691 = vunpack.c.h.b16 %v12673
        %v12692 = vunpack.c.l.b16 %v12674
        %v12693 = vunpack.c.h.b16 %v12674
        %v12694 = vunpack.c.l.b16 %v12675
        %v12695 = vunpack.c.h.b16 %v12675
        %v12696 = vunpack.c.l.b16 %v12676
        %v12697 = vunpack.c.h.b16 %v12676
        %v12698 = vunpack.c.l.b16 %v12677
        %v12699 = vunpack.c.h.b16 %v12677
        %v12700 = vunpack.c.l.b16 %v12678
        %v12701 = vunpack.c.h.b16 %v12678
        %v12702 = vunpack.c.l.b16 %v12679
        %v12703 = vunpack.c.h.b16 %v12679
        %v12704 = vpack.c.b16 %v12690, %v12688
        %v12705 = vpack.c.b16 %v12691, %v12689
        %v12706 = vpack.c.b16 %v12694, %v12692
        %v12707 = vpack.c.b16 %v12695, %v12693
        %v12708 = vpack.c.b16 %v12698, %v12696
        %v12709 = vpack.c.b16 %v12699, %v12697
        %v12710 = vpack.c.b16 %v12702, %v12700
        %v12711 = vpack.c.b16 %v12703, %v12701
        %v12721 = vsel %vm11923, %v12670, 0
        %12723 = vmatpush.bf16.msra.mxu0 0
        %12724 = vmatpush.bf16.msra.mxu0 0
        %12725 = vmatpush.bf16.msra.mxu0 0
        %12726 = vmatpush.bf16.msra.mxu0 0
        %12727 = vmatpush.bf16.msra.mxu0 %v12710
        %12728 = vmatpush.bf16.msra.mxu0 %v12708
        %12729 = vmatpush.bf16.msra.mxu0 %v12706
        %12730 = vmatpush.bf16.msra.mxu0 %v12704
        %12731 = vmatmul.bf16.gmra.mxu0 %v12721
        %v12732 = vpop.f32.mrf.mxu0
        %v12733 = vadd.f32 0.0, %v12732
        %v12734 = vpop.f32.mrf.mxu0
        %12735 = vdwg.mxu0
        %12736 = vmatpush.bf16.msra.mxu0 0
        %12737 = vmatpush.bf16.msra.mxu0 0
        %12738 = vmatpush.bf16.msra.mxu0 0
        %12739 = vmatpush.bf16.msra.mxu0 0
        %12740 = vmatpush.bf16.msra.mxu0 %v12711
        %12741 = vmatpush.bf16.msra.mxu0 %v12709
        %12742 = vmatpush.bf16.msra.mxu0 %v12707
        %12743 = vmatpush.bf16.msra.mxu0 %v12705
        %12744 = vmatmul.bf16.gmra.mxu0 %v12721
        %v12745 = vpop.f32.mrf.mxu0
        %v12746 = vadd.f32 0.0, %v12745
        %v12747 = vpop.f32.mrf.mxu0
        %12748 = vdwg.mxu0
        %v12749 = vadd.f32 %v12668, %v12733
        %v12750 = vadd.f32 %v12669, %v12746
        %v12751 = vpack.c.bf16 %v11859, %v11859
        %s12752 = scalar_lea.vmem %s7, 704
        %v12753 = vld [vmem:[%s12752] sm:$0xff]
        %v12754 = vld [vmem:[%s12752 + $0x8] sm:$0xff]
        %v12755 = vld [vmem:[%s12752 + $0x10] sm:$0xff]
        %v12756 = vld [vmem:[%s12752 + $0x18] sm:$0xff]
        %v12757 = vld [vmem:[%s12752 + $0x20] sm:$0xff]
        %v12758 = vld [vmem:[%s12752 + $0x28] sm:$0xff]
        %v12759 = vld [vmem:[%s12752 + $0x30] sm:$0xff]
        %v12760 = vld [vmem:[%s12752 + $0x38] sm:$0xff]
        %v12769 = vunpack.c.l.b16 %v12753
        %v12770 = vunpack.c.h.b16 %v12753
        %v12771 = vunpack.c.l.b16 %v12754
        %v12772 = vunpack.c.h.b16 %v12754
        %v12773 = vunpack.c.l.b16 %v12755
        %v12774 = vunpack.c.h.b16 %v12755
        %v12775 = vunpack.c.l.b16 %v12756
        %v12776 = vunpack.c.h.b16 %v12756
        %v12777 = vunpack.c.l.b16 %v12757
        %v12778 = vunpack.c.h.b16 %v12757
        %v12779 = vunpack.c.l.b16 %v12758
        %v12780 = vunpack.c.h.b16 %v12758
        %v12781 = vunpack.c.l.b16 %v12759
        %v12782 = vunpack.c.h.b16 %v12759
        %v12783 = vunpack.c.l.b16 %v12760
        %v12784 = vunpack.c.h.b16 %v12760
        %v12785 = vpack.c.b16 %v12771, %v12769
        %v12786 = vpack.c.b16 %v12772, %v12770
        %v12787 = vpack.c.b16 %v12775, %v12773
        %v12788 = vpack.c.b16 %v12776, %v12774
        %v12789 = vpack.c.b16 %v12779, %v12777
        %v12790 = vpack.c.b16 %v12780, %v12778
        %v12791 = vpack.c.b16 %v12783, %v12781
        %v12792 = vpack.c.b16 %v12784, %v12782
        %v12802 = vsel %vm11923, %v12751, 0
        %12804 = vmatpush.bf16.msra.mxu0 0
        %12805 = vmatpush.bf16.msra.mxu0 0
        %12806 = vmatpush.bf16.msra.mxu0 0
        %12807 = vmatpush.bf16.msra.mxu0 0
        %12808 = vmatpush.bf16.msra.mxu0 %v12791
        %12809 = vmatpush.bf16.msra.mxu0 %v12789
        %12810 = vmatpush.bf16.msra.mxu0 %v12787
        %12811 = vmatpush.bf16.msra.mxu0 %v12785
        %12812 = vmatmul.bf16.gmra.mxu0 %v12802
        %v12813 = vpop.f32.mrf.mxu0
        %v12814 = vadd.f32 0.0, %v12813
        %v12815 = vpop.f32.mrf.mxu0
        %12816 = vdwg.mxu0
        %12817 = vmatpush.bf16.msra.mxu0 0
        %12818 = vmatpush.bf16.msra.mxu0 0
        %12819 = vmatpush.bf16.msra.mxu0 0
        %12820 = vmatpush.bf16.msra.mxu0 0
        %12821 = vmatpush.bf16.msra.mxu0 %v12792
        %12822 = vmatpush.bf16.msra.mxu0 %v12790
        %12823 = vmatpush.bf16.msra.mxu0 %v12788
        %12824 = vmatpush.bf16.msra.mxu0 %v12786
        %12825 = vmatmul.bf16.gmra.mxu0 %v12802
        %v12826 = vpop.f32.mrf.mxu0
        %v12827 = vadd.f32 0.0, %v12826
        %v12828 = vpop.f32.mrf.mxu0
        %12829 = vdwg.mxu0
        %v12830 = vadd.f32 %v12749, %v12814
        %v12831 = vadd.f32 %v12750, %v12827
        %v12832 = vpack.c.bf16 %v11860, %v11860
        %s12833 = scalar_lea.vmem %s7, 768
        %v12834 = vld [vmem:[%s12833] sm:$0xff]
        %v12835 = vld [vmem:[%s12833 + $0x8] sm:$0xff]
        %v12836 = vld [vmem:[%s12833 + $0x10] sm:$0xff]
        %v12837 = vld [vmem:[%s12833 + $0x18] sm:$0xff]
        %v12838 = vld [vmem:[%s12833 + $0x20] sm:$0xff]
        %v12839 = vld [vmem:[%s12833 + $0x28] sm:$0xff]
        %v12840 = vld [vmem:[%s12833 + $0x30] sm:$0xff]
        %v12841 = vld [vmem:[%s12833 + $0x38] sm:$0xff]
        %v12850 = vunpack.c.l.b16 %v12834
        %v12851 = vunpack.c.h.b16 %v12834
        %v12852 = vunpack.c.l.b16 %v12835
        %v12853 = vunpack.c.h.b16 %v12835
        %v12854 = vunpack.c.l.b16 %v12836
        %v12855 = vunpack.c.h.b16 %v12836
        %v12856 = vunpack.c.l.b16 %v12837
        %v12857 = vunpack.c.h.b16 %v12837
        %v12858 = vunpack.c.l.b16 %v12838
        %v12859 = vunpack.c.h.b16 %v12838
        %v12860 = vunpack.c.l.b16 %v12839
        %v12861 = vunpack.c.h.b16 %v12839
        %v12862 = vunpack.c.l.b16 %v12840
        %v12863 = vunpack.c.h.b16 %v12840
        %v12864 = vunpack.c.l.b16 %v12841
        %v12865 = vunpack.c.h.b16 %v12841
        %v12866 = vpack.c.b16 %v12852, %v12850
        %v12867 = vpack.c.b16 %v12853, %v12851
        %v12868 = vpack.c.b16 %v12856, %v12854
        %v12869 = vpack.c.b16 %v12857, %v12855
        %v12870 = vpack.c.b16 %v12860, %v12858
        %v12871 = vpack.c.b16 %v12861, %v12859
        %v12872 = vpack.c.b16 %v12864, %v12862
        %v12873 = vpack.c.b16 %v12865, %v12863
        %v12883 = vsel %vm11923, %v12832, 0
        %12885 = vmatpush.bf16.msra.mxu0 0
        %12886 = vmatpush.bf16.msra.mxu0 0
        %12887 = vmatpush.bf16.msra.mxu0 0
        %12888 = vmatpush.bf16.msra.mxu0 0
        %12889 = vmatpush.bf16.msra.mxu0 %v12872
        %12890 = vmatpush.bf16.msra.mxu0 %v12870
        %12891 = vmatpush.bf16.msra.mxu0 %v12868
        %12892 = vmatpush.bf16.msra.mxu0 %v12866
        %12893 = vmatmul.bf16.gmra.mxu0 %v12883
        %v12894 = vpop.f32.mrf.mxu0
        %v12895 = vadd.f32 0.0, %v12894
        %v12896 = vpop.f32.mrf.mxu0
        %12897 = vdwg.mxu0
        %12898 = vmatpush.bf16.msra.mxu0 0
        %12899 = vmatpush.bf16.msra.mxu0 0
        %12900 = vmatpush.bf16.msra.mxu0 0
        %12901 = vmatpush.bf16.msra.mxu0 0
        %12902 = vmatpush.bf16.msra.mxu0 %v12873
        %12903 = vmatpush.bf16.msra.mxu0 %v12871
        %12904 = vmatpush.bf16.msra.mxu0 %v12869
        %12905 = vmatpush.bf16.msra.mxu0 %v12867
        %12906 = vmatmul.bf16.gmra.mxu0 %v12883
        %v12907 = vpop.f32.mrf.mxu0
        %v12908 = vadd.f32 0.0, %v12907
        %v12909 = vpop.f32.mrf.mxu0
        %12910 = vdwg.mxu0
        %v12911 = vadd.f32 %v12830, %v12895
        %v12912 = vadd.f32 %v12831, %v12908
        %v12913 = vpack.c.bf16 %v11861, %v11861
        %s12914 = scalar_lea.vmem %s7, 832
        %v12915 = vld [vmem:[%s12914] sm:$0xff]
        %v12916 = vld [vmem:[%s12914 + $0x8] sm:$0xff]
        %v12917 = vld [vmem:[%s12914 + $0x10] sm:$0xff]
        %v12918 = vld [vmem:[%s12914 + $0x18] sm:$0xff]
        %v12919 = vld [vmem:[%s12914 + $0x20] sm:$0xff]
        %v12920 = vld [vmem:[%s12914 + $0x28] sm:$0xff]
        %v12921 = vld [vmem:[%s12914 + $0x30] sm:$0xff]
        %v12922 = vld [vmem:[%s12914 + $0x38] sm:$0xff]
        %v12931 = vunpack.c.l.b16 %v12915
        %v12932 = vunpack.c.h.b16 %v12915
        %v12933 = vunpack.c.l.b16 %v12916
        %v12934 = vunpack.c.h.b16 %v12916
        %v12935 = vunpack.c.l.b16 %v12917
        %v12936 = vunpack.c.h.b16 %v12917
        %v12937 = vunpack.c.l.b16 %v12918
        %v12938 = vunpack.c.h.b16 %v12918
        %v12939 = vunpack.c.l.b16 %v12919
        %v12940 = vunpack.c.h.b16 %v12919
        %v12941 = vunpack.c.l.b16 %v12920
        %v12942 = vunpack.c.h.b16 %v12920
        %v12943 = vunpack.c.l.b16 %v12921
        %v12944 = vunpack.c.h.b16 %v12921
        %v12945 = vunpack.c.l.b16 %v12922
        %v12946 = vunpack.c.h.b16 %v12922
        %v12947 = vpack.c.b16 %v12933, %v12931
        %v12948 = vpack.c.b16 %v12934, %v12932
        %v12949 = vpack.c.b16 %v12937, %v12935
        %v12950 = vpack.c.b16 %v12938, %v12936
        %v12951 = vpack.c.b16 %v12941, %v12939
        %v12952 = vpack.c.b16 %v12942, %v12940
        %v12953 = vpack.c.b16 %v12945, %v12943
        %v12954 = vpack.c.b16 %v12946, %v12944
        %v12964 = vsel %vm11923, %v12913, 0
        %12966 = vmatpush.bf16.msra.mxu0 0
        %12967 = vmatpush.bf16.msra.mxu0 0
        %12968 = vmatpush.bf16.msra.mxu0 0
        %12969 = vmatpush.bf16.msra.mxu0 0
        %12970 = vmatpush.bf16.msra.mxu0 %v12953
        %12971 = vmatpush.bf16.msra.mxu0 %v12951
        %12972 = vmatpush.bf16.msra.mxu0 %v12949
        %12973 = vmatpush.bf16.msra.mxu0 %v12947
        %12974 = vmatmul.bf16.gmra.mxu0 %v12964
        %v12975 = vpop.f32.mrf.mxu0
        %v12976 = vadd.f32 0.0, %v12975
        %v12977 = vpop.f32.mrf.mxu0
        %12978 = vdwg.mxu0
        %12979 = vmatpush.bf16.msra.mxu0 0
        %12980 = vmatpush.bf16.msra.mxu0 0
        %12981 = vmatpush.bf16.msra.mxu0 0
        %12982 = vmatpush.bf16.msra.mxu0 0
        %12983 = vmatpush.bf16.msra.mxu0 %v12954
        %12984 = vmatpush.bf16.msra.mxu0 %v12952
        %12985 = vmatpush.bf16.msra.mxu0 %v12950
        %12986 = vmatpush.bf16.msra.mxu0 %v12948
        %12987 = vmatmul.bf16.gmra.mxu0 %v12964
        %v12988 = vpop.f32.mrf.mxu0
        %v12989 = vadd.f32 0.0, %v12988
        %v12990 = vpop.f32.mrf.mxu0
        %12991 = vdwg.mxu0
        %v12992 = vadd.f32 %v12911, %v12976
        %v12993 = vadd.f32 %v12912, %v12989
        %v12994 = vpack.c.bf16 %v11862, %v11862
        %s12995 = scalar_lea.vmem %s7, 896
        %v12996 = vld [vmem:[%s12995] sm:$0xff]
        %v12997 = vld [vmem:[%s12995 + $0x8] sm:$0xff]
        %v12998 = vld [vmem:[%s12995 + $0x10] sm:$0xff]
        %v12999 = vld [vmem:[%s12995 + $0x18] sm:$0xff]
        %v13000 = vld [vmem:[%s12995 + $0x20] sm:$0xff]
        %v13001 = vld [vmem:[%s12995 + $0x28] sm:$0xff]
        %v13002 = vld [vmem:[%s12995 + $0x30] sm:$0xff]
        %v13003 = vld [vmem:[%s12995 + $0x38] sm:$0xff]
        %v13012 = vunpack.c.l.b16 %v12996
        %v13013 = vunpack.c.h.b16 %v12996
        %v13014 = vunpack.c.l.b16 %v12997
        %v13015 = vunpack.c.h.b16 %v12997
        %v13016 = vunpack.c.l.b16 %v12998
        %v13017 = vunpack.c.h.b16 %v12998
        %v13018 = vunpack.c.l.b16 %v12999
        %v13019 = vunpack.c.h.b16 %v12999
        %v13020 = vunpack.c.l.b16 %v13000
        %v13021 = vunpack.c.h.b16 %v13000
        %v13022 = vunpack.c.l.b16 %v13001
        %v13023 = vunpack.c.h.b16 %v13001
        %v13024 = vunpack.c.l.b16 %v13002
        %v13025 = vunpack.c.h.b16 %v13002
        %v13026 = vunpack.c.l.b16 %v13003
        %v13027 = vunpack.c.h.b16 %v13003
        %v13028 = vpack.c.b16 %v13014, %v13012
        %v13029 = vpack.c.b16 %v13015, %v13013
        %v13030 = vpack.c.b16 %v13018, %v13016
        %v13031 = vpack.c.b16 %v13019, %v13017
        %v13032 = vpack.c.b16 %v13022, %v13020
        %v13033 = vpack.c.b16 %v13023, %v13021
        %v13034 = vpack.c.b16 %v13026, %v13024
        %v13035 = vpack.c.b16 %v13027, %v13025
        %v13045 = vsel %vm11923, %v12994, 0
        %13047 = vmatpush.bf16.msra.mxu0 0
        %13048 = vmatpush.bf16.msra.mxu0 0
        %13049 = vmatpush.bf16.msra.mxu0 0
        %13050 = vmatpush.bf16.msra.mxu0 0
        %13051 = vmatpush.bf16.msra.mxu0 %v13034
        %13052 = vmatpush.bf16.msra.mxu0 %v13032
        %13053 = vmatpush.bf16.msra.mxu0 %v13030
        %13054 = vmatpush.bf16.msra.mxu0 %v13028
        %13055 = vmatmul.bf16.gmra.mxu0 %v13045
        %v13056 = vpop.f32.mrf.mxu0
        %v13057 = vadd.f32 0.0, %v13056
        %v13058 = vpop.f32.mrf.mxu0
        %13059 = vdwg.mxu0
        %13060 = vmatpush.bf16.msra.mxu0 0
        %13061 = vmatpush.bf16.msra.mxu0 0
        %13062 = vmatpush.bf16.msra.mxu0 0
        %13063 = vmatpush.bf16.msra.mxu0 0
        %13064 = vmatpush.bf16.msra.mxu0 %v13035
        %13065 = vmatpush.bf16.msra.mxu0 %v13033
        %13066 = vmatpush.bf16.msra.mxu0 %v13031
        %13067 = vmatpush.bf16.msra.mxu0 %v13029
        %13068 = vmatmul.bf16.gmra.mxu0 %v13045
        %v13069 = vpop.f32.mrf.mxu0
        %v13070 = vadd.f32 0.0, %v13069
        %v13071 = vpop.f32.mrf.mxu0
        %13072 = vdwg.mxu0
        %v13073 = vadd.f32 %v12992, %v13057
        %v13074 = vadd.f32 %v12993, %v13070
        %v13075 = vpack.c.bf16 %v11863, %v11863
        %s13076 = scalar_lea.vmem %s7, 960
        %v13077 = vld [vmem:[%s13076] sm:$0xff]
        %v13078 = vld [vmem:[%s13076 + $0x8] sm:$0xff]
        %v13079 = vld [vmem:[%s13076 + $0x10] sm:$0xff]
        %v13080 = vld [vmem:[%s13076 + $0x18] sm:$0xff]
        %v13081 = vld [vmem:[%s13076 + $0x20] sm:$0xff]
        %v13082 = vld [vmem:[%s13076 + $0x28] sm:$0xff]
        %v13083 = vld [vmem:[%s13076 + $0x30] sm:$0xff]
        %v13084 = vld [vmem:[%s13076 + $0x38] sm:$0xff]
        %v13093 = vunpack.c.l.b16 %v13077
        %v13094 = vunpack.c.h.b16 %v13077
        %v13095 = vunpack.c.l.b16 %v13078
        %v13096 = vunpack.c.h.b16 %v13078
        %v13097 = vunpack.c.l.b16 %v13079
        %v13098 = vunpack.c.h.b16 %v13079
        %v13099 = vunpack.c.l.b16 %v13080
        %v13100 = vunpack.c.h.b16 %v13080
        %v13101 = vunpack.c.l.b16 %v13081
        %v13102 = vunpack.c.h.b16 %v13081
        %v13103 = vunpack.c.l.b16 %v13082
        %v13104 = vunpack.c.h.b16 %v13082
        %v13105 = vunpack.c.l.b16 %v13083
        %v13106 = vunpack.c.h.b16 %v13083
        %v13107 = vunpack.c.l.b16 %v13084
        %v13108 = vunpack.c.h.b16 %v13084
        %v13109 = vpack.c.b16 %v13095, %v13093
        %v13110 = vpack.c.b16 %v13096, %v13094
        %v13111 = vpack.c.b16 %v13099, %v13097
        %v13112 = vpack.c.b16 %v13100, %v13098
        %v13113 = vpack.c.b16 %v13103, %v13101
        %v13114 = vpack.c.b16 %v13104, %v13102
        %v13115 = vpack.c.b16 %v13107, %v13105
        %v13116 = vpack.c.b16 %v13108, %v13106
        %v13126 = vsel %vm11923, %v13075, 0
        %13128 = vmatpush.bf16.msra.mxu0 0
        %13129 = vmatpush.bf16.msra.mxu0 0
        %13130 = vmatpush.bf16.msra.mxu0 0
        %13131 = vmatpush.bf16.msra.mxu0 0
        %13132 = vmatpush.bf16.msra.mxu0 %v13115
        %13133 = vmatpush.bf16.msra.mxu0 %v13113
        %13134 = vmatpush.bf16.msra.mxu0 %v13111
        %13135 = vmatpush.bf16.msra.mxu0 %v13109
        %13136 = vmatmul.bf16.gmra.mxu0 %v13126
        %v13137 = vpop.f32.mrf.mxu0
        %v13138 = vadd.f32 0.0, %v13137
        %v13139 = vpop.f32.mrf.mxu0
        %13140 = vdwg.mxu0
        %13141 = vmatpush.bf16.msra.mxu0 0
        %13142 = vmatpush.bf16.msra.mxu0 0
        %13143 = vmatpush.bf16.msra.mxu0 0
        %13144 = vmatpush.bf16.msra.mxu0 0
        %13145 = vmatpush.bf16.msra.mxu0 %v13116
        %13146 = vmatpush.bf16.msra.mxu0 %v13114
        %13147 = vmatpush.bf16.msra.mxu0 %v13112
        %13148 = vmatpush.bf16.msra.mxu0 %v13110
        %13149 = vmatmul.bf16.gmra.mxu0 %v13126
        %v13150 = vpop.f32.mrf.mxu0
        %v13151 = vadd.f32 0.0, %v13150
        %v13152 = vpop.f32.mrf.mxu0
        %13153 = vdwg.mxu0
        %v13154 = vadd.f32 %v13073, %v13138
        %v13155 = vadd.f32 %v13074, %v13151
        %v13156 = vld [vmem:[%s8] sm:$0x3]
        %v13158 = vperm.slane %v13156, 0
        %v13159 = vperm.slane %v13156, 1
        %v13162 = vadd.f32 %v13154, %v13158
        %v13163 = vadd.f32 %v13155, %v13159
        %v13164 = vmax.f32 %v13162, 0.0
        %v13165 = vmax.f32 %v13163, 0.0
        %v13166 = vpack.c.bf16 %v13164, %v13164
        %v13167 = vpack.c.bf16 %v13165, %v13165
        %v13168 = vld [vmem:[%s9] sm:$0xf]
        %v13169 = vld [vmem:[%s9 + $0x4] sm:$0xf]
        %v13170 = vld [vmem:[%s9 + $0x8] sm:$0xf]
        %v13171 = vld [vmem:[%s9 + $0xc] sm:$0xf]
        %v13172 = vld [vmem:[%s9 + $0x10] sm:$0xf]
        %v13173 = vld [vmem:[%s9 + $0x14] sm:$0xf]
        %v13174 = vld [vmem:[%s9 + $0x18] sm:$0xf]
        %v13175 = vld [vmem:[%s9 + $0x1c] sm:$0xf]
        %v13176 = vld [vmem:[%s9 + $0x20] sm:$0xf]
        %v13177 = vld [vmem:[%s9 + $0x24] sm:$0xf]
        %v13178 = vld [vmem:[%s9 + $0x28] sm:$0xf]
        %v13179 = vld [vmem:[%s9 + $0x2c] sm:$0xf]
        %v13180 = vld [vmem:[%s9 + $0x30] sm:$0xf]
        %v13181 = vld [vmem:[%s9 + $0x34] sm:$0xf]
        %v13182 = vld [vmem:[%s9 + $0x38] sm:$0xf]
        %v13183 = vld [vmem:[%s9 + $0x3c] sm:$0xf]
        %v13184 = vld [vmem:[%s9 + $0x40] sm:$0xf]
        %v13185 = vld [vmem:[%s9 + $0x44] sm:$0xf]
        %v13186 = vld [vmem:[%s9 + $0x48] sm:$0xf]
        %v13187 = vld [vmem:[%s9 + $0x4c] sm:$0xf]
        %v13188 = vld [vmem:[%s9 + $0x50] sm:$0xf]
        %v13189 = vld [vmem:[%s9 + $0x54] sm:$0xf]
        %v13190 = vld [vmem:[%s9 + $0x58] sm:$0xf]
        %v13191 = vld [vmem:[%s9 + $0x5c] sm:$0xf]
        %v13192 = vld [vmem:[%s9 + $0x60] sm:$0xf]
        %v13193 = vld [vmem:[%s9 + $0x64] sm:$0xf]
        %v13194 = vld [vmem:[%s9 + $0x68] sm:$0xf]
        %v13195 = vld [vmem:[%s9 + $0x6c] sm:$0xf]
        %v13196 = vld [vmem:[%s9 + $0x70] sm:$0xf]
        %v13197 = vld [vmem:[%s9 + $0x74] sm:$0xf]
        %v13198 = vld [vmem:[%s9 + $0x78] sm:$0xf]
        %v13199 = vld [vmem:[%s9 + $0x7c] sm:$0xf]
        %v13200 = vld [vmem:[%s10] sm:$0x1]
        %v13233 = vunpack.c.l.b16 %v13168
        %v13234 = vunpack.c.l.b16 %v13169
        %v13235 = vunpack.c.l.b16 %v13170
        %v13236 = vunpack.c.l.b16 %v13171
        %v13237 = vunpack.c.l.b16 %v13172
        %v13238 = vunpack.c.l.b16 %v13173
        %v13239 = vunpack.c.l.b16 %v13174
        %v13240 = vunpack.c.l.b16 %v13175
        %v13241 = vunpack.c.l.b16 %v13176
        %v13242 = vunpack.c.l.b16 %v13177
        %v13243 = vunpack.c.l.b16 %v13178
        %v13244 = vunpack.c.l.b16 %v13179
        %v13245 = vunpack.c.l.b16 %v13180
        %v13246 = vunpack.c.l.b16 %v13181
        %v13247 = vunpack.c.l.b16 %v13182
        %v13248 = vunpack.c.l.b16 %v13183
        %v13249 = vunpack.c.l.b16 %v13184
        %v13250 = vunpack.c.l.b16 %v13185
        %v13251 = vunpack.c.l.b16 %v13186
        %v13252 = vunpack.c.l.b16 %v13187
        %v13253 = vunpack.c.l.b16 %v13188
        %v13254 = vunpack.c.l.b16 %v13189
        %v13255 = vunpack.c.l.b16 %v13190
        %v13256 = vunpack.c.l.b16 %v13191
        %v13257 = vunpack.c.l.b16 %v13192
        %v13258 = vunpack.c.l.b16 %v13193
        %v13259 = vunpack.c.l.b16 %v13194
        %v13260 = vunpack.c.l.b16 %v13195
        %v13261 = vunpack.c.l.b16 %v13196
        %v13262 = vunpack.c.l.b16 %v13197
        %v13263 = vunpack.c.l.b16 %v13198
        %v13264 = vunpack.c.l.b16 %v13199
        %v13265 = vpack.c.b16 %v13234, %v13233
        %v13266 = vpack.c.b16 %v13236, %v13235
        %v13267 = vpack.c.b16 %v13238, %v13237
        %v13268 = vpack.c.b16 %v13240, %v13239
        %v13269 = vpack.c.b16 %v13242, %v13241
        %v13270 = vpack.c.b16 %v13244, %v13243
        %v13271 = vpack.c.b16 %v13246, %v13245
        %v13272 = vpack.c.b16 %v13248, %v13247
        %v13273 = vpack.c.b16 %v13250, %v13249
        %v13274 = vpack.c.b16 %v13252, %v13251
        %v13275 = vpack.c.b16 %v13254, %v13253
        %v13276 = vpack.c.b16 %v13256, %v13255
        %v13277 = vpack.c.b16 %v13258, %v13257
        %v13278 = vpack.c.b16 %v13260, %v13259
        %v13279 = vpack.c.b16 %v13262, %v13261
        %v13280 = vpack.c.b16 %v13264, %v13263
        %13297 = vmatpush.bf16.msra.mxu0 %v13272
        %13298 = vmatpush.bf16.msra.mxu0 %v13271
        %13299 = vmatpush.bf16.msra.mxu0 %v13270
        %13300 = vmatpush.bf16.msra.mxu0 %v13269
        %13301 = vmatpush.bf16.msra.mxu0 %v13268
        %13302 = vmatpush.bf16.msra.mxu0 %v13267
        %13303 = vmatpush.bf16.msra.mxu0 %v13266
        %13304 = vmatpush.bf16.msra.mxu0 %v13265
        %13305 = vmatmul.bf16.gmra.mxu0 %v13166
        %v13306 = vpop.f32.mrf.mxu0
        %v13307 = vadd.f32 %v13200, %v13306
        %v13308 = vpop.f32.mrf.mxu0
        %13309 = vdwg.mxu0
        %13310 = vmatpush.bf16.msra.mxu0 %v13280
        %13311 = vmatpush.bf16.msra.mxu0 %v13279
        %13312 = vmatpush.bf16.msra.mxu0 %v13278
        %13313 = vmatpush.bf16.msra.mxu0 %v13277
        %13314 = vmatpush.bf16.msra.mxu0 %v13276
        %13315 = vmatpush.bf16.msra.mxu0 %v13275
        %13316 = vmatpush.bf16.msra.mxu0 %v13274
        %13317 = vmatpush.bf16.msra.mxu0 %v13273
        %13318 = vmatmul.bf16.gmra.mxu0 %v13167
        %v13319 = vpop.f32.mrf.mxu0
        %v13320 = vadd.f32 %v13307, %v13319
        %v13321 = vpop.f32.mrf.mxu0
        %13322 = vdwg.mxu0
        %13323 = vst [vmem:[%s378] sm:$0x1] %v13320
        %s13324 = sand.u32 %s269, 1
        %s13325 = scalar_lea.sflag [#allocation3], %s13324
        %s13326 = sand.u32 %s269, 1
        %s13327 = scalar_lea.vmem [#allocation2], %s13326
        // Predicated region
        $region65: #{forward.1} parent=63 // pred_check
          %p13328 = pneg %p279
        $region66: #{forward.1} parent=63 // pred_check_branch
          %13330 = sbr.rel (%p13328) target = $region68
        $region67: #{forward.1} parent=63 // pred_region
          %13332 = vsyncadd %s13325, 0
          %s13333 = scalar_lea.hbm %s11, %s25
          %s13335 = sshll.u32 %s13327, 4
          %s13336 = int_to_ptr.vmem [resolvable:$true] %s13335
          %s13337 = sshll.u32 %s13333, 4
          %s13338 = int_to_ptr.hbm [resolvable:$true] %s13337
          %13340 = dma.vmem_to_hbm [thread:$0]  %s13336, 16, %s13338, %s13325
        $region68: #{forward.1} parent=63 // pred_fallthru
          _
      $region64: #{forward.1} parent=5 // pred_fallthru
        _
      %p13341 = scmp.le.s32.totalorder 2, %s20
      // Predicated region
      $region69: #{forward.1} parent=5 // pred_check
        %p13342 = pneg %p13341
      $region70: #{forward.1} parent=5 // pred_check_branch
        %13344 = sbr.rel (%p13342) target = $region72
      $region71: #{forward.1} parent=5 // pred_region
        %s13345 = ssub.s32 %s20, 2
        // Predicated region
        $region73: #{forward.1} parent=71 // pred_check
          %p13346 = pneg %p285
        $region74: #{forward.1} parent=71 // pred_check_branch
          %13348 = sbr.rel (%p13346) target = $region76
        $region75: #{forward.1} parent=71 // pred_region
          %s13349 = sand.u32 %s270, 1
          %s13350 = scalar_lea.sflag [#allocation3], %s13349
          %s13351 = sand.u32 %s270, 1
          %s13352 = scalar_lea.vmem [#allocation2], %s13351
          %13354 = dma.done %s13350, 16
        $region76: #{forward.1} parent=71 // pred_fallthru
          _
      $region72: #{forward.1} parent=5 // pred_fallthru
        _
    $region6: #{forward.1} parent=1 // loop_footer
      %s24 = sadd.s32 1, %s20
    $region7: #{forward.1} parent=1 // loop_footer_branch
      %19 = sbr.rel target = $region3
    $region8: #{forward.1} parent=1 // loop_exit
      _
    %13355 = vsyncpa [#allocation3], 1
    %s13356 = scalar_lea.sflag [#allocation3], 1
    %13357 = vsyncpa %s13356, 1

</llo_original>
